<compile_context>
chip_gen: v5e
topology: v5e:2x2
jax: 0.10.0
libtpu: 0.0.40
codegen_flags: <defaults>
</compile_context>

<pallas_src>
import functools
import math

import jax
import jax.numpy as jnp
from jax.experimental import pallas as pl
from jax.experimental.pallas import tpu as pltpu


_SQRT1_2 = 1.0 / math.sqrt(2.0)


def _erf(x):
    """erf with exact-GELU-level accuracy (A&S 7.1.26, |err| <= 1.5e-7).

    Uses only mul/add/div/exp/where so it lowers cleanly in Mosaic
    (lax.erf_p has no Pallas TPU lowering rule).
    """
    p = 0.3275911
    a1, a2, a3, a4, a5 = (0.254829592, -0.284496736, 1.421413741,
                          -1.453152027, 1.061405429)
    ax = jnp.abs(x)
    t = 1.0 / (1.0 + p * ax)
    poly = ((((a5 * t + a4) * t + a3) * t + a2) * t + a1) * t
    y = 1.0 - poly * jnp.exp(-ax * ax)
    return jnp.where(x < 0.0, -y, y)


def _gelu_exact(x):
    return 0.5 * x * (1.0 + _erf(x * _SQRT1_2))


def _block_kernel(x_ref, dww_ref, dwb_ref, ln_g_ref, ln_b_ref,
                  w1_ref, b1_ref, grn_g_ref, grn_b_ref, w2_ref, b2_ref,
                  o_ref, *, H, W, C, K):
    pad = K // 2
    Hp = H + 2 * pad
    f32 = jnp.float32

    x = x_ref[0].astype(f32)                               # (H, W, C), one batch elem

    # --- depthwise KxK conv, groups=C (VPU multiply-accumulate) -------------
    # Halo handled in-kernel: H padding is a cheap leading-axis concat; the
    # W (sublane) shift is materialized once per kw, then the kh loop slices
    # only the leading axis (free).
    zrow = jnp.zeros((pad, W, C), f32)
    xh = jnp.concatenate([zrow, x, zrow], axis=0)          # (Hp, W, C)

    acc = jnp.zeros((H, W, C), f32)
    for kw in range(K):                                    # unrolled in Python
        s = kw - pad
        if s < 0:       # shift right: zeros enter on the left
            xkw = jnp.concatenate(
                [jnp.zeros((Hp, -s, C), f32), xh[:, :W + s, :]], axis=1)
        elif s > 0:     # shift left: zeros enter on the right
            xkw = jnp.concatenate(
                [xh[:, s:, :], jnp.zeros((Hp, s, C), f32)], axis=1)
        else:
            xkw = xh
        for kh in range(K):                                # leading-axis slice: free
            acc = acc + xkw[kh:kh + H] * dww_ref[kh * K + kw, :]
    y = (acc + dwb_ref[0, :]).reshape(H * W, C)

    # --- LayerNorm over channels (eps=1e-6, population variance) ------------
    mean = jnp.mean(y, axis=-1, keepdims=True)
    var = jnp.mean(jnp.square(y - mean), axis=-1, keepdims=True)
    y = (y - mean) * jax.lax.rsqrt(var + 1e-6)
    y = y * ln_g_ref[0, :] + ln_b_ref[0, :]

    # --- pwconv1: (H*W, C) @ (C, 4C) on the MXU (bf16 in, f32 accumulate) ----
    h = jnp.dot(y.astype(jnp.bfloat16), w1_ref[...],
                preferred_element_type=f32) + b1_ref[0, :]

    # --- GELU (exact / erf, matches nn.GELU() default) -----------------------
    h = _gelu_exact(h)

    # --- GRN: L2 norm over spatial dims per channel, normalize by channel-mean
    gx = jnp.sqrt(jnp.sum(h * h, axis=0, keepdims=True))          # (1, 4C)
    nx = gx / (jnp.mean(gx, axis=-1, keepdims=True) + 1e-6)       # (1, 4C)
    h = grn_g_ref[0, :] * (h * nx) + grn_b_ref[0, :] + h

    # --- pwconv2: (H*W, 4C) @ (4C, C) on the MXU (bf16 in, f32 accumulate) ---
    out = jnp.dot(h.astype(jnp.bfloat16), w2_ref[...],
                  preferred_element_type=f32) + b2_ref[0, :]

    # --- residual (aligned unpadded input tile, no center slice) -------------
    o_ref[0] = (x + out.reshape(H, W, C)).astype(o_ref.dtype)


def convnextv2_block(x_nchw, params, mask=None):
    """Forward pass of the sparse ConvNeXtV2 Block. Input/output are NCHW."""
    assert mask is None  # TODO(synk): sparse mask path not implemented
    B, C, H, W = x_nchw.shape
    K = 7
    C4 = 4 * C

    x = jnp.transpose(x_nchw, (0, 2, 3, 1))                        # NHWC, no HBM pad copy
    w1 = params["w1"].astype(jnp.bfloat16)                         # MXU-native operands
    w2 = params["w2"].astype(jnp.bfloat16)

    kernel = functools.partial(_block_kernel, H=H, W=W, C=C, K=K)

    def full(shape):
        nd = len(shape)
        return pl.BlockSpec(shape, lambda b, _nd=nd: (0,) * _nd)

    out = pl.pallas_call(
        kernel,
        out_shape=jax.ShapeDtypeStruct((B, H, W, C), x.dtype),
        grid=(B,),
        in_specs=[
            pl.BlockSpec((1, H, W, C), lambda b: (b, 0, 0, 0)),    # unpadded input, 1 batch elem
            full((K * K, C)),                                      # depthwise weights
            full((1, C)),                                          # depthwise bias
            full((1, C)), full((1, C)),                            # LayerNorm gamma/beta
            full((C, C4)), full((1, C4)),                          # pwconv1 W (bf16) / b
            full((1, C4)), full((1, C4)),                          # GRN gamma/beta
            full((C4, C)), full((1, C)),                           # pwconv2 W (bf16) / b
        ],
        out_specs=pl.BlockSpec((1, H, W, C), lambda b: (b, 0, 0, 0)),
        compiler_params=pltpu.CompilerParams(
            dimension_semantics=("parallel",),
            vmem_limit_bytes=32 * 1024 * 1024),
    )(x, params["dw_w"], params["dw_b"], params["ln_g"], params["ln_b"],
      w1, params["b1"], params["grn_g"], params["grn_b"], w2, params["b2"])

    return jnp.transpose(out, (0, 3, 1, 2))                        # back to NCHW


def reference(x_nchw, p):
    """Pure-JAX reference (mirrors the PyTorch forward with mask=None).

    Uses the same bf16-operand / f32-accumulation matmul precision as the
    kernel, and lax.erf (exact GELU) for the activation.
    """
    x = jnp.transpose(x_nchw, (0, 2, 3, 1))
    B, H, W, C = x.shape
    xp = jnp.pad(x, ((0, 0), (3, 3), (3, 3), (0, 0)))
    w = p["dw_w"].reshape(7, 7, C)
    acc = jnp.zeros_like(x)
    for kh in range(7):
        for kw in range(7):
            acc = acc + xp[:, kh:kh + H, kw:kw + W, :] * w[kh, kw]
    y = acc + p["dw_b"][0]
    mean = y.mean(-1, keepdims=True)
    var = ((y - mean) ** 2).mean(-1, keepdims=True)
    y = (y - mean) / jnp.sqrt(var + 1e-6) * p["ln_g"][0] + p["ln_b"][0]
    h = jnp.einsum("bhwc,cd->bhwd", y.astype(jnp.bfloat16),
                   p["w1"].astype(jnp.bfloat16),
                   preferred_element_type=jnp.float32) + p["b1"][0]
    h = 0.5 * h * (1.0 + jax.lax.erf(h / jnp.sqrt(2.0)))
    gx = jnp.sqrt(jnp.sum(h * h, axis=(1, 2), keepdims=True))
    nx = gx / (jnp.mean(gx, axis=-1, keepdims=True) + 1e-6)
    h = p["grn_g"][0] * (h * nx) + p["grn_b"][0] + h
    out = jnp.einsum("bhwd,dc->bhwc", h.astype(jnp.bfloat16),
                     p["w2"].astype(jnp.bfloat16),
                     preferred_element_type=jnp.float32) + p["b2"][0]
    return x_nchw + jnp.transpose(out, (0, 3, 1, 2))


def init_params(key, dim):
    c4 = 4 * dim
    ks = jax.random.split(key, 11)
    n = lambda k, s, sc: sc * jax.random.normal(k, s, jnp.float32)
    return {
        "dw_w": n(ks[0], (49, dim), 0.05),          # depthwise 7x7, per-channel taps
        "dw_b": n(ks[1], (1, dim), 0.05),
        "ln_g": 1.0 + n(ks[2], (1, dim), 0.05),
        "ln_b": n(ks[3], (1, dim), 0.05),
        "w1": n(ks[4], (dim, c4), 0.05),
        "b1": n(ks[5], (1, c4), 0.05),
        "grn_g": n(ks[6], (1, c4), 0.05),           # GRN gamma (torch inits to 0; random here)
        "grn_b": n(ks[7], (1, c4), 0.05),
        "w2": n(ks[8], (c4, dim), 0.05),
        "b2": n(ks[9], (1, dim), 0.05),
    }


if __name__ == "__main__":
    B, dim, H, W = 2, 32, 16, 16
    key = jax.random.PRNGKey(0)
    kx, kp = jax.random.split(key)
    x = jax.random.normal(kx, (B, dim, H, W), jnp.float32)   # NCHW, like PyTorch
    params = init_params(kp, dim)

    out = jax.block_until_ready(convnextv2_block(x, params))
    ref = jax.block_until_ready(reference(x, params))

    assert out.shape == x.shape and out.dtype == x.dtype
    assert jnp.allclose(out, ref, rtol=2e-2, atol=2e-2), \
        f"max abs err {jnp.max(jnp.abs(out - ref))}"
    print("KERNEL_OK")
</pallas_src>

<mosaic_0001>
module attributes {stable_mosaic.version = 11 : i64} {
  func.func @_block_kernel(%arg0: i32, %arg1: memref<1x16x16x32xf32, #tpu.memory_space<vmem>>, %arg2: memref<49x32xf32, #tpu.memory_space<vmem>>, %arg3: memref<1x32xf32, #tpu.memory_space<vmem>>, %arg4: memref<1x32xf32, #tpu.memory_space<vmem>>, %arg5: memref<1x32xf32, #tpu.memory_space<vmem>>, %arg6: memref<32x128xbf16, #tpu.memory_space<vmem>>, %arg7: memref<1x128xf32, #tpu.memory_space<vmem>>, %arg8: memref<1x128xf32, #tpu.memory_space<vmem>>, %arg9: memref<1x128xf32, #tpu.memory_space<vmem>>, %arg10: memref<128x32xbf16, #tpu.memory_space<vmem>>, %arg11: memref<1x32xf32, #tpu.memory_space<vmem>>, %arg12: memref<1x16x16x32xf32, #tpu.memory_space<vmem>>) attributes {dimension_semantics = [#tpu.dimension_semantics<parallel>], iteration_bounds = array<i64: 2>, scalar_prefetch = 0 : i64, scratch_operands = 0 : i64, tpu.core_type = #tpu.core_type<tc>, window_params = [{transform_indices = @transform_0, window_bounds = array<i64: 1, 16, 16, 32>}, {pipeline_mode = #tpu.pipeline_mode<synchronous>, transform_indices = @transform_1, window_bounds = array<i64: 49, 32>}, {pipeline_mode = #tpu.pipeline_mode<synchronous>, transform_indices = @transform_2, window_bounds = array<i64: 1, 32>}, {pipeline_mode = #tpu.pipeline_mode<synchronous>, transform_indices = @transform_3, window_bounds = array<i64: 1, 32>}, {pipeline_mode = #tpu.pipeline_mode<synchronous>, transform_indices = @transform_4, window_bounds = array<i64: 1, 32>}, {pipeline_mode = #tpu.pipeline_mode<synchronous>, transform_indices = @transform_5, window_bounds = array<i64: 32, 128>}, {pipeline_mode = #tpu.pipeline_mode<synchronous>, transform_indices = @transform_6, window_bounds = array<i64: 1, 128>}, {pipeline_mode = #tpu.pipeline_mode<synchronous>, transform_indices = @transform_7, window_bounds = array<i64: 1, 128>}, {pipeline_mode = #tpu.pipeline_mode<synchronous>, transform_indices = @transform_8, window_bounds = array<i64: 1, 128>}, {pipeline_mode = #tpu.pipeline_mode<synchronous>, transform_indices = @transform_9, window_bounds = array<i64: 128, 32>}, {pipeline_mode = #tpu.pipeline_mode<synchronous>, transform_indices = @transform_10, window_bounds = array<i64: 1, 32>}, {transform_indices = @transform_11, window_bounds = array<i64: 1, 16, 16, 32>}]} {
    %c0 = arith.constant 0 : index
    %c0_0 = arith.constant 0 : index
    %c0_1 = arith.constant 0 : index
    %c0_2 = arith.constant 0 : index
    %0 = vector.load %arg1[%c0, %c0_0, %c0_1, %c0_2] : memref<1x16x16x32xf32, #tpu.memory_space<vmem>>, vector<1x16x16x32xf32>
    %1 = vector.shape_cast %0 : vector<1x16x16x32xf32> to vector<16x16x32xf32>
    %cst = arith.constant 0.000000e+00 : f32
    %2 = vector.broadcast %cst : f32 to vector<3x16x32xf32>
    %3 = tpu.concatenate %2, %1, %2 in 0 : vector<3x16x32xf32>, vector<16x16x32xf32>, vector<3x16x32xf32> -> vector<22x16x32xf32>
    %cst_3 = arith.constant 0.000000e+00 : f32
    %4 = vector.broadcast %cst_3 : f32 to vector<16x16x32xf32>
    %cst_4 = arith.constant 0.000000e+00 : f32
    %5 = vector.broadcast %cst_4 : f32 to vector<22x3x32xf32>
    %6 = vector.extract_strided_slice %3 {offsets = [0, 0, 0], sizes = [22, 13, 32], strides = [1, 1, 1]} : vector<22x16x32xf32> to vector<22x13x32xf32>
    %7 = tpu.concatenate %5, %6 in 1 : vector<22x3x32xf32>, vector<22x13x32xf32> -> vector<22x16x32xf32>
    %8 = vector.extract_strided_slice %7 {offsets = [0, 0, 0], sizes = [16, 16, 32], strides = [1, 1, 1]} : vector<22x16x32xf32> to vector<16x16x32xf32>
    %c0_5 = arith.constant 0 : index
    %c0_6 = arith.constant 0 : index
    %9 = vector.load %arg2[%c0_5, %c0_6] : memref<49x32xf32, #tpu.memory_space<vmem>>, vector<1x32xf32>
    %10 = vector.shape_cast %9 : vector<1x32xf32> to vector<32xf32>
    %11 = vector.shape_cast %10 : vector<32xf32> to vector<1x1x32xf32>
    %12 = vector.broadcast %11 : vector<1x1x32xf32> to vector<16x16x32xf32>
    %13 = arith.mulf %8, %12 : vector<16x16x32xf32>
    %14 = arith.addf %4, %13 : vector<16x16x32xf32>
    %15 = vector.extract_strided_slice %7 {offsets = [1, 0, 0], sizes = [16, 16, 32], strides = [1, 1, 1]} : vector<22x16x32xf32> to vector<16x16x32xf32>
    %c7 = arith.constant 7 : index
    %c0_7 = arith.constant 0 : index
    %16 = vector.load %arg2[%c7, %c0_7] : memref<49x32xf32, #tpu.memory_space<vmem>>, vector<1x32xf32>
    %17 = vector.shape_cast %16 : vector<1x32xf32> to vector<32xf32>
    %18 = vector.shape_cast %17 : vector<32xf32> to vector<1x1x32xf32>
    %19 = vector.broadcast %18 : vector<1x1x32xf32> to vector<16x16x32xf32>
    %20 = arith.mulf %15, %19 : vector<16x16x32xf32>
    %21 = arith.addf %14, %20 : vector<16x16x32xf32>
    %22 = vector.extract_strided_slice %7 {offsets = [2, 0, 0], sizes = [16, 16, 32], strides = [1, 1, 1]} : vector<22x16x32xf32> to vector<16x16x32xf32>
    %c14 = arith.constant 14 : index
    %c0_8 = arith.constant 0 : index
    %23 = vector.load %arg2[%c14, %c0_8] : memref<49x32xf32, #tpu.memory_space<vmem>>, vector<1x32xf32>
    %24 = vector.shape_cast %23 : vector<1x32xf32> to vector<32xf32>
    %25 = vector.shape_cast %24 : vector<32xf32> to vector<1x1x32xf32>
    %26 = vector.broadcast %25 : vector<1x1x32xf32> to vector<16x16x32xf32>
    %27 = arith.mulf %22, %26 : vector<16x16x32xf32>
    %28 = arith.addf %21, %27 : vector<16x16x32xf32>
    %29 = vector.extract_strided_slice %7 {offsets = [3, 0, 0], sizes = [16, 16, 32], strides = [1, 1, 1]} : vector<22x16x32xf32> to vector<16x16x32xf32>
    %c21 = arith.constant 21 : index
    %c0_9 = arith.constant 0 : index
    %30 = vector.load %arg2[%c21, %c0_9] : memref<49x32xf32, #tpu.memory_space<vmem>>, vector<1x32xf32>
    %31 = vector.shape_cast %30 : vector<1x32xf32> to vector<32xf32>
    %32 = vector.shape_cast %31 : vector<32xf32> to vector<1x1x32xf32>
    %33 = vector.broadcast %32 : vector<1x1x32xf32> to vector<16x16x32xf32>
    %34 = arith.mulf %29, %33 : vector<16x16x32xf32>
    %35 = arith.addf %28, %34 : vector<16x16x32xf32>
    %36 = vector.extract_strided_slice %7 {offsets = [4, 0, 0], sizes = [16, 16, 32], strides = [1, 1, 1]} : vector<22x16x32xf32> to vector<16x16x32xf32>
    %c28 = arith.constant 28 : index
    %c0_10 = arith.constant 0 : index
    %37 = vector.load %arg2[%c28, %c0_10] : memref<49x32xf32, #tpu.memory_space<vmem>>, vector<1x32xf32>
    %38 = vector.shape_cast %37 : vector<1x32xf32> to vector<32xf32>
    %39 = vector.shape_cast %38 : vector<32xf32> to vector<1x1x32xf32>
    %40 = vector.broadcast %39 : vector<1x1x32xf32> to vector<16x16x32xf32>
    %41 = arith.mulf %36, %40 : vector<16x16x32xf32>
    %42 = arith.addf %35, %41 : vector<16x16x32xf32>
    %43 = vector.extract_strided_slice %7 {offsets = [5, 0, 0], sizes = [16, 16, 32], strides = [1, 1, 1]} : vector<22x16x32xf32> to vector<16x16x32xf32>
    %c35 = arith.constant 35 : index
    %c0_11 = arith.constant 0 : index
    %44 = vector.load %arg2[%c35, %c0_11] : memref<49x32xf32, #tpu.memory_space<vmem>>, vector<1x32xf32>
    %45 = vector.shape_cast %44 : vector<1x32xf32> to vector<32xf32>
    %46 = vector.shape_cast %45 : vector<32xf32> to vector<1x1x32xf32>
    %47 = vector.broadcast %46 : vector<1x1x32xf32> to vector<16x16x32xf32>
    %48 = arith.mulf %43, %47 : vector<16x16x32xf32>
    %49 = arith.addf %42, %48 : vector<16x16x32xf32>
    %50 = vector.extract_strided_slice %7 {offsets = [6, 0, 0], sizes = [16, 16, 32], strides = [1, 1, 1]} : vector<22x16x32xf32> to vector<16x16x32xf32>
    %c42 = arith.constant 42 : index
    %c0_12 = arith.constant 0 : index
    %51 = vector.load %arg2[%c42, %c0_12] : memref<49x32xf32, #tpu.memory_space<vmem>>, vector<1x32xf32>
    %52 = vector.shape_cast %51 : vector<1x32xf32> to vector<32xf32>
    %53 = vector.shape_cast %52 : vector<32xf32> to vector<1x1x32xf32>
    %54 = vector.broadcast %53 : vector<1x1x32xf32> to vector<16x16x32xf32>
    %55 = arith.mulf %50, %54 : vector<16x16x32xf32>
    %56 = arith.addf %49, %55 : vector<16x16x32xf32>
    %cst_13 = arith.constant 0.000000e+00 : f32
    %57 = vector.broadcast %cst_13 : f32 to vector<22x2x32xf32>
    %58 = vector.extract_strided_slice %3 {offsets = [0, 0, 0], sizes = [22, 14, 32], strides = [1, 1, 1]} : vector<22x16x32xf32> to vector<22x14x32xf32>
    %59 = tpu.concatenate %57, %58 in 1 : vector<22x2x32xf32>, vector<22x14x32xf32> -> vector<22x16x32xf32>
    %60 = vector.extract_strided_slice %59 {offsets = [0, 0, 0], sizes = [16, 16, 32], strides = [1, 1, 1]} : vector<22x16x32xf32> to vector<16x16x32xf32>
    %c1 = arith.constant 1 : index
    %c0_14 = arith.constant 0 : index
    %61 = vector.load %arg2[%c1, %c0_14] : memref<49x32xf32, #tpu.memory_space<vmem>>, vector<1x32xf32>
    %62 = vector.shape_cast %61 : vector<1x32xf32> to vector<32xf32>
    %63 = vector.shape_cast %62 : vector<32xf32> to vector<1x1x32xf32>
    %64 = vector.broadcast %63 : vector<1x1x32xf32> to vector<16x16x32xf32>
    %65 = arith.mulf %60, %64 : vector<16x16x32xf32>
    %66 = arith.addf %56, %65 : vector<16x16x32xf32>
    %67 = vector.extract_strided_slice %59 {offsets = [1, 0, 0], sizes = [16, 16, 32], strides = [1, 1, 1]} : vector<22x16x32xf32> to vector<16x16x32xf32>
    %c8 = arith.constant 8 : index
    %c0_15 = arith.constant 0 : index
    %68 = vector.load %arg2[%c8, %c0_15] : memref<49x32xf32, #tpu.memory_space<vmem>>, vector<1x32xf32>
    %69 = vector.shape_cast %68 : vector<1x32xf32> to vector<32xf32>
    %70 = vector.shape_cast %69 : vector<32xf32> to vector<1x1x32xf32>
    %71 = vector.broadcast %70 : vector<1x1x32xf32> to vector<16x16x32xf32>
    %72 = arith.mulf %67, %71 : vector<16x16x32xf32>
    %73 = arith.addf %66, %72 : vector<16x16x32xf32>
    %74 = vector.extract_strided_slice %59 {offsets = [2, 0, 0], sizes = [16, 16, 32], strides = [1, 1, 1]} : vector<22x16x32xf32> to vector<16x16x32xf32>
    %c15 = arith.constant 15 : index
    %c0_16 = arith.constant 0 : index
    %75 = vector.load %arg2[%c15, %c0_16] : memref<49x32xf32, #tpu.memory_space<vmem>>, vector<1x32xf32>
    %76 = vector.shape_cast %75 : vector<1x32xf32> to vector<32xf32>
    %77 = vector.shape_cast %76 : vector<32xf32> to vector<1x1x32xf32>
    %78 = vector.broadcast %77 : vector<1x1x32xf32> to vector<16x16x32xf32>
    %79 = arith.mulf %74, %78 : vector<16x16x32xf32>
    %80 = arith.addf %73, %79 : vector<16x16x32xf32>
    %81 = vector.extract_strided_slice %59 {offsets = [3, 0, 0], sizes = [16, 16, 32], strides = [1, 1, 1]} : vector<22x16x32xf32> to vector<16x16x32xf32>
    %c22 = arith.constant 22 : index
    %c0_17 = arith.constant 0 : index
    %82 = vector.load %arg2[%c22, %c0_17] : memref<49x32xf32, #tpu.memory_space<vmem>>, vector<1x32xf32>
    %83 = vector.shape_cast %82 : vector<1x32xf32> to vector<32xf32>
    %84 = vector.shape_cast %83 : vector<32xf32> to vector<1x1x32xf32>
    %85 = vector.broadcast %84 : vector<1x1x32xf32> to vector<16x16x32xf32>
    %86 = arith.mulf %81, %85 : vector<16x16x32xf32>
    %87 = arith.addf %80, %86 : vector<16x16x32xf32>
    %88 = vector.extract_strided_slice %59 {offsets = [4, 0, 0], sizes = [16, 16, 32], strides = [1, 1, 1]} : vector<22x16x32xf32> to vector<16x16x32xf32>
    %c29 = arith.constant 29 : index
    %c0_18 = arith.constant 0 : index
    %89 = vector.load %arg2[%c29, %c0_18] : memref<49x32xf32, #tpu.memory_space<vmem>>, vector<1x32xf32>
    %90 = vector.shape_cast %89 : vector<1x32xf32> to vector<32xf32>
    %91 = vector.shape_cast %90 : vector<32xf32> to vector<1x1x32xf32>
    %92 = vector.broadcast %91 : vector<1x1x32xf32> to vector<16x16x32xf32>
    %93 = arith.mulf %88, %92 : vector<16x16x32xf32>
    %94 = arith.addf %87, %93 : vector<16x16x32xf32>
    %95 = vector.extract_strided_slice %59 {offsets = [5, 0, 0], sizes = [16, 16, 32], strides = [1, 1, 1]} : vector<22x16x32xf32> to vector<16x16x32xf32>
    %c36 = arith.constant 36 : index
    %c0_19 = arith.constant 0 : index
    %96 = vector.load %arg2[%c36, %c0_19] : memref<49x32xf32, #tpu.memory_space<vmem>>, vector<1x32xf32>
    %97 = vector.shape_cast %96 : vector<1x32xf32> to vector<32xf32>
    %98 = vector.shape_cast %97 : vector<32xf32> to vector<1x1x32xf32>
    %99 = vector.broadcast %98 : vector<1x1x32xf32> to vector<16x16x32xf32>
    %100 = arith.mulf %95, %99 : vector<16x16x32xf32>
    %101 = arith.addf %94, %100 : vector<16x16x32xf32>
    %102 = vector.extract_strided_slice %59 {offsets = [6, 0, 0], sizes = [16, 16, 32], strides = [1, 1, 1]} : vector<22x16x32xf32> to vector<16x16x32xf32>
    %c43 = arith.constant 43 : index
    %c0_20 = arith.constant 0 : index
    %103 = vector.load %arg2[%c43, %c0_20] : memref<49x32xf32, #tpu.memory_space<vmem>>, vector<1x32xf32>
    %104 = vector.shape_cast %103 : vector<1x32xf32> to vector<32xf32>
    %105 = vector.shape_cast %104 : vector<32xf32> to vector<1x1x32xf32>
    %106 = vector.broadcast %105 : vector<1x1x32xf32> to vector<16x16x32xf32>
    %107 = arith.mulf %102, %106 : vector<16x16x32xf32>
    %108 = arith.addf %101, %107 : vector<16x16x32xf32>
    %cst_21 = arith.constant 0.000000e+00 : f32
    %109 = vector.broadcast %cst_21 : f32 to vector<22x1x32xf32>
    %110 = vector.extract_strided_slice %3 {offsets = [0, 0, 0], sizes = [22, 15, 32], strides = [1, 1, 1]} : vector<22x16x32xf32> to vector<22x15x32xf32>
    %111 = tpu.concatenate %109, %110 in 1 : vector<22x1x32xf32>, vector<22x15x32xf32> -> vector<22x16x32xf32>
    %112 = vector.extract_strided_slice %111 {offsets = [0, 0, 0], sizes = [16, 16, 32], strides = [1, 1, 1]} : vector<22x16x32xf32> to vector<16x16x32xf32>
    %c2 = arith.constant 2 : index
    %c0_22 = arith.constant 0 : index
    %113 = vector.load %arg2[%c2, %c0_22] : memref<49x32xf32, #tpu.memory_space<vmem>>, vector<1x32xf32>
    %114 = vector.shape_cast %113 : vector<1x32xf32> to vector<32xf32>
    %115 = vector.shape_cast %114 : vector<32xf32> to vector<1x1x32xf32>
    %116 = vector.broadcast %115 : vector<1x1x32xf32> to vector<16x16x32xf32>
    %117 = arith.mulf %112, %116 : vector<16x16x32xf32>
    %118 = arith.addf %108, %117 : vector<16x16x32xf32>
    %119 = vector.extract_strided_slice %111 {offsets = [1, 0, 0], sizes = [16, 16, 32], strides = [1, 1, 1]} : vector<22x16x32xf32> to vector<16x16x32xf32>
    %c9 = arith.constant 9 : index
    %c0_23 = arith.constant 0 : index
    %120 = vector.load %arg2[%c9, %c0_23] : memref<49x32xf32, #tpu.memory_space<vmem>>, vector<1x32xf32>
    %121 = vector.shape_cast %120 : vector<1x32xf32> to vector<32xf32>
    %122 = vector.shape_cast %121 : vector<32xf32> to vector<1x1x32xf32>
    %123 = vector.broadcast %122 : vector<1x1x32xf32> to vector<16x16x32xf32>
    %124 = arith.mulf %119, %123 : vector<16x16x32xf32>
    %125 = arith.addf %118, %124 : vector<16x16x32xf32>
    %126 = vector.extract_strided_slice %111 {offsets = [2, 0, 0], sizes = [16, 16, 32], strides = [1, 1, 1]} : vector<22x16x32xf32> to vector<16x16x32xf32>
    %c16 = arith.constant 16 : index
    %c0_24 = arith.constant 0 : index
    %127 = vector.load %arg2[%c16, %c0_24] : memref<49x32xf32, #tpu.memory_space<vmem>>, vector<1x32xf32>
    %128 = vector.shape_cast %127 : vector<1x32xf32> to vector<32xf32>
    %129 = vector.shape_cast %128 : vector<32xf32> to vector<1x1x32xf32>
    %130 = vector.broadcast %129 : vector<1x1x32xf32> to vector<16x16x32xf32>
    %131 = arith.mulf %126, %130 : vector<16x16x32xf32>
    %132 = arith.addf %125, %131 : vector<16x16x32xf32>
    %133 = vector.extract_strided_slice %111 {offsets = [3, 0, 0], sizes = [16, 16, 32], strides = [1, 1, 1]} : vector<22x16x32xf32> to vector<16x16x32xf32>
    %c23 = arith.constant 23 : index
    %c0_25 = arith.constant 0 : index
    %134 = vector.load %arg2[%c23, %c0_25] : memref<49x32xf32, #tpu.memory_space<vmem>>, vector<1x32xf32>
    %135 = vector.shape_cast %134 : vector<1x32xf32> to vector<32xf32>
    %136 = vector.shape_cast %135 : vector<32xf32> to vector<1x1x32xf32>
    %137 = vector.broadcast %136 : vector<1x1x32xf32> to vector<16x16x32xf32>
    %138 = arith.mulf %133, %137 : vector<16x16x32xf32>
    %139 = arith.addf %132, %138 : vector<16x16x32xf32>
    %140 = vector.extract_strided_slice %111 {offsets = [4, 0, 0], sizes = [16, 16, 32], strides = [1, 1, 1]} : vector<22x16x32xf32> to vector<16x16x32xf32>
    %c30 = arith.constant 30 : index
    %c0_26 = arith.constant 0 : index
    %141 = vector.load %arg2[%c30, %c0_26] : memref<49x32xf32, #tpu.memory_space<vmem>>, vector<1x32xf32>
    %142 = vector.shape_cast %141 : vector<1x32xf32> to vector<32xf32>
    %143 = vector.shape_cast %142 : vector<32xf32> to vector<1x1x32xf32>
    %144 = vector.broadcast %143 : vector<1x1x32xf32> to vector<16x16x32xf32>
    %145 = arith.mulf %140, %144 : vector<16x16x32xf32>
    %146 = arith.addf %139, %145 : vector<16x16x32xf32>
    %147 = vector.extract_strided_slice %111 {offsets = [5, 0, 0], sizes = [16, 16, 32], strides = [1, 1, 1]} : vector<22x16x32xf32> to vector<16x16x32xf32>
    %c37 = arith.constant 37 : index
    %c0_27 = arith.constant 0 : index
    %148 = vector.load %arg2[%c37, %c0_27] : memref<49x32xf32, #tpu.memory_space<vmem>>, vector<1x32xf32>
    %149 = vector.shape_cast %148 : vector<1x32xf32> to vector<32xf32>
    %150 = vector.shape_cast %149 : vector<32xf32> to vector<1x1x32xf32>
    %151 = vector.broadcast %150 : vector<1x1x32xf32> to vector<16x16x32xf32>
    %152 = arith.mulf %147, %151 : vector<16x16x32xf32>
    %153 = arith.addf %146, %152 : vector<16x16x32xf32>
    %154 = vector.extract_strided_slice %111 {offsets = [6, 0, 0], sizes = [16, 16, 32], strides = [1, 1, 1]} : vector<22x16x32xf32> to vector<16x16x32xf32>
    %c44 = arith.constant 44 : index
    %c0_28 = arith.constant 0 : index
    %155 = vector.load %arg2[%c44, %c0_28] : memref<49x32xf32, #tpu.memory_space<vmem>>, vector<1x32xf32>
    %156 = vector.shape_cast %155 : vector<1x32xf32> to vector<32xf32>
    %157 = vector.shape_cast %156 : vector<32xf32> to vector<1x1x32xf32>
    %158 = vector.broadcast %157 : vector<1x1x32xf32> to vector<16x16x32xf32>
    %159 = arith.mulf %154, %158 : vector<16x16x32xf32>
    %160 = arith.addf %153, %159 : vector<16x16x32xf32>
    %161 = vector.extract_strided_slice %3 {offsets = [0, 0, 0], sizes = [16, 16, 32], strides = [1, 1, 1]} : vector<22x16x32xf32> to vector<16x16x32xf32>
    %c3 = arith.constant 3 : index
    %c0_29 = arith.constant 0 : index
    %162 = vector.load %arg2[%c3, %c0_29] : memref<49x32xf32, #tpu.memory_space<vmem>>, vector<1x32xf32>
    %163 = vector.shape_cast %162 : vector<1x32xf32> to vector<32xf32>
    %164 = vector.shape_cast %163 : vector<32xf32> to vector<1x1x32xf32>
    %165 = vector.broadcast %164 : vector<1x1x32xf32> to vector<16x16x32xf32>
    %166 = arith.mulf %161, %165 : vector<16x16x32xf32>
    %167 = arith.addf %160, %166 : vector<16x16x32xf32>
    %168 = vector.extract_strided_slice %3 {offsets = [1, 0, 0], sizes = [16, 16, 32], strides = [1, 1, 1]} : vector<22x16x32xf32> to vector<16x16x32xf32>
    %c10 = arith.constant 10 : index
    %c0_30 = arith.constant 0 : index
    %169 = vector.load %arg2[%c10, %c0_30] : memref<49x32xf32, #tpu.memory_space<vmem>>, vector<1x32xf32>
    %170 = vector.shape_cast %169 : vector<1x32xf32> to vector<32xf32>
    %171 = vector.shape_cast %170 : vector<32xf32> to vector<1x1x32xf32>
    %172 = vector.broadcast %171 : vector<1x1x32xf32> to vector<16x16x32xf32>
    %173 = arith.mulf %168, %172 : vector<16x16x32xf32>
    %174 = arith.addf %167, %173 : vector<16x16x32xf32>
    %175 = vector.extract_strided_slice %3 {offsets = [2, 0, 0], sizes = [16, 16, 32], strides = [1, 1, 1]} : vector<22x16x32xf32> to vector<16x16x32xf32>
    %c17 = arith.constant 17 : index
    %c0_31 = arith.constant 0 : index
    %176 = vector.load %arg2[%c17, %c0_31] : memref<49x32xf32, #tpu.memory_space<vmem>>, vector<1x32xf32>
    %177 = vector.shape_cast %176 : vector<1x32xf32> to vector<32xf32>
    %178 = vector.shape_cast %177 : vector<32xf32> to vector<1x1x32xf32>
    %179 = vector.broadcast %178 : vector<1x1x32xf32> to vector<16x16x32xf32>
    %180 = arith.mulf %175, %179 : vector<16x16x32xf32>
    %181 = arith.addf %174, %180 : vector<16x16x32xf32>
    %182 = vector.extract_strided_slice %3 {offsets = [3, 0, 0], sizes = [16, 16, 32], strides = [1, 1, 1]} : vector<22x16x32xf32> to vector<16x16x32xf32>
    %c24 = arith.constant 24 : index
    %c0_32 = arith.constant 0 : index
    %183 = vector.load %arg2[%c24, %c0_32] : memref<49x32xf32, #tpu.memory_space<vmem>>, vector<1x32xf32>
    %184 = vector.shape_cast %183 : vector<1x32xf32> to vector<32xf32>
    %185 = vector.shape_cast %184 : vector<32xf32> to vector<1x1x32xf32>
    %186 = vector.broadcast %185 : vector<1x1x32xf32> to vector<16x16x32xf32>
    %187 = arith.mulf %182, %186 : vector<16x16x32xf32>
    %188 = arith.addf %181, %187 : vector<16x16x32xf32>
    %189 = vector.extract_strided_slice %3 {offsets = [4, 0, 0], sizes = [16, 16, 32], strides = [1, 1, 1]} : vector<22x16x32xf32> to vector<16x16x32xf32>
    %c31 = arith.constant 31 : index
    %c0_33 = arith.constant 0 : index
    %190 = vector.load %arg2[%c31, %c0_33] : memref<49x32xf32, #tpu.memory_space<vmem>>, vector<1x32xf32>
    %191 = vector.shape_cast %190 : vector<1x32xf32> to vector<32xf32>
    %192 = vector.shape_cast %191 : vector<32xf32> to vector<1x1x32xf32>
    %193 = vector.broadcast %192 : vector<1x1x32xf32> to vector<16x16x32xf32>
    %194 = arith.mulf %189, %193 : vector<16x16x32xf32>
    %195 = arith.addf %188, %194 : vector<16x16x32xf32>
    %196 = vector.extract_strided_slice %3 {offsets = [5, 0, 0], sizes = [16, 16, 32], strides = [1, 1, 1]} : vector<22x16x32xf32> to vector<16x16x32xf32>
    %c38 = arith.constant 38 : index
    %c0_34 = arith.constant 0 : index
    %197 = vector.load %arg2[%c38, %c0_34] : memref<49x32xf32, #tpu.memory_space<vmem>>, vector<1x32xf32>
    %198 = vector.shape_cast %197 : vector<1x32xf32> to vector<32xf32>
    %199 = vector.shape_cast %198 : vector<32xf32> to vector<1x1x32xf32>
    %200 = vector.broadcast %199 : vector<1x1x32xf32> to vector<16x16x32xf32>
    %201 = arith.mulf %196, %200 : vector<16x16x32xf32>
    %202 = arith.addf %195, %201 : vector<16x16x32xf32>
    %203 = vector.extract_strided_slice %3 {offsets = [6, 0, 0], sizes = [16, 16, 32], strides = [1, 1, 1]} : vector<22x16x32xf32> to vector<16x16x32xf32>
    %c45 = arith.constant 45 : index
    %c0_35 = arith.constant 0 : index
    %204 = vector.load %arg2[%c45, %c0_35] : memref<49x32xf32, #tpu.memory_space<vmem>>, vector<1x32xf32>
    %205 = vector.shape_cast %204 : vector<1x32xf32> to vector<32xf32>
    %206 = vector.shape_cast %205 : vector<32xf32> to vector<1x1x32xf32>
    %207 = vector.broadcast %206 : vector<1x1x32xf32> to vector<16x16x32xf32>
    %208 = arith.mulf %203, %207 : vector<16x16x32xf32>
    %209 = arith.addf %202, %208 : vector<16x16x32xf32>
    %210 = vector.extract_strided_slice %3 {offsets = [0, 1, 0], sizes = [22, 15, 32], strides = [1, 1, 1]} : vector<22x16x32xf32> to vector<22x15x32xf32>
    %cst_36 = arith.constant 0.000000e+00 : f32
    %211 = vector.broadcast %cst_36 : f32 to vector<22x1x32xf32>
    %212 = tpu.concatenate %210, %211 in 1 : vector<22x15x32xf32>, vector<22x1x32xf32> -> vector<22x16x32xf32>
    %213 = vector.extract_strided_slice %212 {offsets = [0, 0, 0], sizes = [16, 16, 32], strides = [1, 1, 1]} : vector<22x16x32xf32> to vector<16x16x32xf32>
    %c4 = arith.constant 4 : index
    %c0_37 = arith.constant 0 : index
    %214 = vector.load %arg2[%c4, %c0_37] : memref<49x32xf32, #tpu.memory_space<vmem>>, vector<1x32xf32>
    %215 = vector.shape_cast %214 : vector<1x32xf32> to vector<32xf32>
    %216 = vector.shape_cast %215 : vector<32xf32> to vector<1x1x32xf32>
    %217 = vector.broadcast %216 : vector<1x1x32xf32> to vector<16x16x32xf32>
    %218 = arith.mulf %213, %217 : vector<16x16x32xf32>
    %219 = arith.addf %209, %218 : vector<16x16x32xf32>
    %220 = vector.extract_strided_slice %212 {offsets = [1, 0, 0], sizes = [16, 16, 32], strides = [1, 1, 1]} : vector<22x16x32xf32> to vector<16x16x32xf32>
    %c11 = arith.constant 11 : index
    %c0_38 = arith.constant 0 : index
    %221 = vector.load %arg2[%c11, %c0_38] : memref<49x32xf32, #tpu.memory_space<vmem>>, vector<1x32xf32>
    %222 = vector.shape_cast %221 : vector<1x32xf32> to vector<32xf32>
    %223 = vector.shape_cast %222 : vector<32xf32> to vector<1x1x32xf32>
    %224 = vector.broadcast %223 : vector<1x1x32xf32> to vector<16x16x32xf32>
    %225 = arith.mulf %220, %224 : vector<16x16x32xf32>
    %226 = arith.addf %219, %225 : vector<16x16x32xf32>
    %227 = vector.extract_strided_slice %212 {offsets = [2, 0, 0], sizes = [16, 16, 32], strides = [1, 1, 1]} : vector<22x16x32xf32> to vector<16x16x32xf32>
    %c18 = arith.constant 18 : index
    %c0_39 = arith.constant 0 : index
    %228 = vector.load %arg2[%c18, %c0_39] : memref<49x32xf32, #tpu.memory_space<vmem>>, vector<1x32xf32>
    %229 = vector.shape_cast %228 : vector<1x32xf32> to vector<32xf32>
    %230 = vector.shape_cast %229 : vector<32xf32> to vector<1x1x32xf32>
    %231 = vector.broadcast %230 : vector<1x1x32xf32> to vector<16x16x32xf32>
    %232 = arith.mulf %227, %231 : vector<16x16x32xf32>
    %233 = arith.addf %226, %232 : vector<16x16x32xf32>
    %234 = vector.extract_strided_slice %212 {offsets = [3, 0, 0], sizes = [16, 16, 32], strides = [1, 1, 1]} : vector<22x16x32xf32> to vector<16x16x32xf32>
    %c25 = arith.constant 25 : index
    %c0_40 = arith.constant 0 : index
    %235 = vector.load %arg2[%c25, %c0_40] : memref<49x32xf32, #tpu.memory_space<vmem>>, vector<1x32xf32>
    %236 = vector.shape_cast %235 : vector<1x32xf32> to vector<32xf32>
    %237 = vector.shape_cast %236 : vector<32xf32> to vector<1x1x32xf32>
    %238 = vector.broadcast %237 : vector<1x1x32xf32> to vector<16x16x32xf32>
    %239 = arith.mulf %234, %238 : vector<16x16x32xf32>
    %240 = arith.addf %233, %239 : vector<16x16x32xf32>
    %241 = vector.extract_strided_slice %212 {offsets = [4, 0, 0], sizes = [16, 16, 32], strides = [1, 1, 1]} : vector<22x16x32xf32> to vector<16x16x32xf32>
    %c32 = arith.constant 32 : index
    %c0_41 = arith.constant 0 : index
    %242 = vector.load %arg2[%c32, %c0_41] : memref<49x32xf32, #tpu.memory_space<vmem>>, vector<1x32xf32>
    %243 = vector.shape_cast %242 : vector<1x32xf32> to vector<32xf32>
    %244 = vector.shape_cast %243 : vector<32xf32> to vector<1x1x32xf32>
    %245 = vector.broadcast %244 : vector<1x1x32xf32> to vector<16x16x32xf32>
    %246 = arith.mulf %241, %245 : vector<16x16x32xf32>
    %247 = arith.addf %240, %246 : vector<16x16x32xf32>
    %248 = vector.extract_strided_slice %212 {offsets = [5, 0, 0], sizes = [16, 16, 32], strides = [1, 1, 1]} : vector<22x16x32xf32> to vector<16x16x32xf32>
    %c39 = arith.constant 39 : index
    %c0_42 = arith.constant 0 : index
    %249 = vector.load %arg2[%c39, %c0_42] : memref<49x32xf32, #tpu.memory_space<vmem>>, vector<1x32xf32>
    %250 = vector.shape_cast %249 : vector<1x32xf32> to vector<32xf32>
    %251 = vector.shape_cast %250 : vector<32xf32> to vector<1x1x32xf32>
    %252 = vector.broadcast %251 : vector<1x1x32xf32> to vector<16x16x32xf32>
    %253 = arith.mulf %248, %252 : vector<16x16x32xf32>
    %254 = arith.addf %247, %253 : vector<16x16x32xf32>
    %255 = vector.extract_strided_slice %212 {offsets = [6, 0, 0], sizes = [16, 16, 32], strides = [1, 1, 1]} : vector<22x16x32xf32> to vector<16x16x32xf32>
    %c46 = arith.constant 46 : index
    %c0_43 = arith.constant 0 : index
    %256 = vector.load %arg2[%c46, %c0_43] : memref<49x32xf32, #tpu.memory_space<vmem>>, vector<1x32xf32>
    %257 = vector.shape_cast %256 : vector<1x32xf32> to vector<32xf32>
    %258 = vector.shape_cast %257 : vector<32xf32> to vector<1x1x32xf32>
    %259 = vector.broadcast %258 : vector<1x1x32xf32> to vector<16x16x32xf32>
    %260 = arith.mulf %255, %259 : vector<16x16x32xf32>
    %261 = arith.addf %254, %260 : vector<16x16x32xf32>
    %262 = vector.extract_strided_slice %3 {offsets = [0, 2, 0], sizes = [22, 14, 32], strides = [1, 1, 1]} : vector<22x16x32xf32> to vector<22x14x32xf32>
    %cst_44 = arith.constant 0.000000e+00 : f32
    %263 = vector.broadcast %cst_44 : f32 to vector<22x2x32xf32>
    %264 = tpu.concatenate %262, %263 in 1 : vector<22x14x32xf32>, vector<22x2x32xf32> -> vector<22x16x32xf32>
    %265 = vector.extract_strided_slice %264 {offsets = [0, 0, 0], sizes = [16, 16, 32], strides = [1, 1, 1]} : vector<22x16x32xf32> to vector<16x16x32xf32>
    %c5 = arith.constant 5 : index
    %c0_45 = arith.constant 0 : index
    %266 = vector.load %arg2[%c5, %c0_45] : memref<49x32xf32, #tpu.memory_space<vmem>>, vector<1x32xf32>
    %267 = vector.shape_cast %266 : vector<1x32xf32> to vector<32xf32>
    %268 = vector.shape_cast %267 : vector<32xf32> to vector<1x1x32xf32>
    %269 = vector.broadcast %268 : vector<1x1x32xf32> to vector<16x16x32xf32>
    %270 = arith.mulf %265, %269 : vector<16x16x32xf32>
    %271 = arith.addf %261, %270 : vector<16x16x32xf32>
    %272 = vector.extract_strided_slice %264 {offsets = [1, 0, 0], sizes = [16, 16, 32], strides = [1, 1, 1]} : vector<22x16x32xf32> to vector<16x16x32xf32>
    %c12 = arith.constant 12 : index
    %c0_46 = arith.constant 0 : index
    %273 = vector.load %arg2[%c12, %c0_46] : memref<49x32xf32, #tpu.memory_space<vmem>>, vector<1x32xf32>
    %274 = vector.shape_cast %273 : vector<1x32xf32> to vector<32xf32>
    %275 = vector.shape_cast %274 : vector<32xf32> to vector<1x1x32xf32>
    %276 = vector.broadcast %275 : vector<1x1x32xf32> to vector<16x16x32xf32>
    %277 = arith.mulf %272, %276 : vector<16x16x32xf32>
    %278 = arith.addf %271, %277 : vector<16x16x32xf32>
    %279 = vector.extract_strided_slice %264 {offsets = [2, 0, 0], sizes = [16, 16, 32], strides = [1, 1, 1]} : vector<22x16x32xf32> to vector<16x16x32xf32>
    %c19 = arith.constant 19 : index
    %c0_47 = arith.constant 0 : index
    %280 = vector.load %arg2[%c19, %c0_47] : memref<49x32xf32, #tpu.memory_space<vmem>>, vector<1x32xf32>
    %281 = vector.shape_cast %280 : vector<1x32xf32> to vector<32xf32>
    %282 = vector.shape_cast %281 : vector<32xf32> to vector<1x1x32xf32>
    %283 = vector.broadcast %282 : vector<1x1x32xf32> to vector<16x16x32xf32>
    %284 = arith.mulf %279, %283 : vector<16x16x32xf32>
    %285 = arith.addf %278, %284 : vector<16x16x32xf32>
    %286 = vector.extract_strided_slice %264 {offsets = [3, 0, 0], sizes = [16, 16, 32], strides = [1, 1, 1]} : vector<22x16x32xf32> to vector<16x16x32xf32>
    %c26 = arith.constant 26 : index
    %c0_48 = arith.constant 0 : index
    %287 = vector.load %arg2[%c26, %c0_48] : memref<49x32xf32, #tpu.memory_space<vmem>>, vector<1x32xf32>
    %288 = vector.shape_cast %287 : vector<1x32xf32> to vector<32xf32>
    %289 = vector.shape_cast %288 : vector<32xf32> to vector<1x1x32xf32>
    %290 = vector.broadcast %289 : vector<1x1x32xf32> to vector<16x16x32xf32>
    %291 = arith.mulf %286, %290 : vector<16x16x32xf32>
    %292 = arith.addf %285, %291 : vector<16x16x32xf32>
    %293 = vector.extract_strided_slice %264 {offsets = [4, 0, 0], sizes = [16, 16, 32], strides = [1, 1, 1]} : vector<22x16x32xf32> to vector<16x16x32xf32>
    %c33 = arith.constant 33 : index
    %c0_49 = arith.constant 0 : index
    %294 = vector.load %arg2[%c33, %c0_49] : memref<49x32xf32, #tpu.memory_space<vmem>>, vector<1x32xf32>
    %295 = vector.shape_cast %294 : vector<1x32xf32> to vector<32xf32>
    %296 = vector.shape_cast %295 : vector<32xf32> to vector<1x1x32xf32>
    %297 = vector.broadcast %296 : vector<1x1x32xf32> to vector<16x16x32xf32>
    %298 = arith.mulf %293, %297 : vector<16x16x32xf32>
    %299 = arith.addf %292, %298 : vector<16x16x32xf32>
    %300 = vector.extract_strided_slice %264 {offsets = [5, 0, 0], sizes = [16, 16, 32], strides = [1, 1, 1]} : vector<22x16x32xf32> to vector<16x16x32xf32>
    %c40 = arith.constant 40 : index
    %c0_50 = arith.constant 0 : index
    %301 = vector.load %arg2[%c40, %c0_50] : memref<49x32xf32, #tpu.memory_space<vmem>>, vector<1x32xf32>
    %302 = vector.shape_cast %301 : vector<1x32xf32> to vector<32xf32>
    %303 = vector.shape_cast %302 : vector<32xf32> to vector<1x1x32xf32>
    %304 = vector.broadcast %303 : vector<1x1x32xf32> to vector<16x16x32xf32>
    %305 = arith.mulf %300, %304 : vector<16x16x32xf32>
    %306 = arith.addf %299, %305 : vector<16x16x32xf32>
    %307 = vector.extract_strided_slice %264 {offsets = [6, 0, 0], sizes = [16, 16, 32], strides = [1, 1, 1]} : vector<22x16x32xf32> to vector<16x16x32xf32>
    %c47 = arith.constant 47 : index
    %c0_51 = arith.constant 0 : index
    %308 = vector.load %arg2[%c47, %c0_51] : memref<49x32xf32, #tpu.memory_space<vmem>>, vector<1x32xf32>
    %309 = vector.shape_cast %308 : vector<1x32xf32> to vector<32xf32>
    %310 = vector.shape_cast %309 : vector<32xf32> to vector<1x1x32xf32>
    %311 = vector.broadcast %310 : vector<1x1x32xf32> to vector<16x16x32xf32>
    %312 = arith.mulf %307, %311 : vector<16x16x32xf32>
    %313 = arith.addf %306, %312 : vector<16x16x32xf32>
    %314 = vector.extract_strided_slice %3 {offsets = [0, 3, 0], sizes = [22, 13, 32], strides = [1, 1, 1]} : vector<22x16x32xf32> to vector<22x13x32xf32>
    %cst_52 = arith.constant 0.000000e+00 : f32
    %315 = vector.broadcast %cst_52 : f32 to vector<22x3x32xf32>
    %316 = tpu.concatenate %314, %315 in 1 : vector<22x13x32xf32>, vector<22x3x32xf32> -> vector<22x16x32xf32>
    %317 = vector.extract_strided_slice %316 {offsets = [0, 0, 0], sizes = [16, 16, 32], strides = [1, 1, 1]} : vector<22x16x32xf32> to vector<16x16x32xf32>
    %c6 = arith.constant 6 : index
    %c0_53 = arith.constant 0 : index
    %318 = vector.load %arg2[%c6, %c0_53] : memref<49x32xf32, #tpu.memory_space<vmem>>, vector<1x32xf32>
    %319 = vector.shape_cast %318 : vector<1x32xf32> to vector<32xf32>
    %320 = vector.shape_cast %319 : vector<32xf32> to vector<1x1x32xf32>
    %321 = vector.broadcast %320 : vector<1x1x32xf32> to vector<16x16x32xf32>
    %322 = arith.mulf %317, %321 : vector<16x16x32xf32>
    %323 = arith.addf %313, %322 : vector<16x16x32xf32>
    %324 = vector.extract_strided_slice %316 {offsets = [1, 0, 0], sizes = [16, 16, 32], strides = [1, 1, 1]} : vector<22x16x32xf32> to vector<16x16x32xf32>
    %c13 = arith.constant 13 : index
    %c0_54 = arith.constant 0 : index
    %325 = vector.load %arg2[%c13, %c0_54] : memref<49x32xf32, #tpu.memory_space<vmem>>, vector<1x32xf32>
    %326 = vector.shape_cast %325 : vector<1x32xf32> to vector<32xf32>
    %327 = vector.shape_cast %326 : vector<32xf32> to vector<1x1x32xf32>
    %328 = vector.broadcast %327 : vector<1x1x32xf32> to vector<16x16x32xf32>
    %329 = arith.mulf %324, %328 : vector<16x16x32xf32>
    %330 = arith.addf %323, %329 : vector<16x16x32xf32>
    %331 = vector.extract_strided_slice %316 {offsets = [2, 0, 0], sizes = [16, 16, 32], strides = [1, 1, 1]} : vector<22x16x32xf32> to vector<16x16x32xf32>
    %c20 = arith.constant 20 : index
    %c0_55 = arith.constant 0 : index
    %332 = vector.load %arg2[%c20, %c0_55] : memref<49x32xf32, #tpu.memory_space<vmem>>, vector<1x32xf32>
    %333 = vector.shape_cast %332 : vector<1x32xf32> to vector<32xf32>
    %334 = vector.shape_cast %333 : vector<32xf32> to vector<1x1x32xf32>
    %335 = vector.broadcast %334 : vector<1x1x32xf32> to vector<16x16x32xf32>
    %336 = arith.mulf %331, %335 : vector<16x16x32xf32>
    %337 = arith.addf %330, %336 : vector<16x16x32xf32>
    %338 = vector.extract_strided_slice %316 {offsets = [3, 0, 0], sizes = [16, 16, 32], strides = [1, 1, 1]} : vector<22x16x32xf32> to vector<16x16x32xf32>
    %c27 = arith.constant 27 : index
    %c0_56 = arith.constant 0 : index
    %339 = vector.load %arg2[%c27, %c0_56] : memref<49x32xf32, #tpu.memory_space<vmem>>, vector<1x32xf32>
    %340 = vector.shape_cast %339 : vector<1x32xf32> to vector<32xf32>
    %341 = vector.shape_cast %340 : vector<32xf32> to vector<1x1x32xf32>
    %342 = vector.broadcast %341 : vector<1x1x32xf32> to vector<16x16x32xf32>
    %343 = arith.mulf %338, %342 : vector<16x16x32xf32>
    %344 = arith.addf %337, %343 : vector<16x16x32xf32>
    %345 = vector.extract_strided_slice %316 {offsets = [4, 0, 0], sizes = [16, 16, 32], strides = [1, 1, 1]} : vector<22x16x32xf32> to vector<16x16x32xf32>
    %c34 = arith.constant 34 : index
    %c0_57 = arith.constant 0 : index
    %346 = vector.load %arg2[%c34, %c0_57] : memref<49x32xf32, #tpu.memory_space<vmem>>, vector<1x32xf32>
    %347 = vector.shape_cast %346 : vector<1x32xf32> to vector<32xf32>
    %348 = vector.shape_cast %347 : vector<32xf32> to vector<1x1x32xf32>
    %349 = vector.broadcast %348 : vector<1x1x32xf32> to vector<16x16x32xf32>
    %350 = arith.mulf %345, %349 : vector<16x16x32xf32>
    %351 = arith.addf %344, %350 : vector<16x16x32xf32>
    %352 = vector.extract_strided_slice %316 {offsets = [5, 0, 0], sizes = [16, 16, 32], strides = [1, 1, 1]} : vector<22x16x32xf32> to vector<16x16x32xf32>
    %c41 = arith.constant 41 : index
    %c0_58 = arith.constant 0 : index
    %353 = vector.load %arg2[%c41, %c0_58] : memref<49x32xf32, #tpu.memory_space<vmem>>, vector<1x32xf32>
    %354 = vector.shape_cast %353 : vector<1x32xf32> to vector<32xf32>
    %355 = vector.shape_cast %354 : vector<32xf32> to vector<1x1x32xf32>
    %356 = vector.broadcast %355 : vector<1x1x32xf32> to vector<16x16x32xf32>
    %357 = arith.mulf %352, %356 : vector<16x16x32xf32>
    %358 = arith.addf %351, %357 : vector<16x16x32xf32>
    %359 = vector.extract_strided_slice %316 {offsets = [6, 0, 0], sizes = [16, 16, 32], strides = [1, 1, 1]} : vector<22x16x32xf32> to vector<16x16x32xf32>
    %c48 = arith.constant 48 : index
    %c0_59 = arith.constant 0 : index
    %360 = vector.load %arg2[%c48, %c0_59] : memref<49x32xf32, #tpu.memory_space<vmem>>, vector<1x32xf32>
    %361 = vector.shape_cast %360 : vector<1x32xf32> to vector<32xf32>
    %362 = vector.shape_cast %361 : vector<32xf32> to vector<1x1x32xf32>
    %363 = vector.broadcast %362 : vector<1x1x32xf32> to vector<16x16x32xf32>
    %364 = arith.mulf %359, %363 : vector<16x16x32xf32>
    %365 = arith.addf %358, %364 : vector<16x16x32xf32>
    %c0_60 = arith.constant 0 : index
    %c0_61 = arith.constant 0 : index
    %366 = vector.load %arg3[%c0_60, %c0_61] : memref<1x32xf32, #tpu.memory_space<vmem>>, vector<1x32xf32>
    %367 = vector.shape_cast %366 : vector<1x32xf32> to vector<32xf32>
    %368 = vector.shape_cast %367 : vector<32xf32> to vector<1x1x32xf32>
    %369 = vector.broadcast %368 : vector<1x1x32xf32> to vector<16x16x32xf32>
    %370 = arith.addf %365, %369 : vector<16x16x32xf32>
    %371 = vector.shape_cast %370 : vector<16x16x32xf32> to vector<256x32xf32>
    %cst_62 = arith.constant dense<0.000000e+00> : vector<256xf32>
    %372 = vector.multi_reduction <add>, %371, %cst_62 [1] : vector<256x32xf32> to vector<256xf32>
    %373 = vector.shape_cast %372 : vector<256xf32> to vector<256x1xf32>
    %cst_63 = arith.constant 3.200000e+01 : f32
    %374 = vector.broadcast %cst_63 : f32 to vector<256x1xf32>
    %375 = arith.divf %373, %374 : vector<256x1xf32>
    %376 = vector.broadcast %375 : vector<256x1xf32> to vector<256x32xf32>
    %377 = arith.subf %371, %376 : vector<256x32xf32>
    %378 = arith.mulf %377, %377 : vector<256x32xf32>
    %cst_64 = arith.constant dense<0.000000e+00> : vector<256xf32>
    %379 = vector.multi_reduction <add>, %378, %cst_64 [1] : vector<256x32xf32> to vector<256xf32>
    %380 = vector.shape_cast %379 : vector<256xf32> to vector<256x1xf32>
    %cst_65 = arith.constant 3.200000e+01 : f32
    %381 = vector.broadcast %cst_65 : f32 to vector<256x1xf32>
    %382 = arith.divf %380, %381 : vector<256x1xf32>
    %383 = vector.broadcast %375 : vector<256x1xf32> to vector<256x32xf32>
    %384 = arith.subf %371, %383 : vector<256x32xf32>
    %cst_66 = arith.constant 9.99999997E-7 : f32
    %385 = vector.broadcast %cst_66 : f32 to vector<256x1xf32>
    %386 = arith.addf %382, %385 : vector<256x1xf32>
    %387 = math.rsqrt %386 : vector<256x1xf32>
    %388 = vector.broadcast %387 : vector<256x1xf32> to vector<256x32xf32>
    %389 = arith.mulf %384, %388 : vector<256x32xf32>
    %c0_67 = arith.constant 0 : index
    %c0_68 = arith.constant 0 : index
    %390 = vector.load %arg4[%c0_67, %c0_68] : memref<1x32xf32, #tpu.memory_space<vmem>>, vector<1x32xf32>
    %391 = vector.shape_cast %390 : vector<1x32xf32> to vector<32xf32>
    %392 = vector.shape_cast %391 : vector<32xf32> to vector<1x32xf32>
    %393 = vector.broadcast %392 : vector<1x32xf32> to vector<256x32xf32>
    %394 = arith.mulf %389, %393 : vector<256x32xf32>
    %c0_69 = arith.constant 0 : index
    %c0_70 = arith.constant 0 : index
    %395 = vector.load %arg5[%c0_69, %c0_70] : memref<1x32xf32, #tpu.memory_space<vmem>>, vector<1x32xf32>
    %396 = vector.shape_cast %395 : vector<1x32xf32> to vector<32xf32>
    %397 = vector.shape_cast %396 : vector<32xf32> to vector<1x32xf32>
    %398 = vector.broadcast %397 : vector<1x32xf32> to vector<256x32xf32>
    %399 = arith.addf %394, %398 : vector<256x32xf32>
    %400 = arith.truncf %399 : vector<256x32xf32> to vector<256x32xbf16>
    %c0_71 = arith.constant 0 : index
    %c0_72 = arith.constant 0 : index
    %401 = vector.load %arg6[%c0_71, %c0_72] : memref<32x128xbf16, #tpu.memory_space<vmem>>, vector<32x128xbf16>
    %cst_73 = arith.constant dense<0.000000e+00> : vector<256x128xf32>
    %402 = tpu.matmul %400, %401, %cst_73 {dimension_numbers = #tpu.dot_dimension_numbers<[1], [0], [0], [1], [0, 0, 1, 1], [], []>} : vector<256x32xbf16>, vector<32x128xbf16>, vector<256x128xf32> -> vector<256x128xf32>
    %c0_74 = arith.constant 0 : index
    %c0_75 = arith.constant 0 : index
    %403 = vector.load %arg7[%c0_74, %c0_75] : memref<1x128xf32, #tpu.memory_space<vmem>>, vector<1x128xf32>
    %404 = vector.shape_cast %403 : vector<1x128xf32> to vector<128xf32>
    %405 = vector.shape_cast %404 : vector<128xf32> to vector<1x128xf32>
    %406 = vector.broadcast %405 : vector<1x128xf32> to vector<256x128xf32>
    %407 = arith.addf %402, %406 : vector<256x128xf32>
    %cst_76 = arith.constant 5.000000e-01 : f32
    %408 = vector.broadcast %cst_76 : f32 to vector<256x128xf32>
    %409 = arith.mulf %408, %407 : vector<256x128xf32>
    %cst_77 = arith.constant 0.707106769 : f32
    %410 = vector.broadcast %cst_77 : f32 to vector<256x128xf32>
    %411 = arith.mulf %407, %410 : vector<256x128xf32>
    %412 = math.absf %411 : vector<256x128xf32>
    %cst_78 = arith.constant 0.327591091 : f32
    %413 = vector.broadcast %cst_78 : f32 to vector<256x128xf32>
    %414 = arith.mulf %413, %412 : vector<256x128xf32>
    %cst_79 = arith.constant 1.000000e+00 : f32
    %415 = vector.broadcast %cst_79 : f32 to vector<256x128xf32>
    %416 = arith.addf %415, %414 : vector<256x128xf32>
    %cst_80 = arith.constant 1.000000e+00 : f32
    %417 = vector.broadcast %cst_80 : f32 to vector<256x128xf32>
    %418 = arith.divf %417, %416 : vector<256x128xf32>
    %cst_81 = arith.constant 1.06140542 : f32
    %419 = vector.broadcast %cst_81 : f32 to vector<256x128xf32>
    %420 = arith.mulf %419, %418 : vector<256x128xf32>
    %cst_82 = arith.constant -1.45315206 : f32
    %421 = vector.broadcast %cst_82 : f32 to vector<256x128xf32>
    %422 = arith.addf %420, %421 : vector<256x128xf32>
    %423 = arith.mulf %422, %418 : vector<256x128xf32>
    %cst_83 = arith.constant 1.42141378 : f32
    %424 = vector.broadcast %cst_83 : f32 to vector<256x128xf32>
    %425 = arith.addf %423, %424 : vector<256x128xf32>
    %426 = arith.mulf %425, %418 : vector<256x128xf32>
    %cst_84 = arith.constant -0.284496725 : f32
    %427 = vector.broadcast %cst_84 : f32 to vector<256x128xf32>
    %428 = arith.addf %426, %427 : vector<256x128xf32>
    %429 = arith.mulf %428, %418 : vector<256x128xf32>
    %cst_85 = arith.constant 0.254829586 : f32
    %430 = vector.broadcast %cst_85 : f32 to vector<256x128xf32>
    %431 = arith.addf %429, %430 : vector<256x128xf32>
    %432 = arith.mulf %431, %418 : vector<256x128xf32>
    %cst_86 = arith.constant 0.000000e+00 : f32
    %433 = vector.broadcast %cst_86 : f32 to vector<256x128xf32>
    %434 = arith.subf %433, %412 : vector<256x128xf32>
    %435 = arith.mulf %434, %412 : vector<256x128xf32>
    %436 = math.exp %435 : vector<256x128xf32>
    %437 = arith.mulf %432, %436 : vector<256x128xf32>
    %cst_87 = arith.constant 1.000000e+00 : f32
    %438 = vector.broadcast %cst_87 : f32 to vector<256x128xf32>
    %439 = arith.subf %438, %437 : vector<256x128xf32>
    %cst_88 = arith.constant 0.000000e+00 : f32
    %440 = vector.broadcast %cst_88 : f32 to vector<256x128xf32>
    %441 = arith.cmpf olt, %411, %440 : vector<256x128xf32>
    %cst_89 = arith.constant 0.000000e+00 : f32
    %442 = vector.broadcast %cst_89 : f32 to vector<256x128xf32>
    %443 = arith.subf %442, %439 : vector<256x128xf32>
    %444 = arith.select %441, %443, %439 : vector<256x128xi1>, vector<256x128xf32>
    %cst_90 = arith.constant 1.000000e+00 : f32
    %445 = vector.broadcast %cst_90 : f32 to vector<256x128xf32>
    %446 = arith.addf %445, %444 : vector<256x128xf32>
    %447 = arith.mulf %409, %446 : vector<256x128xf32>
    %448 = arith.mulf %447, %447 : vector<256x128xf32>
    %cst_91 = arith.constant dense<0.000000e+00> : vector<128xf32>
    %449 = vector.multi_reduction <add>, %448, %cst_91 [0] : vector<256x128xf32> to vector<128xf32>
    %450 = vector.shape_cast %449 : vector<128xf32> to vector<1x128xf32>
    %451 = math.sqrt %450 : vector<1x128xf32>
    %cst_92 = arith.constant dense<0.000000e+00> : vector<1xf32>
    %452 = vector.multi_reduction <add>, %451, %cst_92 [1] : vector<1x128xf32> to vector<1xf32>
    %453 = vector.shape_cast %452 : vector<1xf32> to vector<1x1xf32>
    %cst_93 = arith.constant 1.280000e+02 : f32
    %454 = vector.broadcast %cst_93 : f32 to vector<1x1xf32>
    %455 = arith.divf %453, %454 : vector<1x1xf32>
    %cst_94 = arith.constant 9.99999997E-7 : f32
    %456 = vector.broadcast %cst_94 : f32 to vector<1x1xf32>
    %457 = arith.addf %455, %456 : vector<1x1xf32>
    %458 = vector.broadcast %457 : vector<1x1xf32> to vector<1x128xf32>
    %459 = arith.divf %451, %458 : vector<1x128xf32>
    %c0_95 = arith.constant 0 : index
    %c0_96 = arith.constant 0 : index
    %460 = vector.load %arg8[%c0_95, %c0_96] : memref<1x128xf32, #tpu.memory_space<vmem>>, vector<1x128xf32>
    %461 = vector.shape_cast %460 : vector<1x128xf32> to vector<128xf32>
    %462 = vector.broadcast %459 : vector<1x128xf32> to vector<256x128xf32>
    %463 = arith.mulf %447, %462 : vector<256x128xf32>
    %464 = vector.shape_cast %461 : vector<128xf32> to vector<1x128xf32>
    %465 = vector.broadcast %464 : vector<1x128xf32> to vector<256x128xf32>
    %466 = arith.mulf %465, %463 : vector<256x128xf32>
    %c0_97 = arith.constant 0 : index
    %c0_98 = arith.constant 0 : index
    %467 = vector.load %arg9[%c0_97, %c0_98] : memref<1x128xf32, #tpu.memory_space<vmem>>, vector<1x128xf32>
    %468 = vector.shape_cast %467 : vector<1x128xf32> to vector<128xf32>
    %469 = vector.shape_cast %468 : vector<128xf32> to vector<1x128xf32>
    %470 = vector.broadcast %469 : vector<1x128xf32> to vector<256x128xf32>
    %471 = arith.addf %466, %470 : vector<256x128xf32>
    %472 = arith.addf %471, %447 : vector<256x128xf32>
    %473 = arith.truncf %472 : vector<256x128xf32> to vector<256x128xbf16>
    %c0_99 = arith.constant 0 : index
    %c0_100 = arith.constant 0 : index
    %474 = vector.load %arg10[%c0_99, %c0_100] : memref<128x32xbf16, #tpu.memory_space<vmem>>, vector<128x32xbf16>
    %cst_101 = arith.constant dense<0.000000e+00> : vector<256x32xf32>
    %475 = tpu.matmul %473, %474, %cst_101 {dimension_numbers = #tpu.dot_dimension_numbers<[1], [0], [0], [1], [0, 0, 1, 1], [], []>} : vector<256x128xbf16>, vector<128x32xbf16>, vector<256x32xf32> -> vector<256x32xf32>
    %c0_102 = arith.constant 0 : index
    %c0_103 = arith.constant 0 : index
    %476 = vector.load %arg11[%c0_102, %c0_103] : memref<1x32xf32, #tpu.memory_space<vmem>>, vector<1x32xf32>
    %477 = vector.shape_cast %476 : vector<1x32xf32> to vector<32xf32>
    %478 = vector.shape_cast %477 : vector<32xf32> to vector<1x32xf32>
    %479 = vector.broadcast %478 : vector<1x32xf32> to vector<256x32xf32>
    %480 = arith.addf %475, %479 : vector<256x32xf32>
    %481 = vector.shape_cast %480 : vector<256x32xf32> to vector<16x16x32xf32>
    %482 = arith.addf %1, %481 : vector<16x16x32xf32>
    %c0_104 = arith.constant 0 : index
    %c0_105 = arith.constant 0 : index
    %c0_106 = arith.constant 0 : index
    %c0_107 = arith.constant 0 : index
    %483 = vector.load %arg12[%c0_104, %c0_105, %c0_106, %c0_107] : memref<1x16x16x32xf32, #tpu.memory_space<vmem>>, vector<1x16x16x32xf32>
    %484 = vector.shape_cast %483 : vector<1x16x16x32xf32> to vector<16x16x32xf32>
    %485 = vector.shape_cast %482 : vector<16x16x32xf32> to vector<1x16x16x32xf32>
    tpu.vector_store %arg12[%c0_104, %c0_105, %c0_106, %c0_107], %485 {strides = array<i32>} : memref<1x16x16x32xf32, #tpu.memory_space<vmem>>, vector<1x16x16x32xf32>,
    return
  }
  func.func @transform_0(%arg0: i32) -> (i32, i32, i32, i32) {
    %c0_i32 = arith.constant 0 : i32
    %c0_i32_0 = arith.constant 0 : i32
    %c0_i32_1 = arith.constant 0 : i32
    %c0_i32_2 = arith.constant 0 : i32
    return %arg0, %c0_i32, %c0_i32_0, %c0_i32_1 : i32, i32, i32, i32
  }
  func.func @transform_1(%arg0: i32) -> (i32, i32) {
    %c0_i32 = arith.constant 0 : i32
    %c0_i32_0 = arith.constant 0 : i32
    %c0_i32_1 = arith.constant 0 : i32
    return %c0_i32, %c0_i32_0 : i32, i32
  }
  func.func @transform_2(%arg0: i32) -> (i32, i32) {
    %c0_i32 = arith.constant 0 : i32
    %c0_i32_0 = arith.constant 0 : i32
    %c0_i32_1 = arith.constant 0 : i32
    return %c0_i32, %c0_i32_0 : i32, i32
  }
  func.func @transform_3(%arg0: i32) -> (i32, i32) {
    %c0_i32 = arith.constant 0 : i32
    %c0_i32_0 = arith.constant 0 : i32
    %c0_i32_1 = arith.constant 0 : i32
    return %c0_i32, %c0_i32_0 : i32, i32
  }
  func.func @transform_4(%arg0: i32) -> (i32, i32) {
    %c0_i32 = arith.constant 0 : i32
    %c0_i32_0 = arith.constant 0 : i32
    %c0_i32_1 = arith.constant 0 : i32
    return %c0_i32, %c0_i32_0 : i32, i32
  }
  func.func @transform_5(%arg0: i32) -> (i32, i32) {
    %c0_i32 = arith.constant 0 : i32
    %c0_i32_0 = arith.constant 0 : i32
    %c0_i32_1 = arith.constant 0 : i32
    return %c0_i32, %c0_i32_0 : i32, i32
  }
  func.func @transform_6(%arg0: i32) -> (i32, i32) {
    %c0_i32 = arith.constant 0 : i32
    %c0_i32_0 = arith.constant 0 : i32
    %c0_i32_1 = arith.constant 0 : i32
    return %c0_i32, %c0_i32_0 : i32, i32
  }
  func.func @transform_7(%arg0: i32) -> (i32, i32) {
    %c0_i32 = arith.constant 0 : i32
    %c0_i32_0 = arith.constant 0 : i32
    %c0_i32_1 = arith.constant 0 : i32
    return %c0_i32, %c0_i32_0 : i32, i32
  }
  func.func @transform_8(%arg0: i32) -> (i32, i32) {
    %c0_i32 = arith.constant 0 : i32
    %c0_i32_0 = arith.constant 0 : i32
    %c0_i32_1 = arith.constant 0 : i32
    return %c0_i32, %c0_i32_0 : i32, i32
  }
  func.func @transform_9(%arg0: i32) -> (i32, i32) {
    %c0_i32 = arith.constant 0 : i32
    %c0_i32_0 = arith.constant 0 : i32
    %c0_i32_1 = arith.constant 0 : i32
    return %c0_i32, %c0_i32_0 : i32, i32
  }
  func.func @transform_10(%arg0: i32) -> (i32, i32) {
    %c0_i32 = arith.constant 0 : i32
    %c0_i32_0 = arith.constant 0 : i32
    %c0_i32_1 = arith.constant 0 : i32
    return %c0_i32, %c0_i32_0 : i32, i32
  }
  func.func @transform_11(%arg0: i32) -> (i32, i32, i32, i32) {
    %c0_i32 = arith.constant 0 : i32
    %c0_i32_0 = arith.constant 0 : i32
    %c0_i32_1 = arith.constant 0 : i32
    %c0_i32_2 = arith.constant 0 : i32
    return %arg0, %c0_i32, %c0_i32_0, %c0_i32_1 : i32, i32, i32, i32
  }
}

</mosaic_0001>

<llo_original>
// kernel: tpu_custom_call.1
$region0: #{tpu_custom_call.1}
  #allocation0 [shape = 'u32[]', space=smem, size = 0x4, offset = 0x4, fixed_abs, tag = 'smem constant byte address 0x4 - core index']
  #allocation1 [shape = 'u32[72,128]{1,0:T(1,128)}', space=vmem, size = 0x9000, scoped, tag = 'internal scratch']
  %s0 = inlined_call_operand.hbm [shape: f32[2,16,16,32], index: 0, kind: input, shape index: {}]
  %s1 = inlined_call_operand.vmem [shape: f32[49,32], index: 1, kind: input, shape index: {}]
  %s2 = inlined_call_operand.vmem [shape: f32[1,32], index: 2, kind: input, shape index: {}]
  %s3 = inlined_call_operand.vmem [shape: f32[1,32], index: 3, kind: input, shape index: {}]
  %s4 = inlined_call_operand.vmem [shape: f32[1,32], index: 4, kind: input, shape index: {}]
  %s5 = inlined_call_operand.vmem [shape: bf16[32,128], index: 5, kind: input, shape index: {}]
  %s6 = inlined_call_operand.vmem [shape: f32[1,128], index: 6, kind: input, shape index: {}]
  %s7 = inlined_call_operand.vmem [shape: f32[1,128], index: 7, kind: input, shape index: {}]
  %s8 = inlined_call_operand.vmem [shape: f32[1,128], index: 8, kind: input, shape index: {}]
  %s9 = inlined_call_operand.vmem [shape: bf16[128,32], index: 9, kind: input, shape index: {}]
  %s10 = inlined_call_operand.vmem [shape: f32[1,32], index: 10, kind: input, shape index: {}]
  %s11 = inlined_call_operand.hbm [shape: f32[2,16,16,32], index: 11, kind: output, shape index: {}]
  %s12 = sld [smem:[#allocation0]]
  $region81: #{tpu_custom_call.1} parent=0
    _
  %s14 = ssub.s32 1, %s12
  %s15 = scalar_select 0, %s14, %s12
  $region1: #{tpu_custom_call.1} parent=0
    #allocation2 [shape = 'u8[262144]{0}', space=vmem, size = 0x40000, scoped, tag = 'input window, operand 0']
    #allocation3 [shape = 's32[2]{0}', space=sflag, size = 0x8, scoped, tag = 'scoped memory for tpu_custom_call.1']
    #allocation4 [shape = 's32[2]{0}', space=sflag, size = 0x8, scoped, tag = 'scoped memory for tpu_custom_call.1']
    #allocation5 [shape = 'u8[262144]{0}', space=vmem, size = 0x40000, scoped, tag = 'output window, operand 0']
    %16 = vsyncpa [#allocation3], 0
    %s17 = scalar_lea.sflag [#allocation3], 1
    %18 = vsyncpa %s17, 0
    %19 = vsyncpa [#allocation4], 0
    %s20 = scalar_lea.sflag [#allocation4], 1
    %21 = vsyncpa %s20, 0
    loop: start=0, step=1, limit=4
    $region2: #{tpu_custom_call.1} parent=1 // loop_pre_header
      _
    $region3: #{tpu_custom_call.1} parent=1 // loop_header
      %s23 = sphi 0, %s27
      %p24 = scmp.ge.s32.totalorder %s23, 4
      %s33 = sphi 0, %s35
      %s36 = sphi 0, %s33
      %s37 = sphi 0, %s36
      %s53 = sphi 0, %s37
      %s57 = sphi 0, %s57
      %s59 = sphi 0, %s57
      %s60 = sphi 0, %s59
      %s74 = sphi 0, %s60
      %s78 = sphi 0, %s78
      %s80 = sphi 0, %s78
      %s81 = sphi 0, %s80
      %s95 = sphi 0, %s81
      %s99 = sphi 0, %s99
      %s101 = sphi 0, %s99
      %s102 = sphi 0, %s101
      %s116 = sphi 0, %s102
      %s120 = sphi 0, %s120
      %s122 = sphi 0, %s120
      %s123 = sphi 0, %s122
      %s137 = sphi 0, %s123
      %s141 = sphi 0, %s141
      %s143 = sphi 0, %s141
      %s144 = sphi 0, %s143
      %s158 = sphi 0, %s144
      %s162 = sphi 0, %s162
      %s164 = sphi 0, %s162
      %s165 = sphi 0, %s164
      %s179 = sphi 0, %s165
      %s183 = sphi 0, %s183
      %s185 = sphi 0, %s183
      %s186 = sphi 0, %s185
      %s200 = sphi 0, %s186
      %s204 = sphi 0, %s204
      %s206 = sphi 0, %s204
      %s207 = sphi 0, %s206
      %s221 = sphi 0, %s207
      %s225 = sphi 0, %s225
      %s227 = sphi 0, %s225
      %s228 = sphi 0, %s227
      %s242 = sphi 0, %s228
      %s246 = sphi 0, %s246
      %s248 = sphi 0, %s246
      %s249 = sphi 0, %s248
      %s263 = sphi 0, %s249
      %s269 = sphi 0, %s271
      %s272 = sphi 0, %s269
      %s273 = sphi 0, %s272
      %s289 = sphi 0, %s273
    $region4: #{tpu_custom_call.1} parent=1 // loop_header_branch
      %26 = sbr.rel (%p24) target = $region8
    $region5: #{tpu_custom_call.1} parent=1 // loop_body
      %s28 = ssub.s32 %s23, 1
      %s29 = ssub.s32 %s23, 2
      %s30 = sadd.s32 %s23, 1
      %s31 = ssub.s32 %s23, %s30
      %p32 = scmp.eq.s32.totalorder %s31, 0
      %s34 = sadd.s32 %s33, 1
      %s35 = scalar_select %p32, %s33, %s34
      %p38 = pneg %p32
      %p39 = scmp.eq.s32.totalorder %s23, 1
      %p40 = por %p38, %p39
      %p41 = scmp.ne.s32.totalorder %s33, %s36
      %p42 = scmp.eq.s32.totalorder %s23, 0
      %p43 = por %p41, %p42
      %p44 = scmp.ne.s32.totalorder %s33, %s36
      %p45 = scmp.eq.s32.totalorder %s28, 1
      %p46 = por %p44, %p45
      %p47 = scmp.ne.s32.totalorder %s36, %s37
      %p48 = scmp.eq.s32.totalorder %s28, 0
      %p49 = por %p47, %p48
      %p50 = scmp.ne.s32.totalorder %s36, %s37
      %p51 = scmp.eq.s32.totalorder %s29, 1
      %p52 = por %p50, %p51
      %p54 = scmp.ne.s32.totalorder %s37, %s53
      %p55 = scmp.eq.s32.totalorder %s29, 0
      %p56 = por %p54, %p55
      %s58 = sadd.s32 %s57, 1
      %p61 = scmp.eq.s32.totalorder %s23, 1
      %p62 = scmp.ne.s32.totalorder %s57, %s59
      %p63 = scmp.eq.s32.totalorder %s23, 0
      %p64 = por %p62, %p63
      %p65 = scmp.ne.s32.totalorder %s57, %s59
      %p66 = scmp.eq.s32.totalorder %s28, 1
      %p67 = por %p65, %p66
      %p68 = scmp.ne.s32.totalorder %s59, %s60
      %p69 = scmp.eq.s32.totalorder %s28, 0
      %p70 = por %p68, %p69
      %p71 = scmp.ne.s32.totalorder %s59, %s60
      %p72 = scmp.eq.s32.totalorder %s29, 1
      %p73 = por %p71, %p72
      %p75 = scmp.ne.s32.totalorder %s60, %s74
      %p76 = scmp.eq.s32.totalorder %s29, 0
      %p77 = por %p75, %p76
      %s79 = sadd.s32 %s78, 1
      %p82 = scmp.eq.s32.totalorder %s23, 1
      %p83 = scmp.ne.s32.totalorder %s78, %s80
      %p84 = scmp.eq.s32.totalorder %s23, 0
      %p85 = por %p83, %p84
      %p86 = scmp.ne.s32.totalorder %s78, %s80
      %p87 = scmp.eq.s32.totalorder %s28, 1
      %p88 = por %p86, %p87
      %p89 = scmp.ne.s32.totalorder %s80, %s81
      %p90 = scmp.eq.s32.totalorder %s28, 0
      %p91 = por %p89, %p90
      %p92 = scmp.ne.s32.totalorder %s80, %s81
      %p93 = scmp.eq.s32.totalorder %s29, 1
      %p94 = por %p92, %p93
      %p96 = scmp.ne.s32.totalorder %s81, %s95
      %p97 = scmp.eq.s32.totalorder %s29, 0
      %p98 = por %p96, %p97
      %s100 = sadd.s32 %s99, 1
      %p103 = scmp.eq.s32.totalorder %s23, 1
      %p104 = scmp.ne.s32.totalorder %s99, %s101
      %p105 = scmp.eq.s32.totalorder %s23, 0
      %p106 = por %p104, %p105
      %p107 = scmp.ne.s32.totalorder %s99, %s101
      %p108 = scmp.eq.s32.totalorder %s28, 1
      %p109 = por %p107, %p108
      %p110 = scmp.ne.s32.totalorder %s101, %s102
      %p111 = scmp.eq.s32.totalorder %s28, 0
      %p112 = por %p110, %p111
      %p113 = scmp.ne.s32.totalorder %s101, %s102
      %p114 = scmp.eq.s32.totalorder %s29, 1
      %p115 = por %p113, %p114
      %p117 = scmp.ne.s32.totalorder %s102, %s116
      %p118 = scmp.eq.s32.totalorder %s29, 0
      %p119 = por %p117, %p118
      %s121 = sadd.s32 %s120, 1
      %p124 = scmp.eq.s32.totalorder %s23, 1
      %p125 = scmp.ne.s32.totalorder %s120, %s122
      %p126 = scmp.eq.s32.totalorder %s23, 0
      %p127 = por %p125, %p126
      %p128 = scmp.ne.s32.totalorder %s120, %s122
      %p129 = scmp.eq.s32.totalorder %s28, 1
      %p130 = por %p128, %p129
      %p131 = scmp.ne.s32.totalorder %s122, %s123
      %p132 = scmp.eq.s32.totalorder %s28, 0
      %p133 = por %p131, %p132
      %p134 = scmp.ne.s32.totalorder %s122, %s123
      %p135 = scmp.eq.s32.totalorder %s29, 1
      %p136 = por %p134, %p135
      %p138 = scmp.ne.s32.totalorder %s123, %s137
      %p139 = scmp.eq.s32.totalorder %s29, 0
      %p140 = por %p138, %p139
      %s142 = sadd.s32 %s141, 1
      %p145 = scmp.eq.s32.totalorder %s23, 1
      %p146 = scmp.ne.s32.totalorder %s141, %s143
      %p147 = scmp.eq.s32.totalorder %s23, 0
      %p148 = por %p146, %p147
      %p149 = scmp.ne.s32.totalorder %s141, %s143
      %p150 = scmp.eq.s32.totalorder %s28, 1
      %p151 = por %p149, %p150
      %p152 = scmp.ne.s32.totalorder %s143, %s144
      %p153 = scmp.eq.s32.totalorder %s28, 0
      %p154 = por %p152, %p153
      %p155 = scmp.ne.s32.totalorder %s143, %s144
      %p156 = scmp.eq.s32.totalorder %s29, 1
      %p157 = por %p155, %p156
      %p159 = scmp.ne.s32.totalorder %s144, %s158
      %p160 = scmp.eq.s32.totalorder %s29, 0
      %p161 = por %p159, %p160
      %s163 = sadd.s32 %s162, 1
      %p166 = scmp.eq.s32.totalorder %s23, 1
      %p167 = scmp.ne.s32.totalorder %s162, %s164
      %p168 = scmp.eq.s32.totalorder %s23, 0
      %p169 = por %p167, %p168
      %p170 = scmp.ne.s32.totalorder %s162, %s164
      %p171 = scmp.eq.s32.totalorder %s28, 1
      %p172 = por %p170, %p171
      %p173 = scmp.ne.s32.totalorder %s164, %s165
      %p174 = scmp.eq.s32.totalorder %s28, 0
      %p175 = por %p173, %p174
      %p176 = scmp.ne.s32.totalorder %s164, %s165
      %p177 = scmp.eq.s32.totalorder %s29, 1
      %p178 = por %p176, %p177
      %p180 = scmp.ne.s32.totalorder %s165, %s179
      %p181 = scmp.eq.s32.totalorder %s29, 0
      %p182 = por %p180, %p181
      %s184 = sadd.s32 %s183, 1
      %p187 = scmp.eq.s32.totalorder %s23, 1
      %p188 = scmp.ne.s32.totalorder %s183, %s185
      %p189 = scmp.eq.s32.totalorder %s23, 0
      %p190 = por %p188, %p189
      %p191 = scmp.ne.s32.totalorder %s183, %s185
      %p192 = scmp.eq.s32.totalorder %s28, 1
      %p193 = por %p191, %p192
      %p194 = scmp.ne.s32.totalorder %s185, %s186
      %p195 = scmp.eq.s32.totalorder %s28, 0
      %p196 = por %p194, %p195
      %p197 = scmp.ne.s32.totalorder %s185, %s186
      %p198 = scmp.eq.s32.totalorder %s29, 1
      %p199 = por %p197, %p198
      %p201 = scmp.ne.s32.totalorder %s186, %s200
      %p202 = scmp.eq.s32.totalorder %s29, 0
      %p203 = por %p201, %p202
      %s205 = sadd.s32 %s204, 1
      %p208 = scmp.eq.s32.totalorder %s23, 1
      %p209 = scmp.ne.s32.totalorder %s204, %s206
      %p210 = scmp.eq.s32.totalorder %s23, 0
      %p211 = por %p209, %p210
      %p212 = scmp.ne.s32.totalorder %s204, %s206
      %p213 = scmp.eq.s32.totalorder %s28, 1
      %p214 = por %p212, %p213
      %p215 = scmp.ne.s32.totalorder %s206, %s207
      %p216 = scmp.eq.s32.totalorder %s28, 0
      %p217 = por %p215, %p216
      %p218 = scmp.ne.s32.totalorder %s206, %s207
      %p219 = scmp.eq.s32.totalorder %s29, 1
      %p220 = por %p218, %p219
      %p222 = scmp.ne.s32.totalorder %s207, %s221
      %p223 = scmp.eq.s32.totalorder %s29, 0
      %p224 = por %p222, %p223
      %s226 = sadd.s32 %s225, 1
      %p229 = scmp.eq.s32.totalorder %s23, 1
      %p230 = scmp.ne.s32.totalorder %s225, %s227
      %p231 = scmp.eq.s32.totalorder %s23, 0
      %p232 = por %p230, %p231
      %p233 = scmp.ne.s32.totalorder %s225, %s227
      %p234 = scmp.eq.s32.totalorder %s28, 1
      %p235 = por %p233, %p234
      %p236 = scmp.ne.s32.totalorder %s227, %s228
      %p237 = scmp.eq.s32.totalorder %s28, 0
      %p238 = por %p236, %p237
      %p239 = scmp.ne.s32.totalorder %s227, %s228
      %p240 = scmp.eq.s32.totalorder %s29, 1
      %p241 = por %p239, %p240
      %p243 = scmp.ne.s32.totalorder %s228, %s242
      %p244 = scmp.eq.s32.totalorder %s29, 0
      %p245 = por %p243, %p244
      %s247 = sadd.s32 %s246, 1
      %p250 = scmp.eq.s32.totalorder %s23, 1
      %p251 = scmp.ne.s32.totalorder %s246, %s248
      %p252 = scmp.eq.s32.totalorder %s23, 0
      %p253 = por %p251, %p252
      %p254 = scmp.ne.s32.totalorder %s246, %s248
      %p255 = scmp.eq.s32.totalorder %s28, 1
      %p256 = por %p254, %p255
      %p257 = scmp.ne.s32.totalorder %s248, %s249
      %p258 = scmp.eq.s32.totalorder %s28, 0
      %p259 = por %p257, %p258
      %p260 = scmp.ne.s32.totalorder %s248, %s249
      %p261 = scmp.eq.s32.totalorder %s29, 1
      %p262 = por %p260, %p261
      %p264 = scmp.ne.s32.totalorder %s249, %s263
      %p265 = scmp.eq.s32.totalorder %s29, 0
      %p266 = por %p264, %p265
      %s267 = ssub.s32 %s23, %s30
      %p268 = scmp.eq.s32.totalorder %s267, 0
      %s270 = sadd.s32 %s269, 1
      %s271 = scalar_select %p268, %s269, %s270
      %p274 = pneg %p268
      %p275 = scmp.eq.s32.totalorder %s23, 1
      %p276 = por %p274, %p275
      %p277 = scmp.ne.s32.totalorder %s269, %s272
      %p278 = scmp.eq.s32.totalorder %s23, 0
      %p279 = por %p277, %p278
      %p280 = scmp.ne.s32.totalorder %s269, %s272
      %p281 = scmp.eq.s32.totalorder %s28, 1
      %p282 = por %p280, %p281
      %p283 = scmp.ne.s32.totalorder %s272, %s273
      %p284 = scmp.eq.s32.totalorder %s28, 0
      %p285 = por %p283, %p284
      %p286 = scmp.ne.s32.totalorder %s272, %s273
      %p287 = scmp.eq.s32.totalorder %s29, 1
      %p288 = por %p286, %p287
      %p290 = scmp.ne.s32.totalorder %s273, %s289
      %p291 = scmp.eq.s32.totalorder %s29, 0
      %p292 = por %p290, %p291
      %p293 = scmp.le.s32.totalorder 1, %s23
      %p294 = scmp.lt.s32.totalorder %s23, 3
      %p295 = pnand %p293, %p294
      %p296 = pneg %p295
      // Predicated region
      $region9: #{tpu_custom_call.1} parent=5 // pred_check
        _
      $region10: #{tpu_custom_call.1} parent=5 // pred_check_branch
        %298 = sbr.rel (%p295) target = $region12
      $region11: #{tpu_custom_call.1} parent=5 // pred_region
        %s299 = ssub.s32 %s23, 1
        // Predicated region
        $region13: #{tpu_custom_call.1} parent=11 // pred_check
          %p300 = pneg %p70
        $region14: #{tpu_custom_call.1} parent=11 // pred_check_branch
          %302 = sbr.rel (%p300) target = $region16
        $region15: #{tpu_custom_call.1} parent=11 // pred_region
          _
        $region16: #{tpu_custom_call.1} parent=11 // pred_fallthru
          _
        // Predicated region
        $region17: #{tpu_custom_call.1} parent=11 // pred_check
          %p303 = pneg %p91
        $region18: #{tpu_custom_call.1} parent=11 // pred_check_branch
          %305 = sbr.rel (%p303) target = $region20
        $region19: #{tpu_custom_call.1} parent=11 // pred_region
          _
        $region20: #{tpu_custom_call.1} parent=11 // pred_fallthru
          _
        // Predicated region
        $region21: #{tpu_custom_call.1} parent=11 // pred_check
          %p306 = pneg %p112
        $region22: #{tpu_custom_call.1} parent=11 // pred_check_branch
          %308 = sbr.rel (%p306) target = $region24
        $region23: #{tpu_custom_call.1} parent=11 // pred_region
          _
        $region24: #{tpu_custom_call.1} parent=11 // pred_fallthru
          _
        // Predicated region
        $region25: #{tpu_custom_call.1} parent=11 // pred_check
          %p309 = pneg %p133
        $region26: #{tpu_custom_call.1} parent=11 // pred_check_branch
          %311 = sbr.rel (%p309) target = $region28
        $region27: #{tpu_custom_call.1} parent=11 // pred_region
          _
        $region28: #{tpu_custom_call.1} parent=11 // pred_fallthru
          _
        // Predicated region
        $region29: #{tpu_custom_call.1} parent=11 // pred_check
          %p312 = pneg %p154
        $region30: #{tpu_custom_call.1} parent=11 // pred_check_branch
          %314 = sbr.rel (%p312) target = $region32
        $region31: #{tpu_custom_call.1} parent=11 // pred_region
          _
        $region32: #{tpu_custom_call.1} parent=11 // pred_fallthru
          _
        // Predicated region
        $region33: #{tpu_custom_call.1} parent=11 // pred_check
          %p315 = pneg %p175
        $region34: #{tpu_custom_call.1} parent=11 // pred_check_branch
          %317 = sbr.rel (%p315) target = $region36
        $region35: #{tpu_custom_call.1} parent=11 // pred_region
          _
        $region36: #{tpu_custom_call.1} parent=11 // pred_fallthru
          _
        // Predicated region
        $region37: #{tpu_custom_call.1} parent=11 // pred_check
          %p318 = pneg %p196
        $region38: #{tpu_custom_call.1} parent=11 // pred_check_branch
          %320 = sbr.rel (%p318) target = $region40
        $region39: #{tpu_custom_call.1} parent=11 // pred_region
          _
        $region40: #{tpu_custom_call.1} parent=11 // pred_fallthru
          _
        // Predicated region
        $region41: #{tpu_custom_call.1} parent=11 // pred_check
          %p321 = pneg %p217
        $region42: #{tpu_custom_call.1} parent=11 // pred_check_branch
          %323 = sbr.rel (%p321) target = $region44
        $region43: #{tpu_custom_call.1} parent=11 // pred_region
          _
        $region44: #{tpu_custom_call.1} parent=11 // pred_fallthru
          _
        // Predicated region
        $region45: #{tpu_custom_call.1} parent=11 // pred_check
          %p324 = pneg %p238
        $region46: #{tpu_custom_call.1} parent=11 // pred_check_branch
          %326 = sbr.rel (%p324) target = $region48
        $region47: #{tpu_custom_call.1} parent=11 // pred_region
          _
        $region48: #{tpu_custom_call.1} parent=11 // pred_fallthru
          _
        // Predicated region
        $region49: #{tpu_custom_call.1} parent=11 // pred_check
          %p327 = pneg %p259
        $region50: #{tpu_custom_call.1} parent=11 // pred_check_branch
          %329 = sbr.rel (%p327) target = $region52
        $region51: #{tpu_custom_call.1} parent=11 // pred_region
          _
        $region52: #{tpu_custom_call.1} parent=11 // pred_fallthru
          _
      $region12: #{tpu_custom_call.1} parent=5 // pred_fallthru
        _
      %p330 = scmp.lt.s32.totalorder %s23, 2
      // Predicated region
      $region53: #{tpu_custom_call.1} parent=5 // pred_check
        %p331 = pneg %p330
      $region54: #{tpu_custom_call.1} parent=5 // pred_check_branch
        %333 = sbr.rel (%p331) target = $region56
      $region55: #{tpu_custom_call.1} parent=5 // pred_region
        // Predicated region
        $region57: #{tpu_custom_call.1} parent=55 // pred_check
          %p334 = pneg %p43
        $region58: #{tpu_custom_call.1} parent=55 // pred_check_branch
          %336 = sbr.rel (%p334) target = $region60
        $region59: #{tpu_custom_call.1} parent=55 // pred_region
          %s337 = sand.u32 %s33, 1
          %s338 = scalar_lea.sflag [#allocation3], %s337
          %s339 = sand.u32 %s33, 1
          %s340 = smul.addr %s339, 256
          %s341 = scalar_lea.vmem [#allocation2], %s340
          %343 = vsyncadd %s338, 0
          %s344 = smul.addr %s23, 32
          %s345 = smul.addr %s344, 8
          %s346 = scalar_lea.hbm %s0, %s345
          %s347 = sshll.u32 %s346, 4
          %s348 = int_to_ptr.hbm [resolvable:$true] %s347
          %s349 = sshll.u32 %s341, 4
          %s350 = int_to_ptr.vmem [resolvable:$true] %s349
          %355 = dma.hbm_to_vmem [thread:$0]  %s348, 4096, %s350, %s338, 128, 128, 8
        $region60: #{tpu_custom_call.1} parent=55 // pred_fallthru
          _
      $region56: #{tpu_custom_call.1} parent=5 // pred_fallthru
        _
      %p356 = scmp.le.s32.totalorder 1, %s23
      %p357 = scmp.lt.s32.totalorder %s23, 3
      %p358 = pnand %p356, %p357
      %p359 = pneg %p358
      // Predicated region
      $region61: #{tpu_custom_call.1} parent=5 // pred_check
        _
      $region62: #{tpu_custom_call.1} parent=5 // pred_check_branch
        %361 = sbr.rel (%p358) target = $region64
      $region63: #{tpu_custom_call.1} parent=5 // pred_region
        %s362 = ssub.s32 %s23, 1
        %s363 = sand.u32 %s36, 1
        %s364 = scalar_lea.sflag [#allocation3], %s363
        %s365 = sand.u32 %s36, 1
        %s366 = smul.addr %s365, 256
        %s367 = scalar_lea.vmem [#allocation2], %s366
        // Predicated region
        $region65: #{tpu_custom_call.1} parent=63 // pred_check
          %p368 = pneg %p49
        $region66: #{tpu_custom_call.1} parent=63 // pred_check_branch
          %370 = sbr.rel (%p368) target = $region68
        $region67: #{tpu_custom_call.1} parent=63 // pred_region
          %372 = dma.done %s364, 4096
        $region68: #{tpu_custom_call.1} parent=63 // pred_fallthru
          _
        %s373 = sand.u32 %s36, 1
        %s374 = scalar_lea.sflag [#allocation3], %s373
        %s375 = sand.u32 %s36, 1
        %s376 = smul.addr %s375, 256
        %s377 = scalar_lea.vmem [#allocation2], %s376
        %p378 = pneg %p49
        %p379 = pneg %p46
        %p380 = pneg %p70
        %p381 = pneg %p67
        %p382 = pneg %p91
        %p383 = pneg %p88
        %p384 = pneg %p112
        %p385 = pneg %p109
        %p386 = pneg %p133
        %p387 = pneg %p130
        %p388 = pneg %p154
        %p389 = pneg %p151
        %p390 = pneg %p175
        %p391 = pneg %p172
        %p392 = pneg %p196
        %p393 = pneg %p193
        %p394 = pneg %p217
        %p395 = pneg %p214
        %p396 = pneg %p238
        %p397 = pneg %p235
        %p398 = pneg %p259
        %p399 = pneg %p256
        %p400 = pneg %p285
        %p401 = pneg %p282
        %s402 = sand.u32 %s272, 1
        %s403 = scalar_lea.sflag [#allocation4], %s402
        %s404 = sand.u32 %s272, 1
        %s405 = smul.addr %s404, 256
        %s406 = scalar_lea.vmem [#allocation5], %s405
        %v408 = vld [vmem:[%s367] sm:$0xff]
        %v409 = vld [vmem:[%s367 + $0x8] sm:$0xff]
        %v410 = vld [vmem:[%s367 + $0x10] sm:$0xff]
        %v411 = vld [vmem:[%s367 + $0x18] sm:$0xff]
        %v412 = vld [vmem:[%s367 + $0x20] sm:$0xff]
        %v413 = vld [vmem:[%s367 + $0x28] sm:$0xff]
        %v414 = vld [vmem:[%s367 + $0x30] sm:$0xff]
        %v415 = vld [vmem:[%s367 + $0x38] sm:$0xff]
        %v416 = vld [vmem:[%s367 + $0x40] sm:$0xff]
        %v417 = vld [vmem:[%s367 + $0x48] sm:$0xff]
        %v418 = vld [vmem:[%s367 + $0x50] sm:$0xff]
        %v419 = vld [vmem:[%s367 + $0x58] sm:$0xff]
        %v420 = vld [vmem:[%s367 + $0x60] sm:$0xff]
        %v421 = vld [vmem:[%s367 + $0x68] sm:$0xff]
        %v422 = vld [vmem:[%s367 + $0x70] sm:$0xff]
        %v423 = vld [vmem:[%s367 + $0x78] sm:$0xff]
        %v424 = vld [vmem:[%s367 + $0x80] sm:$0xff]
        %v425 = vld [vmem:[%s367 + $0x88] sm:$0xff]
        %v426 = vld [vmem:[%s367 + $0x90] sm:$0xff]
        %v427 = vld [vmem:[%s367 + $0x98] sm:$0xff]
        %v428 = vld [vmem:[%s367 + $0xa0] sm:$0xff]
        %v429 = vld [vmem:[%s367 + $0xa8] sm:$0xff]
        %v430 = vld [vmem:[%s367 + $0xb0] sm:$0xff]
        %v431 = vld [vmem:[%s367 + $0xb8] sm:$0xff]
        %v432 = vld [vmem:[%s367 + $0xc0] sm:$0xff]
        %v433 = vld [vmem:[%s367 + $0xc8] sm:$0xff]
        %v434 = vld [vmem:[%s367 + $0xd0] sm:$0xff]
        %v435 = vld [vmem:[%s367 + $0xd8] sm:$0xff]
        %v436 = vld [vmem:[%s367 + $0xe0] sm:$0xff]
        %v437 = vld [vmem:[%s367 + $0xe8] sm:$0xff]
        %v438 = vld [vmem:[%s367 + $0xf0] sm:$0xff]
        %v439 = vld [vmem:[%s367 + $0xf8] sm:$0xff]
        %vm473 = vcmask 1042432
        %v474 = vrot.slane 0.0, 5
        %v475 = vsel %vm473, %v474, %v474
        %v476 = vrot.slane %v408, 5
        %v477 = vrot.slane %v409, 5
        %v478 = vsel %vm473, %v476, %v477
        %v479 = vrot.slane %v410, 5
        %v480 = vrot.slane %v411, 5
        %v481 = vsel %vm473, %v479, %v480
        %v482 = vrot.slane %v412, 5
        %v483 = vrot.slane %v413, 5
        %v484 = vsel %vm473, %v482, %v483
        %v485 = vrot.slane %v414, 5
        %v486 = vrot.slane %v415, 5
        %v487 = vsel %vm473, %v485, %v486
        %v488 = vrot.slane %v416, 5
        %v489 = vrot.slane %v417, 5
        %v490 = vsel %vm473, %v488, %v489
        %v491 = vrot.slane %v418, 5
        %v492 = vrot.slane %v419, 5
        %v493 = vsel %vm473, %v491, %v492
        %v494 = vrot.slane %v420, 5
        %v495 = vrot.slane %v421, 5
        %v496 = vsel %vm473, %v494, %v495
        %v497 = vrot.slane %v422, 5
        %v498 = vrot.slane %v423, 5
        %v499 = vsel %vm473, %v497, %v498
        %v500 = vrot.slane %v424, 5
        %v501 = vrot.slane %v425, 5
        %v502 = vsel %vm473, %v500, %v501
        %v503 = vrot.slane %v426, 5
        %v504 = vrot.slane %v427, 5
        %v505 = vsel %vm473, %v503, %v504
        %v506 = vrot.slane %v428, 5
        %v507 = vrot.slane %v429, 5
        %v508 = vsel %vm473, %v506, %v507
        %v509 = vrot.slane %v430, 5
        %v510 = vrot.slane %v431, 5
        %v511 = vsel %vm473, %v509, %v510
        %v512 = vrot.slane %v432, 5
        %v513 = vrot.slane %v433, 5
        %v514 = vsel %vm473, %v512, %v513
        %v515 = vrot.slane %v434, 5
        %v516 = vrot.slane %v435, 5
        %v517 = vsel %vm473, %v515, %v516
        %v518 = vrot.slane %v436, 5
        %v519 = vrot.slane %v437, 5
        %v520 = vsel %vm473, %v518, %v519
        %v521 = vrot.slane %v438, 5
        %v522 = vrot.slane %v439, 5
        %v523 = vsel %vm473, %v521, %v522
        %v558 = vsel %vm473, 0.0, %v474
        %v559 = vsel %vm473, 0.0, %v476
        %v560 = vsel %vm473, 0.0, %v479
        %v561 = vsel %vm473, 0.0, %v482
        %v562 = vsel %vm473, 0.0, %v485
        %v563 = vsel %vm473, 0.0, %v488
        %v564 = vsel %vm473, 0.0, %v491
        %v565 = vsel %vm473, 0.0, %v494
        %v566 = vsel %vm473, 0.0, %v497
        %v567 = vsel %vm473, 0.0, %v500
        %v568 = vsel %vm473, 0.0, %v503
        %v569 = vsel %vm473, 0.0, %v506
        %v570 = vsel %vm473, 0.0, %v509
        %v571 = vsel %vm473, 0.0, %v512
        %v572 = vsel %vm473, 0.0, %v515
        %v573 = vsel %vm473, 0.0, %v518
        %v574 = vsel %vm473, 0.0, %v521
        %v575 = vld [vmem:[%s1] sm:$0x1]
        %v576 = vperm.slane %v575, 0
        %v577 = vmul.f32 %v558, %v576
        %v578 = vmul.f32 %v475, %v576
        %v579 = vmul.f32 %v559, %v576
        %v580 = vmul.f32 %v478, %v576
        %v581 = vmul.f32 %v560, %v576
        %v582 = vmul.f32 %v481, %v576
        %v583 = vmul.f32 %v561, %v576
        %v584 = vmul.f32 %v484, %v576
        %v585 = vmul.f32 %v562, %v576
        %v586 = vmul.f32 %v487, %v576
        %v587 = vmul.f32 %v563, %v576
        %v588 = vmul.f32 %v490, %v576
        %v589 = vmul.f32 %v564, %v576
        %v590 = vmul.f32 %v493, %v576
        %v591 = vmul.f32 %v565, %v576
        %v592 = vmul.f32 %v496, %v576
        %v593 = vmul.f32 %v566, %v576
        %v594 = vmul.f32 %v499, %v576
        %v595 = vmul.f32 %v567, %v576
        %v596 = vmul.f32 %v502, %v576
        %v597 = vmul.f32 %v568, %v576
        %v598 = vmul.f32 %v505, %v576
        %v599 = vmul.f32 %v569, %v576
        %v600 = vmul.f32 %v508, %v576
        %v601 = vmul.f32 %v570, %v576
        %v602 = vmul.f32 %v511, %v576
        %v603 = vmul.f32 %v571, %v576
        %v604 = vmul.f32 %v514, %v576
        %v605 = vadd.f32 %v577, 0.0
        %v606 = vadd.f32 %v578, 0.0
        %v607 = vadd.f32 %v579, 0.0
        %v608 = vadd.f32 %v580, 0.0
        %v609 = vadd.f32 %v581, 0.0
        %v610 = vadd.f32 %v582, 0.0
        %v611 = vadd.f32 %v583, 0.0
        %v612 = vadd.f32 %v584, 0.0
        %v613 = vadd.f32 %v585, 0.0
        %v614 = vadd.f32 %v586, 0.0
        %v615 = vadd.f32 %v587, 0.0
        %v616 = vadd.f32 %v588, 0.0
        %v617 = vadd.f32 %v589, 0.0
        %v618 = vadd.f32 %v590, 0.0
        %v619 = vadd.f32 %v591, 0.0
        %v620 = vadd.f32 %v592, 0.0
        %v621 = vadd.f32 %v593, 0.0
        %v622 = vadd.f32 %v594, 0.0
        %v623 = vadd.f32 %v595, 0.0
        %v624 = vadd.f32 %v596, 0.0
        %v625 = vadd.f32 %v597, 0.0
        %v626 = vadd.f32 %v598, 0.0
        %v627 = vadd.f32 %v599, 0.0
        %v628 = vadd.f32 %v600, 0.0
        %v629 = vadd.f32 %v601, 0.0
        %v630 = vadd.f32 %v602, 0.0
        %v631 = vadd.f32 %v603, 0.0
        %v632 = vadd.f32 %v604, 0.0
        %v633 = vld [vmem:[%s1 + $0x7] sm:$0x1]
        %v634 = vperm.slane %v633, 0
        %v635 = vmul.f32 %v558, %v634
        %v636 = vmul.f32 %v475, %v634
        %v637 = vmul.f32 %v559, %v634
        %v638 = vmul.f32 %v478, %v634
        %v639 = vmul.f32 %v560, %v634
        %v640 = vmul.f32 %v481, %v634
        %v641 = vmul.f32 %v561, %v634
        %v642 = vmul.f32 %v484, %v634
        %v643 = vmul.f32 %v562, %v634
        %v644 = vmul.f32 %v487, %v634
        %v645 = vmul.f32 %v563, %v634
        %v646 = vmul.f32 %v490, %v634
        %v647 = vmul.f32 %v564, %v634
        %v648 = vmul.f32 %v493, %v634
        %v649 = vmul.f32 %v565, %v634
        %v650 = vmul.f32 %v496, %v634
        %v651 = vmul.f32 %v566, %v634
        %v652 = vmul.f32 %v499, %v634
        %v653 = vmul.f32 %v567, %v634
        %v654 = vmul.f32 %v502, %v634
        %v655 = vmul.f32 %v568, %v634
        %v656 = vmul.f32 %v505, %v634
        %v657 = vmul.f32 %v569, %v634
        %v658 = vmul.f32 %v508, %v634
        %v659 = vmul.f32 %v570, %v634
        %v660 = vmul.f32 %v511, %v634
        %v661 = vmul.f32 %v571, %v634
        %v662 = vmul.f32 %v514, %v634
        %v663 = vmul.f32 %v572, %v634
        %v664 = vmul.f32 %v517, %v634
        %v665 = vadd.f32 %v605, %v635
        %v666 = vadd.f32 %v606, %v636
        %v667 = vadd.f32 %v605, %v637
        %v668 = vadd.f32 %v606, %v638
        %v669 = vadd.f32 %v607, %v639
        %v670 = vadd.f32 %v608, %v640
        %v671 = vadd.f32 %v609, %v641
        %v672 = vadd.f32 %v610, %v642
        %v673 = vadd.f32 %v611, %v643
        %v674 = vadd.f32 %v612, %v644
        %v675 = vadd.f32 %v613, %v645
        %v676 = vadd.f32 %v614, %v646
        %v677 = vadd.f32 %v615, %v647
        %v678 = vadd.f32 %v616, %v648
        %v679 = vadd.f32 %v617, %v649
        %v680 = vadd.f32 %v618, %v650
        %v681 = vadd.f32 %v619, %v651
        %v682 = vadd.f32 %v620, %v652
        %v683 = vadd.f32 %v621, %v653
        %v684 = vadd.f32 %v622, %v654
        %v685 = vadd.f32 %v623, %v655
        %v686 = vadd.f32 %v624, %v656
        %v687 = vadd.f32 %v625, %v657
        %v688 = vadd.f32 %v626, %v658
        %v689 = vadd.f32 %v627, %v659
        %v690 = vadd.f32 %v628, %v660
        %v691 = vadd.f32 %v629, %v661
        %v692 = vadd.f32 %v630, %v662
        %v693 = vadd.f32 %v631, %v663
        %v694 = vadd.f32 %v632, %v664
        %v695 = vld [vmem:[%s1 + $0xe] sm:$0x1]
        %v696 = vperm.slane %v695, 0
        %v697 = vmul.f32 %v558, %v696
        %v698 = vmul.f32 %v475, %v696
        %v699 = vmul.f32 %v559, %v696
        %v700 = vmul.f32 %v478, %v696
        %v701 = vmul.f32 %v560, %v696
        %v702 = vmul.f32 %v481, %v696
        %v703 = vmul.f32 %v561, %v696
        %v704 = vmul.f32 %v484, %v696
        %v705 = vmul.f32 %v562, %v696
        %v706 = vmul.f32 %v487, %v696
        %v707 = vmul.f32 %v563, %v696
        %v708 = vmul.f32 %v490, %v696
        %v709 = vmul.f32 %v564, %v696
        %v710 = vmul.f32 %v493, %v696
        %v711 = vmul.f32 %v565, %v696
        %v712 = vmul.f32 %v496, %v696
        %v713 = vmul.f32 %v566, %v696
        %v714 = vmul.f32 %v499, %v696
        %v715 = vmul.f32 %v567, %v696
        %v716 = vmul.f32 %v502, %v696
        %v717 = vmul.f32 %v568, %v696
        %v718 = vmul.f32 %v505, %v696
        %v719 = vmul.f32 %v569, %v696
        %v720 = vmul.f32 %v508, %v696
        %v721 = vmul.f32 %v570, %v696
        %v722 = vmul.f32 %v511, %v696
        %v723 = vmul.f32 %v571, %v696
        %v724 = vmul.f32 %v514, %v696
        %v725 = vmul.f32 %v572, %v696
        %v726 = vmul.f32 %v517, %v696
        %v727 = vmul.f32 %v573, %v696
        %v728 = vmul.f32 %v520, %v696
        %v729 = vadd.f32 %v665, %v697
        %v730 = vadd.f32 %v666, %v698
        %v731 = vadd.f32 %v665, %v699
        %v732 = vadd.f32 %v666, %v700
        %v733 = vadd.f32 %v667, %v701
        %v734 = vadd.f32 %v668, %v702
        %v735 = vadd.f32 %v669, %v703
        %v736 = vadd.f32 %v670, %v704
        %v737 = vadd.f32 %v671, %v705
        %v738 = vadd.f32 %v672, %v706
        %v739 = vadd.f32 %v673, %v707
        %v740 = vadd.f32 %v674, %v708
        %v741 = vadd.f32 %v675, %v709
        %v742 = vadd.f32 %v676, %v710
        %v743 = vadd.f32 %v677, %v711
        %v744 = vadd.f32 %v678, %v712
        %v745 = vadd.f32 %v679, %v713
        %v746 = vadd.f32 %v680, %v714
        %v747 = vadd.f32 %v681, %v715
        %v748 = vadd.f32 %v682, %v716
        %v749 = vadd.f32 %v683, %v717
        %v750 = vadd.f32 %v684, %v718
        %v751 = vadd.f32 %v685, %v719
        %v752 = vadd.f32 %v686, %v720
        %v753 = vadd.f32 %v687, %v721
        %v754 = vadd.f32 %v688, %v722
        %v755 = vadd.f32 %v689, %v723
        %v756 = vadd.f32 %v690, %v724
        %v757 = vadd.f32 %v691, %v725
        %v758 = vadd.f32 %v692, %v726
        %v759 = vadd.f32 %v693, %v727
        %v760 = vadd.f32 %v694, %v728
        %v761 = vld [vmem:[%s1 + $0x15] sm:$0x1]
        %v762 = vperm.slane %v761, 0
        %v763 = vmul.f32 %v559, %v762
        %v764 = vmul.f32 %v478, %v762
        %v765 = vmul.f32 %v560, %v762
        %v766 = vmul.f32 %v481, %v762
        %v767 = vmul.f32 %v561, %v762
        %v768 = vmul.f32 %v484, %v762
        %v769 = vmul.f32 %v562, %v762
        %v770 = vmul.f32 %v487, %v762
        %v771 = vmul.f32 %v563, %v762
        %v772 = vmul.f32 %v490, %v762
        %v773 = vmul.f32 %v564, %v762
        %v774 = vmul.f32 %v493, %v762
        %v775 = vmul.f32 %v565, %v762
        %v776 = vmul.f32 %v496, %v762
        %v777 = vmul.f32 %v566, %v762
        %v778 = vmul.f32 %v499, %v762
        %v779 = vmul.f32 %v567, %v762
        %v780 = vmul.f32 %v502, %v762
        %v781 = vmul.f32 %v568, %v762
        %v782 = vmul.f32 %v505, %v762
        %v783 = vmul.f32 %v569, %v762
        %v784 = vmul.f32 %v508, %v762
        %v785 = vmul.f32 %v570, %v762
        %v786 = vmul.f32 %v511, %v762
        %v787 = vmul.f32 %v571, %v762
        %v788 = vmul.f32 %v514, %v762
        %v789 = vmul.f32 %v572, %v762
        %v790 = vmul.f32 %v517, %v762
        %v791 = vmul.f32 %v573, %v762
        %v792 = vmul.f32 %v520, %v762
        %v793 = vmul.f32 %v574, %v762
        %v794 = vmul.f32 %v523, %v762
        %v795 = vadd.f32 %v729, %v763
        %v796 = vadd.f32 %v730, %v764
        %v797 = vadd.f32 %v731, %v765
        %v798 = vadd.f32 %v732, %v766
        %v799 = vadd.f32 %v733, %v767
        %v800 = vadd.f32 %v734, %v768
        %v801 = vadd.f32 %v735, %v769
        %v802 = vadd.f32 %v736, %v770
        %v803 = vadd.f32 %v737, %v771
        %v804 = vadd.f32 %v738, %v772
        %v805 = vadd.f32 %v739, %v773
        %v806 = vadd.f32 %v740, %v774
        %v807 = vadd.f32 %v741, %v775
        %v808 = vadd.f32 %v742, %v776
        %v809 = vadd.f32 %v743, %v777
        %v810 = vadd.f32 %v744, %v778
        %v811 = vadd.f32 %v745, %v779
        %v812 = vadd.f32 %v746, %v780
        %v813 = vadd.f32 %v747, %v781
        %v814 = vadd.f32 %v748, %v782
        %v815 = vadd.f32 %v749, %v783
        %v816 = vadd.f32 %v750, %v784
        %v817 = vadd.f32 %v751, %v785
        %v818 = vadd.f32 %v752, %v786
        %v819 = vadd.f32 %v753, %v787
        %v820 = vadd.f32 %v754, %v788
        %v821 = vadd.f32 %v755, %v789
        %v822 = vadd.f32 %v756, %v790
        %v823 = vadd.f32 %v757, %v791
        %v824 = vadd.f32 %v758, %v792
        %v825 = vadd.f32 %v759, %v793
        %v826 = vadd.f32 %v760, %v794
        %v827 = vld [vmem:[%s1 + $0x1c] sm:$0x1]
        %v828 = vperm.slane %v827, 0
        %v829 = vmul.f32 %v560, %v828
        %v830 = vmul.f32 %v481, %v828
        %v831 = vmul.f32 %v561, %v828
        %v832 = vmul.f32 %v484, %v828
        %v833 = vmul.f32 %v562, %v828
        %v834 = vmul.f32 %v487, %v828
        %v835 = vmul.f32 %v563, %v828
        %v836 = vmul.f32 %v490, %v828
        %v837 = vmul.f32 %v564, %v828
        %v838 = vmul.f32 %v493, %v828
        %v839 = vmul.f32 %v565, %v828
        %v840 = vmul.f32 %v496, %v828
        %v841 = vmul.f32 %v566, %v828
        %v842 = vmul.f32 %v499, %v828
        %v843 = vmul.f32 %v567, %v828
        %v844 = vmul.f32 %v502, %v828
        %v845 = vmul.f32 %v568, %v828
        %v846 = vmul.f32 %v505, %v828
        %v847 = vmul.f32 %v569, %v828
        %v848 = vmul.f32 %v508, %v828
        %v849 = vmul.f32 %v570, %v828
        %v850 = vmul.f32 %v511, %v828
        %v851 = vmul.f32 %v571, %v828
        %v852 = vmul.f32 %v514, %v828
        %v853 = vmul.f32 %v572, %v828
        %v854 = vmul.f32 %v517, %v828
        %v855 = vmul.f32 %v573, %v828
        %v856 = vmul.f32 %v520, %v828
        %v857 = vmul.f32 %v574, %v828
        %v858 = vmul.f32 %v523, %v828
        %v859 = vmul.f32 %v558, %v828
        %v860 = vmul.f32 %v475, %v828
        %v861 = vadd.f32 %v795, %v829
        %v862 = vadd.f32 %v796, %v830
        %v863 = vadd.f32 %v797, %v831
        %v864 = vadd.f32 %v798, %v832
        %v865 = vadd.f32 %v799, %v833
        %v866 = vadd.f32 %v800, %v834
        %v867 = vadd.f32 %v801, %v835
        %v868 = vadd.f32 %v802, %v836
        %v869 = vadd.f32 %v803, %v837
        %v870 = vadd.f32 %v804, %v838
        %v871 = vadd.f32 %v805, %v839
        %v872 = vadd.f32 %v806, %v840
        %v873 = vadd.f32 %v807, %v841
        %v874 = vadd.f32 %v808, %v842
        %v875 = vadd.f32 %v809, %v843
        %v876 = vadd.f32 %v810, %v844
        %v877 = vadd.f32 %v811, %v845
        %v878 = vadd.f32 %v812, %v846
        %v879 = vadd.f32 %v813, %v847
        %v880 = vadd.f32 %v814, %v848
        %v881 = vadd.f32 %v815, %v849
        %v882 = vadd.f32 %v816, %v850
        %v883 = vadd.f32 %v817, %v851
        %v884 = vadd.f32 %v818, %v852
        %v885 = vadd.f32 %v819, %v853
        %v886 = vadd.f32 %v820, %v854
        %v887 = vadd.f32 %v821, %v855
        %v888 = vadd.f32 %v822, %v856
        %v889 = vadd.f32 %v823, %v857
        %v890 = vadd.f32 %v824, %v858
        %v891 = vadd.f32 %v825, %v859
        %v892 = vadd.f32 %v826, %v860
        %v893 = vld [vmem:[%s1 + $0x23] sm:$0x1]
        %v894 = vperm.slane %v893, 0
        %v895 = vmul.f32 %v561, %v894
        %v896 = vmul.f32 %v484, %v894
        %v897 = vmul.f32 %v562, %v894
        %v898 = vmul.f32 %v487, %v894
        %v899 = vmul.f32 %v563, %v894
        %v900 = vmul.f32 %v490, %v894
        %v901 = vmul.f32 %v564, %v894
        %v902 = vmul.f32 %v493, %v894
        %v903 = vmul.f32 %v565, %v894
        %v904 = vmul.f32 %v496, %v894
        %v905 = vmul.f32 %v566, %v894
        %v906 = vmul.f32 %v499, %v894
        %v907 = vmul.f32 %v567, %v894
        %v908 = vmul.f32 %v502, %v894
        %v909 = vmul.f32 %v568, %v894
        %v910 = vmul.f32 %v505, %v894
        %v911 = vmul.f32 %v569, %v894
        %v912 = vmul.f32 %v508, %v894
        %v913 = vmul.f32 %v570, %v894
        %v914 = vmul.f32 %v511, %v894
        %v915 = vmul.f32 %v571, %v894
        %v916 = vmul.f32 %v514, %v894
        %v917 = vmul.f32 %v572, %v894
        %v918 = vmul.f32 %v517, %v894
        %v919 = vmul.f32 %v573, %v894
        %v920 = vmul.f32 %v520, %v894
        %v921 = vmul.f32 %v574, %v894
        %v922 = vmul.f32 %v523, %v894
        %v923 = vmul.f32 %v558, %v894
        %v924 = vmul.f32 %v475, %v894
        %v925 = vadd.f32 %v861, %v895
        %v926 = vadd.f32 %v862, %v896
        %v927 = vadd.f32 %v863, %v897
        %v928 = vadd.f32 %v864, %v898
        %v929 = vadd.f32 %v865, %v899
        %v930 = vadd.f32 %v866, %v900
        %v931 = vadd.f32 %v867, %v901
        %v932 = vadd.f32 %v868, %v902
        %v933 = vadd.f32 %v869, %v903
        %v934 = vadd.f32 %v870, %v904
        %v935 = vadd.f32 %v871, %v905
        %v936 = vadd.f32 %v872, %v906
        %v937 = vadd.f32 %v873, %v907
        %v938 = vadd.f32 %v874, %v908
        %v939 = vadd.f32 %v875, %v909
        %v940 = vadd.f32 %v876, %v910
        %v941 = vadd.f32 %v877, %v911
        %v942 = vadd.f32 %v878, %v912
        %v943 = vadd.f32 %v879, %v913
        %v944 = vadd.f32 %v880, %v914
        %v945 = vadd.f32 %v881, %v915
        %v946 = vadd.f32 %v882, %v916
        %v947 = vadd.f32 %v883, %v917
        %v948 = vadd.f32 %v884, %v918
        %v949 = vadd.f32 %v885, %v919
        %v950 = vadd.f32 %v886, %v920
        %v951 = vadd.f32 %v887, %v921
        %v952 = vadd.f32 %v888, %v922
        %v953 = vadd.f32 %v889, %v923
        %v954 = vadd.f32 %v890, %v924
        %v955 = vadd.f32 %v891, %v923
        %v956 = vadd.f32 %v892, %v924
        %v957 = vld [vmem:[%s1 + $0x2a] sm:$0x1]
        %v958 = vperm.slane %v957, 0
        %v959 = vmul.f32 %v562, %v958
        %v960 = vmul.f32 %v487, %v958
        %v961 = vmul.f32 %v563, %v958
        %v962 = vmul.f32 %v490, %v958
        %v963 = vmul.f32 %v564, %v958
        %v964 = vmul.f32 %v493, %v958
        %v965 = vmul.f32 %v565, %v958
        %v966 = vmul.f32 %v496, %v958
        %v967 = vmul.f32 %v566, %v958
        %v968 = vmul.f32 %v499, %v958
        %v969 = vmul.f32 %v567, %v958
        %v970 = vmul.f32 %v502, %v958
        %v971 = vmul.f32 %v568, %v958
        %v972 = vmul.f32 %v505, %v958
        %v973 = vmul.f32 %v569, %v958
        %v974 = vmul.f32 %v508, %v958
        %v975 = vmul.f32 %v570, %v958
        %v976 = vmul.f32 %v511, %v958
        %v977 = vmul.f32 %v571, %v958
        %v978 = vmul.f32 %v514, %v958
        %v979 = vmul.f32 %v572, %v958
        %v980 = vmul.f32 %v517, %v958
        %v981 = vmul.f32 %v573, %v958
        %v982 = vmul.f32 %v520, %v958
        %v983 = vmul.f32 %v574, %v958
        %v984 = vmul.f32 %v523, %v958
        %v985 = vmul.f32 %v558, %v958
        %v986 = vmul.f32 %v475, %v958
        %v987 = vadd.f32 %v925, %v959
        %v988 = vadd.f32 %v926, %v960
        %v989 = vadd.f32 %v927, %v961
        %v990 = vadd.f32 %v928, %v962
        %v991 = vadd.f32 %v929, %v963
        %v992 = vadd.f32 %v930, %v964
        %v993 = vadd.f32 %v931, %v965
        %v994 = vadd.f32 %v932, %v966
        %v995 = vadd.f32 %v933, %v967
        %v996 = vadd.f32 %v934, %v968
        %v997 = vadd.f32 %v935, %v969
        %v998 = vadd.f32 %v936, %v970
        %v999 = vadd.f32 %v937, %v971
        %v1000 = vadd.f32 %v938, %v972
        %v1001 = vadd.f32 %v939, %v973
        %v1002 = vadd.f32 %v940, %v974
        %v1003 = vadd.f32 %v941, %v975
        %v1004 = vadd.f32 %v942, %v976
        %v1005 = vadd.f32 %v943, %v977
        %v1006 = vadd.f32 %v944, %v978
        %v1007 = vadd.f32 %v945, %v979
        %v1008 = vadd.f32 %v946, %v980
        %v1009 = vadd.f32 %v947, %v981
        %v1010 = vadd.f32 %v948, %v982
        %v1011 = vadd.f32 %v949, %v983
        %v1012 = vadd.f32 %v950, %v984
        %v1013 = vadd.f32 %v951, %v985
        %v1014 = vadd.f32 %v952, %v986
        %v1015 = vadd.f32 %v953, %v985
        %v1016 = vadd.f32 %v954, %v986
        %v1017 = vadd.f32 %v955, %v985
        %v1018 = vadd.f32 %v956, %v986
        %vm1019 = vcmask 1041408
        %v1020 = vrot.slane 0.0, 6
        %v1021 = vsel %vm1019, %v1020, %v1020
        %v1022 = vrot.slane %v408, 6
        %v1023 = vrot.slane %v409, 6
        %v1024 = vsel %vm1019, %v1022, %v1023
        %v1025 = vrot.slane %v410, 6
        %v1026 = vrot.slane %v411, 6
        %v1027 = vsel %vm1019, %v1025, %v1026
        %v1028 = vrot.slane %v412, 6
        %v1029 = vrot.slane %v413, 6
        %v1030 = vsel %vm1019, %v1028, %v1029
        %v1031 = vrot.slane %v414, 6
        %v1032 = vrot.slane %v415, 6
        %v1033 = vsel %vm1019, %v1031, %v1032
        %v1034 = vrot.slane %v416, 6
        %v1035 = vrot.slane %v417, 6
        %v1036 = vsel %vm1019, %v1034, %v1035
        %v1037 = vrot.slane %v418, 6
        %v1038 = vrot.slane %v419, 6
        %v1039 = vsel %vm1019, %v1037, %v1038
        %v1040 = vrot.slane %v420, 6
        %v1041 = vrot.slane %v421, 6
        %v1042 = vsel %vm1019, %v1040, %v1041
        %v1043 = vrot.slane %v422, 6
        %v1044 = vrot.slane %v423, 6
        %v1045 = vsel %vm1019, %v1043, %v1044
        %v1046 = vrot.slane %v424, 6
        %v1047 = vrot.slane %v425, 6
        %v1048 = vsel %vm1019, %v1046, %v1047
        %v1049 = vrot.slane %v426, 6
        %v1050 = vrot.slane %v427, 6
        %v1051 = vsel %vm1019, %v1049, %v1050
        %v1052 = vrot.slane %v428, 6
        %v1053 = vrot.slane %v429, 6
        %v1054 = vsel %vm1019, %v1052, %v1053
        %v1055 = vrot.slane %v430, 6
        %v1056 = vrot.slane %v431, 6
        %v1057 = vsel %vm1019, %v1055, %v1056
        %v1058 = vrot.slane %v432, 6
        %v1059 = vrot.slane %v433, 6
        %v1060 = vsel %vm1019, %v1058, %v1059
        %v1061 = vrot.slane %v434, 6
        %v1062 = vrot.slane %v435, 6
        %v1063 = vsel %vm1019, %v1061, %v1062
        %v1064 = vrot.slane %v436, 6
        %v1065 = vrot.slane %v437, 6
        %v1066 = vsel %vm1019, %v1064, %v1065
        %v1067 = vrot.slane %v438, 6
        %v1068 = vrot.slane %v439, 6
        %v1069 = vsel %vm1019, %v1067, %v1068
        %v1104 = vsel %vm1019, 0.0, %v1020
        %v1105 = vsel %vm1019, 0.0, %v1022
        %v1106 = vsel %vm1019, 0.0, %v1025
        %v1107 = vsel %vm1019, 0.0, %v1028
        %v1108 = vsel %vm1019, 0.0, %v1031
        %v1109 = vsel %vm1019, 0.0, %v1034
        %v1110 = vsel %vm1019, 0.0, %v1037
        %v1111 = vsel %vm1019, 0.0, %v1040
        %v1112 = vsel %vm1019, 0.0, %v1043
        %v1113 = vsel %vm1019, 0.0, %v1046
        %v1114 = vsel %vm1019, 0.0, %v1049
        %v1115 = vsel %vm1019, 0.0, %v1052
        %v1116 = vsel %vm1019, 0.0, %v1055
        %v1117 = vsel %vm1019, 0.0, %v1058
        %v1118 = vsel %vm1019, 0.0, %v1061
        %v1119 = vsel %vm1019, 0.0, %v1064
        %v1120 = vsel %vm1019, 0.0, %v1067
        %v1121 = vld [vmem:[%s1 + $0x1] sm:$0x1]
        %v1122 = vperm.slane %v1121, 0
        %v1123 = vmul.f32 %v1104, %v1122
        %v1124 = vmul.f32 %v1021, %v1122
        %v1125 = vmul.f32 %v1105, %v1122
        %v1126 = vmul.f32 %v1024, %v1122
        %v1127 = vmul.f32 %v1106, %v1122
        %v1128 = vmul.f32 %v1027, %v1122
        %v1129 = vmul.f32 %v1107, %v1122
        %v1130 = vmul.f32 %v1030, %v1122
        %v1131 = vmul.f32 %v1108, %v1122
        %v1132 = vmul.f32 %v1033, %v1122
        %v1133 = vmul.f32 %v1109, %v1122
        %v1134 = vmul.f32 %v1036, %v1122
        %v1135 = vmul.f32 %v1110, %v1122
        %v1136 = vmul.f32 %v1039, %v1122
        %v1137 = vmul.f32 %v1111, %v1122
        %v1138 = vmul.f32 %v1042, %v1122
        %v1139 = vmul.f32 %v1112, %v1122
        %v1140 = vmul.f32 %v1045, %v1122
        %v1141 = vmul.f32 %v1113, %v1122
        %v1142 = vmul.f32 %v1048, %v1122
        %v1143 = vmul.f32 %v1114, %v1122
        %v1144 = vmul.f32 %v1051, %v1122
        %v1145 = vmul.f32 %v1115, %v1122
        %v1146 = vmul.f32 %v1054, %v1122
        %v1147 = vmul.f32 %v1116, %v1122
        %v1148 = vmul.f32 %v1057, %v1122
        %v1149 = vmul.f32 %v1117, %v1122
        %v1150 = vmul.f32 %v1060, %v1122
        %v1151 = vadd.f32 %v987, %v1123
        %v1152 = vadd.f32 %v988, %v1124
        %v1153 = vadd.f32 %v989, %v1123
        %v1154 = vadd.f32 %v990, %v1124
        %v1155 = vadd.f32 %v991, %v1123
        %v1156 = vadd.f32 %v992, %v1124
        %v1157 = vadd.f32 %v993, %v1125
        %v1158 = vadd.f32 %v994, %v1126
        %v1159 = vadd.f32 %v995, %v1127
        %v1160 = vadd.f32 %v996, %v1128
        %v1161 = vadd.f32 %v997, %v1129
        %v1162 = vadd.f32 %v998, %v1130
        %v1163 = vadd.f32 %v999, %v1131
        %v1164 = vadd.f32 %v1000, %v1132
        %v1165 = vadd.f32 %v1001, %v1133
        %v1166 = vadd.f32 %v1002, %v1134
        %v1167 = vadd.f32 %v1003, %v1135
        %v1168 = vadd.f32 %v1004, %v1136
        %v1169 = vadd.f32 %v1005, %v1137
        %v1170 = vadd.f32 %v1006, %v1138
        %v1171 = vadd.f32 %v1007, %v1139
        %v1172 = vadd.f32 %v1008, %v1140
        %v1173 = vadd.f32 %v1009, %v1141
        %v1174 = vadd.f32 %v1010, %v1142
        %v1175 = vadd.f32 %v1011, %v1143
        %v1176 = vadd.f32 %v1012, %v1144
        %v1177 = vadd.f32 %v1013, %v1145
        %v1178 = vadd.f32 %v1014, %v1146
        %v1179 = vadd.f32 %v1015, %v1147
        %v1180 = vadd.f32 %v1016, %v1148
        %v1181 = vadd.f32 %v1017, %v1149
        %v1182 = vadd.f32 %v1018, %v1150
        %v1183 = vld [vmem:[%s1 + $0x8] sm:$0x1]
        %v1184 = vperm.slane %v1183, 0
        %v1185 = vmul.f32 %v1104, %v1184
        %v1186 = vmul.f32 %v1021, %v1184
        %v1187 = vmul.f32 %v1105, %v1184
        %v1188 = vmul.f32 %v1024, %v1184
        %v1189 = vmul.f32 %v1106, %v1184
        %v1190 = vmul.f32 %v1027, %v1184
        %v1191 = vmul.f32 %v1107, %v1184
        %v1192 = vmul.f32 %v1030, %v1184
        %v1193 = vmul.f32 %v1108, %v1184
        %v1194 = vmul.f32 %v1033, %v1184
        %v1195 = vmul.f32 %v1109, %v1184
        %v1196 = vmul.f32 %v1036, %v1184
        %v1197 = vmul.f32 %v1110, %v1184
        %v1198 = vmul.f32 %v1039, %v1184
        %v1199 = vmul.f32 %v1111, %v1184
        %v1200 = vmul.f32 %v1042, %v1184
        %v1201 = vmul.f32 %v1112, %v1184
        %v1202 = vmul.f32 %v1045, %v1184
        %v1203 = vmul.f32 %v1113, %v1184
        %v1204 = vmul.f32 %v1048, %v1184
        %v1205 = vmul.f32 %v1114, %v1184
        %v1206 = vmul.f32 %v1051, %v1184
        %v1207 = vmul.f32 %v1115, %v1184
        %v1208 = vmul.f32 %v1054, %v1184
        %v1209 = vmul.f32 %v1116, %v1184
        %v1210 = vmul.f32 %v1057, %v1184
        %v1211 = vmul.f32 %v1117, %v1184
        %v1212 = vmul.f32 %v1060, %v1184
        %v1213 = vmul.f32 %v1118, %v1184
        %v1214 = vmul.f32 %v1063, %v1184
        %v1215 = vadd.f32 %v1151, %v1185
        %v1216 = vadd.f32 %v1152, %v1186
        %v1217 = vadd.f32 %v1153, %v1185
        %v1218 = vadd.f32 %v1154, %v1186
        %v1219 = vadd.f32 %v1155, %v1187
        %v1220 = vadd.f32 %v1156, %v1188
        %v1221 = vadd.f32 %v1157, %v1189
        %v1222 = vadd.f32 %v1158, %v1190
        %v1223 = vadd.f32 %v1159, %v1191
        %v1224 = vadd.f32 %v1160, %v1192
        %v1225 = vadd.f32 %v1161, %v1193
        %v1226 = vadd.f32 %v1162, %v1194
        %v1227 = vadd.f32 %v1163, %v1195
        %v1228 = vadd.f32 %v1164, %v1196
        %v1229 = vadd.f32 %v1165, %v1197
        %v1230 = vadd.f32 %v1166, %v1198
        %v1231 = vadd.f32 %v1167, %v1199
        %v1232 = vadd.f32 %v1168, %v1200
        %v1233 = vadd.f32 %v1169, %v1201
        %v1234 = vadd.f32 %v1170, %v1202
        %v1235 = vadd.f32 %v1171, %v1203
        %v1236 = vadd.f32 %v1172, %v1204
        %v1237 = vadd.f32 %v1173, %v1205
        %v1238 = vadd.f32 %v1174, %v1206
        %v1239 = vadd.f32 %v1175, %v1207
        %v1240 = vadd.f32 %v1176, %v1208
        %v1241 = vadd.f32 %v1177, %v1209
        %v1242 = vadd.f32 %v1178, %v1210
        %v1243 = vadd.f32 %v1179, %v1211
        %v1244 = vadd.f32 %v1180, %v1212
        %v1245 = vadd.f32 %v1181, %v1213
        %v1246 = vadd.f32 %v1182, %v1214
        %v1247 = vld [vmem:[%s1 + $0xf] sm:$0x1]
        %v1248 = vperm.slane %v1247, 0
        %v1249 = vmul.f32 %v1104, %v1248
        %v1250 = vmul.f32 %v1021, %v1248
        %v1251 = vmul.f32 %v1105, %v1248
        %v1252 = vmul.f32 %v1024, %v1248
        %v1253 = vmul.f32 %v1106, %v1248
        %v1254 = vmul.f32 %v1027, %v1248
        %v1255 = vmul.f32 %v1107, %v1248
        %v1256 = vmul.f32 %v1030, %v1248
        %v1257 = vmul.f32 %v1108, %v1248
        %v1258 = vmul.f32 %v1033, %v1248
        %v1259 = vmul.f32 %v1109, %v1248
        %v1260 = vmul.f32 %v1036, %v1248
        %v1261 = vmul.f32 %v1110, %v1248
        %v1262 = vmul.f32 %v1039, %v1248
        %v1263 = vmul.f32 %v1111, %v1248
        %v1264 = vmul.f32 %v1042, %v1248
        %v1265 = vmul.f32 %v1112, %v1248
        %v1266 = vmul.f32 %v1045, %v1248
        %v1267 = vmul.f32 %v1113, %v1248
        %v1268 = vmul.f32 %v1048, %v1248
        %v1269 = vmul.f32 %v1114, %v1248
        %v1270 = vmul.f32 %v1051, %v1248
        %v1271 = vmul.f32 %v1115, %v1248
        %v1272 = vmul.f32 %v1054, %v1248
        %v1273 = vmul.f32 %v1116, %v1248
        %v1274 = vmul.f32 %v1057, %v1248
        %v1275 = vmul.f32 %v1117, %v1248
        %v1276 = vmul.f32 %v1060, %v1248
        %v1277 = vmul.f32 %v1118, %v1248
        %v1278 = vmul.f32 %v1063, %v1248
        %v1279 = vmul.f32 %v1119, %v1248
        %v1280 = vmul.f32 %v1066, %v1248
        %v1281 = vadd.f32 %v1215, %v1249
        %v1282 = vadd.f32 %v1216, %v1250
        %v1283 = vadd.f32 %v1217, %v1251
        %v1284 = vadd.f32 %v1218, %v1252
        %v1285 = vadd.f32 %v1219, %v1253
        %v1286 = vadd.f32 %v1220, %v1254
        %v1287 = vadd.f32 %v1221, %v1255
        %v1288 = vadd.f32 %v1222, %v1256
        %v1289 = vadd.f32 %v1223, %v1257
        %v1290 = vadd.f32 %v1224, %v1258
        %v1291 = vadd.f32 %v1225, %v1259
        %v1292 = vadd.f32 %v1226, %v1260
        %v1293 = vadd.f32 %v1227, %v1261
        %v1294 = vadd.f32 %v1228, %v1262
        %v1295 = vadd.f32 %v1229, %v1263
        %v1296 = vadd.f32 %v1230, %v1264
        %v1297 = vadd.f32 %v1231, %v1265
        %v1298 = vadd.f32 %v1232, %v1266
        %v1299 = vadd.f32 %v1233, %v1267
        %v1300 = vadd.f32 %v1234, %v1268
        %v1301 = vadd.f32 %v1235, %v1269
        %v1302 = vadd.f32 %v1236, %v1270
        %v1303 = vadd.f32 %v1237, %v1271
        %v1304 = vadd.f32 %v1238, %v1272
        %v1305 = vadd.f32 %v1239, %v1273
        %v1306 = vadd.f32 %v1240, %v1274
        %v1307 = vadd.f32 %v1241, %v1275
        %v1308 = vadd.f32 %v1242, %v1276
        %v1309 = vadd.f32 %v1243, %v1277
        %v1310 = vadd.f32 %v1244, %v1278
        %v1311 = vadd.f32 %v1245, %v1279
        %v1312 = vadd.f32 %v1246, %v1280
        %v1313 = vld [vmem:[%s1 + $0x16] sm:$0x1]
        %v1314 = vperm.slane %v1313, 0
        %v1315 = vmul.f32 %v1105, %v1314
        %v1316 = vmul.f32 %v1024, %v1314
        %v1317 = vmul.f32 %v1106, %v1314
        %v1318 = vmul.f32 %v1027, %v1314
        %v1319 = vmul.f32 %v1107, %v1314
        %v1320 = vmul.f32 %v1030, %v1314
        %v1321 = vmul.f32 %v1108, %v1314
        %v1322 = vmul.f32 %v1033, %v1314
        %v1323 = vmul.f32 %v1109, %v1314
        %v1324 = vmul.f32 %v1036, %v1314
        %v1325 = vmul.f32 %v1110, %v1314
        %v1326 = vmul.f32 %v1039, %v1314
        %v1327 = vmul.f32 %v1111, %v1314
        %v1328 = vmul.f32 %v1042, %v1314
        %v1329 = vmul.f32 %v1112, %v1314
        %v1330 = vmul.f32 %v1045, %v1314
        %v1331 = vmul.f32 %v1113, %v1314
        %v1332 = vmul.f32 %v1048, %v1314
        %v1333 = vmul.f32 %v1114, %v1314
        %v1334 = vmul.f32 %v1051, %v1314
        %v1335 = vmul.f32 %v1115, %v1314
        %v1336 = vmul.f32 %v1054, %v1314
        %v1337 = vmul.f32 %v1116, %v1314
        %v1338 = vmul.f32 %v1057, %v1314
        %v1339 = vmul.f32 %v1117, %v1314
        %v1340 = vmul.f32 %v1060, %v1314
        %v1341 = vmul.f32 %v1118, %v1314
        %v1342 = vmul.f32 %v1063, %v1314
        %v1343 = vmul.f32 %v1119, %v1314
        %v1344 = vmul.f32 %v1066, %v1314
        %v1345 = vmul.f32 %v1120, %v1314
        %v1346 = vmul.f32 %v1069, %v1314
        %v1347 = vadd.f32 %v1281, %v1315
        %v1348 = vadd.f32 %v1282, %v1316
        %v1349 = vadd.f32 %v1283, %v1317
        %v1350 = vadd.f32 %v1284, %v1318
        %v1351 = vadd.f32 %v1285, %v1319
        %v1352 = vadd.f32 %v1286, %v1320
        %v1353 = vadd.f32 %v1287, %v1321
        %v1354 = vadd.f32 %v1288, %v1322
        %v1355 = vadd.f32 %v1289, %v1323
        %v1356 = vadd.f32 %v1290, %v1324
        %v1357 = vadd.f32 %v1291, %v1325
        %v1358 = vadd.f32 %v1292, %v1326
        %v1359 = vadd.f32 %v1293, %v1327
        %v1360 = vadd.f32 %v1294, %v1328
        %v1361 = vadd.f32 %v1295, %v1329
        %v1362 = vadd.f32 %v1296, %v1330
        %v1363 = vadd.f32 %v1297, %v1331
        %v1364 = vadd.f32 %v1298, %v1332
        %v1365 = vadd.f32 %v1299, %v1333
        %v1366 = vadd.f32 %v1300, %v1334
        %v1367 = vadd.f32 %v1301, %v1335
        %v1368 = vadd.f32 %v1302, %v1336
        %v1369 = vadd.f32 %v1303, %v1337
        %v1370 = vadd.f32 %v1304, %v1338
        %v1371 = vadd.f32 %v1305, %v1339
        %v1372 = vadd.f32 %v1306, %v1340
        %v1373 = vadd.f32 %v1307, %v1341
        %v1374 = vadd.f32 %v1308, %v1342
        %v1375 = vadd.f32 %v1309, %v1343
        %v1376 = vadd.f32 %v1310, %v1344
        %v1377 = vadd.f32 %v1311, %v1345
        %v1378 = vadd.f32 %v1312, %v1346
        %v1379 = vld [vmem:[%s1 + $0x1d] sm:$0x1]
        %v1380 = vperm.slane %v1379, 0
        %v1381 = vmul.f32 %v1106, %v1380
        %v1382 = vmul.f32 %v1027, %v1380
        %v1383 = vmul.f32 %v1107, %v1380
        %v1384 = vmul.f32 %v1030, %v1380
        %v1385 = vmul.f32 %v1108, %v1380
        %v1386 = vmul.f32 %v1033, %v1380
        %v1387 = vmul.f32 %v1109, %v1380
        %v1388 = vmul.f32 %v1036, %v1380
        %v1389 = vmul.f32 %v1110, %v1380
        %v1390 = vmul.f32 %v1039, %v1380
        %v1391 = vmul.f32 %v1111, %v1380
        %v1392 = vmul.f32 %v1042, %v1380
        %v1393 = vmul.f32 %v1112, %v1380
        %v1394 = vmul.f32 %v1045, %v1380
        %v1395 = vmul.f32 %v1113, %v1380
        %v1396 = vmul.f32 %v1048, %v1380
        %v1397 = vmul.f32 %v1114, %v1380
        %v1398 = vmul.f32 %v1051, %v1380
        %v1399 = vmul.f32 %v1115, %v1380
        %v1400 = vmul.f32 %v1054, %v1380
        %v1401 = vmul.f32 %v1116, %v1380
        %v1402 = vmul.f32 %v1057, %v1380
        %v1403 = vmul.f32 %v1117, %v1380
        %v1404 = vmul.f32 %v1060, %v1380
        %v1405 = vmul.f32 %v1118, %v1380
        %v1406 = vmul.f32 %v1063, %v1380
        %v1407 = vmul.f32 %v1119, %v1380
        %v1408 = vmul.f32 %v1066, %v1380
        %v1409 = vmul.f32 %v1120, %v1380
        %v1410 = vmul.f32 %v1069, %v1380
        %v1411 = vmul.f32 %v1104, %v1380
        %v1412 = vmul.f32 %v1021, %v1380
        %v1413 = vadd.f32 %v1347, %v1381
        %v1414 = vadd.f32 %v1348, %v1382
        %v1415 = vadd.f32 %v1349, %v1383
        %v1416 = vadd.f32 %v1350, %v1384
        %v1417 = vadd.f32 %v1351, %v1385
        %v1418 = vadd.f32 %v1352, %v1386
        %v1419 = vadd.f32 %v1353, %v1387
        %v1420 = vadd.f32 %v1354, %v1388
        %v1421 = vadd.f32 %v1355, %v1389
        %v1422 = vadd.f32 %v1356, %v1390
        %v1423 = vadd.f32 %v1357, %v1391
        %v1424 = vadd.f32 %v1358, %v1392
        %v1425 = vadd.f32 %v1359, %v1393
        %v1426 = vadd.f32 %v1360, %v1394
        %v1427 = vadd.f32 %v1361, %v1395
        %v1428 = vadd.f32 %v1362, %v1396
        %v1429 = vadd.f32 %v1363, %v1397
        %v1430 = vadd.f32 %v1364, %v1398
        %v1431 = vadd.f32 %v1365, %v1399
        %v1432 = vadd.f32 %v1366, %v1400
        %v1433 = vadd.f32 %v1367, %v1401
        %v1434 = vadd.f32 %v1368, %v1402
        %v1435 = vadd.f32 %v1369, %v1403
        %v1436 = vadd.f32 %v1370, %v1404
        %v1437 = vadd.f32 %v1371, %v1405
        %v1438 = vadd.f32 %v1372, %v1406
        %v1439 = vadd.f32 %v1373, %v1407
        %v1440 = vadd.f32 %v1374, %v1408
        %v1441 = vadd.f32 %v1375, %v1409
        %v1442 = vadd.f32 %v1376, %v1410
        %v1443 = vadd.f32 %v1377, %v1411
        %v1444 = vadd.f32 %v1378, %v1412
        %v1445 = vld [vmem:[%s1 + $0x24] sm:$0x1]
        %v1446 = vperm.slane %v1445, 0
        %v1447 = vmul.f32 %v1107, %v1446
        %v1448 = vmul.f32 %v1030, %v1446
        %v1449 = vmul.f32 %v1108, %v1446
        %v1450 = vmul.f32 %v1033, %v1446
        %v1451 = vmul.f32 %v1109, %v1446
        %v1452 = vmul.f32 %v1036, %v1446
        %v1453 = vmul.f32 %v1110, %v1446
        %v1454 = vmul.f32 %v1039, %v1446
        %v1455 = vmul.f32 %v1111, %v1446
        %v1456 = vmul.f32 %v1042, %v1446
        %v1457 = vmul.f32 %v1112, %v1446
        %v1458 = vmul.f32 %v1045, %v1446
        %v1459 = vmul.f32 %v1113, %v1446
        %v1460 = vmul.f32 %v1048, %v1446
        %v1461 = vmul.f32 %v1114, %v1446
        %v1462 = vmul.f32 %v1051, %v1446
        %v1463 = vmul.f32 %v1115, %v1446
        %v1464 = vmul.f32 %v1054, %v1446
        %v1465 = vmul.f32 %v1116, %v1446
        %v1466 = vmul.f32 %v1057, %v1446
        %v1467 = vmul.f32 %v1117, %v1446
        %v1468 = vmul.f32 %v1060, %v1446
        %v1469 = vmul.f32 %v1118, %v1446
        %v1470 = vmul.f32 %v1063, %v1446
        %v1471 = vmul.f32 %v1119, %v1446
        %v1472 = vmul.f32 %v1066, %v1446
        %v1473 = vmul.f32 %v1120, %v1446
        %v1474 = vmul.f32 %v1069, %v1446
        %v1475 = vmul.f32 %v1104, %v1446
        %v1476 = vmul.f32 %v1021, %v1446
        %v1477 = vadd.f32 %v1413, %v1447
        %v1478 = vadd.f32 %v1414, %v1448
        %v1479 = vadd.f32 %v1415, %v1449
        %v1480 = vadd.f32 %v1416, %v1450
        %v1481 = vadd.f32 %v1417, %v1451
        %v1482 = vadd.f32 %v1418, %v1452
        %v1483 = vadd.f32 %v1419, %v1453
        %v1484 = vadd.f32 %v1420, %v1454
        %v1485 = vadd.f32 %v1421, %v1455
        %v1486 = vadd.f32 %v1422, %v1456
        %v1487 = vadd.f32 %v1423, %v1457
        %v1488 = vadd.f32 %v1424, %v1458
        %v1489 = vadd.f32 %v1425, %v1459
        %v1490 = vadd.f32 %v1426, %v1460
        %v1491 = vadd.f32 %v1427, %v1461
        %v1492 = vadd.f32 %v1428, %v1462
        %v1493 = vadd.f32 %v1429, %v1463
        %v1494 = vadd.f32 %v1430, %v1464
        %v1495 = vadd.f32 %v1431, %v1465
        %v1496 = vadd.f32 %v1432, %v1466
        %v1497 = vadd.f32 %v1433, %v1467
        %v1498 = vadd.f32 %v1434, %v1468
        %v1499 = vadd.f32 %v1435, %v1469
        %v1500 = vadd.f32 %v1436, %v1470
        %v1501 = vadd.f32 %v1437, %v1471
        %v1502 = vadd.f32 %v1438, %v1472
        %v1503 = vadd.f32 %v1439, %v1473
        %v1504 = vadd.f32 %v1440, %v1474
        %v1505 = vadd.f32 %v1441, %v1475
        %v1506 = vadd.f32 %v1442, %v1476
        %v1507 = vadd.f32 %v1443, %v1475
        %v1508 = vadd.f32 %v1444, %v1476
        %v1509 = vld [vmem:[%s1 + $0x2b] sm:$0x1]
        %v1510 = vperm.slane %v1509, 0
        %v1511 = vmul.f32 %v1108, %v1510
        %v1512 = vmul.f32 %v1033, %v1510
        %v1513 = vmul.f32 %v1109, %v1510
        %v1514 = vmul.f32 %v1036, %v1510
        %v1515 = vmul.f32 %v1110, %v1510
        %v1516 = vmul.f32 %v1039, %v1510
        %v1517 = vmul.f32 %v1111, %v1510
        %v1518 = vmul.f32 %v1042, %v1510
        %v1519 = vmul.f32 %v1112, %v1510
        %v1520 = vmul.f32 %v1045, %v1510
        %v1521 = vmul.f32 %v1113, %v1510
        %v1522 = vmul.f32 %v1048, %v1510
        %v1523 = vmul.f32 %v1114, %v1510
        %v1524 = vmul.f32 %v1051, %v1510
        %v1525 = vmul.f32 %v1115, %v1510
        %v1526 = vmul.f32 %v1054, %v1510
        %v1527 = vmul.f32 %v1116, %v1510
        %v1528 = vmul.f32 %v1057, %v1510
        %v1529 = vmul.f32 %v1117, %v1510
        %v1530 = vmul.f32 %v1060, %v1510
        %v1531 = vmul.f32 %v1118, %v1510
        %v1532 = vmul.f32 %v1063, %v1510
        %v1533 = vmul.f32 %v1119, %v1510
        %v1534 = vmul.f32 %v1066, %v1510
        %v1535 = vmul.f32 %v1120, %v1510
        %v1536 = vmul.f32 %v1069, %v1510
        %v1537 = vmul.f32 %v1104, %v1510
        %v1538 = vmul.f32 %v1021, %v1510
        %v1539 = vadd.f32 %v1477, %v1511
        %v1540 = vadd.f32 %v1478, %v1512
        %v1541 = vadd.f32 %v1479, %v1513
        %v1542 = vadd.f32 %v1480, %v1514
        %v1543 = vadd.f32 %v1481, %v1515
        %v1544 = vadd.f32 %v1482, %v1516
        %v1545 = vadd.f32 %v1483, %v1517
        %v1546 = vadd.f32 %v1484, %v1518
        %v1547 = vadd.f32 %v1485, %v1519
        %v1548 = vadd.f32 %v1486, %v1520
        %v1549 = vadd.f32 %v1487, %v1521
        %v1550 = vadd.f32 %v1488, %v1522
        %v1551 = vadd.f32 %v1489, %v1523
        %v1552 = vadd.f32 %v1490, %v1524
        %v1553 = vadd.f32 %v1491, %v1525
        %v1554 = vadd.f32 %v1492, %v1526
        %v1555 = vadd.f32 %v1493, %v1527
        %v1556 = vadd.f32 %v1494, %v1528
        %v1557 = vadd.f32 %v1495, %v1529
        %v1558 = vadd.f32 %v1496, %v1530
        %v1559 = vadd.f32 %v1497, %v1531
        %v1560 = vadd.f32 %v1498, %v1532
        %v1561 = vadd.f32 %v1499, %v1533
        %v1562 = vadd.f32 %v1500, %v1534
        %v1563 = vadd.f32 %v1501, %v1535
        %v1564 = vadd.f32 %v1502, %v1536
        %v1565 = vadd.f32 %v1503, %v1537
        %v1566 = vadd.f32 %v1504, %v1538
        %v1567 = vadd.f32 %v1505, %v1537
        %v1568 = vadd.f32 %v1506, %v1538
        %v1569 = vadd.f32 %v1507, %v1537
        %v1570 = vadd.f32 %v1508, %v1538
        %vm1571 = vcmask 1040384
        %v1572 = vrot.slane 0.0, 7
        %v1573 = vsel %vm1571, %v1572, %v1572
        %v1574 = vrot.slane %v408, 7
        %v1575 = vrot.slane %v409, 7
        %v1576 = vsel %vm1571, %v1574, %v1575
        %v1577 = vrot.slane %v410, 7
        %v1578 = vrot.slane %v411, 7
        %v1579 = vsel %vm1571, %v1577, %v1578
        %v1580 = vrot.slane %v412, 7
        %v1581 = vrot.slane %v413, 7
        %v1582 = vsel %vm1571, %v1580, %v1581
        %v1583 = vrot.slane %v414, 7
        %v1584 = vrot.slane %v415, 7
        %v1585 = vsel %vm1571, %v1583, %v1584
        %v1586 = vrot.slane %v416, 7
        %v1587 = vrot.slane %v417, 7
        %v1588 = vsel %vm1571, %v1586, %v1587
        %v1589 = vrot.slane %v418, 7
        %v1590 = vrot.slane %v419, 7
        %v1591 = vsel %vm1571, %v1589, %v1590
        %v1592 = vrot.slane %v420, 7
        %v1593 = vrot.slane %v421, 7
        %v1594 = vsel %vm1571, %v1592, %v1593
        %v1595 = vrot.slane %v422, 7
        %v1596 = vrot.slane %v423, 7
        %v1597 = vsel %vm1571, %v1595, %v1596
        %v1598 = vrot.slane %v424, 7
        %v1599 = vrot.slane %v425, 7
        %v1600 = vsel %vm1571, %v1598, %v1599
        %v1601 = vrot.slane %v426, 7
        %v1602 = vrot.slane %v427, 7
        %v1603 = vsel %vm1571, %v1601, %v1602
        %v1604 = vrot.slane %v428, 7
        %v1605 = vrot.slane %v429, 7
        %v1606 = vsel %vm1571, %v1604, %v1605
        %v1607 = vrot.slane %v430, 7
        %v1608 = vrot.slane %v431, 7
        %v1609 = vsel %vm1571, %v1607, %v1608
        %v1610 = vrot.slane %v432, 7
        %v1611 = vrot.slane %v433, 7
        %v1612 = vsel %vm1571, %v1610, %v1611
        %v1613 = vrot.slane %v434, 7
        %v1614 = vrot.slane %v435, 7
        %v1615 = vsel %vm1571, %v1613, %v1614
        %v1616 = vrot.slane %v436, 7
        %v1617 = vrot.slane %v437, 7
        %v1618 = vsel %vm1571, %v1616, %v1617
        %v1619 = vrot.slane %v438, 7
        %v1620 = vrot.slane %v439, 7
        %v1621 = vsel %vm1571, %v1619, %v1620
        %v1656 = vsel %vm1571, 0.0, %v1572
        %v1657 = vsel %vm1571, 0.0, %v1574
        %v1658 = vsel %vm1571, 0.0, %v1577
        %v1659 = vsel %vm1571, 0.0, %v1580
        %v1660 = vsel %vm1571, 0.0, %v1583
        %v1661 = vsel %vm1571, 0.0, %v1586
        %v1662 = vsel %vm1571, 0.0, %v1589
        %v1663 = vsel %vm1571, 0.0, %v1592
        %v1664 = vsel %vm1571, 0.0, %v1595
        %v1665 = vsel %vm1571, 0.0, %v1598
        %v1666 = vsel %vm1571, 0.0, %v1601
        %v1667 = vsel %vm1571, 0.0, %v1604
        %v1668 = vsel %vm1571, 0.0, %v1607
        %v1669 = vsel %vm1571, 0.0, %v1610
        %v1670 = vsel %vm1571, 0.0, %v1613
        %v1671 = vsel %vm1571, 0.0, %v1616
        %v1672 = vsel %vm1571, 0.0, %v1619
        %v1673 = vld [vmem:[%s1 + $0x2] sm:$0x1]
        %v1674 = vperm.slane %v1673, 0
        %v1675 = vmul.f32 %v1656, %v1674
        %v1676 = vmul.f32 %v1573, %v1674
        %v1677 = vmul.f32 %v1657, %v1674
        %v1678 = vmul.f32 %v1576, %v1674
        %v1679 = vmul.f32 %v1658, %v1674
        %v1680 = vmul.f32 %v1579, %v1674
        %v1681 = vmul.f32 %v1659, %v1674
        %v1682 = vmul.f32 %v1582, %v1674
        %v1683 = vmul.f32 %v1660, %v1674
        %v1684 = vmul.f32 %v1585, %v1674
        %v1685 = vmul.f32 %v1661, %v1674
        %v1686 = vmul.f32 %v1588, %v1674
        %v1687 = vmul.f32 %v1662, %v1674
        %v1688 = vmul.f32 %v1591, %v1674
        %v1689 = vmul.f32 %v1663, %v1674
        %v1690 = vmul.f32 %v1594, %v1674
        %v1691 = vmul.f32 %v1664, %v1674
        %v1692 = vmul.f32 %v1597, %v1674
        %v1693 = vmul.f32 %v1665, %v1674
        %v1694 = vmul.f32 %v1600, %v1674
        %v1695 = vmul.f32 %v1666, %v1674
        %v1696 = vmul.f32 %v1603, %v1674
        %v1697 = vmul.f32 %v1667, %v1674
        %v1698 = vmul.f32 %v1606, %v1674
        %v1699 = vmul.f32 %v1668, %v1674
        %v1700 = vmul.f32 %v1609, %v1674
        %v1701 = vmul.f32 %v1669, %v1674
        %v1702 = vmul.f32 %v1612, %v1674
        %v1703 = vadd.f32 %v1539, %v1675
        %v1704 = vadd.f32 %v1540, %v1676
        %v1705 = vadd.f32 %v1541, %v1675
        %v1706 = vadd.f32 %v1542, %v1676
        %v1707 = vadd.f32 %v1543, %v1675
        %v1708 = vadd.f32 %v1544, %v1676
        %v1709 = vadd.f32 %v1545, %v1677
        %v1710 = vadd.f32 %v1546, %v1678
        %v1711 = vadd.f32 %v1547, %v1679
        %v1712 = vadd.f32 %v1548, %v1680
        %v1713 = vadd.f32 %v1549, %v1681
        %v1714 = vadd.f32 %v1550, %v1682
        %v1715 = vadd.f32 %v1551, %v1683
        %v1716 = vadd.f32 %v1552, %v1684
        %v1717 = vadd.f32 %v1553, %v1685
        %v1718 = vadd.f32 %v1554, %v1686
        %v1719 = vadd.f32 %v1555, %v1687
        %v1720 = vadd.f32 %v1556, %v1688
        %v1721 = vadd.f32 %v1557, %v1689
        %v1722 = vadd.f32 %v1558, %v1690
        %v1723 = vadd.f32 %v1559, %v1691
        %v1724 = vadd.f32 %v1560, %v1692
        %v1725 = vadd.f32 %v1561, %v1693
        %v1726 = vadd.f32 %v1562, %v1694
        %v1727 = vadd.f32 %v1563, %v1695
        %v1728 = vadd.f32 %v1564, %v1696
        %v1729 = vadd.f32 %v1565, %v1697
        %v1730 = vadd.f32 %v1566, %v1698
        %v1731 = vadd.f32 %v1567, %v1699
        %v1732 = vadd.f32 %v1568, %v1700
        %v1733 = vadd.f32 %v1569, %v1701
        %v1734 = vadd.f32 %v1570, %v1702
        %v1735 = vld [vmem:[%s1 + $0x9] sm:$0x1]
        %v1736 = vperm.slane %v1735, 0
        %v1737 = vmul.f32 %v1656, %v1736
        %v1738 = vmul.f32 %v1573, %v1736
        %v1739 = vmul.f32 %v1657, %v1736
        %v1740 = vmul.f32 %v1576, %v1736
        %v1741 = vmul.f32 %v1658, %v1736
        %v1742 = vmul.f32 %v1579, %v1736
        %v1743 = vmul.f32 %v1659, %v1736
        %v1744 = vmul.f32 %v1582, %v1736
        %v1745 = vmul.f32 %v1660, %v1736
        %v1746 = vmul.f32 %v1585, %v1736
        %v1747 = vmul.f32 %v1661, %v1736
        %v1748 = vmul.f32 %v1588, %v1736
        %v1749 = vmul.f32 %v1662, %v1736
        %v1750 = vmul.f32 %v1591, %v1736
        %v1751 = vmul.f32 %v1663, %v1736
        %v1752 = vmul.f32 %v1594, %v1736
        %v1753 = vmul.f32 %v1664, %v1736
        %v1754 = vmul.f32 %v1597, %v1736
        %v1755 = vmul.f32 %v1665, %v1736
        %v1756 = vmul.f32 %v1600, %v1736
        %v1757 = vmul.f32 %v1666, %v1736
        %v1758 = vmul.f32 %v1603, %v1736
        %v1759 = vmul.f32 %v1667, %v1736
        %v1760 = vmul.f32 %v1606, %v1736
        %v1761 = vmul.f32 %v1668, %v1736
        %v1762 = vmul.f32 %v1609, %v1736
        %v1763 = vmul.f32 %v1669, %v1736
        %v1764 = vmul.f32 %v1612, %v1736
        %v1765 = vmul.f32 %v1670, %v1736
        %v1766 = vmul.f32 %v1615, %v1736
        %v1767 = vadd.f32 %v1703, %v1737
        %v1768 = vadd.f32 %v1704, %v1738
        %v1769 = vadd.f32 %v1705, %v1737
        %v1770 = vadd.f32 %v1706, %v1738
        %v1771 = vadd.f32 %v1707, %v1739
        %v1772 = vadd.f32 %v1708, %v1740
        %v1773 = vadd.f32 %v1709, %v1741
        %v1774 = vadd.f32 %v1710, %v1742
        %v1775 = vadd.f32 %v1711, %v1743
        %v1776 = vadd.f32 %v1712, %v1744
        %v1777 = vadd.f32 %v1713, %v1745
        %v1778 = vadd.f32 %v1714, %v1746
        %v1779 = vadd.f32 %v1715, %v1747
        %v1780 = vadd.f32 %v1716, %v1748
        %v1781 = vadd.f32 %v1717, %v1749
        %v1782 = vadd.f32 %v1718, %v1750
        %v1783 = vadd.f32 %v1719, %v1751
        %v1784 = vadd.f32 %v1720, %v1752
        %v1785 = vadd.f32 %v1721, %v1753
        %v1786 = vadd.f32 %v1722, %v1754
        %v1787 = vadd.f32 %v1723, %v1755
        %v1788 = vadd.f32 %v1724, %v1756
        %v1789 = vadd.f32 %v1725, %v1757
        %v1790 = vadd.f32 %v1726, %v1758
        %v1791 = vadd.f32 %v1727, %v1759
        %v1792 = vadd.f32 %v1728, %v1760
        %v1793 = vadd.f32 %v1729, %v1761
        %v1794 = vadd.f32 %v1730, %v1762
        %v1795 = vadd.f32 %v1731, %v1763
        %v1796 = vadd.f32 %v1732, %v1764
        %v1797 = vadd.f32 %v1733, %v1765
        %v1798 = vadd.f32 %v1734, %v1766
        %v1799 = vld [vmem:[%s1 + $0x10] sm:$0x1]
        %v1800 = vperm.slane %v1799, 0
        %v1801 = vmul.f32 %v1656, %v1800
        %v1802 = vmul.f32 %v1573, %v1800
        %v1803 = vmul.f32 %v1657, %v1800
        %v1804 = vmul.f32 %v1576, %v1800
        %v1805 = vmul.f32 %v1658, %v1800
        %v1806 = vmul.f32 %v1579, %v1800
        %v1807 = vmul.f32 %v1659, %v1800
        %v1808 = vmul.f32 %v1582, %v1800
        %v1809 = vmul.f32 %v1660, %v1800
        %v1810 = vmul.f32 %v1585, %v1800
        %v1811 = vmul.f32 %v1661, %v1800
        %v1812 = vmul.f32 %v1588, %v1800
        %v1813 = vmul.f32 %v1662, %v1800
        %v1814 = vmul.f32 %v1591, %v1800
        %v1815 = vmul.f32 %v1663, %v1800
        %v1816 = vmul.f32 %v1594, %v1800
        %v1817 = vmul.f32 %v1664, %v1800
        %v1818 = vmul.f32 %v1597, %v1800
        %v1819 = vmul.f32 %v1665, %v1800
        %v1820 = vmul.f32 %v1600, %v1800
        %v1821 = vmul.f32 %v1666, %v1800
        %v1822 = vmul.f32 %v1603, %v1800
        %v1823 = vmul.f32 %v1667, %v1800
        %v1824 = vmul.f32 %v1606, %v1800
        %v1825 = vmul.f32 %v1668, %v1800
        %v1826 = vmul.f32 %v1609, %v1800
        %v1827 = vmul.f32 %v1669, %v1800
        %v1828 = vmul.f32 %v1612, %v1800
        %v1829 = vmul.f32 %v1670, %v1800
        %v1830 = vmul.f32 %v1615, %v1800
        %v1831 = vmul.f32 %v1671, %v1800
        %v1832 = vmul.f32 %v1618, %v1800
        %v1833 = vadd.f32 %v1767, %v1801
        %v1834 = vadd.f32 %v1768, %v1802
        %v1835 = vadd.f32 %v1769, %v1803
        %v1836 = vadd.f32 %v1770, %v1804
        %v1837 = vadd.f32 %v1771, %v1805
        %v1838 = vadd.f32 %v1772, %v1806
        %v1839 = vadd.f32 %v1773, %v1807
        %v1840 = vadd.f32 %v1774, %v1808
        %v1841 = vadd.f32 %v1775, %v1809
        %v1842 = vadd.f32 %v1776, %v1810
        %v1843 = vadd.f32 %v1777, %v1811
        %v1844 = vadd.f32 %v1778, %v1812
        %v1845 = vadd.f32 %v1779, %v1813
        %v1846 = vadd.f32 %v1780, %v1814
        %v1847 = vadd.f32 %v1781, %v1815
        %v1848 = vadd.f32 %v1782, %v1816
        %v1849 = vadd.f32 %v1783, %v1817
        %v1850 = vadd.f32 %v1784, %v1818
        %v1851 = vadd.f32 %v1785, %v1819
        %v1852 = vadd.f32 %v1786, %v1820
        %v1853 = vadd.f32 %v1787, %v1821
        %v1854 = vadd.f32 %v1788, %v1822
        %v1855 = vadd.f32 %v1789, %v1823
        %v1856 = vadd.f32 %v1790, %v1824
        %v1857 = vadd.f32 %v1791, %v1825
        %v1858 = vadd.f32 %v1792, %v1826
        %v1859 = vadd.f32 %v1793, %v1827
        %v1860 = vadd.f32 %v1794, %v1828
        %v1861 = vadd.f32 %v1795, %v1829
        %v1862 = vadd.f32 %v1796, %v1830
        %v1863 = vadd.f32 %v1797, %v1831
        %v1864 = vadd.f32 %v1798, %v1832
        %v1865 = vld [vmem:[%s1 + $0x17] sm:$0x1]
        %v1866 = vperm.slane %v1865, 0
        %v1867 = vmul.f32 %v1657, %v1866
        %v1868 = vmul.f32 %v1576, %v1866
        %v1869 = vmul.f32 %v1658, %v1866
        %v1870 = vmul.f32 %v1579, %v1866
        %v1871 = vmul.f32 %v1659, %v1866
        %v1872 = vmul.f32 %v1582, %v1866
        %v1873 = vmul.f32 %v1660, %v1866
        %v1874 = vmul.f32 %v1585, %v1866
        %v1875 = vmul.f32 %v1661, %v1866
        %v1876 = vmul.f32 %v1588, %v1866
        %v1877 = vmul.f32 %v1662, %v1866
        %v1878 = vmul.f32 %v1591, %v1866
        %v1879 = vmul.f32 %v1663, %v1866
        %v1880 = vmul.f32 %v1594, %v1866
        %v1881 = vmul.f32 %v1664, %v1866
        %v1882 = vmul.f32 %v1597, %v1866
        %v1883 = vmul.f32 %v1665, %v1866
        %v1884 = vmul.f32 %v1600, %v1866
        %v1885 = vmul.f32 %v1666, %v1866
        %v1886 = vmul.f32 %v1603, %v1866
        %v1887 = vmul.f32 %v1667, %v1866
        %v1888 = vmul.f32 %v1606, %v1866
        %v1889 = vmul.f32 %v1668, %v1866
        %v1890 = vmul.f32 %v1609, %v1866
        %v1891 = vmul.f32 %v1669, %v1866
        %v1892 = vmul.f32 %v1612, %v1866
        %v1893 = vmul.f32 %v1670, %v1866
        %v1894 = vmul.f32 %v1615, %v1866
        %v1895 = vmul.f32 %v1671, %v1866
        %v1896 = vmul.f32 %v1618, %v1866
        %v1897 = vmul.f32 %v1672, %v1866
        %v1898 = vmul.f32 %v1621, %v1866
        %v1899 = vadd.f32 %v1833, %v1867
        %v1900 = vadd.f32 %v1834, %v1868
        %v1901 = vadd.f32 %v1835, %v1869
        %v1902 = vadd.f32 %v1836, %v1870
        %v1903 = vadd.f32 %v1837, %v1871
        %v1904 = vadd.f32 %v1838, %v1872
        %v1905 = vadd.f32 %v1839, %v1873
        %v1906 = vadd.f32 %v1840, %v1874
        %v1907 = vadd.f32 %v1841, %v1875
        %v1908 = vadd.f32 %v1842, %v1876
        %v1909 = vadd.f32 %v1843, %v1877
        %v1910 = vadd.f32 %v1844, %v1878
        %v1911 = vadd.f32 %v1845, %v1879
        %v1912 = vadd.f32 %v1846, %v1880
        %v1913 = vadd.f32 %v1847, %v1881
        %v1914 = vadd.f32 %v1848, %v1882
        %v1915 = vadd.f32 %v1849, %v1883
        %v1916 = vadd.f32 %v1850, %v1884
        %v1917 = vadd.f32 %v1851, %v1885
        %v1918 = vadd.f32 %v1852, %v1886
        %v1919 = vadd.f32 %v1853, %v1887
        %v1920 = vadd.f32 %v1854, %v1888
        %v1921 = vadd.f32 %v1855, %v1889
        %v1922 = vadd.f32 %v1856, %v1890
        %v1923 = vadd.f32 %v1857, %v1891
        %v1924 = vadd.f32 %v1858, %v1892
        %v1925 = vadd.f32 %v1859, %v1893
        %v1926 = vadd.f32 %v1860, %v1894
        %v1927 = vadd.f32 %v1861, %v1895
        %v1928 = vadd.f32 %v1862, %v1896
        %v1929 = vadd.f32 %v1863, %v1897
        %v1930 = vadd.f32 %v1864, %v1898
        %v1931 = vld [vmem:[%s1 + $0x1e] sm:$0x1]
        %v1932 = vperm.slane %v1931, 0
        %v1933 = vmul.f32 %v1658, %v1932
        %v1934 = vmul.f32 %v1579, %v1932
        %v1935 = vmul.f32 %v1659, %v1932
        %v1936 = vmul.f32 %v1582, %v1932
        %v1937 = vmul.f32 %v1660, %v1932
        %v1938 = vmul.f32 %v1585, %v1932
        %v1939 = vmul.f32 %v1661, %v1932
        %v1940 = vmul.f32 %v1588, %v1932
        %v1941 = vmul.f32 %v1662, %v1932
        %v1942 = vmul.f32 %v1591, %v1932
        %v1943 = vmul.f32 %v1663, %v1932
        %v1944 = vmul.f32 %v1594, %v1932
        %v1945 = vmul.f32 %v1664, %v1932
        %v1946 = vmul.f32 %v1597, %v1932
        %v1947 = vmul.f32 %v1665, %v1932
        %v1948 = vmul.f32 %v1600, %v1932
        %v1949 = vmul.f32 %v1666, %v1932
        %v1950 = vmul.f32 %v1603, %v1932
        %v1951 = vmul.f32 %v1667, %v1932
        %v1952 = vmul.f32 %v1606, %v1932
        %v1953 = vmul.f32 %v1668, %v1932
        %v1954 = vmul.f32 %v1609, %v1932
        %v1955 = vmul.f32 %v1669, %v1932
        %v1956 = vmul.f32 %v1612, %v1932
        %v1957 = vmul.f32 %v1670, %v1932
        %v1958 = vmul.f32 %v1615, %v1932
        %v1959 = vmul.f32 %v1671, %v1932
        %v1960 = vmul.f32 %v1618, %v1932
        %v1961 = vmul.f32 %v1672, %v1932
        %v1962 = vmul.f32 %v1621, %v1932
        %v1963 = vmul.f32 %v1656, %v1932
        %v1964 = vmul.f32 %v1573, %v1932
        %v1965 = vadd.f32 %v1899, %v1933
        %v1966 = vadd.f32 %v1900, %v1934
        %v1967 = vadd.f32 %v1901, %v1935
        %v1968 = vadd.f32 %v1902, %v1936
        %v1969 = vadd.f32 %v1903, %v1937
        %v1970 = vadd.f32 %v1904, %v1938
        %v1971 = vadd.f32 %v1905, %v1939
        %v1972 = vadd.f32 %v1906, %v1940
        %v1973 = vadd.f32 %v1907, %v1941
        %v1974 = vadd.f32 %v1908, %v1942
        %v1975 = vadd.f32 %v1909, %v1943
        %v1976 = vadd.f32 %v1910, %v1944
        %v1977 = vadd.f32 %v1911, %v1945
        %v1978 = vadd.f32 %v1912, %v1946
        %v1979 = vadd.f32 %v1913, %v1947
        %v1980 = vadd.f32 %v1914, %v1948
        %v1981 = vadd.f32 %v1915, %v1949
        %v1982 = vadd.f32 %v1916, %v1950
        %v1983 = vadd.f32 %v1917, %v1951
        %v1984 = vadd.f32 %v1918, %v1952
        %v1985 = vadd.f32 %v1919, %v1953
        %v1986 = vadd.f32 %v1920, %v1954
        %v1987 = vadd.f32 %v1921, %v1955
        %v1988 = vadd.f32 %v1922, %v1956
        %v1989 = vadd.f32 %v1923, %v1957
        %v1990 = vadd.f32 %v1924, %v1958
        %v1991 = vadd.f32 %v1925, %v1959
        %v1992 = vadd.f32 %v1926, %v1960
        %v1993 = vadd.f32 %v1927, %v1961
        %v1994 = vadd.f32 %v1928, %v1962
        %v1995 = vadd.f32 %v1929, %v1963
        %v1996 = vadd.f32 %v1930, %v1964
        %v1997 = vld [vmem:[%s1 + $0x25] sm:$0x1]
        %v1998 = vperm.slane %v1997, 0
        %v1999 = vmul.f32 %v1659, %v1998
        %v2000 = vmul.f32 %v1582, %v1998
        %v2001 = vmul.f32 %v1660, %v1998
        %v2002 = vmul.f32 %v1585, %v1998
        %v2003 = vmul.f32 %v1661, %v1998
        %v2004 = vmul.f32 %v1588, %v1998
        %v2005 = vmul.f32 %v1662, %v1998
        %v2006 = vmul.f32 %v1591, %v1998
        %v2007 = vmul.f32 %v1663, %v1998
        %v2008 = vmul.f32 %v1594, %v1998
        %v2009 = vmul.f32 %v1664, %v1998
        %v2010 = vmul.f32 %v1597, %v1998
        %v2011 = vmul.f32 %v1665, %v1998
        %v2012 = vmul.f32 %v1600, %v1998
        %v2013 = vmul.f32 %v1666, %v1998
        %v2014 = vmul.f32 %v1603, %v1998
        %v2015 = vmul.f32 %v1667, %v1998
        %v2016 = vmul.f32 %v1606, %v1998
        %v2017 = vmul.f32 %v1668, %v1998
        %v2018 = vmul.f32 %v1609, %v1998
        %v2019 = vmul.f32 %v1669, %v1998
        %v2020 = vmul.f32 %v1612, %v1998
        %v2021 = vmul.f32 %v1670, %v1998
        %v2022 = vmul.f32 %v1615, %v1998
        %v2023 = vmul.f32 %v1671, %v1998
        %v2024 = vmul.f32 %v1618, %v1998
        %v2025 = vmul.f32 %v1672, %v1998
        %v2026 = vmul.f32 %v1621, %v1998
        %v2027 = vmul.f32 %v1656, %v1998
        %v2028 = vmul.f32 %v1573, %v1998
        %v2029 = vadd.f32 %v1965, %v1999
        %v2030 = vadd.f32 %v1966, %v2000
        %v2031 = vadd.f32 %v1967, %v2001
        %v2032 = vadd.f32 %v1968, %v2002
        %v2033 = vadd.f32 %v1969, %v2003
        %v2034 = vadd.f32 %v1970, %v2004
        %v2035 = vadd.f32 %v1971, %v2005
        %v2036 = vadd.f32 %v1972, %v2006
        %v2037 = vadd.f32 %v1973, %v2007
        %v2038 = vadd.f32 %v1974, %v2008
        %v2039 = vadd.f32 %v1975, %v2009
        %v2040 = vadd.f32 %v1976, %v2010
        %v2041 = vadd.f32 %v1977, %v2011
        %v2042 = vadd.f32 %v1978, %v2012
        %v2043 = vadd.f32 %v1979, %v2013
        %v2044 = vadd.f32 %v1980, %v2014
        %v2045 = vadd.f32 %v1981, %v2015
        %v2046 = vadd.f32 %v1982, %v2016
        %v2047 = vadd.f32 %v1983, %v2017
        %v2048 = vadd.f32 %v1984, %v2018
        %v2049 = vadd.f32 %v1985, %v2019
        %v2050 = vadd.f32 %v1986, %v2020
        %v2051 = vadd.f32 %v1987, %v2021
        %v2052 = vadd.f32 %v1988, %v2022
        %v2053 = vadd.f32 %v1989, %v2023
        %v2054 = vadd.f32 %v1990, %v2024
        %v2055 = vadd.f32 %v1991, %v2025
        %v2056 = vadd.f32 %v1992, %v2026
        %v2057 = vadd.f32 %v1993, %v2027
        %v2058 = vadd.f32 %v1994, %v2028
        %v2059 = vadd.f32 %v1995, %v2027
        %v2060 = vadd.f32 %v1996, %v2028
        %v2061 = vld [vmem:[%s1 + $0x2c] sm:$0x1]
        %v2062 = vperm.slane %v2061, 0
        %v2063 = vmul.f32 %v1660, %v2062
        %v2064 = vmul.f32 %v1585, %v2062
        %v2065 = vmul.f32 %v1661, %v2062
        %v2066 = vmul.f32 %v1588, %v2062
        %v2067 = vmul.f32 %v1662, %v2062
        %v2068 = vmul.f32 %v1591, %v2062
        %v2069 = vmul.f32 %v1663, %v2062
        %v2070 = vmul.f32 %v1594, %v2062
        %v2071 = vmul.f32 %v1664, %v2062
        %v2072 = vmul.f32 %v1597, %v2062
        %v2073 = vmul.f32 %v1665, %v2062
        %v2074 = vmul.f32 %v1600, %v2062
        %v2075 = vmul.f32 %v1666, %v2062
        %v2076 = vmul.f32 %v1603, %v2062
        %v2077 = vmul.f32 %v1667, %v2062
        %v2078 = vmul.f32 %v1606, %v2062
        %v2079 = vmul.f32 %v1668, %v2062
        %v2080 = vmul.f32 %v1609, %v2062
        %v2081 = vmul.f32 %v1669, %v2062
        %v2082 = vmul.f32 %v1612, %v2062
        %v2083 = vmul.f32 %v1670, %v2062
        %v2084 = vmul.f32 %v1615, %v2062
        %v2085 = vmul.f32 %v1671, %v2062
        %v2086 = vmul.f32 %v1618, %v2062
        %v2087 = vmul.f32 %v1672, %v2062
        %v2088 = vmul.f32 %v1621, %v2062
        %v2089 = vmul.f32 %v1656, %v2062
        %v2090 = vmul.f32 %v1573, %v2062
        %v2091 = vadd.f32 %v2029, %v2063
        %v2092 = vadd.f32 %v2030, %v2064
        %v2093 = vadd.f32 %v2031, %v2065
        %v2094 = vadd.f32 %v2032, %v2066
        %v2095 = vadd.f32 %v2033, %v2067
        %v2096 = vadd.f32 %v2034, %v2068
        %v2097 = vadd.f32 %v2035, %v2069
        %v2098 = vadd.f32 %v2036, %v2070
        %v2099 = vadd.f32 %v2037, %v2071
        %v2100 = vadd.f32 %v2038, %v2072
        %v2101 = vadd.f32 %v2039, %v2073
        %v2102 = vadd.f32 %v2040, %v2074
        %v2103 = vadd.f32 %v2041, %v2075
        %v2104 = vadd.f32 %v2042, %v2076
        %v2105 = vadd.f32 %v2043, %v2077
        %v2106 = vadd.f32 %v2044, %v2078
        %v2107 = vadd.f32 %v2045, %v2079
        %v2108 = vadd.f32 %v2046, %v2080
        %v2109 = vadd.f32 %v2047, %v2081
        %v2110 = vadd.f32 %v2048, %v2082
        %v2111 = vadd.f32 %v2049, %v2083
        %v2112 = vadd.f32 %v2050, %v2084
        %v2113 = vadd.f32 %v2051, %v2085
        %v2114 = vadd.f32 %v2052, %v2086
        %v2115 = vadd.f32 %v2053, %v2087
        %v2116 = vadd.f32 %v2054, %v2088
        %v2117 = vadd.f32 %v2055, %v2089
        %v2118 = vadd.f32 %v2056, %v2090
        %v2119 = vadd.f32 %v2057, %v2089
        %v2120 = vadd.f32 %v2058, %v2090
        %v2121 = vadd.f32 %v2059, %v2089
        %v2122 = vadd.f32 %v2060, %v2090
        %v2123 = vld [vmem:[%s1 + $0x3] sm:$0x1]
        %v2124 = vperm.slane %v2123, 0
        %v2125 = vmul.f32 %v2124, 0.0
        %v2126 = vmul.f32 %v408, %v2124
        %v2127 = vmul.f32 %v409, %v2124
        %v2128 = vmul.f32 %v410, %v2124
        %v2129 = vmul.f32 %v411, %v2124
        %v2130 = vmul.f32 %v412, %v2124
        %v2131 = vmul.f32 %v413, %v2124
        %v2132 = vmul.f32 %v414, %v2124
        %v2133 = vmul.f32 %v415, %v2124
        %v2134 = vmul.f32 %v416, %v2124
        %v2135 = vmul.f32 %v417, %v2124
        %v2136 = vmul.f32 %v418, %v2124
        %v2137 = vmul.f32 %v419, %v2124
        %v2138 = vmul.f32 %v420, %v2124
        %v2139 = vmul.f32 %v421, %v2124
        %v2140 = vmul.f32 %v422, %v2124
        %v2141 = vmul.f32 %v423, %v2124
        %v2142 = vmul.f32 %v424, %v2124
        %v2143 = vmul.f32 %v425, %v2124
        %v2144 = vmul.f32 %v426, %v2124
        %v2145 = vmul.f32 %v427, %v2124
        %v2146 = vmul.f32 %v428, %v2124
        %v2147 = vmul.f32 %v429, %v2124
        %v2148 = vmul.f32 %v430, %v2124
        %v2149 = vmul.f32 %v431, %v2124
        %v2150 = vmul.f32 %v432, %v2124
        %v2151 = vmul.f32 %v433, %v2124
        %v2152 = vadd.f32 %v2091, %v2125
        %v2153 = vadd.f32 %v2092, %v2125
        %v2154 = vadd.f32 %v2093, %v2125
        %v2155 = vadd.f32 %v2094, %v2125
        %v2156 = vadd.f32 %v2095, %v2125
        %v2157 = vadd.f32 %v2096, %v2125
        %v2158 = vadd.f32 %v2097, %v2126
        %v2159 = vadd.f32 %v2098, %v2127
        %v2160 = vadd.f32 %v2099, %v2128
        %v2161 = vadd.f32 %v2100, %v2129
        %v2162 = vadd.f32 %v2101, %v2130
        %v2163 = vadd.f32 %v2102, %v2131
        %v2164 = vadd.f32 %v2103, %v2132
        %v2165 = vadd.f32 %v2104, %v2133
        %v2166 = vadd.f32 %v2105, %v2134
        %v2167 = vadd.f32 %v2106, %v2135
        %v2168 = vadd.f32 %v2107, %v2136
        %v2169 = vadd.f32 %v2108, %v2137
        %v2170 = vadd.f32 %v2109, %v2138
        %v2171 = vadd.f32 %v2110, %v2139
        %v2172 = vadd.f32 %v2111, %v2140
        %v2173 = vadd.f32 %v2112, %v2141
        %v2174 = vadd.f32 %v2113, %v2142
        %v2175 = vadd.f32 %v2114, %v2143
        %v2176 = vadd.f32 %v2115, %v2144
        %v2177 = vadd.f32 %v2116, %v2145
        %v2178 = vadd.f32 %v2117, %v2146
        %v2179 = vadd.f32 %v2118, %v2147
        %v2180 = vadd.f32 %v2119, %v2148
        %v2181 = vadd.f32 %v2120, %v2149
        %v2182 = vadd.f32 %v2121, %v2150
        %v2183 = vadd.f32 %v2122, %v2151
        %v2184 = vld [vmem:[%s1 + $0xa] sm:$0x1]
        %v2185 = vperm.slane %v2184, 0
        %v2186 = vmul.f32 %v2185, 0.0
        %v2187 = vmul.f32 %v408, %v2185
        %v2188 = vmul.f32 %v409, %v2185
        %v2189 = vmul.f32 %v410, %v2185
        %v2190 = vmul.f32 %v411, %v2185
        %v2191 = vmul.f32 %v412, %v2185
        %v2192 = vmul.f32 %v413, %v2185
        %v2193 = vmul.f32 %v414, %v2185
        %v2194 = vmul.f32 %v415, %v2185
        %v2195 = vmul.f32 %v416, %v2185
        %v2196 = vmul.f32 %v417, %v2185
        %v2197 = vmul.f32 %v418, %v2185
        %v2198 = vmul.f32 %v419, %v2185
        %v2199 = vmul.f32 %v420, %v2185
        %v2200 = vmul.f32 %v421, %v2185
        %v2201 = vmul.f32 %v422, %v2185
        %v2202 = vmul.f32 %v423, %v2185
        %v2203 = vmul.f32 %v424, %v2185
        %v2204 = vmul.f32 %v425, %v2185
        %v2205 = vmul.f32 %v426, %v2185
        %v2206 = vmul.f32 %v427, %v2185
        %v2207 = vmul.f32 %v428, %v2185
        %v2208 = vmul.f32 %v429, %v2185
        %v2209 = vmul.f32 %v430, %v2185
        %v2210 = vmul.f32 %v431, %v2185
        %v2211 = vmul.f32 %v432, %v2185
        %v2212 = vmul.f32 %v433, %v2185
        %v2213 = vmul.f32 %v434, %v2185
        %v2214 = vmul.f32 %v435, %v2185
        %v2215 = vadd.f32 %v2152, %v2186
        %v2216 = vadd.f32 %v2153, %v2186
        %v2217 = vadd.f32 %v2154, %v2186
        %v2218 = vadd.f32 %v2155, %v2186
        %v2219 = vadd.f32 %v2156, %v2187
        %v2220 = vadd.f32 %v2157, %v2188
        %v2221 = vadd.f32 %v2158, %v2189
        %v2222 = vadd.f32 %v2159, %v2190
        %v2223 = vadd.f32 %v2160, %v2191
        %v2224 = vadd.f32 %v2161, %v2192
        %v2225 = vadd.f32 %v2162, %v2193
        %v2226 = vadd.f32 %v2163, %v2194
        %v2227 = vadd.f32 %v2164, %v2195
        %v2228 = vadd.f32 %v2165, %v2196
        %v2229 = vadd.f32 %v2166, %v2197
        %v2230 = vadd.f32 %v2167, %v2198
        %v2231 = vadd.f32 %v2168, %v2199
        %v2232 = vadd.f32 %v2169, %v2200
        %v2233 = vadd.f32 %v2170, %v2201
        %v2234 = vadd.f32 %v2171, %v2202
        %v2235 = vadd.f32 %v2172, %v2203
        %v2236 = vadd.f32 %v2173, %v2204
        %v2237 = vadd.f32 %v2174, %v2205
        %v2238 = vadd.f32 %v2175, %v2206
        %v2239 = vadd.f32 %v2176, %v2207
        %v2240 = vadd.f32 %v2177, %v2208
        %v2241 = vadd.f32 %v2178, %v2209
        %v2242 = vadd.f32 %v2179, %v2210
        %v2243 = vadd.f32 %v2180, %v2211
        %v2244 = vadd.f32 %v2181, %v2212
        %v2245 = vadd.f32 %v2182, %v2213
        %v2246 = vadd.f32 %v2183, %v2214
        %v2247 = vld [vmem:[%s1 + $0x11] sm:$0x1]
        %v2248 = vperm.slane %v2247, 0
        %v2249 = vmul.f32 %v2248, 0.0
        %v2250 = vmul.f32 %v408, %v2248
        %v2251 = vmul.f32 %v409, %v2248
        %v2252 = vmul.f32 %v410, %v2248
        %v2253 = vmul.f32 %v411, %v2248
        %v2254 = vmul.f32 %v412, %v2248
        %v2255 = vmul.f32 %v413, %v2248
        %v2256 = vmul.f32 %v414, %v2248
        %v2257 = vmul.f32 %v415, %v2248
        %v2258 = vmul.f32 %v416, %v2248
        %v2259 = vmul.f32 %v417, %v2248
        %v2260 = vmul.f32 %v418, %v2248
        %v2261 = vmul.f32 %v419, %v2248
        %v2262 = vmul.f32 %v420, %v2248
        %v2263 = vmul.f32 %v421, %v2248
        %v2264 = vmul.f32 %v422, %v2248
        %v2265 = vmul.f32 %v423, %v2248
        %v2266 = vmul.f32 %v424, %v2248
        %v2267 = vmul.f32 %v425, %v2248
        %v2268 = vmul.f32 %v426, %v2248
        %v2269 = vmul.f32 %v427, %v2248
        %v2270 = vmul.f32 %v428, %v2248
        %v2271 = vmul.f32 %v429, %v2248
        %v2272 = vmul.f32 %v430, %v2248
        %v2273 = vmul.f32 %v431, %v2248
        %v2274 = vmul.f32 %v432, %v2248
        %v2275 = vmul.f32 %v433, %v2248
        %v2276 = vmul.f32 %v434, %v2248
        %v2277 = vmul.f32 %v435, %v2248
        %v2278 = vmul.f32 %v436, %v2248
        %v2279 = vmul.f32 %v437, %v2248
        %v2280 = vadd.f32 %v2215, %v2249
        %v2281 = vadd.f32 %v2216, %v2249
        %v2282 = vadd.f32 %v2217, %v2250
        %v2283 = vadd.f32 %v2218, %v2251
        %v2284 = vadd.f32 %v2219, %v2252
        %v2285 = vadd.f32 %v2220, %v2253
        %v2286 = vadd.f32 %v2221, %v2254
        %v2287 = vadd.f32 %v2222, %v2255
        %v2288 = vadd.f32 %v2223, %v2256
        %v2289 = vadd.f32 %v2224, %v2257
        %v2290 = vadd.f32 %v2225, %v2258
        %v2291 = vadd.f32 %v2226, %v2259
        %v2292 = vadd.f32 %v2227, %v2260
        %v2293 = vadd.f32 %v2228, %v2261
        %v2294 = vadd.f32 %v2229, %v2262
        %v2295 = vadd.f32 %v2230, %v2263
        %v2296 = vadd.f32 %v2231, %v2264
        %v2297 = vadd.f32 %v2232, %v2265
        %v2298 = vadd.f32 %v2233, %v2266
        %v2299 = vadd.f32 %v2234, %v2267
        %v2300 = vadd.f32 %v2235, %v2268
        %v2301 = vadd.f32 %v2236, %v2269
        %v2302 = vadd.f32 %v2237, %v2270
        %v2303 = vadd.f32 %v2238, %v2271
        %v2304 = vadd.f32 %v2239, %v2272
        %v2305 = vadd.f32 %v2240, %v2273
        %v2306 = vadd.f32 %v2241, %v2274
        %v2307 = vadd.f32 %v2242, %v2275
        %v2308 = vadd.f32 %v2243, %v2276
        %v2309 = vadd.f32 %v2244, %v2277
        %v2310 = vadd.f32 %v2245, %v2278
        %v2311 = vadd.f32 %v2246, %v2279
        %v2312 = vld [vmem:[%s1 + $0x18] sm:$0x1]
        %v2313 = vperm.slane %v2312, 0
        %v2314 = vmul.f32 %v408, %v2313
        %v2315 = vmul.f32 %v409, %v2313
        %v2316 = vmul.f32 %v410, %v2313
        %v2317 = vmul.f32 %v411, %v2313
        %v2318 = vmul.f32 %v412, %v2313
        %v2319 = vmul.f32 %v413, %v2313
        %v2320 = vmul.f32 %v414, %v2313
        %v2321 = vmul.f32 %v415, %v2313
        %v2322 = vmul.f32 %v416, %v2313
        %v2323 = vmul.f32 %v417, %v2313
        %v2324 = vmul.f32 %v418, %v2313
        %v2325 = vmul.f32 %v419, %v2313
        %v2326 = vmul.f32 %v420, %v2313
        %v2327 = vmul.f32 %v421, %v2313
        %v2328 = vmul.f32 %v422, %v2313
        %v2329 = vmul.f32 %v423, %v2313
        %v2330 = vmul.f32 %v424, %v2313
        %v2331 = vmul.f32 %v425, %v2313
        %v2332 = vmul.f32 %v426, %v2313
        %v2333 = vmul.f32 %v427, %v2313
        %v2334 = vmul.f32 %v428, %v2313
        %v2335 = vmul.f32 %v429, %v2313
        %v2336 = vmul.f32 %v430, %v2313
        %v2337 = vmul.f32 %v431, %v2313
        %v2338 = vmul.f32 %v432, %v2313
        %v2339 = vmul.f32 %v433, %v2313
        %v2340 = vmul.f32 %v434, %v2313
        %v2341 = vmul.f32 %v435, %v2313
        %v2342 = vmul.f32 %v436, %v2313
        %v2343 = vmul.f32 %v437, %v2313
        %v2344 = vmul.f32 %v438, %v2313
        %v2345 = vmul.f32 %v439, %v2313
        %v2346 = vadd.f32 %v2280, %v2314
        %v2347 = vadd.f32 %v2281, %v2315
        %v2348 = vadd.f32 %v2282, %v2316
        %v2349 = vadd.f32 %v2283, %v2317
        %v2350 = vadd.f32 %v2284, %v2318
        %v2351 = vadd.f32 %v2285, %v2319
        %v2352 = vadd.f32 %v2286, %v2320
        %v2353 = vadd.f32 %v2287, %v2321
        %v2354 = vadd.f32 %v2288, %v2322
        %v2355 = vadd.f32 %v2289, %v2323
        %v2356 = vadd.f32 %v2290, %v2324
        %v2357 = vadd.f32 %v2291, %v2325
        %v2358 = vadd.f32 %v2292, %v2326
        %v2359 = vadd.f32 %v2293, %v2327
        %v2360 = vadd.f32 %v2294, %v2328
        %v2361 = vadd.f32 %v2295, %v2329
        %v2362 = vadd.f32 %v2296, %v2330
        %v2363 = vadd.f32 %v2297, %v2331
        %v2364 = vadd.f32 %v2298, %v2332
        %v2365 = vadd.f32 %v2299, %v2333
        %v2366 = vadd.f32 %v2300, %v2334
        %v2367 = vadd.f32 %v2301, %v2335
        %v2368 = vadd.f32 %v2302, %v2336
        %v2369 = vadd.f32 %v2303, %v2337
        %v2370 = vadd.f32 %v2304, %v2338
        %v2371 = vadd.f32 %v2305, %v2339
        %v2372 = vadd.f32 %v2306, %v2340
        %v2373 = vadd.f32 %v2307, %v2341
        %v2374 = vadd.f32 %v2308, %v2342
        %v2375 = vadd.f32 %v2309, %v2343
        %v2376 = vadd.f32 %v2310, %v2344
        %v2377 = vadd.f32 %v2311, %v2345
        %v2378 = vld [vmem:[%s1 + $0x1f] sm:$0x1]
        %v2379 = vperm.slane %v2378, 0
        %v2380 = vmul.f32 %v410, %v2379
        %v2381 = vmul.f32 %v411, %v2379
        %v2382 = vmul.f32 %v412, %v2379
        %v2383 = vmul.f32 %v413, %v2379
        %v2384 = vmul.f32 %v414, %v2379
        %v2385 = vmul.f32 %v415, %v2379
        %v2386 = vmul.f32 %v416, %v2379
        %v2387 = vmul.f32 %v417, %v2379
        %v2388 = vmul.f32 %v418, %v2379
        %v2389 = vmul.f32 %v419, %v2379
        %v2390 = vmul.f32 %v420, %v2379
        %v2391 = vmul.f32 %v421, %v2379
        %v2392 = vmul.f32 %v422, %v2379
        %v2393 = vmul.f32 %v423, %v2379
        %v2394 = vmul.f32 %v424, %v2379
        %v2395 = vmul.f32 %v425, %v2379
        %v2396 = vmul.f32 %v426, %v2379
        %v2397 = vmul.f32 %v427, %v2379
        %v2398 = vmul.f32 %v428, %v2379
        %v2399 = vmul.f32 %v429, %v2379
        %v2400 = vmul.f32 %v430, %v2379
        %v2401 = vmul.f32 %v431, %v2379
        %v2402 = vmul.f32 %v432, %v2379
        %v2403 = vmul.f32 %v433, %v2379
        %v2404 = vmul.f32 %v434, %v2379
        %v2405 = vmul.f32 %v435, %v2379
        %v2406 = vmul.f32 %v436, %v2379
        %v2407 = vmul.f32 %v437, %v2379
        %v2408 = vmul.f32 %v438, %v2379
        %v2409 = vmul.f32 %v439, %v2379
        %v2410 = vmul.f32 %v2379, 0.0
        %v2411 = vadd.f32 %v2346, %v2380
        %v2412 = vadd.f32 %v2347, %v2381
        %v2413 = vadd.f32 %v2348, %v2382
        %v2414 = vadd.f32 %v2349, %v2383
        %v2415 = vadd.f32 %v2350, %v2384
        %v2416 = vadd.f32 %v2351, %v2385
        %v2417 = vadd.f32 %v2352, %v2386
        %v2418 = vadd.f32 %v2353, %v2387
        %v2419 = vadd.f32 %v2354, %v2388
        %v2420 = vadd.f32 %v2355, %v2389
        %v2421 = vadd.f32 %v2356, %v2390
        %v2422 = vadd.f32 %v2357, %v2391
        %v2423 = vadd.f32 %v2358, %v2392
        %v2424 = vadd.f32 %v2359, %v2393
        %v2425 = vadd.f32 %v2360, %v2394
        %v2426 = vadd.f32 %v2361, %v2395
        %v2427 = vadd.f32 %v2362, %v2396
        %v2428 = vadd.f32 %v2363, %v2397
        %v2429 = vadd.f32 %v2364, %v2398
        %v2430 = vadd.f32 %v2365, %v2399
        %v2431 = vadd.f32 %v2366, %v2400
        %v2432 = vadd.f32 %v2367, %v2401
        %v2433 = vadd.f32 %v2368, %v2402
        %v2434 = vadd.f32 %v2369, %v2403
        %v2435 = vadd.f32 %v2370, %v2404
        %v2436 = vadd.f32 %v2371, %v2405
        %v2437 = vadd.f32 %v2372, %v2406
        %v2438 = vadd.f32 %v2373, %v2407
        %v2439 = vadd.f32 %v2374, %v2408
        %v2440 = vadd.f32 %v2375, %v2409
        %v2441 = vadd.f32 %v2376, %v2410
        %v2442 = vadd.f32 %v2377, %v2410
        %v2443 = vld [vmem:[%s1 + $0x26] sm:$0x1]
        %v2444 = vperm.slane %v2443, 0
        %v2445 = vmul.f32 %v412, %v2444
        %v2446 = vmul.f32 %v413, %v2444
        %v2447 = vmul.f32 %v414, %v2444
        %v2448 = vmul.f32 %v415, %v2444
        %v2449 = vmul.f32 %v416, %v2444
        %v2450 = vmul.f32 %v417, %v2444
        %v2451 = vmul.f32 %v418, %v2444
        %v2452 = vmul.f32 %v419, %v2444
        %v2453 = vmul.f32 %v420, %v2444
        %v2454 = vmul.f32 %v421, %v2444
        %v2455 = vmul.f32 %v422, %v2444
        %v2456 = vmul.f32 %v423, %v2444
        %v2457 = vmul.f32 %v424, %v2444
        %v2458 = vmul.f32 %v425, %v2444
        %v2459 = vmul.f32 %v426, %v2444
        %v2460 = vmul.f32 %v427, %v2444
        %v2461 = vmul.f32 %v428, %v2444
        %v2462 = vmul.f32 %v429, %v2444
        %v2463 = vmul.f32 %v430, %v2444
        %v2464 = vmul.f32 %v431, %v2444
        %v2465 = vmul.f32 %v432, %v2444
        %v2466 = vmul.f32 %v433, %v2444
        %v2467 = vmul.f32 %v434, %v2444
        %v2468 = vmul.f32 %v435, %v2444
        %v2469 = vmul.f32 %v436, %v2444
        %v2470 = vmul.f32 %v437, %v2444
        %v2471 = vmul.f32 %v438, %v2444
        %v2472 = vmul.f32 %v439, %v2444
        %v2473 = vmul.f32 %v2444, 0.0
        %v2474 = vadd.f32 %v2411, %v2445
        %v2475 = vadd.f32 %v2412, %v2446
        %v2476 = vadd.f32 %v2413, %v2447
        %v2477 = vadd.f32 %v2414, %v2448
        %v2478 = vadd.f32 %v2415, %v2449
        %v2479 = vadd.f32 %v2416, %v2450
        %v2480 = vadd.f32 %v2417, %v2451
        %v2481 = vadd.f32 %v2418, %v2452
        %v2482 = vadd.f32 %v2419, %v2453
        %v2483 = vadd.f32 %v2420, %v2454
        %v2484 = vadd.f32 %v2421, %v2455
        %v2485 = vadd.f32 %v2422, %v2456
        %v2486 = vadd.f32 %v2423, %v2457
        %v2487 = vadd.f32 %v2424, %v2458
        %v2488 = vadd.f32 %v2425, %v2459
        %v2489 = vadd.f32 %v2426, %v2460
        %v2490 = vadd.f32 %v2427, %v2461
        %v2491 = vadd.f32 %v2428, %v2462
        %v2492 = vadd.f32 %v2429, %v2463
        %v2493 = vadd.f32 %v2430, %v2464
        %v2494 = vadd.f32 %v2431, %v2465
        %v2495 = vadd.f32 %v2432, %v2466
        %v2496 = vadd.f32 %v2433, %v2467
        %v2497 = vadd.f32 %v2434, %v2468
        %v2498 = vadd.f32 %v2435, %v2469
        %v2499 = vadd.f32 %v2436, %v2470
        %v2500 = vadd.f32 %v2437, %v2471
        %v2501 = vadd.f32 %v2438, %v2472
        %v2502 = vadd.f32 %v2439, %v2473
        %v2503 = vadd.f32 %v2440, %v2473
        %v2504 = vadd.f32 %v2441, %v2473
        %v2505 = vadd.f32 %v2442, %v2473
        %v2506 = vld [vmem:[%s1 + $0x2d] sm:$0x1]
        %v2507 = vperm.slane %v2506, 0
        %v2508 = vmul.f32 %v414, %v2507
        %v2509 = vmul.f32 %v415, %v2507
        %v2510 = vmul.f32 %v416, %v2507
        %v2511 = vmul.f32 %v417, %v2507
        %v2512 = vmul.f32 %v418, %v2507
        %v2513 = vmul.f32 %v419, %v2507
        %v2514 = vmul.f32 %v420, %v2507
        %v2515 = vmul.f32 %v421, %v2507
        %v2516 = vmul.f32 %v422, %v2507
        %v2517 = vmul.f32 %v423, %v2507
        %v2518 = vmul.f32 %v424, %v2507
        %v2519 = vmul.f32 %v425, %v2507
        %v2520 = vmul.f32 %v426, %v2507
        %v2521 = vmul.f32 %v427, %v2507
        %v2522 = vmul.f32 %v428, %v2507
        %v2523 = vmul.f32 %v429, %v2507
        %v2524 = vmul.f32 %v430, %v2507
        %v2525 = vmul.f32 %v431, %v2507
        %v2526 = vmul.f32 %v432, %v2507
        %v2527 = vmul.f32 %v433, %v2507
        %v2528 = vmul.f32 %v434, %v2507
        %v2529 = vmul.f32 %v435, %v2507
        %v2530 = vmul.f32 %v436, %v2507
        %v2531 = vmul.f32 %v437, %v2507
        %v2532 = vmul.f32 %v438, %v2507
        %v2533 = vmul.f32 %v439, %v2507
        %v2534 = vmul.f32 %v2507, 0.0
        %v2535 = vadd.f32 %v2474, %v2508
        %v2536 = vadd.f32 %v2475, %v2509
        %v2537 = vadd.f32 %v2476, %v2510
        %v2538 = vadd.f32 %v2477, %v2511
        %v2539 = vadd.f32 %v2478, %v2512
        %v2540 = vadd.f32 %v2479, %v2513
        %v2541 = vadd.f32 %v2480, %v2514
        %v2542 = vadd.f32 %v2481, %v2515
        %v2543 = vadd.f32 %v2482, %v2516
        %v2544 = vadd.f32 %v2483, %v2517
        %v2545 = vadd.f32 %v2484, %v2518
        %v2546 = vadd.f32 %v2485, %v2519
        %v2547 = vadd.f32 %v2486, %v2520
        %v2548 = vadd.f32 %v2487, %v2521
        %v2549 = vadd.f32 %v2488, %v2522
        %v2550 = vadd.f32 %v2489, %v2523
        %v2551 = vadd.f32 %v2490, %v2524
        %v2552 = vadd.f32 %v2491, %v2525
        %v2553 = vadd.f32 %v2492, %v2526
        %v2554 = vadd.f32 %v2493, %v2527
        %v2555 = vadd.f32 %v2494, %v2528
        %v2556 = vadd.f32 %v2495, %v2529
        %v2557 = vadd.f32 %v2496, %v2530
        %v2558 = vadd.f32 %v2497, %v2531
        %v2559 = vadd.f32 %v2498, %v2532
        %v2560 = vadd.f32 %v2499, %v2533
        %v2561 = vadd.f32 %v2500, %v2534
        %v2562 = vadd.f32 %v2501, %v2534
        %v2563 = vadd.f32 %v2502, %v2534
        %v2564 = vadd.f32 %v2503, %v2534
        %v2565 = vadd.f32 %v2504, %v2534
        %v2566 = vadd.f32 %v2505, %v2534
        %vm2567 = vcmask 1046528
        %v2568 = vrot.slane 0.0, 1
        %v2569 = vsel %vm2567, %v2568, %v2568
        %v2570 = vrot.slane %v408, 1
        %v2571 = vrot.slane %v409, 1
        %v2572 = vsel %vm2567, %v2570, %v2571
        %v2573 = vrot.slane %v410, 1
        %v2574 = vrot.slane %v411, 1
        %v2575 = vsel %vm2567, %v2573, %v2574
        %v2576 = vrot.slane %v412, 1
        %v2577 = vrot.slane %v413, 1
        %v2578 = vsel %vm2567, %v2576, %v2577
        %v2579 = vrot.slane %v414, 1
        %v2580 = vrot.slane %v415, 1
        %v2581 = vsel %vm2567, %v2579, %v2580
        %v2582 = vrot.slane %v416, 1
        %v2583 = vrot.slane %v417, 1
        %v2584 = vsel %vm2567, %v2582, %v2583
        %v2585 = vrot.slane %v418, 1
        %v2586 = vrot.slane %v419, 1
        %v2587 = vsel %vm2567, %v2585, %v2586
        %v2588 = vrot.slane %v420, 1
        %v2589 = vrot.slane %v421, 1
        %v2590 = vsel %vm2567, %v2588, %v2589
        %v2591 = vrot.slane %v422, 1
        %v2592 = vrot.slane %v423, 1
        %v2593 = vsel %vm2567, %v2591, %v2592
        %v2594 = vrot.slane %v424, 1
        %v2595 = vrot.slane %v425, 1
        %v2596 = vsel %vm2567, %v2594, %v2595
        %v2597 = vrot.slane %v426, 1
        %v2598 = vrot.slane %v427, 1
        %v2599 = vsel %vm2567, %v2597, %v2598
        %v2600 = vrot.slane %v428, 1
        %v2601 = vrot.slane %v429, 1
        %v2602 = vsel %vm2567, %v2600, %v2601
        %v2603 = vrot.slane %v430, 1
        %v2604 = vrot.slane %v431, 1
        %v2605 = vsel %vm2567, %v2603, %v2604
        %v2606 = vrot.slane %v432, 1
        %v2607 = vrot.slane %v433, 1
        %v2608 = vsel %vm2567, %v2606, %v2607
        %v2609 = vrot.slane %v434, 1
        %v2610 = vrot.slane %v435, 1
        %v2611 = vsel %vm2567, %v2609, %v2610
        %v2612 = vrot.slane %v436, 1
        %v2613 = vrot.slane %v437, 1
        %v2614 = vsel %vm2567, %v2612, %v2613
        %v2615 = vrot.slane %v438, 1
        %v2616 = vrot.slane %v439, 1
        %v2617 = vsel %vm2567, %v2615, %v2616
        %v2652 = vsel %vm2567, %v2568, 0.0
        %v2653 = vsel %vm2567, %v2571, 0.0
        %v2654 = vsel %vm2567, %v2574, 0.0
        %v2655 = vsel %vm2567, %v2577, 0.0
        %v2656 = vsel %vm2567, %v2580, 0.0
        %v2657 = vsel %vm2567, %v2583, 0.0
        %v2658 = vsel %vm2567, %v2586, 0.0
        %v2659 = vsel %vm2567, %v2589, 0.0
        %v2660 = vsel %vm2567, %v2592, 0.0
        %v2661 = vsel %vm2567, %v2595, 0.0
        %v2662 = vsel %vm2567, %v2598, 0.0
        %v2663 = vsel %vm2567, %v2601, 0.0
        %v2664 = vsel %vm2567, %v2604, 0.0
        %v2665 = vsel %vm2567, %v2607, 0.0
        %v2666 = vsel %vm2567, %v2610, 0.0
        %v2667 = vsel %vm2567, %v2613, 0.0
        %v2668 = vsel %vm2567, %v2616, 0.0
        %v2669 = vld [vmem:[%s1 + $0x4] sm:$0x1]
        %v2670 = vperm.slane %v2669, 0
        %v2671 = vmul.f32 %v2569, %v2670
        %v2672 = vmul.f32 %v2652, %v2670
        %v2673 = vmul.f32 %v2572, %v2670
        %v2674 = vmul.f32 %v2653, %v2670
        %v2675 = vmul.f32 %v2575, %v2670
        %v2676 = vmul.f32 %v2654, %v2670
        %v2677 = vmul.f32 %v2578, %v2670
        %v2678 = vmul.f32 %v2655, %v2670
        %v2679 = vmul.f32 %v2581, %v2670
        %v2680 = vmul.f32 %v2656, %v2670
        %v2681 = vmul.f32 %v2584, %v2670
        %v2682 = vmul.f32 %v2657, %v2670
        %v2683 = vmul.f32 %v2587, %v2670
        %v2684 = vmul.f32 %v2658, %v2670
        %v2685 = vmul.f32 %v2590, %v2670
        %v2686 = vmul.f32 %v2659, %v2670
        %v2687 = vmul.f32 %v2593, %v2670
        %v2688 = vmul.f32 %v2660, %v2670
        %v2689 = vmul.f32 %v2596, %v2670
        %v2690 = vmul.f32 %v2661, %v2670
        %v2691 = vmul.f32 %v2599, %v2670
        %v2692 = vmul.f32 %v2662, %v2670
        %v2693 = vmul.f32 %v2602, %v2670
        %v2694 = vmul.f32 %v2663, %v2670
        %v2695 = vmul.f32 %v2605, %v2670
        %v2696 = vmul.f32 %v2664, %v2670
        %v2697 = vmul.f32 %v2608, %v2670
        %v2698 = vmul.f32 %v2665, %v2670
        %v2699 = vadd.f32 %v2535, %v2671
        %v2700 = vadd.f32 %v2536, %v2672
        %v2701 = vadd.f32 %v2537, %v2671
        %v2702 = vadd.f32 %v2538, %v2672
        %v2703 = vadd.f32 %v2539, %v2671
        %v2704 = vadd.f32 %v2540, %v2672
        %v2705 = vadd.f32 %v2541, %v2673
        %v2706 = vadd.f32 %v2542, %v2674
        %v2707 = vadd.f32 %v2543, %v2675
        %v2708 = vadd.f32 %v2544, %v2676
        %v2709 = vadd.f32 %v2545, %v2677
        %v2710 = vadd.f32 %v2546, %v2678
        %v2711 = vadd.f32 %v2547, %v2679
        %v2712 = vadd.f32 %v2548, %v2680
        %v2713 = vadd.f32 %v2549, %v2681
        %v2714 = vadd.f32 %v2550, %v2682
        %v2715 = vadd.f32 %v2551, %v2683
        %v2716 = vadd.f32 %v2552, %v2684
        %v2717 = vadd.f32 %v2553, %v2685
        %v2718 = vadd.f32 %v2554, %v2686
        %v2719 = vadd.f32 %v2555, %v2687
        %v2720 = vadd.f32 %v2556, %v2688
        %v2721 = vadd.f32 %v2557, %v2689
        %v2722 = vadd.f32 %v2558, %v2690
        %v2723 = vadd.f32 %v2559, %v2691
        %v2724 = vadd.f32 %v2560, %v2692
        %v2725 = vadd.f32 %v2561, %v2693
        %v2726 = vadd.f32 %v2562, %v2694
        %v2727 = vadd.f32 %v2563, %v2695
        %v2728 = vadd.f32 %v2564, %v2696
        %v2729 = vadd.f32 %v2565, %v2697
        %v2730 = vadd.f32 %v2566, %v2698
        %v2731 = vld [vmem:[%s1 + $0xb] sm:$0x1]
        %v2732 = vperm.slane %v2731, 0
        %v2733 = vmul.f32 %v2569, %v2732
        %v2734 = vmul.f32 %v2652, %v2732
        %v2735 = vmul.f32 %v2572, %v2732
        %v2736 = vmul.f32 %v2653, %v2732
        %v2737 = vmul.f32 %v2575, %v2732
        %v2738 = vmul.f32 %v2654, %v2732
        %v2739 = vmul.f32 %v2578, %v2732
        %v2740 = vmul.f32 %v2655, %v2732
        %v2741 = vmul.f32 %v2581, %v2732
        %v2742 = vmul.f32 %v2656, %v2732
        %v2743 = vmul.f32 %v2584, %v2732
        %v2744 = vmul.f32 %v2657, %v2732
        %v2745 = vmul.f32 %v2587, %v2732
        %v2746 = vmul.f32 %v2658, %v2732
        %v2747 = vmul.f32 %v2590, %v2732
        %v2748 = vmul.f32 %v2659, %v2732
        %v2749 = vmul.f32 %v2593, %v2732
        %v2750 = vmul.f32 %v2660, %v2732
        %v2751 = vmul.f32 %v2596, %v2732
        %v2752 = vmul.f32 %v2661, %v2732
        %v2753 = vmul.f32 %v2599, %v2732
        %v2754 = vmul.f32 %v2662, %v2732
        %v2755 = vmul.f32 %v2602, %v2732
        %v2756 = vmul.f32 %v2663, %v2732
        %v2757 = vmul.f32 %v2605, %v2732
        %v2758 = vmul.f32 %v2664, %v2732
        %v2759 = vmul.f32 %v2608, %v2732
        %v2760 = vmul.f32 %v2665, %v2732
        %v2761 = vmul.f32 %v2611, %v2732
        %v2762 = vmul.f32 %v2666, %v2732
        %v2763 = vadd.f32 %v2699, %v2733
        %v2764 = vadd.f32 %v2700, %v2734
        %v2765 = vadd.f32 %v2701, %v2733
        %v2766 = vadd.f32 %v2702, %v2734
        %v2767 = vadd.f32 %v2703, %v2735
        %v2768 = vadd.f32 %v2704, %v2736
        %v2769 = vadd.f32 %v2705, %v2737
        %v2770 = vadd.f32 %v2706, %v2738
        %v2771 = vadd.f32 %v2707, %v2739
        %v2772 = vadd.f32 %v2708, %v2740
        %v2773 = vadd.f32 %v2709, %v2741
        %v2774 = vadd.f32 %v2710, %v2742
        %v2775 = vadd.f32 %v2711, %v2743
        %v2776 = vadd.f32 %v2712, %v2744
        %v2777 = vadd.f32 %v2713, %v2745
        %v2778 = vadd.f32 %v2714, %v2746
        %v2779 = vadd.f32 %v2715, %v2747
        %v2780 = vadd.f32 %v2716, %v2748
        %v2781 = vadd.f32 %v2717, %v2749
        %v2782 = vadd.f32 %v2718, %v2750
        %v2783 = vadd.f32 %v2719, %v2751
        %v2784 = vadd.f32 %v2720, %v2752
        %v2785 = vadd.f32 %v2721, %v2753
        %v2786 = vadd.f32 %v2722, %v2754
        %v2787 = vadd.f32 %v2723, %v2755
        %v2788 = vadd.f32 %v2724, %v2756
        %v2789 = vadd.f32 %v2725, %v2757
        %v2790 = vadd.f32 %v2726, %v2758
        %v2791 = vadd.f32 %v2727, %v2759
        %v2792 = vadd.f32 %v2728, %v2760
        %v2793 = vadd.f32 %v2729, %v2761
        %v2794 = vadd.f32 %v2730, %v2762
        %v2795 = vld [vmem:[%s1 + $0x12] sm:$0x1]
        %v2796 = vperm.slane %v2795, 0
        %v2797 = vmul.f32 %v2569, %v2796
        %v2798 = vmul.f32 %v2652, %v2796
        %v2799 = vmul.f32 %v2572, %v2796
        %v2800 = vmul.f32 %v2653, %v2796
        %v2801 = vmul.f32 %v2575, %v2796
        %v2802 = vmul.f32 %v2654, %v2796
        %v2803 = vmul.f32 %v2578, %v2796
        %v2804 = vmul.f32 %v2655, %v2796
        %v2805 = vmul.f32 %v2581, %v2796
        %v2806 = vmul.f32 %v2656, %v2796
        %v2807 = vmul.f32 %v2584, %v2796
        %v2808 = vmul.f32 %v2657, %v2796
        %v2809 = vmul.f32 %v2587, %v2796
        %v2810 = vmul.f32 %v2658, %v2796
        %v2811 = vmul.f32 %v2590, %v2796
        %v2812 = vmul.f32 %v2659, %v2796
        %v2813 = vmul.f32 %v2593, %v2796
        %v2814 = vmul.f32 %v2660, %v2796
        %v2815 = vmul.f32 %v2596, %v2796
        %v2816 = vmul.f32 %v2661, %v2796
        %v2817 = vmul.f32 %v2599, %v2796
        %v2818 = vmul.f32 %v2662, %v2796
        %v2819 = vmul.f32 %v2602, %v2796
        %v2820 = vmul.f32 %v2663, %v2796
        %v2821 = vmul.f32 %v2605, %v2796
        %v2822 = vmul.f32 %v2664, %v2796
        %v2823 = vmul.f32 %v2608, %v2796
        %v2824 = vmul.f32 %v2665, %v2796
        %v2825 = vmul.f32 %v2611, %v2796
        %v2826 = vmul.f32 %v2666, %v2796
        %v2827 = vmul.f32 %v2614, %v2796
        %v2828 = vmul.f32 %v2667, %v2796
        %v2829 = vadd.f32 %v2763, %v2797
        %v2830 = vadd.f32 %v2764, %v2798
        %v2831 = vadd.f32 %v2765, %v2799
        %v2832 = vadd.f32 %v2766, %v2800
        %v2833 = vadd.f32 %v2767, %v2801
        %v2834 = vadd.f32 %v2768, %v2802
        %v2835 = vadd.f32 %v2769, %v2803
        %v2836 = vadd.f32 %v2770, %v2804
        %v2837 = vadd.f32 %v2771, %v2805
        %v2838 = vadd.f32 %v2772, %v2806
        %v2839 = vadd.f32 %v2773, %v2807
        %v2840 = vadd.f32 %v2774, %v2808
        %v2841 = vadd.f32 %v2775, %v2809
        %v2842 = vadd.f32 %v2776, %v2810
        %v2843 = vadd.f32 %v2777, %v2811
        %v2844 = vadd.f32 %v2778, %v2812
        %v2845 = vadd.f32 %v2779, %v2813
        %v2846 = vadd.f32 %v2780, %v2814
        %v2847 = vadd.f32 %v2781, %v2815
        %v2848 = vadd.f32 %v2782, %v2816
        %v2849 = vadd.f32 %v2783, %v2817
        %v2850 = vadd.f32 %v2784, %v2818
        %v2851 = vadd.f32 %v2785, %v2819
        %v2852 = vadd.f32 %v2786, %v2820
        %v2853 = vadd.f32 %v2787, %v2821
        %v2854 = vadd.f32 %v2788, %v2822
        %v2855 = vadd.f32 %v2789, %v2823
        %v2856 = vadd.f32 %v2790, %v2824
        %v2857 = vadd.f32 %v2791, %v2825
        %v2858 = vadd.f32 %v2792, %v2826
        %v2859 = vadd.f32 %v2793, %v2827
        %v2860 = vadd.f32 %v2794, %v2828
        %v2861 = vld [vmem:[%s1 + $0x19] sm:$0x1]
        %v2862 = vperm.slane %v2861, 0
        %v2863 = vmul.f32 %v2572, %v2862
        %v2864 = vmul.f32 %v2653, %v2862
        %v2865 = vmul.f32 %v2575, %v2862
        %v2866 = vmul.f32 %v2654, %v2862
        %v2867 = vmul.f32 %v2578, %v2862
        %v2868 = vmul.f32 %v2655, %v2862
        %v2869 = vmul.f32 %v2581, %v2862
        %v2870 = vmul.f32 %v2656, %v2862
        %v2871 = vmul.f32 %v2584, %v2862
        %v2872 = vmul.f32 %v2657, %v2862
        %v2873 = vmul.f32 %v2587, %v2862
        %v2874 = vmul.f32 %v2658, %v2862
        %v2875 = vmul.f32 %v2590, %v2862
        %v2876 = vmul.f32 %v2659, %v2862
        %v2877 = vmul.f32 %v2593, %v2862
        %v2878 = vmul.f32 %v2660, %v2862
        %v2879 = vmul.f32 %v2596, %v2862
        %v2880 = vmul.f32 %v2661, %v2862
        %v2881 = vmul.f32 %v2599, %v2862
        %v2882 = vmul.f32 %v2662, %v2862
        %v2883 = vmul.f32 %v2602, %v2862
        %v2884 = vmul.f32 %v2663, %v2862
        %v2885 = vmul.f32 %v2605, %v2862
        %v2886 = vmul.f32 %v2664, %v2862
        %v2887 = vmul.f32 %v2608, %v2862
        %v2888 = vmul.f32 %v2665, %v2862
        %v2889 = vmul.f32 %v2611, %v2862
        %v2890 = vmul.f32 %v2666, %v2862
        %v2891 = vmul.f32 %v2614, %v2862
        %v2892 = vmul.f32 %v2667, %v2862
        %v2893 = vmul.f32 %v2617, %v2862
        %v2894 = vmul.f32 %v2668, %v2862
        %v2895 = vadd.f32 %v2829, %v2863
        %v2896 = vadd.f32 %v2830, %v2864
        %v2897 = vadd.f32 %v2831, %v2865
        %v2898 = vadd.f32 %v2832, %v2866
        %v2899 = vadd.f32 %v2833, %v2867
        %v2900 = vadd.f32 %v2834, %v2868
        %v2901 = vadd.f32 %v2835, %v2869
        %v2902 = vadd.f32 %v2836, %v2870
        %v2903 = vadd.f32 %v2837, %v2871
        %v2904 = vadd.f32 %v2838, %v2872
        %v2905 = vadd.f32 %v2839, %v2873
        %v2906 = vadd.f32 %v2840, %v2874
        %v2907 = vadd.f32 %v2841, %v2875
        %v2908 = vadd.f32 %v2842, %v2876
        %v2909 = vadd.f32 %v2843, %v2877
        %v2910 = vadd.f32 %v2844, %v2878
        %v2911 = vadd.f32 %v2845, %v2879
        %v2912 = vadd.f32 %v2846, %v2880
        %v2913 = vadd.f32 %v2847, %v2881
        %v2914 = vadd.f32 %v2848, %v2882
        %v2915 = vadd.f32 %v2849, %v2883
        %v2916 = vadd.f32 %v2850, %v2884
        %v2917 = vadd.f32 %v2851, %v2885
        %v2918 = vadd.f32 %v2852, %v2886
        %v2919 = vadd.f32 %v2853, %v2887
        %v2920 = vadd.f32 %v2854, %v2888
        %v2921 = vadd.f32 %v2855, %v2889
        %v2922 = vadd.f32 %v2856, %v2890
        %v2923 = vadd.f32 %v2857, %v2891
        %v2924 = vadd.f32 %v2858, %v2892
        %v2925 = vadd.f32 %v2859, %v2893
        %v2926 = vadd.f32 %v2860, %v2894
        %v2927 = vld [vmem:[%s1 + $0x20] sm:$0x1]
        %v2928 = vperm.slane %v2927, 0
        %v2929 = vmul.f32 %v2575, %v2928
        %v2930 = vmul.f32 %v2654, %v2928
        %v2931 = vmul.f32 %v2578, %v2928
        %v2932 = vmul.f32 %v2655, %v2928
        %v2933 = vmul.f32 %v2581, %v2928
        %v2934 = vmul.f32 %v2656, %v2928
        %v2935 = vmul.f32 %v2584, %v2928
        %v2936 = vmul.f32 %v2657, %v2928
        %v2937 = vmul.f32 %v2587, %v2928
        %v2938 = vmul.f32 %v2658, %v2928
        %v2939 = vmul.f32 %v2590, %v2928
        %v2940 = vmul.f32 %v2659, %v2928
        %v2941 = vmul.f32 %v2593, %v2928
        %v2942 = vmul.f32 %v2660, %v2928
        %v2943 = vmul.f32 %v2596, %v2928
        %v2944 = vmul.f32 %v2661, %v2928
        %v2945 = vmul.f32 %v2599, %v2928
        %v2946 = vmul.f32 %v2662, %v2928
        %v2947 = vmul.f32 %v2602, %v2928
        %v2948 = vmul.f32 %v2663, %v2928
        %v2949 = vmul.f32 %v2605, %v2928
        %v2950 = vmul.f32 %v2664, %v2928
        %v2951 = vmul.f32 %v2608, %v2928
        %v2952 = vmul.f32 %v2665, %v2928
        %v2953 = vmul.f32 %v2611, %v2928
        %v2954 = vmul.f32 %v2666, %v2928
        %v2955 = vmul.f32 %v2614, %v2928
        %v2956 = vmul.f32 %v2667, %v2928
        %v2957 = vmul.f32 %v2617, %v2928
        %v2958 = vmul.f32 %v2668, %v2928
        %v2959 = vmul.f32 %v2569, %v2928
        %v2960 = vmul.f32 %v2652, %v2928
        %v2961 = vadd.f32 %v2895, %v2929
        %v2962 = vadd.f32 %v2896, %v2930
        %v2963 = vadd.f32 %v2897, %v2931
        %v2964 = vadd.f32 %v2898, %v2932
        %v2965 = vadd.f32 %v2899, %v2933
        %v2966 = vadd.f32 %v2900, %v2934
        %v2967 = vadd.f32 %v2901, %v2935
        %v2968 = vadd.f32 %v2902, %v2936
        %v2969 = vadd.f32 %v2903, %v2937
        %v2970 = vadd.f32 %v2904, %v2938
        %v2971 = vadd.f32 %v2905, %v2939
        %v2972 = vadd.f32 %v2906, %v2940
        %v2973 = vadd.f32 %v2907, %v2941
        %v2974 = vadd.f32 %v2908, %v2942
        %v2975 = vadd.f32 %v2909, %v2943
        %v2976 = vadd.f32 %v2910, %v2944
        %v2977 = vadd.f32 %v2911, %v2945
        %v2978 = vadd.f32 %v2912, %v2946
        %v2979 = vadd.f32 %v2913, %v2947
        %v2980 = vadd.f32 %v2914, %v2948
        %v2981 = vadd.f32 %v2915, %v2949
        %v2982 = vadd.f32 %v2916, %v2950
        %v2983 = vadd.f32 %v2917, %v2951
        %v2984 = vadd.f32 %v2918, %v2952
        %v2985 = vadd.f32 %v2919, %v2953
        %v2986 = vadd.f32 %v2920, %v2954
        %v2987 = vadd.f32 %v2921, %v2955
        %v2988 = vadd.f32 %v2922, %v2956
        %v2989 = vadd.f32 %v2923, %v2957
        %v2990 = vadd.f32 %v2924, %v2958
        %v2991 = vadd.f32 %v2925, %v2959
        %v2992 = vadd.f32 %v2926, %v2960
        %v2993 = vld [vmem:[%s1 + $0x27] sm:$0x1]
        %v2994 = vperm.slane %v2993, 0
        %v2995 = vmul.f32 %v2578, %v2994
        %v2996 = vmul.f32 %v2655, %v2994
        %v2997 = vmul.f32 %v2581, %v2994
        %v2998 = vmul.f32 %v2656, %v2994
        %v2999 = vmul.f32 %v2584, %v2994
        %v3000 = vmul.f32 %v2657, %v2994
        %v3001 = vmul.f32 %v2587, %v2994
        %v3002 = vmul.f32 %v2658, %v2994
        %v3003 = vmul.f32 %v2590, %v2994
        %v3004 = vmul.f32 %v2659, %v2994
        %v3005 = vmul.f32 %v2593, %v2994
        %v3006 = vmul.f32 %v2660, %v2994
        %v3007 = vmul.f32 %v2596, %v2994
        %v3008 = vmul.f32 %v2661, %v2994
        %v3009 = vmul.f32 %v2599, %v2994
        %v3010 = vmul.f32 %v2662, %v2994
        %v3011 = vmul.f32 %v2602, %v2994
        %v3012 = vmul.f32 %v2663, %v2994
        %v3013 = vmul.f32 %v2605, %v2994
        %v3014 = vmul.f32 %v2664, %v2994
        %v3015 = vmul.f32 %v2608, %v2994
        %v3016 = vmul.f32 %v2665, %v2994
        %v3017 = vmul.f32 %v2611, %v2994
        %v3018 = vmul.f32 %v2666, %v2994
        %v3019 = vmul.f32 %v2614, %v2994
        %v3020 = vmul.f32 %v2667, %v2994
        %v3021 = vmul.f32 %v2617, %v2994
        %v3022 = vmul.f32 %v2668, %v2994
        %v3023 = vmul.f32 %v2569, %v2994
        %v3024 = vmul.f32 %v2652, %v2994
        %v3025 = vadd.f32 %v2961, %v2995
        %v3026 = vadd.f32 %v2962, %v2996
        %v3027 = vadd.f32 %v2963, %v2997
        %v3028 = vadd.f32 %v2964, %v2998
        %v3029 = vadd.f32 %v2965, %v2999
        %v3030 = vadd.f32 %v2966, %v3000
        %v3031 = vadd.f32 %v2967, %v3001
        %v3032 = vadd.f32 %v2968, %v3002
        %v3033 = vadd.f32 %v2969, %v3003
        %v3034 = vadd.f32 %v2970, %v3004
        %v3035 = vadd.f32 %v2971, %v3005
        %v3036 = vadd.f32 %v2972, %v3006
        %v3037 = vadd.f32 %v2973, %v3007
        %v3038 = vadd.f32 %v2974, %v3008
        %v3039 = vadd.f32 %v2975, %v3009
        %v3040 = vadd.f32 %v2976, %v3010
        %v3041 = vadd.f32 %v2977, %v3011
        %v3042 = vadd.f32 %v2978, %v3012
        %v3043 = vadd.f32 %v2979, %v3013
        %v3044 = vadd.f32 %v2980, %v3014
        %v3045 = vadd.f32 %v2981, %v3015
        %v3046 = vadd.f32 %v2982, %v3016
        %v3047 = vadd.f32 %v2983, %v3017
        %v3048 = vadd.f32 %v2984, %v3018
        %v3049 = vadd.f32 %v2985, %v3019
        %v3050 = vadd.f32 %v2986, %v3020
        %v3051 = vadd.f32 %v2987, %v3021
        %v3052 = vadd.f32 %v2988, %v3022
        %v3053 = vadd.f32 %v2989, %v3023
        %v3054 = vadd.f32 %v2990, %v3024
        %v3055 = vadd.f32 %v2991, %v3023
        %v3056 = vadd.f32 %v2992, %v3024
        %v3057 = vld [vmem:[%s1 + $0x2e] sm:$0x1]
        %v3058 = vperm.slane %v3057, 0
        %v3059 = vmul.f32 %v2581, %v3058
        %v3060 = vmul.f32 %v2656, %v3058
        %v3061 = vmul.f32 %v2584, %v3058
        %v3062 = vmul.f32 %v2657, %v3058
        %v3063 = vmul.f32 %v2587, %v3058
        %v3064 = vmul.f32 %v2658, %v3058
        %v3065 = vmul.f32 %v2590, %v3058
        %v3066 = vmul.f32 %v2659, %v3058
        %v3067 = vmul.f32 %v2593, %v3058
        %v3068 = vmul.f32 %v2660, %v3058
        %v3069 = vmul.f32 %v2596, %v3058
        %v3070 = vmul.f32 %v2661, %v3058
        %v3071 = vmul.f32 %v2599, %v3058
        %v3072 = vmul.f32 %v2662, %v3058
        %v3073 = vmul.f32 %v2602, %v3058
        %v3074 = vmul.f32 %v2663, %v3058
        %v3075 = vmul.f32 %v2605, %v3058
        %v3076 = vmul.f32 %v2664, %v3058
        %v3077 = vmul.f32 %v2608, %v3058
        %v3078 = vmul.f32 %v2665, %v3058
        %v3079 = vmul.f32 %v2611, %v3058
        %v3080 = vmul.f32 %v2666, %v3058
        %v3081 = vmul.f32 %v2614, %v3058
        %v3082 = vmul.f32 %v2667, %v3058
        %v3083 = vmul.f32 %v2617, %v3058
        %v3084 = vmul.f32 %v2668, %v3058
        %v3085 = vmul.f32 %v2569, %v3058
        %v3086 = vmul.f32 %v2652, %v3058
        %v3087 = vadd.f32 %v3025, %v3059
        %v3088 = vadd.f32 %v3026, %v3060
        %v3089 = vadd.f32 %v3027, %v3061
        %v3090 = vadd.f32 %v3028, %v3062
        %v3091 = vadd.f32 %v3029, %v3063
        %v3092 = vadd.f32 %v3030, %v3064
        %v3093 = vadd.f32 %v3031, %v3065
        %v3094 = vadd.f32 %v3032, %v3066
        %v3095 = vadd.f32 %v3033, %v3067
        %v3096 = vadd.f32 %v3034, %v3068
        %v3097 = vadd.f32 %v3035, %v3069
        %v3098 = vadd.f32 %v3036, %v3070
        %v3099 = vadd.f32 %v3037, %v3071
        %v3100 = vadd.f32 %v3038, %v3072
        %v3101 = vadd.f32 %v3039, %v3073
        %v3102 = vadd.f32 %v3040, %v3074
        %v3103 = vadd.f32 %v3041, %v3075
        %v3104 = vadd.f32 %v3042, %v3076
        %v3105 = vadd.f32 %v3043, %v3077
        %v3106 = vadd.f32 %v3044, %v3078
        %v3107 = vadd.f32 %v3045, %v3079
        %v3108 = vadd.f32 %v3046, %v3080
        %v3109 = vadd.f32 %v3047, %v3081
        %v3110 = vadd.f32 %v3048, %v3082
        %v3111 = vadd.f32 %v3049, %v3083
        %v3112 = vadd.f32 %v3050, %v3084
        %v3113 = vadd.f32 %v3051, %v3085
        %v3114 = vadd.f32 %v3052, %v3086
        %v3115 = vadd.f32 %v3053, %v3085
        %v3116 = vadd.f32 %v3054, %v3086
        %v3117 = vadd.f32 %v3055, %v3085
        %v3118 = vadd.f32 %v3056, %v3086
        %vm3119 = vcmask 1045504
        %v3120 = vrot.slane 0.0, 2
        %v3121 = vsel %vm3119, %v3120, %v3120
        %v3122 = vrot.slane %v408, 2
        %v3123 = vrot.slane %v409, 2
        %v3124 = vsel %vm3119, %v3122, %v3123
        %v3125 = vrot.slane %v410, 2
        %v3126 = vrot.slane %v411, 2
        %v3127 = vsel %vm3119, %v3125, %v3126
        %v3128 = vrot.slane %v412, 2
        %v3129 = vrot.slane %v413, 2
        %v3130 = vsel %vm3119, %v3128, %v3129
        %v3131 = vrot.slane %v414, 2
        %v3132 = vrot.slane %v415, 2
        %v3133 = vsel %vm3119, %v3131, %v3132
        %v3134 = vrot.slane %v416, 2
        %v3135 = vrot.slane %v417, 2
        %v3136 = vsel %vm3119, %v3134, %v3135
        %v3137 = vrot.slane %v418, 2
        %v3138 = vrot.slane %v419, 2
        %v3139 = vsel %vm3119, %v3137, %v3138
        %v3140 = vrot.slane %v420, 2
        %v3141 = vrot.slane %v421, 2
        %v3142 = vsel %vm3119, %v3140, %v3141
        %v3143 = vrot.slane %v422, 2
        %v3144 = vrot.slane %v423, 2
        %v3145 = vsel %vm3119, %v3143, %v3144
        %v3146 = vrot.slane %v424, 2
        %v3147 = vrot.slane %v425, 2
        %v3148 = vsel %vm3119, %v3146, %v3147
        %v3149 = vrot.slane %v426, 2
        %v3150 = vrot.slane %v427, 2
        %v3151 = vsel %vm3119, %v3149, %v3150
        %v3152 = vrot.slane %v428, 2
        %v3153 = vrot.slane %v429, 2
        %v3154 = vsel %vm3119, %v3152, %v3153
        %v3155 = vrot.slane %v430, 2
        %v3156 = vrot.slane %v431, 2
        %v3157 = vsel %vm3119, %v3155, %v3156
        %v3158 = vrot.slane %v432, 2
        %v3159 = vrot.slane %v433, 2
        %v3160 = vsel %vm3119, %v3158, %v3159
        %v3161 = vrot.slane %v434, 2
        %v3162 = vrot.slane %v435, 2
        %v3163 = vsel %vm3119, %v3161, %v3162
        %v3164 = vrot.slane %v436, 2
        %v3165 = vrot.slane %v437, 2
        %v3166 = vsel %vm3119, %v3164, %v3165
        %v3167 = vrot.slane %v438, 2
        %v3168 = vrot.slane %v439, 2
        %v3169 = vsel %vm3119, %v3167, %v3168
        %v3204 = vsel %vm3119, %v3120, 0.0
        %v3205 = vsel %vm3119, %v3123, 0.0
        %v3206 = vsel %vm3119, %v3126, 0.0
        %v3207 = vsel %vm3119, %v3129, 0.0
        %v3208 = vsel %vm3119, %v3132, 0.0
        %v3209 = vsel %vm3119, %v3135, 0.0
        %v3210 = vsel %vm3119, %v3138, 0.0
        %v3211 = vsel %vm3119, %v3141, 0.0
        %v3212 = vsel %vm3119, %v3144, 0.0
        %v3213 = vsel %vm3119, %v3147, 0.0
        %v3214 = vsel %vm3119, %v3150, 0.0
        %v3215 = vsel %vm3119, %v3153, 0.0
        %v3216 = vsel %vm3119, %v3156, 0.0
        %v3217 = vsel %vm3119, %v3159, 0.0
        %v3218 = vsel %vm3119, %v3162, 0.0
        %v3219 = vsel %vm3119, %v3165, 0.0
        %v3220 = vsel %vm3119, %v3168, 0.0
        %v3221 = vld [vmem:[%s1 + $0x5] sm:$0x1]
        %v3222 = vperm.slane %v3221, 0
        %v3223 = vmul.f32 %v3121, %v3222
        %v3224 = vmul.f32 %v3204, %v3222
        %v3225 = vmul.f32 %v3124, %v3222
        %v3226 = vmul.f32 %v3205, %v3222
        %v3227 = vmul.f32 %v3127, %v3222
        %v3228 = vmul.f32 %v3206, %v3222
        %v3229 = vmul.f32 %v3130, %v3222
        %v3230 = vmul.f32 %v3207, %v3222
        %v3231 = vmul.f32 %v3133, %v3222
        %v3232 = vmul.f32 %v3208, %v3222
        %v3233 = vmul.f32 %v3136, %v3222
        %v3234 = vmul.f32 %v3209, %v3222
        %v3235 = vmul.f32 %v3139, %v3222
        %v3236 = vmul.f32 %v3210, %v3222
        %v3237 = vmul.f32 %v3142, %v3222
        %v3238 = vmul.f32 %v3211, %v3222
        %v3239 = vmul.f32 %v3145, %v3222
        %v3240 = vmul.f32 %v3212, %v3222
        %v3241 = vmul.f32 %v3148, %v3222
        %v3242 = vmul.f32 %v3213, %v3222
        %v3243 = vmul.f32 %v3151, %v3222
        %v3244 = vmul.f32 %v3214, %v3222
        %v3245 = vmul.f32 %v3154, %v3222
        %v3246 = vmul.f32 %v3215, %v3222
        %v3247 = vmul.f32 %v3157, %v3222
        %v3248 = vmul.f32 %v3216, %v3222
        %v3249 = vmul.f32 %v3160, %v3222
        %v3250 = vmul.f32 %v3217, %v3222
        %v3251 = vadd.f32 %v3087, %v3223
        %v3252 = vadd.f32 %v3088, %v3224
        %v3253 = vadd.f32 %v3089, %v3223
        %v3254 = vadd.f32 %v3090, %v3224
        %v3255 = vadd.f32 %v3091, %v3223
        %v3256 = vadd.f32 %v3092, %v3224
        %v3257 = vadd.f32 %v3093, %v3225
        %v3258 = vadd.f32 %v3094, %v3226
        %v3259 = vadd.f32 %v3095, %v3227
        %v3260 = vadd.f32 %v3096, %v3228
        %v3261 = vadd.f32 %v3097, %v3229
        %v3262 = vadd.f32 %v3098, %v3230
        %v3263 = vadd.f32 %v3099, %v3231
        %v3264 = vadd.f32 %v3100, %v3232
        %v3265 = vadd.f32 %v3101, %v3233
        %v3266 = vadd.f32 %v3102, %v3234
        %v3267 = vadd.f32 %v3103, %v3235
        %v3268 = vadd.f32 %v3104, %v3236
        %v3269 = vadd.f32 %v3105, %v3237
        %v3270 = vadd.f32 %v3106, %v3238
        %v3271 = vadd.f32 %v3107, %v3239
        %v3272 = vadd.f32 %v3108, %v3240
        %v3273 = vadd.f32 %v3109, %v3241
        %v3274 = vadd.f32 %v3110, %v3242
        %v3275 = vadd.f32 %v3111, %v3243
        %v3276 = vadd.f32 %v3112, %v3244
        %v3277 = vadd.f32 %v3113, %v3245
        %v3278 = vadd.f32 %v3114, %v3246
        %v3279 = vadd.f32 %v3115, %v3247
        %v3280 = vadd.f32 %v3116, %v3248
        %v3281 = vadd.f32 %v3117, %v3249
        %v3282 = vadd.f32 %v3118, %v3250
        %v3283 = vld [vmem:[%s1 + $0xc] sm:$0x1]
        %v3284 = vperm.slane %v3283, 0
        %v3285 = vmul.f32 %v3121, %v3284
        %v3286 = vmul.f32 %v3204, %v3284
        %v3287 = vmul.f32 %v3124, %v3284
        %v3288 = vmul.f32 %v3205, %v3284
        %v3289 = vmul.f32 %v3127, %v3284
        %v3290 = vmul.f32 %v3206, %v3284
        %v3291 = vmul.f32 %v3130, %v3284
        %v3292 = vmul.f32 %v3207, %v3284
        %v3293 = vmul.f32 %v3133, %v3284
        %v3294 = vmul.f32 %v3208, %v3284
        %v3295 = vmul.f32 %v3136, %v3284
        %v3296 = vmul.f32 %v3209, %v3284
        %v3297 = vmul.f32 %v3139, %v3284
        %v3298 = vmul.f32 %v3210, %v3284
        %v3299 = vmul.f32 %v3142, %v3284
        %v3300 = vmul.f32 %v3211, %v3284
        %v3301 = vmul.f32 %v3145, %v3284
        %v3302 = vmul.f32 %v3212, %v3284
        %v3303 = vmul.f32 %v3148, %v3284
        %v3304 = vmul.f32 %v3213, %v3284
        %v3305 = vmul.f32 %v3151, %v3284
        %v3306 = vmul.f32 %v3214, %v3284
        %v3307 = vmul.f32 %v3154, %v3284
        %v3308 = vmul.f32 %v3215, %v3284
        %v3309 = vmul.f32 %v3157, %v3284
        %v3310 = vmul.f32 %v3216, %v3284
        %v3311 = vmul.f32 %v3160, %v3284
        %v3312 = vmul.f32 %v3217, %v3284
        %v3313 = vmul.f32 %v3163, %v3284
        %v3314 = vmul.f32 %v3218, %v3284
        %v3315 = vadd.f32 %v3251, %v3285
        %v3316 = vadd.f32 %v3252, %v3286
        %v3317 = vadd.f32 %v3253, %v3285
        %v3318 = vadd.f32 %v3254, %v3286
        %v3319 = vadd.f32 %v3255, %v3287
        %v3320 = vadd.f32 %v3256, %v3288
        %v3321 = vadd.f32 %v3257, %v3289
        %v3322 = vadd.f32 %v3258, %v3290
        %v3323 = vadd.f32 %v3259, %v3291
        %v3324 = vadd.f32 %v3260, %v3292
        %v3325 = vadd.f32 %v3261, %v3293
        %v3326 = vadd.f32 %v3262, %v3294
        %v3327 = vadd.f32 %v3263, %v3295
        %v3328 = vadd.f32 %v3264, %v3296
        %v3329 = vadd.f32 %v3265, %v3297
        %v3330 = vadd.f32 %v3266, %v3298
        %v3331 = vadd.f32 %v3267, %v3299
        %v3332 = vadd.f32 %v3268, %v3300
        %v3333 = vadd.f32 %v3269, %v3301
        %v3334 = vadd.f32 %v3270, %v3302
        %v3335 = vadd.f32 %v3271, %v3303
        %v3336 = vadd.f32 %v3272, %v3304
        %v3337 = vadd.f32 %v3273, %v3305
        %v3338 = vadd.f32 %v3274, %v3306
        %v3339 = vadd.f32 %v3275, %v3307
        %v3340 = vadd.f32 %v3276, %v3308
        %v3341 = vadd.f32 %v3277, %v3309
        %v3342 = vadd.f32 %v3278, %v3310
        %v3343 = vadd.f32 %v3279, %v3311
        %v3344 = vadd.f32 %v3280, %v3312
        %v3345 = vadd.f32 %v3281, %v3313
        %v3346 = vadd.f32 %v3282, %v3314
        %v3347 = vld [vmem:[%s1 + $0x13] sm:$0x1]
        %v3348 = vperm.slane %v3347, 0
        %v3349 = vmul.f32 %v3121, %v3348
        %v3350 = vmul.f32 %v3204, %v3348
        %v3351 = vmul.f32 %v3124, %v3348
        %v3352 = vmul.f32 %v3205, %v3348
        %v3353 = vmul.f32 %v3127, %v3348
        %v3354 = vmul.f32 %v3206, %v3348
        %v3355 = vmul.f32 %v3130, %v3348
        %v3356 = vmul.f32 %v3207, %v3348
        %v3357 = vmul.f32 %v3133, %v3348
        %v3358 = vmul.f32 %v3208, %v3348
        %v3359 = vmul.f32 %v3136, %v3348
        %v3360 = vmul.f32 %v3209, %v3348
        %v3361 = vmul.f32 %v3139, %v3348
        %v3362 = vmul.f32 %v3210, %v3348
        %v3363 = vmul.f32 %v3142, %v3348
        %v3364 = vmul.f32 %v3211, %v3348
        %v3365 = vmul.f32 %v3145, %v3348
        %v3366 = vmul.f32 %v3212, %v3348
        %v3367 = vmul.f32 %v3148, %v3348
        %v3368 = vmul.f32 %v3213, %v3348
        %v3369 = vmul.f32 %v3151, %v3348
        %v3370 = vmul.f32 %v3214, %v3348
        %v3371 = vmul.f32 %v3154, %v3348
        %v3372 = vmul.f32 %v3215, %v3348
        %v3373 = vmul.f32 %v3157, %v3348
        %v3374 = vmul.f32 %v3216, %v3348
        %v3375 = vmul.f32 %v3160, %v3348
        %v3376 = vmul.f32 %v3217, %v3348
        %v3377 = vmul.f32 %v3163, %v3348
        %v3378 = vmul.f32 %v3218, %v3348
        %v3379 = vmul.f32 %v3166, %v3348
        %v3380 = vmul.f32 %v3219, %v3348
        %v3381 = vadd.f32 %v3315, %v3349
        %v3382 = vadd.f32 %v3316, %v3350
        %v3383 = vadd.f32 %v3317, %v3351
        %v3384 = vadd.f32 %v3318, %v3352
        %v3385 = vadd.f32 %v3319, %v3353
        %v3386 = vadd.f32 %v3320, %v3354
        %v3387 = vadd.f32 %v3321, %v3355
        %v3388 = vadd.f32 %v3322, %v3356
        %v3389 = vadd.f32 %v3323, %v3357
        %v3390 = vadd.f32 %v3324, %v3358
        %v3391 = vadd.f32 %v3325, %v3359
        %v3392 = vadd.f32 %v3326, %v3360
        %v3393 = vadd.f32 %v3327, %v3361
        %v3394 = vadd.f32 %v3328, %v3362
        %v3395 = vadd.f32 %v3329, %v3363
        %v3396 = vadd.f32 %v3330, %v3364
        %v3397 = vadd.f32 %v3331, %v3365
        %v3398 = vadd.f32 %v3332, %v3366
        %v3399 = vadd.f32 %v3333, %v3367
        %v3400 = vadd.f32 %v3334, %v3368
        %v3401 = vadd.f32 %v3335, %v3369
        %v3402 = vadd.f32 %v3336, %v3370
        %v3403 = vadd.f32 %v3337, %v3371
        %v3404 = vadd.f32 %v3338, %v3372
        %v3405 = vadd.f32 %v3339, %v3373
        %v3406 = vadd.f32 %v3340, %v3374
        %v3407 = vadd.f32 %v3341, %v3375
        %v3408 = vadd.f32 %v3342, %v3376
        %v3409 = vadd.f32 %v3343, %v3377
        %v3410 = vadd.f32 %v3344, %v3378
        %v3411 = vadd.f32 %v3345, %v3379
        %v3412 = vadd.f32 %v3346, %v3380
        %v3413 = vld [vmem:[%s1 + $0x1a] sm:$0x1]
        %v3414 = vperm.slane %v3413, 0
        %v3415 = vmul.f32 %v3124, %v3414
        %v3416 = vmul.f32 %v3205, %v3414
        %v3417 = vmul.f32 %v3127, %v3414
        %v3418 = vmul.f32 %v3206, %v3414
        %v3419 = vmul.f32 %v3130, %v3414
        %v3420 = vmul.f32 %v3207, %v3414
        %v3421 = vmul.f32 %v3133, %v3414
        %v3422 = vmul.f32 %v3208, %v3414
        %v3423 = vmul.f32 %v3136, %v3414
        %v3424 = vmul.f32 %v3209, %v3414
        %v3425 = vmul.f32 %v3139, %v3414
        %v3426 = vmul.f32 %v3210, %v3414
        %v3427 = vmul.f32 %v3142, %v3414
        %v3428 = vmul.f32 %v3211, %v3414
        %v3429 = vmul.f32 %v3145, %v3414
        %v3430 = vmul.f32 %v3212, %v3414
        %v3431 = vmul.f32 %v3148, %v3414
        %v3432 = vmul.f32 %v3213, %v3414
        %v3433 = vmul.f32 %v3151, %v3414
        %v3434 = vmul.f32 %v3214, %v3414
        %v3435 = vmul.f32 %v3154, %v3414
        %v3436 = vmul.f32 %v3215, %v3414
        %v3437 = vmul.f32 %v3157, %v3414
        %v3438 = vmul.f32 %v3216, %v3414
        %v3439 = vmul.f32 %v3160, %v3414
        %v3440 = vmul.f32 %v3217, %v3414
        %v3441 = vmul.f32 %v3163, %v3414
        %v3442 = vmul.f32 %v3218, %v3414
        %v3443 = vmul.f32 %v3166, %v3414
        %v3444 = vmul.f32 %v3219, %v3414
        %v3445 = vmul.f32 %v3169, %v3414
        %v3446 = vmul.f32 %v3220, %v3414
        %v3447 = vadd.f32 %v3381, %v3415
        %v3448 = vadd.f32 %v3382, %v3416
        %v3449 = vadd.f32 %v3383, %v3417
        %v3450 = vadd.f32 %v3384, %v3418
        %v3451 = vadd.f32 %v3385, %v3419
        %v3452 = vadd.f32 %v3386, %v3420
        %v3453 = vadd.f32 %v3387, %v3421
        %v3454 = vadd.f32 %v3388, %v3422
        %v3455 = vadd.f32 %v3389, %v3423
        %v3456 = vadd.f32 %v3390, %v3424
        %v3457 = vadd.f32 %v3391, %v3425
        %v3458 = vadd.f32 %v3392, %v3426
        %v3459 = vadd.f32 %v3393, %v3427
        %v3460 = vadd.f32 %v3394, %v3428
        %v3461 = vadd.f32 %v3395, %v3429
        %v3462 = vadd.f32 %v3396, %v3430
        %v3463 = vadd.f32 %v3397, %v3431
        %v3464 = vadd.f32 %v3398, %v3432
        %v3465 = vadd.f32 %v3399, %v3433
        %v3466 = vadd.f32 %v3400, %v3434
        %v3467 = vadd.f32 %v3401, %v3435
        %v3468 = vadd.f32 %v3402, %v3436
        %v3469 = vadd.f32 %v3403, %v3437
        %v3470 = vadd.f32 %v3404, %v3438
        %v3471 = vadd.f32 %v3405, %v3439
        %v3472 = vadd.f32 %v3406, %v3440
        %v3473 = vadd.f32 %v3407, %v3441
        %v3474 = vadd.f32 %v3408, %v3442
        %v3475 = vadd.f32 %v3409, %v3443
        %v3476 = vadd.f32 %v3410, %v3444
        %v3477 = vadd.f32 %v3411, %v3445
        %v3478 = vadd.f32 %v3412, %v3446
        %v3479 = vld [vmem:[%s1 + $0x21] sm:$0x1]
        %v3480 = vperm.slane %v3479, 0
        %v3481 = vmul.f32 %v3127, %v3480
        %v3482 = vmul.f32 %v3206, %v3480
        %v3483 = vmul.f32 %v3130, %v3480
        %v3484 = vmul.f32 %v3207, %v3480
        %v3485 = vmul.f32 %v3133, %v3480
        %v3486 = vmul.f32 %v3208, %v3480
        %v3487 = vmul.f32 %v3136, %v3480
        %v3488 = vmul.f32 %v3209, %v3480
        %v3489 = vmul.f32 %v3139, %v3480
        %v3490 = vmul.f32 %v3210, %v3480
        %v3491 = vmul.f32 %v3142, %v3480
        %v3492 = vmul.f32 %v3211, %v3480
        %v3493 = vmul.f32 %v3145, %v3480
        %v3494 = vmul.f32 %v3212, %v3480
        %v3495 = vmul.f32 %v3148, %v3480
        %v3496 = vmul.f32 %v3213, %v3480
        %v3497 = vmul.f32 %v3151, %v3480
        %v3498 = vmul.f32 %v3214, %v3480
        %v3499 = vmul.f32 %v3154, %v3480
        %v3500 = vmul.f32 %v3215, %v3480
        %v3501 = vmul.f32 %v3157, %v3480
        %v3502 = vmul.f32 %v3216, %v3480
        %v3503 = vmul.f32 %v3160, %v3480
        %v3504 = vmul.f32 %v3217, %v3480
        %v3505 = vmul.f32 %v3163, %v3480
        %v3506 = vmul.f32 %v3218, %v3480
        %v3507 = vmul.f32 %v3166, %v3480
        %v3508 = vmul.f32 %v3219, %v3480
        %v3509 = vmul.f32 %v3169, %v3480
        %v3510 = vmul.f32 %v3220, %v3480
        %v3511 = vmul.f32 %v3121, %v3480
        %v3512 = vmul.f32 %v3204, %v3480
        %v3513 = vadd.f32 %v3447, %v3481
        %v3514 = vadd.f32 %v3448, %v3482
        %v3515 = vadd.f32 %v3449, %v3483
        %v3516 = vadd.f32 %v3450, %v3484
        %v3517 = vadd.f32 %v3451, %v3485
        %v3518 = vadd.f32 %v3452, %v3486
        %v3519 = vadd.f32 %v3453, %v3487
        %v3520 = vadd.f32 %v3454, %v3488
        %v3521 = vadd.f32 %v3455, %v3489
        %v3522 = vadd.f32 %v3456, %v3490
        %v3523 = vadd.f32 %v3457, %v3491
        %v3524 = vadd.f32 %v3458, %v3492
        %v3525 = vadd.f32 %v3459, %v3493
        %v3526 = vadd.f32 %v3460, %v3494
        %v3527 = vadd.f32 %v3461, %v3495
        %v3528 = vadd.f32 %v3462, %v3496
        %v3529 = vadd.f32 %v3463, %v3497
        %v3530 = vadd.f32 %v3464, %v3498
        %v3531 = vadd.f32 %v3465, %v3499
        %v3532 = vadd.f32 %v3466, %v3500
        %v3533 = vadd.f32 %v3467, %v3501
        %v3534 = vadd.f32 %v3468, %v3502
        %v3535 = vadd.f32 %v3469, %v3503
        %v3536 = vadd.f32 %v3470, %v3504
        %v3537 = vadd.f32 %v3471, %v3505
        %v3538 = vadd.f32 %v3472, %v3506
        %v3539 = vadd.f32 %v3473, %v3507
        %v3540 = vadd.f32 %v3474, %v3508
        %v3541 = vadd.f32 %v3475, %v3509
        %v3542 = vadd.f32 %v3476, %v3510
        %v3543 = vadd.f32 %v3477, %v3511
        %v3544 = vadd.f32 %v3478, %v3512
        %v3545 = vld [vmem:[%s1 + $0x28] sm:$0x1]
        %v3546 = vperm.slane %v3545, 0
        %v3547 = vmul.f32 %v3130, %v3546
        %v3548 = vmul.f32 %v3207, %v3546
        %v3549 = vmul.f32 %v3133, %v3546
        %v3550 = vmul.f32 %v3208, %v3546
        %v3551 = vmul.f32 %v3136, %v3546
        %v3552 = vmul.f32 %v3209, %v3546
        %v3553 = vmul.f32 %v3139, %v3546
        %v3554 = vmul.f32 %v3210, %v3546
        %v3555 = vmul.f32 %v3142, %v3546
        %v3556 = vmul.f32 %v3211, %v3546
        %v3557 = vmul.f32 %v3145, %v3546
        %v3558 = vmul.f32 %v3212, %v3546
        %v3559 = vmul.f32 %v3148, %v3546
        %v3560 = vmul.f32 %v3213, %v3546
        %v3561 = vmul.f32 %v3151, %v3546
        %v3562 = vmul.f32 %v3214, %v3546
        %v3563 = vmul.f32 %v3154, %v3546
        %v3564 = vmul.f32 %v3215, %v3546
        %v3565 = vmul.f32 %v3157, %v3546
        %v3566 = vmul.f32 %v3216, %v3546
        %v3567 = vmul.f32 %v3160, %v3546
        %v3568 = vmul.f32 %v3217, %v3546
        %v3569 = vmul.f32 %v3163, %v3546
        %v3570 = vmul.f32 %v3218, %v3546
        %v3571 = vmul.f32 %v3166, %v3546
        %v3572 = vmul.f32 %v3219, %v3546
        %v3573 = vmul.f32 %v3169, %v3546
        %v3574 = vmul.f32 %v3220, %v3546
        %v3575 = vmul.f32 %v3121, %v3546
        %v3576 = vmul.f32 %v3204, %v3546
        %v3577 = vadd.f32 %v3513, %v3547
        %v3578 = vadd.f32 %v3514, %v3548
        %v3579 = vadd.f32 %v3515, %v3549
        %v3580 = vadd.f32 %v3516, %v3550
        %v3581 = vadd.f32 %v3517, %v3551
        %v3582 = vadd.f32 %v3518, %v3552
        %v3583 = vadd.f32 %v3519, %v3553
        %v3584 = vadd.f32 %v3520, %v3554
        %v3585 = vadd.f32 %v3521, %v3555
        %v3586 = vadd.f32 %v3522, %v3556
        %v3587 = vadd.f32 %v3523, %v3557
        %v3588 = vadd.f32 %v3524, %v3558
        %v3589 = vadd.f32 %v3525, %v3559
        %v3590 = vadd.f32 %v3526, %v3560
        %v3591 = vadd.f32 %v3527, %v3561
        %v3592 = vadd.f32 %v3528, %v3562
        %v3593 = vadd.f32 %v3529, %v3563
        %v3594 = vadd.f32 %v3530, %v3564
        %v3595 = vadd.f32 %v3531, %v3565
        %v3596 = vadd.f32 %v3532, %v3566
        %v3597 = vadd.f32 %v3533, %v3567
        %v3598 = vadd.f32 %v3534, %v3568
        %v3599 = vadd.f32 %v3535, %v3569
        %v3600 = vadd.f32 %v3536, %v3570
        %v3601 = vadd.f32 %v3537, %v3571
        %v3602 = vadd.f32 %v3538, %v3572
        %v3603 = vadd.f32 %v3539, %v3573
        %v3604 = vadd.f32 %v3540, %v3574
        %v3605 = vadd.f32 %v3541, %v3575
        %v3606 = vadd.f32 %v3542, %v3576
        %v3607 = vadd.f32 %v3543, %v3575
        %v3608 = vadd.f32 %v3544, %v3576
        %v3609 = vld [vmem:[%s1 + $0x2f] sm:$0x1]
        %v3610 = vperm.slane %v3609, 0
        %v3611 = vmul.f32 %v3133, %v3610
        %v3612 = vmul.f32 %v3208, %v3610
        %v3613 = vmul.f32 %v3136, %v3610
        %v3614 = vmul.f32 %v3209, %v3610
        %v3615 = vmul.f32 %v3139, %v3610
        %v3616 = vmul.f32 %v3210, %v3610
        %v3617 = vmul.f32 %v3142, %v3610
        %v3618 = vmul.f32 %v3211, %v3610
        %v3619 = vmul.f32 %v3145, %v3610
        %v3620 = vmul.f32 %v3212, %v3610
        %v3621 = vmul.f32 %v3148, %v3610
        %v3622 = vmul.f32 %v3213, %v3610
        %v3623 = vmul.f32 %v3151, %v3610
        %v3624 = vmul.f32 %v3214, %v3610
        %v3625 = vmul.f32 %v3154, %v3610
        %v3626 = vmul.f32 %v3215, %v3610
        %v3627 = vmul.f32 %v3157, %v3610
        %v3628 = vmul.f32 %v3216, %v3610
        %v3629 = vmul.f32 %v3160, %v3610
        %v3630 = vmul.f32 %v3217, %v3610
        %v3631 = vmul.f32 %v3163, %v3610
        %v3632 = vmul.f32 %v3218, %v3610
        %v3633 = vmul.f32 %v3166, %v3610
        %v3634 = vmul.f32 %v3219, %v3610
        %v3635 = vmul.f32 %v3169, %v3610
        %v3636 = vmul.f32 %v3220, %v3610
        %v3637 = vmul.f32 %v3121, %v3610
        %v3638 = vmul.f32 %v3204, %v3610
        %v3639 = vadd.f32 %v3577, %v3611
        %v3640 = vadd.f32 %v3578, %v3612
        %v3641 = vadd.f32 %v3579, %v3613
        %v3642 = vadd.f32 %v3580, %v3614
        %v3643 = vadd.f32 %v3581, %v3615
        %v3644 = vadd.f32 %v3582, %v3616
        %v3645 = vadd.f32 %v3583, %v3617
        %v3646 = vadd.f32 %v3584, %v3618
        %v3647 = vadd.f32 %v3585, %v3619
        %v3648 = vadd.f32 %v3586, %v3620
        %v3649 = vadd.f32 %v3587, %v3621
        %v3650 = vadd.f32 %v3588, %v3622
        %v3651 = vadd.f32 %v3589, %v3623
        %v3652 = vadd.f32 %v3590, %v3624
        %v3653 = vadd.f32 %v3591, %v3625
        %v3654 = vadd.f32 %v3592, %v3626
        %v3655 = vadd.f32 %v3593, %v3627
        %v3656 = vadd.f32 %v3594, %v3628
        %v3657 = vadd.f32 %v3595, %v3629
        %v3658 = vadd.f32 %v3596, %v3630
        %v3659 = vadd.f32 %v3597, %v3631
        %v3660 = vadd.f32 %v3598, %v3632
        %v3661 = vadd.f32 %v3599, %v3633
        %v3662 = vadd.f32 %v3600, %v3634
        %v3663 = vadd.f32 %v3601, %v3635
        %v3664 = vadd.f32 %v3602, %v3636
        %v3665 = vadd.f32 %v3603, %v3637
        %v3666 = vadd.f32 %v3604, %v3638
        %v3667 = vadd.f32 %v3605, %v3637
        %v3668 = vadd.f32 %v3606, %v3638
        %v3669 = vadd.f32 %v3607, %v3637
        %v3670 = vadd.f32 %v3608, %v3638
        %vm3671 = vcmask 1044480
        %v3672 = vrot.slane 0.0, 3
        %v3673 = vsel %vm3671, %v3672, %v3672
        %v3674 = vrot.slane %v408, 3
        %v3675 = vrot.slane %v409, 3
        %v3676 = vsel %vm3671, %v3674, %v3675
        %v3677 = vrot.slane %v410, 3
        %v3678 = vrot.slane %v411, 3
        %v3679 = vsel %vm3671, %v3677, %v3678
        %v3680 = vrot.slane %v412, 3
        %v3681 = vrot.slane %v413, 3
        %v3682 = vsel %vm3671, %v3680, %v3681
        %v3683 = vrot.slane %v414, 3
        %v3684 = vrot.slane %v415, 3
        %v3685 = vsel %vm3671, %v3683, %v3684
        %v3686 = vrot.slane %v416, 3
        %v3687 = vrot.slane %v417, 3
        %v3688 = vsel %vm3671, %v3686, %v3687
        %v3689 = vrot.slane %v418, 3
        %v3690 = vrot.slane %v419, 3
        %v3691 = vsel %vm3671, %v3689, %v3690
        %v3692 = vrot.slane %v420, 3
        %v3693 = vrot.slane %v421, 3
        %v3694 = vsel %vm3671, %v3692, %v3693
        %v3695 = vrot.slane %v422, 3
        %v3696 = vrot.slane %v423, 3
        %v3697 = vsel %vm3671, %v3695, %v3696
        %v3698 = vrot.slane %v424, 3
        %v3699 = vrot.slane %v425, 3
        %v3700 = vsel %vm3671, %v3698, %v3699
        %v3701 = vrot.slane %v426, 3
        %v3702 = vrot.slane %v427, 3
        %v3703 = vsel %vm3671, %v3701, %v3702
        %v3704 = vrot.slane %v428, 3
        %v3705 = vrot.slane %v429, 3
        %v3706 = vsel %vm3671, %v3704, %v3705
        %v3707 = vrot.slane %v430, 3
        %v3708 = vrot.slane %v431, 3
        %v3709 = vsel %vm3671, %v3707, %v3708
        %v3710 = vrot.slane %v432, 3
        %v3711 = vrot.slane %v433, 3
        %v3712 = vsel %vm3671, %v3710, %v3711
        %v3713 = vrot.slane %v434, 3
        %v3714 = vrot.slane %v435, 3
        %v3715 = vsel %vm3671, %v3713, %v3714
        %v3716 = vrot.slane %v436, 3
        %v3717 = vrot.slane %v437, 3
        %v3718 = vsel %vm3671, %v3716, %v3717
        %v3719 = vrot.slane %v438, 3
        %v3720 = vrot.slane %v439, 3
        %v3721 = vsel %vm3671, %v3719, %v3720
        %v3756 = vsel %vm3671, %v3672, 0.0
        %v3757 = vsel %vm3671, %v3675, 0.0
        %v3758 = vsel %vm3671, %v3678, 0.0
        %v3759 = vsel %vm3671, %v3681, 0.0
        %v3760 = vsel %vm3671, %v3684, 0.0
        %v3761 = vsel %vm3671, %v3687, 0.0
        %v3762 = vsel %vm3671, %v3690, 0.0
        %v3763 = vsel %vm3671, %v3693, 0.0
        %v3764 = vsel %vm3671, %v3696, 0.0
        %v3765 = vsel %vm3671, %v3699, 0.0
        %v3766 = vsel %vm3671, %v3702, 0.0
        %v3767 = vsel %vm3671, %v3705, 0.0
        %v3768 = vsel %vm3671, %v3708, 0.0
        %v3769 = vsel %vm3671, %v3711, 0.0
        %v3770 = vsel %vm3671, %v3714, 0.0
        %v3771 = vsel %vm3671, %v3717, 0.0
        %v3772 = vsel %vm3671, %v3720, 0.0
        %v3773 = vld [vmem:[%s1 + $0x6] sm:$0x1]
        %v3774 = vperm.slane %v3773, 0
        %v3775 = vmul.f32 %v3673, %v3774
        %v3776 = vmul.f32 %v3756, %v3774
        %v3777 = vmul.f32 %v3676, %v3774
        %v3778 = vmul.f32 %v3757, %v3774
        %v3779 = vmul.f32 %v3679, %v3774
        %v3780 = vmul.f32 %v3758, %v3774
        %v3781 = vmul.f32 %v3682, %v3774
        %v3782 = vmul.f32 %v3759, %v3774
        %v3783 = vmul.f32 %v3685, %v3774
        %v3784 = vmul.f32 %v3760, %v3774
        %v3785 = vmul.f32 %v3688, %v3774
        %v3786 = vmul.f32 %v3761, %v3774
        %v3787 = vmul.f32 %v3691, %v3774
        %v3788 = vmul.f32 %v3762, %v3774
        %v3789 = vmul.f32 %v3694, %v3774
        %v3790 = vmul.f32 %v3763, %v3774
        %v3791 = vmul.f32 %v3697, %v3774
        %v3792 = vmul.f32 %v3764, %v3774
        %v3793 = vmul.f32 %v3700, %v3774
        %v3794 = vmul.f32 %v3765, %v3774
        %v3795 = vmul.f32 %v3703, %v3774
        %v3796 = vmul.f32 %v3766, %v3774
        %v3797 = vmul.f32 %v3706, %v3774
        %v3798 = vmul.f32 %v3767, %v3774
        %v3799 = vmul.f32 %v3709, %v3774
        %v3800 = vmul.f32 %v3768, %v3774
        %v3801 = vmul.f32 %v3712, %v3774
        %v3802 = vmul.f32 %v3769, %v3774
        %v3803 = vadd.f32 %v3639, %v3775
        %v3804 = vadd.f32 %v3640, %v3776
        %v3805 = vadd.f32 %v3641, %v3775
        %v3806 = vadd.f32 %v3642, %v3776
        %v3807 = vadd.f32 %v3643, %v3775
        %v3808 = vadd.f32 %v3644, %v3776
        %v3809 = vadd.f32 %v3645, %v3777
        %v3810 = vadd.f32 %v3646, %v3778
        %v3811 = vadd.f32 %v3647, %v3779
        %v3812 = vadd.f32 %v3648, %v3780
        %v3813 = vadd.f32 %v3649, %v3781
        %v3814 = vadd.f32 %v3650, %v3782
        %v3815 = vadd.f32 %v3651, %v3783
        %v3816 = vadd.f32 %v3652, %v3784
        %v3817 = vadd.f32 %v3653, %v3785
        %v3818 = vadd.f32 %v3654, %v3786
        %v3819 = vadd.f32 %v3655, %v3787
        %v3820 = vadd.f32 %v3656, %v3788
        %v3821 = vadd.f32 %v3657, %v3789
        %v3822 = vadd.f32 %v3658, %v3790
        %v3823 = vadd.f32 %v3659, %v3791
        %v3824 = vadd.f32 %v3660, %v3792
        %v3825 = vadd.f32 %v3661, %v3793
        %v3826 = vadd.f32 %v3662, %v3794
        %v3827 = vadd.f32 %v3663, %v3795
        %v3828 = vadd.f32 %v3664, %v3796
        %v3829 = vadd.f32 %v3665, %v3797
        %v3830 = vadd.f32 %v3666, %v3798
        %v3831 = vadd.f32 %v3667, %v3799
        %v3832 = vadd.f32 %v3668, %v3800
        %v3833 = vadd.f32 %v3669, %v3801
        %v3834 = vadd.f32 %v3670, %v3802
        %v3835 = vld [vmem:[%s1 + $0xd] sm:$0x1]
        %v3836 = vperm.slane %v3835, 0
        %v3837 = vmul.f32 %v3673, %v3836
        %v3838 = vmul.f32 %v3756, %v3836
        %v3839 = vmul.f32 %v3676, %v3836
        %v3840 = vmul.f32 %v3757, %v3836
        %v3841 = vmul.f32 %v3679, %v3836
        %v3842 = vmul.f32 %v3758, %v3836
        %v3843 = vmul.f32 %v3682, %v3836
        %v3844 = vmul.f32 %v3759, %v3836
        %v3845 = vmul.f32 %v3685, %v3836
        %v3846 = vmul.f32 %v3760, %v3836
        %v3847 = vmul.f32 %v3688, %v3836
        %v3848 = vmul.f32 %v3761, %v3836
        %v3849 = vmul.f32 %v3691, %v3836
        %v3850 = vmul.f32 %v3762, %v3836
        %v3851 = vmul.f32 %v3694, %v3836
        %v3852 = vmul.f32 %v3763, %v3836
        %v3853 = vmul.f32 %v3697, %v3836
        %v3854 = vmul.f32 %v3764, %v3836
        %v3855 = vmul.f32 %v3700, %v3836
        %v3856 = vmul.f32 %v3765, %v3836
        %v3857 = vmul.f32 %v3703, %v3836
        %v3858 = vmul.f32 %v3766, %v3836
        %v3859 = vmul.f32 %v3706, %v3836
        %v3860 = vmul.f32 %v3767, %v3836
        %v3861 = vmul.f32 %v3709, %v3836
        %v3862 = vmul.f32 %v3768, %v3836
        %v3863 = vmul.f32 %v3712, %v3836
        %v3864 = vmul.f32 %v3769, %v3836
        %v3865 = vmul.f32 %v3715, %v3836
        %v3866 = vmul.f32 %v3770, %v3836
        %v3867 = vadd.f32 %v3803, %v3837
        %v3868 = vadd.f32 %v3804, %v3838
        %v3869 = vadd.f32 %v3805, %v3837
        %v3870 = vadd.f32 %v3806, %v3838
        %v3871 = vadd.f32 %v3807, %v3839
        %v3872 = vadd.f32 %v3808, %v3840
        %v3873 = vadd.f32 %v3809, %v3841
        %v3874 = vadd.f32 %v3810, %v3842
        %v3875 = vadd.f32 %v3811, %v3843
        %v3876 = vadd.f32 %v3812, %v3844
        %v3877 = vadd.f32 %v3813, %v3845
        %v3878 = vadd.f32 %v3814, %v3846
        %v3879 = vadd.f32 %v3815, %v3847
        %v3880 = vadd.f32 %v3816, %v3848
        %v3881 = vadd.f32 %v3817, %v3849
        %v3882 = vadd.f32 %v3818, %v3850
        %v3883 = vadd.f32 %v3819, %v3851
        %v3884 = vadd.f32 %v3820, %v3852
        %v3885 = vadd.f32 %v3821, %v3853
        %v3886 = vadd.f32 %v3822, %v3854
        %v3887 = vadd.f32 %v3823, %v3855
        %v3888 = vadd.f32 %v3824, %v3856
        %v3889 = vadd.f32 %v3825, %v3857
        %v3890 = vadd.f32 %v3826, %v3858
        %v3891 = vadd.f32 %v3827, %v3859
        %v3892 = vadd.f32 %v3828, %v3860
        %v3893 = vadd.f32 %v3829, %v3861
        %v3894 = vadd.f32 %v3830, %v3862
        %v3895 = vadd.f32 %v3831, %v3863
        %v3896 = vadd.f32 %v3832, %v3864
        %v3897 = vadd.f32 %v3833, %v3865
        %v3898 = vadd.f32 %v3834, %v3866
        %v3899 = vld [vmem:[%s1 + $0x14] sm:$0x1]
        %v3900 = vperm.slane %v3899, 0
        %v3901 = vmul.f32 %v3673, %v3900
        %v3902 = vmul.f32 %v3756, %v3900
        %v3903 = vmul.f32 %v3676, %v3900
        %v3904 = vmul.f32 %v3757, %v3900
        %v3905 = vmul.f32 %v3679, %v3900
        %v3906 = vmul.f32 %v3758, %v3900
        %v3907 = vmul.f32 %v3682, %v3900
        %v3908 = vmul.f32 %v3759, %v3900
        %v3909 = vmul.f32 %v3685, %v3900
        %v3910 = vmul.f32 %v3760, %v3900
        %v3911 = vmul.f32 %v3688, %v3900
        %v3912 = vmul.f32 %v3761, %v3900
        %v3913 = vmul.f32 %v3691, %v3900
        %v3914 = vmul.f32 %v3762, %v3900
        %v3915 = vmul.f32 %v3694, %v3900
        %v3916 = vmul.f32 %v3763, %v3900
        %v3917 = vmul.f32 %v3697, %v3900
        %v3918 = vmul.f32 %v3764, %v3900
        %v3919 = vmul.f32 %v3700, %v3900
        %v3920 = vmul.f32 %v3765, %v3900
        %v3921 = vmul.f32 %v3703, %v3900
        %v3922 = vmul.f32 %v3766, %v3900
        %v3923 = vmul.f32 %v3706, %v3900
        %v3924 = vmul.f32 %v3767, %v3900
        %v3925 = vmul.f32 %v3709, %v3900
        %v3926 = vmul.f32 %v3768, %v3900
        %v3927 = vmul.f32 %v3712, %v3900
        %v3928 = vmul.f32 %v3769, %v3900
        %v3929 = vmul.f32 %v3715, %v3900
        %v3930 = vmul.f32 %v3770, %v3900
        %v3931 = vmul.f32 %v3718, %v3900
        %v3932 = vmul.f32 %v3771, %v3900
        %v3933 = vadd.f32 %v3867, %v3901
        %v3934 = vadd.f32 %v3868, %v3902
        %v3935 = vadd.f32 %v3869, %v3903
        %v3936 = vadd.f32 %v3870, %v3904
        %v3937 = vadd.f32 %v3871, %v3905
        %v3938 = vadd.f32 %v3872, %v3906
        %v3939 = vadd.f32 %v3873, %v3907
        %v3940 = vadd.f32 %v3874, %v3908
        %v3941 = vadd.f32 %v3875, %v3909
        %v3942 = vadd.f32 %v3876, %v3910
        %v3943 = vadd.f32 %v3877, %v3911
        %v3944 = vadd.f32 %v3878, %v3912
        %v3945 = vadd.f32 %v3879, %v3913
        %v3946 = vadd.f32 %v3880, %v3914
        %v3947 = vadd.f32 %v3881, %v3915
        %v3948 = vadd.f32 %v3882, %v3916
        %v3949 = vadd.f32 %v3883, %v3917
        %v3950 = vadd.f32 %v3884, %v3918
        %v3951 = vadd.f32 %v3885, %v3919
        %v3952 = vadd.f32 %v3886, %v3920
        %v3953 = vadd.f32 %v3887, %v3921
        %v3954 = vadd.f32 %v3888, %v3922
        %v3955 = vadd.f32 %v3889, %v3923
        %v3956 = vadd.f32 %v3890, %v3924
        %v3957 = vadd.f32 %v3891, %v3925
        %v3958 = vadd.f32 %v3892, %v3926
        %v3959 = vadd.f32 %v3893, %v3927
        %v3960 = vadd.f32 %v3894, %v3928
        %v3961 = vadd.f32 %v3895, %v3929
        %v3962 = vadd.f32 %v3896, %v3930
        %v3963 = vadd.f32 %v3897, %v3931
        %v3964 = vadd.f32 %v3898, %v3932
        %v3965 = vld [vmem:[%s1 + $0x1b] sm:$0x1]
        %v3966 = vperm.slane %v3965, 0
        %v3967 = vmul.f32 %v3676, %v3966
        %v3968 = vmul.f32 %v3757, %v3966
        %v3969 = vmul.f32 %v3679, %v3966
        %v3970 = vmul.f32 %v3758, %v3966
        %v3971 = vmul.f32 %v3682, %v3966
        %v3972 = vmul.f32 %v3759, %v3966
        %v3973 = vmul.f32 %v3685, %v3966
        %v3974 = vmul.f32 %v3760, %v3966
        %v3975 = vmul.f32 %v3688, %v3966
        %v3976 = vmul.f32 %v3761, %v3966
        %v3977 = vmul.f32 %v3691, %v3966
        %v3978 = vmul.f32 %v3762, %v3966
        %v3979 = vmul.f32 %v3694, %v3966
        %v3980 = vmul.f32 %v3763, %v3966
        %v3981 = vmul.f32 %v3697, %v3966
        %v3982 = vmul.f32 %v3764, %v3966
        %v3983 = vmul.f32 %v3700, %v3966
        %v3984 = vmul.f32 %v3765, %v3966
        %v3985 = vmul.f32 %v3703, %v3966
        %v3986 = vmul.f32 %v3766, %v3966
        %v3987 = vmul.f32 %v3706, %v3966
        %v3988 = vmul.f32 %v3767, %v3966
        %v3989 = vmul.f32 %v3709, %v3966
        %v3990 = vmul.f32 %v3768, %v3966
        %v3991 = vmul.f32 %v3712, %v3966
        %v3992 = vmul.f32 %v3769, %v3966
        %v3993 = vmul.f32 %v3715, %v3966
        %v3994 = vmul.f32 %v3770, %v3966
        %v3995 = vmul.f32 %v3718, %v3966
        %v3996 = vmul.f32 %v3771, %v3966
        %v3997 = vmul.f32 %v3721, %v3966
        %v3998 = vmul.f32 %v3772, %v3966
        %v3999 = vadd.f32 %v3933, %v3967
        %v4000 = vadd.f32 %v3934, %v3968
        %v4001 = vadd.f32 %v3935, %v3969
        %v4002 = vadd.f32 %v3936, %v3970
        %v4003 = vadd.f32 %v3937, %v3971
        %v4004 = vadd.f32 %v3938, %v3972
        %v4005 = vadd.f32 %v3939, %v3973
        %v4006 = vadd.f32 %v3940, %v3974
        %v4007 = vadd.f32 %v3941, %v3975
        %v4008 = vadd.f32 %v3942, %v3976
        %v4009 = vadd.f32 %v3943, %v3977
        %v4010 = vadd.f32 %v3944, %v3978
        %v4011 = vadd.f32 %v3945, %v3979
        %v4012 = vadd.f32 %v3946, %v3980
        %v4013 = vadd.f32 %v3947, %v3981
        %v4014 = vadd.f32 %v3948, %v3982
        %v4015 = vadd.f32 %v3949, %v3983
        %v4016 = vadd.f32 %v3950, %v3984
        %v4017 = vadd.f32 %v3951, %v3985
        %v4018 = vadd.f32 %v3952, %v3986
        %v4019 = vadd.f32 %v3953, %v3987
        %v4020 = vadd.f32 %v3954, %v3988
        %v4021 = vadd.f32 %v3955, %v3989
        %v4022 = vadd.f32 %v3956, %v3990
        %v4023 = vadd.f32 %v3957, %v3991
        %v4024 = vadd.f32 %v3958, %v3992
        %v4025 = vadd.f32 %v3959, %v3993
        %v4026 = vadd.f32 %v3960, %v3994
        %v4027 = vadd.f32 %v3961, %v3995
        %v4028 = vadd.f32 %v3962, %v3996
        %v4029 = vadd.f32 %v3963, %v3997
        %v4030 = vadd.f32 %v3964, %v3998
        %v4031 = vld [vmem:[%s1 + $0x22] sm:$0x1]
        %v4032 = vperm.slane %v4031, 0
        %v4033 = vmul.f32 %v3679, %v4032
        %v4034 = vmul.f32 %v3758, %v4032
        %v4035 = vmul.f32 %v3682, %v4032
        %v4036 = vmul.f32 %v3759, %v4032
        %v4037 = vmul.f32 %v3685, %v4032
        %v4038 = vmul.f32 %v3760, %v4032
        %v4039 = vmul.f32 %v3688, %v4032
        %v4040 = vmul.f32 %v3761, %v4032
        %v4041 = vmul.f32 %v3691, %v4032
        %v4042 = vmul.f32 %v3762, %v4032
        %v4043 = vmul.f32 %v3694, %v4032
        %v4044 = vmul.f32 %v3763, %v4032
        %v4045 = vmul.f32 %v3697, %v4032
        %v4046 = vmul.f32 %v3764, %v4032
        %v4047 = vmul.f32 %v3700, %v4032
        %v4048 = vmul.f32 %v3765, %v4032
        %v4049 = vmul.f32 %v3703, %v4032
        %v4050 = vmul.f32 %v3766, %v4032
        %v4051 = vmul.f32 %v3706, %v4032
        %v4052 = vmul.f32 %v3767, %v4032
        %v4053 = vmul.f32 %v3709, %v4032
        %v4054 = vmul.f32 %v3768, %v4032
        %v4055 = vmul.f32 %v3712, %v4032
        %v4056 = vmul.f32 %v3769, %v4032
        %v4057 = vmul.f32 %v3715, %v4032
        %v4058 = vmul.f32 %v3770, %v4032
        %v4059 = vmul.f32 %v3718, %v4032
        %v4060 = vmul.f32 %v3771, %v4032
        %v4061 = vmul.f32 %v3721, %v4032
        %v4062 = vmul.f32 %v3772, %v4032
        %v4063 = vmul.f32 %v3673, %v4032
        %v4064 = vmul.f32 %v3756, %v4032
        %v4065 = vadd.f32 %v3999, %v4033
        %v4066 = vadd.f32 %v4000, %v4034
        %v4067 = vadd.f32 %v4001, %v4035
        %v4068 = vadd.f32 %v4002, %v4036
        %v4069 = vadd.f32 %v4003, %v4037
        %v4070 = vadd.f32 %v4004, %v4038
        %v4071 = vadd.f32 %v4005, %v4039
        %v4072 = vadd.f32 %v4006, %v4040
        %v4073 = vadd.f32 %v4007, %v4041
        %v4074 = vadd.f32 %v4008, %v4042
        %v4075 = vadd.f32 %v4009, %v4043
        %v4076 = vadd.f32 %v4010, %v4044
        %v4077 = vadd.f32 %v4011, %v4045
        %v4078 = vadd.f32 %v4012, %v4046
        %v4079 = vadd.f32 %v4013, %v4047
        %v4080 = vadd.f32 %v4014, %v4048
        %v4081 = vadd.f32 %v4015, %v4049
        %v4082 = vadd.f32 %v4016, %v4050
        %v4083 = vadd.f32 %v4017, %v4051
        %v4084 = vadd.f32 %v4018, %v4052
        %v4085 = vadd.f32 %v4019, %v4053
        %v4086 = vadd.f32 %v4020, %v4054
        %v4087 = vadd.f32 %v4021, %v4055
        %v4088 = vadd.f32 %v4022, %v4056
        %v4089 = vadd.f32 %v4023, %v4057
        %v4090 = vadd.f32 %v4024, %v4058
        %v4091 = vadd.f32 %v4025, %v4059
        %v4092 = vadd.f32 %v4026, %v4060
        %v4093 = vadd.f32 %v4027, %v4061
        %v4094 = vadd.f32 %v4028, %v4062
        %v4095 = vadd.f32 %v4029, %v4063
        %v4096 = vadd.f32 %v4030, %v4064
        %v4097 = vld [vmem:[%s1 + $0x29] sm:$0x1]
        %v4098 = vperm.slane %v4097, 0
        %v4099 = vmul.f32 %v3682, %v4098
        %v4100 = vmul.f32 %v3759, %v4098
        %v4101 = vmul.f32 %v3685, %v4098
        %v4102 = vmul.f32 %v3760, %v4098
        %v4103 = vmul.f32 %v3688, %v4098
        %v4104 = vmul.f32 %v3761, %v4098
        %v4105 = vmul.f32 %v3691, %v4098
        %v4106 = vmul.f32 %v3762, %v4098
        %v4107 = vmul.f32 %v3694, %v4098
        %v4108 = vmul.f32 %v3763, %v4098
        %v4109 = vmul.f32 %v3697, %v4098
        %v4110 = vmul.f32 %v3764, %v4098
        %v4111 = vmul.f32 %v3700, %v4098
        %v4112 = vmul.f32 %v3765, %v4098
        %v4113 = vmul.f32 %v3703, %v4098
        %v4114 = vmul.f32 %v3766, %v4098
        %v4115 = vmul.f32 %v3706, %v4098
        %v4116 = vmul.f32 %v3767, %v4098
        %v4117 = vmul.f32 %v3709, %v4098
        %v4118 = vmul.f32 %v3768, %v4098
        %v4119 = vmul.f32 %v3712, %v4098
        %v4120 = vmul.f32 %v3769, %v4098
        %v4121 = vmul.f32 %v3715, %v4098
        %v4122 = vmul.f32 %v3770, %v4098
        %v4123 = vmul.f32 %v3718, %v4098
        %v4124 = vmul.f32 %v3771, %v4098
        %v4125 = vmul.f32 %v3721, %v4098
        %v4126 = vmul.f32 %v3772, %v4098
        %v4127 = vmul.f32 %v3673, %v4098
        %v4128 = vmul.f32 %v3756, %v4098
        %v4129 = vadd.f32 %v4065, %v4099
        %v4130 = vadd.f32 %v4066, %v4100
        %v4131 = vadd.f32 %v4067, %v4101
        %v4132 = vadd.f32 %v4068, %v4102
        %v4133 = vadd.f32 %v4069, %v4103
        %v4134 = vadd.f32 %v4070, %v4104
        %v4135 = vadd.f32 %v4071, %v4105
        %v4136 = vadd.f32 %v4072, %v4106
        %v4137 = vadd.f32 %v4073, %v4107
        %v4138 = vadd.f32 %v4074, %v4108
        %v4139 = vadd.f32 %v4075, %v4109
        %v4140 = vadd.f32 %v4076, %v4110
        %v4141 = vadd.f32 %v4077, %v4111
        %v4142 = vadd.f32 %v4078, %v4112
        %v4143 = vadd.f32 %v4079, %v4113
        %v4144 = vadd.f32 %v4080, %v4114
        %v4145 = vadd.f32 %v4081, %v4115
        %v4146 = vadd.f32 %v4082, %v4116
        %v4147 = vadd.f32 %v4083, %v4117
        %v4148 = vadd.f32 %v4084, %v4118
        %v4149 = vadd.f32 %v4085, %v4119
        %v4150 = vadd.f32 %v4086, %v4120
        %v4151 = vadd.f32 %v4087, %v4121
        %v4152 = vadd.f32 %v4088, %v4122
        %v4153 = vadd.f32 %v4089, %v4123
        %v4154 = vadd.f32 %v4090, %v4124
        %v4155 = vadd.f32 %v4091, %v4125
        %v4156 = vadd.f32 %v4092, %v4126
        %v4157 = vadd.f32 %v4093, %v4127
        %v4158 = vadd.f32 %v4094, %v4128
        %v4159 = vadd.f32 %v4095, %v4127
        %v4160 = vadd.f32 %v4096, %v4128
        %v4161 = vld [vmem:[%s1 + $0x30] sm:$0x1]
        %v4162 = vperm.slane %v4161, 0
        %v4163 = vmul.f32 %v3685, %v4162
        %v4164 = vmul.f32 %v3760, %v4162
        %v4165 = vmul.f32 %v3688, %v4162
        %v4166 = vmul.f32 %v3761, %v4162
        %v4167 = vmul.f32 %v3691, %v4162
        %v4168 = vmul.f32 %v3762, %v4162
        %v4169 = vmul.f32 %v3694, %v4162
        %v4170 = vmul.f32 %v3763, %v4162
        %v4171 = vmul.f32 %v3697, %v4162
        %v4172 = vmul.f32 %v3764, %v4162
        %v4173 = vmul.f32 %v3700, %v4162
        %v4174 = vmul.f32 %v3765, %v4162
        %v4175 = vmul.f32 %v3703, %v4162
        %v4176 = vmul.f32 %v3766, %v4162
        %v4177 = vmul.f32 %v3706, %v4162
        %v4178 = vmul.f32 %v3767, %v4162
        %v4179 = vmul.f32 %v3709, %v4162
        %v4180 = vmul.f32 %v3768, %v4162
        %v4181 = vmul.f32 %v3712, %v4162
        %v4182 = vmul.f32 %v3769, %v4162
        %v4183 = vmul.f32 %v3715, %v4162
        %v4184 = vmul.f32 %v3770, %v4162
        %v4185 = vmul.f32 %v3718, %v4162
        %v4186 = vmul.f32 %v3771, %v4162
        %v4187 = vmul.f32 %v3721, %v4162
        %v4188 = vmul.f32 %v3772, %v4162
        %v4189 = vmul.f32 %v3673, %v4162
        %v4190 = vmul.f32 %v3756, %v4162
        %v4191 = vadd.f32 %v4129, %v4163
        %v4192 = vadd.f32 %v4130, %v4164
        %v4193 = vadd.f32 %v4131, %v4165
        %v4194 = vadd.f32 %v4132, %v4166
        %v4195 = vadd.f32 %v4133, %v4167
        %v4196 = vadd.f32 %v4134, %v4168
        %v4197 = vadd.f32 %v4135, %v4169
        %v4198 = vadd.f32 %v4136, %v4170
        %v4199 = vadd.f32 %v4137, %v4171
        %v4200 = vadd.f32 %v4138, %v4172
        %v4201 = vadd.f32 %v4139, %v4173
        %v4202 = vadd.f32 %v4140, %v4174
        %v4203 = vadd.f32 %v4141, %v4175
        %v4204 = vadd.f32 %v4142, %v4176
        %v4205 = vadd.f32 %v4143, %v4177
        %v4206 = vadd.f32 %v4144, %v4178
        %v4207 = vadd.f32 %v4145, %v4179
        %v4208 = vadd.f32 %v4146, %v4180
        %v4209 = vadd.f32 %v4147, %v4181
        %v4210 = vadd.f32 %v4148, %v4182
        %v4211 = vadd.f32 %v4149, %v4183
        %v4212 = vadd.f32 %v4150, %v4184
        %v4213 = vadd.f32 %v4151, %v4185
        %v4214 = vadd.f32 %v4152, %v4186
        %v4215 = vadd.f32 %v4153, %v4187
        %v4216 = vadd.f32 %v4154, %v4188
        %v4217 = vadd.f32 %v4155, %v4189
        %v4218 = vadd.f32 %v4156, %v4190
        %v4219 = vadd.f32 %v4157, %v4189
        %v4220 = vadd.f32 %v4158, %v4190
        %v4221 = vadd.f32 %v4159, %v4189
        %v4222 = vadd.f32 %v4160, %v4190
        %v4223 = vld [vmem:[%s2] sm:$0x1]
        %v4225 = vperm.slane %v4223, 0
        %v4227 = vadd.f32 %v4191, %v4225
        %v4228 = vadd.f32 %v4192, %v4225
        %v4229 = vadd.f32 %v4193, %v4225
        %v4230 = vadd.f32 %v4194, %v4225
        %v4231 = vadd.f32 %v4195, %v4225
        %v4232 = vadd.f32 %v4196, %v4225
        %v4233 = vadd.f32 %v4197, %v4225
        %v4234 = vadd.f32 %v4198, %v4225
        %v4235 = vadd.f32 %v4199, %v4225
        %v4236 = vadd.f32 %v4200, %v4225
        %v4237 = vadd.f32 %v4201, %v4225
        %v4238 = vadd.f32 %v4202, %v4225
        %v4239 = vadd.f32 %v4203, %v4225
        %v4240 = vadd.f32 %v4204, %v4225
        %v4241 = vadd.f32 %v4205, %v4225
        %v4242 = vadd.f32 %v4206, %v4225
        %v4243 = vadd.f32 %v4207, %v4225
        %v4244 = vadd.f32 %v4208, %v4225
        %v4245 = vadd.f32 %v4209, %v4225
        %v4246 = vadd.f32 %v4210, %v4225
        %v4247 = vadd.f32 %v4211, %v4225
        %v4248 = vadd.f32 %v4212, %v4225
        %v4249 = vadd.f32 %v4213, %v4225
        %v4250 = vadd.f32 %v4214, %v4225
        %v4251 = vadd.f32 %v4215, %v4225
        %v4252 = vadd.f32 %v4216, %v4225
        %v4253 = vadd.f32 %v4217, %v4225
        %v4254 = vadd.f32 %v4218, %v4225
        %v4255 = vadd.f32 %v4219, %v4225
        %v4256 = vadd.f32 %v4220, %v4225
        %v4257 = vadd.f32 %v4221, %v4225
        %v4258 = vadd.f32 %v4222, %v4225
        %vm4259 = vcmask 261120
        %v4260 = vsel %vm4259, %v4227, 0.0
        %4261 = vadd.xlane.f32.xlu0 %v4260
        %v4262 = vpop.xlane.xlu0 %4261
        %v4263 = vsel %vm4259, %v4228, 0.0
        %4264 = vadd.xlane.f32.xlu0 %v4263
        %v4265 = vpop.xlane.xlu0 %4264
        %v4266 = vsel %vm4259, %v4229, 0.0
        %4267 = vadd.xlane.f32.xlu0 %v4266
        %v4268 = vpop.xlane.xlu0 %4267
        %v4269 = vsel %vm4259, %v4230, 0.0
        %4270 = vadd.xlane.f32.xlu0 %v4269
        %v4271 = vpop.xlane.xlu0 %4270
        %v4272 = vsel %vm4259, %v4231, 0.0
        %4273 = vadd.xlane.f32.xlu0 %v4272
        %v4274 = vpop.xlane.xlu0 %4273
        %v4275 = vsel %vm4259, %v4232, 0.0
        %4276 = vadd.xlane.f32.xlu0 %v4275
        %v4277 = vpop.xlane.xlu0 %4276
        %v4278 = vsel %vm4259, %v4233, 0.0
        %4279 = vadd.xlane.f32.xlu0 %v4278
        %v4280 = vpop.xlane.xlu0 %4279
        %v4281 = vsel %vm4259, %v4234, 0.0
        %4282 = vadd.xlane.f32.xlu0 %v4281
        %v4283 = vpop.xlane.xlu0 %4282
        %v4284 = vsel %vm4259, %v4235, 0.0
        %4285 = vadd.xlane.f32.xlu0 %v4284
        %v4286 = vpop.xlane.xlu0 %4285
        %v4287 = vsel %vm4259, %v4236, 0.0
        %4288 = vadd.xlane.f32.xlu0 %v4287
        %v4289 = vpop.xlane.xlu0 %4288
        %v4290 = vsel %vm4259, %v4237, 0.0
        %4291 = vadd.xlane.f32.xlu0 %v4290
        %v4292 = vpop.xlane.xlu0 %4291
        %v4293 = vsel %vm4259, %v4238, 0.0
        %4294 = vadd.xlane.f32.xlu0 %v4293
        %v4295 = vpop.xlane.xlu0 %4294
        %v4296 = vsel %vm4259, %v4239, 0.0
        %4297 = vadd.xlane.f32.xlu0 %v4296
        %v4298 = vpop.xlane.xlu0 %4297
        %v4299 = vsel %vm4259, %v4240, 0.0
        %4300 = vadd.xlane.f32.xlu0 %v4299
        %v4301 = vpop.xlane.xlu0 %4300
        %v4302 = vsel %vm4259, %v4241, 0.0
        %4303 = vadd.xlane.f32.xlu0 %v4302
        %v4304 = vpop.xlane.xlu0 %4303
        %v4305 = vsel %vm4259, %v4242, 0.0
        %4306 = vadd.xlane.f32.xlu0 %v4305
        %v4307 = vpop.xlane.xlu0 %4306
        %v4308 = vsel %vm4259, %v4243, 0.0
        %4309 = vadd.xlane.f32.xlu0 %v4308
        %v4310 = vpop.xlane.xlu0 %4309
        %v4311 = vsel %vm4259, %v4244, 0.0
        %4312 = vadd.xlane.f32.xlu0 %v4311
        %v4313 = vpop.xlane.xlu0 %4312
        %v4314 = vsel %vm4259, %v4245, 0.0
        %4315 = vadd.xlane.f32.xlu0 %v4314
        %v4316 = vpop.xlane.xlu0 %4315
        %v4317 = vsel %vm4259, %v4246, 0.0
        %4318 = vadd.xlane.f32.xlu0 %v4317
        %v4319 = vpop.xlane.xlu0 %4318
        %v4320 = vsel %vm4259, %v4247, 0.0
        %4321 = vadd.xlane.f32.xlu0 %v4320
        %v4322 = vpop.xlane.xlu0 %4321
        %v4323 = vsel %vm4259, %v4248, 0.0
        %4324 = vadd.xlane.f32.xlu0 %v4323
        %v4325 = vpop.xlane.xlu0 %4324
        %v4326 = vsel %vm4259, %v4249, 0.0
        %4327 = vadd.xlane.f32.xlu0 %v4326
        %v4328 = vpop.xlane.xlu0 %4327
        %v4329 = vsel %vm4259, %v4250, 0.0
        %4330 = vadd.xlane.f32.xlu0 %v4329
        %v4331 = vpop.xlane.xlu0 %4330
        %v4332 = vsel %vm4259, %v4251, 0.0
        %4333 = vadd.xlane.f32.xlu0 %v4332
        %v4334 = vpop.xlane.xlu0 %4333
        %v4335 = vsel %vm4259, %v4252, 0.0
        %4336 = vadd.xlane.f32.xlu0 %v4335
        %v4337 = vpop.xlane.xlu0 %4336
        %v4338 = vsel %vm4259, %v4253, 0.0
        %4339 = vadd.xlane.f32.xlu0 %v4338
        %v4340 = vpop.xlane.xlu0 %4339
        %v4341 = vsel %vm4259, %v4254, 0.0
        %4342 = vadd.xlane.f32.xlu0 %v4341
        %v4343 = vpop.xlane.xlu0 %4342
        %v4344 = vsel %vm4259, %v4255, 0.0
        %4345 = vadd.xlane.f32.xlu0 %v4344
        %v4346 = vpop.xlane.xlu0 %4345
        %v4347 = vsel %vm4259, %v4256, 0.0
        %4348 = vadd.xlane.f32.xlu0 %v4347
        %v4349 = vpop.xlane.xlu0 %4348
        %v4350 = vsel %vm4259, %v4257, 0.0
        %4351 = vadd.xlane.f32.xlu0 %v4350
        %v4352 = vpop.xlane.xlu0 %4351
        %v4353 = vsel %vm4259, %v4258, 0.0
        %4354 = vadd.xlane.f32.xlu0 %v4353
        %v4355 = vpop.xlane.xlu0 %4354
        %v4356 = vrcp.pop 32.0
        %v4357 = vmul.f32 32.0, %v4356
        %v4358 = vsub.f32 1.0, %v4357
        %v4359 = vmul.f32 %v4356, %v4358
        %v4360 = vadd.f32 %v4356, %v4359
        %vm4361 = vweird.f32 %v4356
        %v4362 = vsel %vm4361, %v4356, %v4360
        %v4363 = vmul.f32 %v4262, %v4362
        %v4364 = vmul.f32 %v4265, %v4362
        %v4365 = vmul.f32 %v4268, %v4362
        %v4366 = vmul.f32 %v4271, %v4362
        %v4367 = vmul.f32 %v4274, %v4362
        %v4368 = vmul.f32 %v4277, %v4362
        %v4369 = vmul.f32 %v4280, %v4362
        %v4370 = vmul.f32 %v4283, %v4362
        %v4371 = vmul.f32 %v4286, %v4362
        %v4372 = vmul.f32 %v4289, %v4362
        %v4373 = vmul.f32 %v4292, %v4362
        %v4374 = vmul.f32 %v4295, %v4362
        %v4375 = vmul.f32 %v4298, %v4362
        %v4376 = vmul.f32 %v4301, %v4362
        %v4377 = vmul.f32 %v4304, %v4362
        %v4378 = vmul.f32 %v4307, %v4362
        %v4379 = vmul.f32 %v4310, %v4362
        %v4380 = vmul.f32 %v4313, %v4362
        %v4381 = vmul.f32 %v4316, %v4362
        %v4382 = vmul.f32 %v4319, %v4362
        %v4383 = vmul.f32 %v4322, %v4362
        %v4384 = vmul.f32 %v4325, %v4362
        %v4385 = vmul.f32 %v4328, %v4362
        %v4386 = vmul.f32 %v4331, %v4362
        %v4387 = vmul.f32 %v4334, %v4362
        %v4388 = vmul.f32 %v4337, %v4362
        %v4389 = vmul.f32 %v4340, %v4362
        %v4390 = vmul.f32 %v4343, %v4362
        %v4391 = vmul.f32 %v4346, %v4362
        %v4392 = vmul.f32 %v4349, %v4362
        %v4393 = vmul.f32 %v4352, %v4362
        %v4394 = vmul.f32 %v4355, %v4362
        %v4395 = vsub.f32 %v4227, %v4363
        %v4396 = vsub.f32 %v4228, %v4364
        %v4397 = vsub.f32 %v4229, %v4365
        %v4398 = vsub.f32 %v4230, %v4366
        %v4399 = vsub.f32 %v4231, %v4367
        %v4400 = vsub.f32 %v4232, %v4368
        %v4401 = vsub.f32 %v4233, %v4369
        %v4402 = vsub.f32 %v4234, %v4370
        %v4403 = vsub.f32 %v4235, %v4371
        %v4404 = vsub.f32 %v4236, %v4372
        %v4405 = vsub.f32 %v4237, %v4373
        %v4406 = vsub.f32 %v4238, %v4374
        %v4407 = vsub.f32 %v4239, %v4375
        %v4408 = vsub.f32 %v4240, %v4376
        %v4409 = vsub.f32 %v4241, %v4377
        %v4410 = vsub.f32 %v4242, %v4378
        %v4411 = vsub.f32 %v4243, %v4379
        %v4412 = vsub.f32 %v4244, %v4380
        %v4413 = vsub.f32 %v4245, %v4381
        %v4414 = vsub.f32 %v4246, %v4382
        %v4415 = vsub.f32 %v4247, %v4383
        %v4416 = vsub.f32 %v4248, %v4384
        %v4417 = vsub.f32 %v4249, %v4385
        %v4418 = vsub.f32 %v4250, %v4386
        %v4419 = vsub.f32 %v4251, %v4387
        %v4420 = vsub.f32 %v4252, %v4388
        %v4421 = vsub.f32 %v4253, %v4389
        %v4422 = vsub.f32 %v4254, %v4390
        %v4423 = vsub.f32 %v4255, %v4391
        %v4424 = vsub.f32 %v4256, %v4392
        %v4425 = vsub.f32 %v4257, %v4393
        %v4426 = vsub.f32 %v4258, %v4394
        %v4427 = vmul.f32 %v4395, %v4395
        %v4428 = vmul.f32 %v4396, %v4396
        %v4429 = vmul.f32 %v4397, %v4397
        %v4430 = vmul.f32 %v4398, %v4398
        %v4431 = vmul.f32 %v4399, %v4399
        %v4432 = vmul.f32 %v4400, %v4400
        %v4433 = vmul.f32 %v4401, %v4401
        %v4434 = vmul.f32 %v4402, %v4402
        %v4435 = vmul.f32 %v4403, %v4403
        %v4436 = vmul.f32 %v4404, %v4404
        %v4437 = vmul.f32 %v4405, %v4405
        %v4438 = vmul.f32 %v4406, %v4406
        %v4439 = vmul.f32 %v4407, %v4407
        %v4440 = vmul.f32 %v4408, %v4408
        %v4441 = vmul.f32 %v4409, %v4409
        %v4442 = vmul.f32 %v4410, %v4410
        %v4443 = vmul.f32 %v4411, %v4411
        %v4444 = vmul.f32 %v4412, %v4412
        %v4445 = vmul.f32 %v4413, %v4413
        %v4446 = vmul.f32 %v4414, %v4414
        %v4447 = vmul.f32 %v4415, %v4415
        %v4448 = vmul.f32 %v4416, %v4416
        %v4449 = vmul.f32 %v4417, %v4417
        %v4450 = vmul.f32 %v4418, %v4418
        %v4451 = vmul.f32 %v4419, %v4419
        %v4452 = vmul.f32 %v4420, %v4420
        %v4453 = vmul.f32 %v4421, %v4421
        %v4454 = vmul.f32 %v4422, %v4422
        %v4455 = vmul.f32 %v4423, %v4423
        %v4456 = vmul.f32 %v4424, %v4424
        %v4457 = vmul.f32 %v4425, %v4425
        %v4458 = vmul.f32 %v4426, %v4426
        %v4459 = vsel %vm4259, %v4427, 0.0
        %4460 = vadd.xlane.f32.xlu0 %v4459
        %v4461 = vpop.xlane.xlu0 %4460
        %v4462 = vsel %vm4259, %v4428, 0.0
        %4463 = vadd.xlane.f32.xlu0 %v4462
        %v4464 = vpop.xlane.xlu0 %4463
        %v4465 = vsel %vm4259, %v4429, 0.0
        %4466 = vadd.xlane.f32.xlu0 %v4465
        %v4467 = vpop.xlane.xlu0 %4466
        %v4468 = vsel %vm4259, %v4430, 0.0
        %4469 = vadd.xlane.f32.xlu0 %v4468
        %v4470 = vpop.xlane.xlu0 %4469
        %v4471 = vsel %vm4259, %v4431, 0.0
        %4472 = vadd.xlane.f32.xlu0 %v4471
        %v4473 = vpop.xlane.xlu0 %4472
        %v4474 = vsel %vm4259, %v4432, 0.0
        %4475 = vadd.xlane.f32.xlu0 %v4474
        %v4476 = vpop.xlane.xlu0 %4475
        %v4477 = vsel %vm4259, %v4433, 0.0
        %4478 = vadd.xlane.f32.xlu0 %v4477
        %v4479 = vpop.xlane.xlu0 %4478
        %v4480 = vsel %vm4259, %v4434, 0.0
        %4481 = vadd.xlane.f32.xlu0 %v4480
        %v4482 = vpop.xlane.xlu0 %4481
        %v4483 = vsel %vm4259, %v4435, 0.0
        %4484 = vadd.xlane.f32.xlu0 %v4483
        %v4485 = vpop.xlane.xlu0 %4484
        %v4486 = vsel %vm4259, %v4436, 0.0
        %4487 = vadd.xlane.f32.xlu0 %v4486
        %v4488 = vpop.xlane.xlu0 %4487
        %v4489 = vsel %vm4259, %v4437, 0.0
        %4490 = vadd.xlane.f32.xlu0 %v4489
        %v4491 = vpop.xlane.xlu0 %4490
        %v4492 = vsel %vm4259, %v4438, 0.0
        %4493 = vadd.xlane.f32.xlu0 %v4492
        %v4494 = vpop.xlane.xlu0 %4493
        %v4495 = vsel %vm4259, %v4439, 0.0
        %4496 = vadd.xlane.f32.xlu0 %v4495
        %v4497 = vpop.xlane.xlu0 %4496
        %v4498 = vsel %vm4259, %v4440, 0.0
        %4499 = vadd.xlane.f32.xlu0 %v4498
        %v4500 = vpop.xlane.xlu0 %4499
        %v4501 = vsel %vm4259, %v4441, 0.0
        %4502 = vadd.xlane.f32.xlu0 %v4501
        %v4503 = vpop.xlane.xlu0 %4502
        %v4504 = vsel %vm4259, %v4442, 0.0
        %4505 = vadd.xlane.f32.xlu0 %v4504
        %v4506 = vpop.xlane.xlu0 %4505
        %v4507 = vsel %vm4259, %v4443, 0.0
        %4508 = vadd.xlane.f32.xlu0 %v4507
        %v4509 = vpop.xlane.xlu0 %4508
        %v4510 = vsel %vm4259, %v4444, 0.0
        %4511 = vadd.xlane.f32.xlu0 %v4510
        %v4512 = vpop.xlane.xlu0 %4511
        %v4513 = vsel %vm4259, %v4445, 0.0
        %4514 = vadd.xlane.f32.xlu0 %v4513
        %v4515 = vpop.xlane.xlu0 %4514
        %v4516 = vsel %vm4259, %v4446, 0.0
        %4517 = vadd.xlane.f32.xlu0 %v4516
        %v4518 = vpop.xlane.xlu0 %4517
        %v4519 = vsel %vm4259, %v4447, 0.0
        %4520 = vadd.xlane.f32.xlu0 %v4519
        %v4521 = vpop.xlane.xlu0 %4520
        %v4522 = vsel %vm4259, %v4448, 0.0
        %4523 = vadd.xlane.f32.xlu0 %v4522
        %v4524 = vpop.xlane.xlu0 %4523
        %v4525 = vsel %vm4259, %v4449, 0.0
        %4526 = vadd.xlane.f32.xlu0 %v4525
        %v4527 = vpop.xlane.xlu0 %4526
        %v4528 = vsel %vm4259, %v4450, 0.0
        %4529 = vadd.xlane.f32.xlu0 %v4528
        %v4530 = vpop.xlane.xlu0 %4529
        %v4531 = vsel %vm4259, %v4451, 0.0
        %4532 = vadd.xlane.f32.xlu0 %v4531
        %v4533 = vpop.xlane.xlu0 %4532
        %v4534 = vsel %vm4259, %v4452, 0.0
        %4535 = vadd.xlane.f32.xlu0 %v4534
        %v4536 = vpop.xlane.xlu0 %4535
        %v4537 = vsel %vm4259, %v4453, 0.0
        %4538 = vadd.xlane.f32.xlu0 %v4537
        %v4539 = vpop.xlane.xlu0 %4538
        %v4540 = vsel %vm4259, %v4454, 0.0
        %4541 = vadd.xlane.f32.xlu0 %v4540
        %v4542 = vpop.xlane.xlu0 %4541
        %v4543 = vsel %vm4259, %v4455, 0.0
        %4544 = vadd.xlane.f32.xlu0 %v4543
        %v4545 = vpop.xlane.xlu0 %4544
        %v4546 = vsel %vm4259, %v4456, 0.0
        %4547 = vadd.xlane.f32.xlu0 %v4546
        %v4548 = vpop.xlane.xlu0 %4547
        %v4549 = vsel %vm4259, %v4457, 0.0
        %4550 = vadd.xlane.f32.xlu0 %v4549
        %v4551 = vpop.xlane.xlu0 %4550
        %v4552 = vsel %vm4259, %v4458, 0.0
        %4553 = vadd.xlane.f32.xlu0 %v4552
        %v4554 = vpop.xlane.xlu0 %4553
        %v4555 = vmul.f32 %v4461, %v4362
        %v4556 = vmul.f32 %v4464, %v4362
        %v4557 = vmul.f32 %v4467, %v4362
        %v4558 = vmul.f32 %v4470, %v4362
        %v4559 = vmul.f32 %v4473, %v4362
        %v4560 = vmul.f32 %v4476, %v4362
        %v4561 = vmul.f32 %v4479, %v4362
        %v4562 = vmul.f32 %v4482, %v4362
        %v4563 = vmul.f32 %v4485, %v4362
        %v4564 = vmul.f32 %v4488, %v4362
        %v4565 = vmul.f32 %v4491, %v4362
        %v4566 = vmul.f32 %v4494, %v4362
        %v4567 = vmul.f32 %v4497, %v4362
        %v4568 = vmul.f32 %v4500, %v4362
        %v4569 = vmul.f32 %v4503, %v4362
        %v4570 = vmul.f32 %v4506, %v4362
        %v4571 = vmul.f32 %v4509, %v4362
        %v4572 = vmul.f32 %v4512, %v4362
        %v4573 = vmul.f32 %v4515, %v4362
        %v4574 = vmul.f32 %v4518, %v4362
        %v4575 = vmul.f32 %v4521, %v4362
        %v4576 = vmul.f32 %v4524, %v4362
        %v4577 = vmul.f32 %v4527, %v4362
        %v4578 = vmul.f32 %v4530, %v4362
        %v4579 = vmul.f32 %v4533, %v4362
        %v4580 = vmul.f32 %v4536, %v4362
        %v4581 = vmul.f32 %v4539, %v4362
        %v4582 = vmul.f32 %v4542, %v4362
        %v4583 = vmul.f32 %v4545, %v4362
        %v4584 = vmul.f32 %v4548, %v4362
        %v4585 = vmul.f32 %v4551, %v4362
        %v4586 = vmul.f32 %v4554, %v4362
        %v4587 = vadd.f32 %v4555, 1e-06
        %v4588 = vadd.f32 %v4556, 1e-06
        %v4589 = vadd.f32 %v4557, 1e-06
        %v4590 = vadd.f32 %v4558, 1e-06
        %v4591 = vadd.f32 %v4559, 1e-06
        %v4592 = vadd.f32 %v4560, 1e-06
        %v4593 = vadd.f32 %v4561, 1e-06
        %v4594 = vadd.f32 %v4562, 1e-06
        %v4595 = vadd.f32 %v4563, 1e-06
        %v4596 = vadd.f32 %v4564, 1e-06
        %v4597 = vadd.f32 %v4565, 1e-06
        %v4598 = vadd.f32 %v4566, 1e-06
        %v4599 = vadd.f32 %v4567, 1e-06
        %v4600 = vadd.f32 %v4568, 1e-06
        %v4601 = vadd.f32 %v4569, 1e-06
        %v4602 = vadd.f32 %v4570, 1e-06
        %v4603 = vadd.f32 %v4571, 1e-06
        %v4604 = vadd.f32 %v4572, 1e-06
        %v4605 = vadd.f32 %v4573, 1e-06
        %v4606 = vadd.f32 %v4574, 1e-06
        %v4607 = vadd.f32 %v4575, 1e-06
        %v4608 = vadd.f32 %v4576, 1e-06
        %v4609 = vadd.f32 %v4577, 1e-06
        %v4610 = vadd.f32 %v4578, 1e-06
        %v4611 = vadd.f32 %v4579, 1e-06
        %v4612 = vadd.f32 %v4580, 1e-06
        %v4613 = vadd.f32 %v4581, 1e-06
        %v4614 = vadd.f32 %v4582, 1e-06
        %v4615 = vadd.f32 %v4583, 1e-06
        %v4616 = vadd.f32 %v4584, 1e-06
        %v4617 = vadd.f32 %v4585, 1e-06
        %v4618 = vadd.f32 %v4586, 1e-06
        %v4619 = vrsqrt.pop %v4587
        %v4620 = vmul.f32 %v4619, %v4587
        %v4621 = vmul.f32 %v4620, %v4619
        %v4622 = vmul.f32 0.5, %v4621
        %v4623 = vsub.f32 1.5, %v4622
        %v4624 = vmul.f32 %v4619, %v4623
        %vm4625 = vweird.f32 %v4587
        %vm4626 = vweird.f32 %v4619
        %vm4627 = vmor %vm4625, %vm4626
        %v4628 = vsel %vm4627, %v4619, %v4624
        %v4629 = vrsqrt.pop %v4588
        %v4630 = vmul.f32 %v4629, %v4588
        %v4631 = vmul.f32 %v4630, %v4629
        %v4632 = vmul.f32 0.5, %v4631
        %v4633 = vsub.f32 1.5, %v4632
        %v4634 = vmul.f32 %v4629, %v4633
        %vm4635 = vweird.f32 %v4588
        %vm4636 = vweird.f32 %v4629
        %vm4637 = vmor %vm4635, %vm4636
        %v4638 = vsel %vm4637, %v4629, %v4634
        %v4639 = vrsqrt.pop %v4589
        %v4640 = vmul.f32 %v4639, %v4589
        %v4641 = vmul.f32 %v4640, %v4639
        %v4642 = vmul.f32 0.5, %v4641
        %v4643 = vsub.f32 1.5, %v4642
        %v4644 = vmul.f32 %v4639, %v4643
        %vm4645 = vweird.f32 %v4589
        %vm4646 = vweird.f32 %v4639
        %vm4647 = vmor %vm4645, %vm4646
        %v4648 = vsel %vm4647, %v4639, %v4644
        %v4649 = vrsqrt.pop %v4590
        %v4650 = vmul.f32 %v4649, %v4590
        %v4651 = vmul.f32 %v4650, %v4649
        %v4652 = vmul.f32 0.5, %v4651
        %v4653 = vsub.f32 1.5, %v4652
        %v4654 = vmul.f32 %v4649, %v4653
        %vm4655 = vweird.f32 %v4590
        %vm4656 = vweird.f32 %v4649
        %vm4657 = vmor %vm4655, %vm4656
        %v4658 = vsel %vm4657, %v4649, %v4654
        %v4659 = vrsqrt.pop %v4591
        %v4660 = vmul.f32 %v4659, %v4591
        %v4661 = vmul.f32 %v4660, %v4659
        %v4662 = vmul.f32 0.5, %v4661
        %v4663 = vsub.f32 1.5, %v4662
        %v4664 = vmul.f32 %v4659, %v4663
        %vm4665 = vweird.f32 %v4591
        %vm4666 = vweird.f32 %v4659
        %vm4667 = vmor %vm4665, %vm4666
        %v4668 = vsel %vm4667, %v4659, %v4664
        %v4669 = vrsqrt.pop %v4592
        %v4670 = vmul.f32 %v4669, %v4592
        %v4671 = vmul.f32 %v4670, %v4669
        %v4672 = vmul.f32 0.5, %v4671
        %v4673 = vsub.f32 1.5, %v4672
        %v4674 = vmul.f32 %v4669, %v4673
        %vm4675 = vweird.f32 %v4592
        %vm4676 = vweird.f32 %v4669
        %vm4677 = vmor %vm4675, %vm4676
        %v4678 = vsel %vm4677, %v4669, %v4674
        %v4679 = vrsqrt.pop %v4593
        %v4680 = vmul.f32 %v4679, %v4593
        %v4681 = vmul.f32 %v4680, %v4679
        %v4682 = vmul.f32 0.5, %v4681
        %v4683 = vsub.f32 1.5, %v4682
        %v4684 = vmul.f32 %v4679, %v4683
        %vm4685 = vweird.f32 %v4593
        %vm4686 = vweird.f32 %v4679
        %vm4687 = vmor %vm4685, %vm4686
        %v4688 = vsel %vm4687, %v4679, %v4684
        %v4689 = vrsqrt.pop %v4594
        %v4690 = vmul.f32 %v4689, %v4594
        %v4691 = vmul.f32 %v4690, %v4689
        %v4692 = vmul.f32 0.5, %v4691
        %v4693 = vsub.f32 1.5, %v4692
        %v4694 = vmul.f32 %v4689, %v4693
        %vm4695 = vweird.f32 %v4594
        %vm4696 = vweird.f32 %v4689
        %vm4697 = vmor %vm4695, %vm4696
        %v4698 = vsel %vm4697, %v4689, %v4694
        %v4699 = vrsqrt.pop %v4595
        %v4700 = vmul.f32 %v4699, %v4595
        %v4701 = vmul.f32 %v4700, %v4699
        %v4702 = vmul.f32 0.5, %v4701
        %v4703 = vsub.f32 1.5, %v4702
        %v4704 = vmul.f32 %v4699, %v4703
        %vm4705 = vweird.f32 %v4595
        %vm4706 = vweird.f32 %v4699
        %vm4707 = vmor %vm4705, %vm4706
        %v4708 = vsel %vm4707, %v4699, %v4704
        %v4709 = vrsqrt.pop %v4596
        %v4710 = vmul.f32 %v4709, %v4596
        %v4711 = vmul.f32 %v4710, %v4709
        %v4712 = vmul.f32 0.5, %v4711
        %v4713 = vsub.f32 1.5, %v4712
        %v4714 = vmul.f32 %v4709, %v4713
        %vm4715 = vweird.f32 %v4596
        %vm4716 = vweird.f32 %v4709
        %vm4717 = vmor %vm4715, %vm4716
        %v4718 = vsel %vm4717, %v4709, %v4714
        %v4719 = vrsqrt.pop %v4597
        %v4720 = vmul.f32 %v4719, %v4597
        %v4721 = vmul.f32 %v4720, %v4719
        %v4722 = vmul.f32 0.5, %v4721
        %v4723 = vsub.f32 1.5, %v4722
        %v4724 = vmul.f32 %v4719, %v4723
        %vm4725 = vweird.f32 %v4597
        %vm4726 = vweird.f32 %v4719
        %vm4727 = vmor %vm4725, %vm4726
        %v4728 = vsel %vm4727, %v4719, %v4724
        %v4729 = vrsqrt.pop %v4598
        %v4730 = vmul.f32 %v4729, %v4598
        %v4731 = vmul.f32 %v4730, %v4729
        %v4732 = vmul.f32 0.5, %v4731
        %v4733 = vsub.f32 1.5, %v4732
        %v4734 = vmul.f32 %v4729, %v4733
        %vm4735 = vweird.f32 %v4598
        %vm4736 = vweird.f32 %v4729
        %vm4737 = vmor %vm4735, %vm4736
        %v4738 = vsel %vm4737, %v4729, %v4734
        %v4739 = vrsqrt.pop %v4599
        %v4740 = vmul.f32 %v4739, %v4599
        %v4741 = vmul.f32 %v4740, %v4739
        %v4742 = vmul.f32 0.5, %v4741
        %v4743 = vsub.f32 1.5, %v4742
        %v4744 = vmul.f32 %v4739, %v4743
        %vm4745 = vweird.f32 %v4599
        %vm4746 = vweird.f32 %v4739
        %vm4747 = vmor %vm4745, %vm4746
        %v4748 = vsel %vm4747, %v4739, %v4744
        %v4749 = vrsqrt.pop %v4600
        %v4750 = vmul.f32 %v4749, %v4600
        %v4751 = vmul.f32 %v4750, %v4749
        %v4752 = vmul.f32 0.5, %v4751
        %v4753 = vsub.f32 1.5, %v4752
        %v4754 = vmul.f32 %v4749, %v4753
        %vm4755 = vweird.f32 %v4600
        %vm4756 = vweird.f32 %v4749
        %vm4757 = vmor %vm4755, %vm4756
        %v4758 = vsel %vm4757, %v4749, %v4754
        %v4759 = vrsqrt.pop %v4601
        %v4760 = vmul.f32 %v4759, %v4601
        %v4761 = vmul.f32 %v4760, %v4759
        %v4762 = vmul.f32 0.5, %v4761
        %v4763 = vsub.f32 1.5, %v4762
        %v4764 = vmul.f32 %v4759, %v4763
        %vm4765 = vweird.f32 %v4601
        %vm4766 = vweird.f32 %v4759
        %vm4767 = vmor %vm4765, %vm4766
        %v4768 = vsel %vm4767, %v4759, %v4764
        %v4769 = vrsqrt.pop %v4602
        %v4770 = vmul.f32 %v4769, %v4602
        %v4771 = vmul.f32 %v4770, %v4769
        %v4772 = vmul.f32 0.5, %v4771
        %v4773 = vsub.f32 1.5, %v4772
        %v4774 = vmul.f32 %v4769, %v4773
        %vm4775 = vweird.f32 %v4602
        %vm4776 = vweird.f32 %v4769
        %vm4777 = vmor %vm4775, %vm4776
        %v4778 = vsel %vm4777, %v4769, %v4774
        %v4779 = vrsqrt.pop %v4603
        %v4780 = vmul.f32 %v4779, %v4603
        %v4781 = vmul.f32 %v4780, %v4779
        %v4782 = vmul.f32 0.5, %v4781
        %v4783 = vsub.f32 1.5, %v4782
        %v4784 = vmul.f32 %v4779, %v4783
        %vm4785 = vweird.f32 %v4603
        %vm4786 = vweird.f32 %v4779
        %vm4787 = vmor %vm4785, %vm4786
        %v4788 = vsel %vm4787, %v4779, %v4784
        %v4789 = vrsqrt.pop %v4604
        %v4790 = vmul.f32 %v4789, %v4604
        %v4791 = vmul.f32 %v4790, %v4789
        %v4792 = vmul.f32 0.5, %v4791
        %v4793 = vsub.f32 1.5, %v4792
        %v4794 = vmul.f32 %v4789, %v4793
        %vm4795 = vweird.f32 %v4604
        %vm4796 = vweird.f32 %v4789
        %vm4797 = vmor %vm4795, %vm4796
        %v4798 = vsel %vm4797, %v4789, %v4794
        %v4799 = vrsqrt.pop %v4605
        %v4800 = vmul.f32 %v4799, %v4605
        %v4801 = vmul.f32 %v4800, %v4799
        %v4802 = vmul.f32 0.5, %v4801
        %v4803 = vsub.f32 1.5, %v4802
        %v4804 = vmul.f32 %v4799, %v4803
        %vm4805 = vweird.f32 %v4605
        %vm4806 = vweird.f32 %v4799
        %vm4807 = vmor %vm4805, %vm4806
        %v4808 = vsel %vm4807, %v4799, %v4804
        %v4809 = vrsqrt.pop %v4606
        %v4810 = vmul.f32 %v4809, %v4606
        %v4811 = vmul.f32 %v4810, %v4809
        %v4812 = vmul.f32 0.5, %v4811
        %v4813 = vsub.f32 1.5, %v4812
        %v4814 = vmul.f32 %v4809, %v4813
        %vm4815 = vweird.f32 %v4606
        %vm4816 = vweird.f32 %v4809
        %vm4817 = vmor %vm4815, %vm4816
        %v4818 = vsel %vm4817, %v4809, %v4814
        %v4819 = vrsqrt.pop %v4607
        %v4820 = vmul.f32 %v4819, %v4607
        %v4821 = vmul.f32 %v4820, %v4819
        %v4822 = vmul.f32 0.5, %v4821
        %v4823 = vsub.f32 1.5, %v4822
        %v4824 = vmul.f32 %v4819, %v4823
        %vm4825 = vweird.f32 %v4607
        %vm4826 = vweird.f32 %v4819
        %vm4827 = vmor %vm4825, %vm4826
        %v4828 = vsel %vm4827, %v4819, %v4824
        %v4829 = vrsqrt.pop %v4608
        %v4830 = vmul.f32 %v4829, %v4608
        %v4831 = vmul.f32 %v4830, %v4829
        %v4832 = vmul.f32 0.5, %v4831
        %v4833 = vsub.f32 1.5, %v4832
        %v4834 = vmul.f32 %v4829, %v4833
        %vm4835 = vweird.f32 %v4608
        %vm4836 = vweird.f32 %v4829
        %vm4837 = vmor %vm4835, %vm4836
        %v4838 = vsel %vm4837, %v4829, %v4834
        %v4839 = vrsqrt.pop %v4609
        %v4840 = vmul.f32 %v4839, %v4609
        %v4841 = vmul.f32 %v4840, %v4839
        %v4842 = vmul.f32 0.5, %v4841
        %v4843 = vsub.f32 1.5, %v4842
        %v4844 = vmul.f32 %v4839, %v4843
        %vm4845 = vweird.f32 %v4609
        %vm4846 = vweird.f32 %v4839
        %vm4847 = vmor %vm4845, %vm4846
        %v4848 = vsel %vm4847, %v4839, %v4844
        %v4849 = vrsqrt.pop %v4610
        %v4850 = vmul.f32 %v4849, %v4610
        %v4851 = vmul.f32 %v4850, %v4849
        %v4852 = vmul.f32 0.5, %v4851
        %v4853 = vsub.f32 1.5, %v4852
        %v4854 = vmul.f32 %v4849, %v4853
        %vm4855 = vweird.f32 %v4610
        %vm4856 = vweird.f32 %v4849
        %vm4857 = vmor %vm4855, %vm4856
        %v4858 = vsel %vm4857, %v4849, %v4854
        %v4859 = vrsqrt.pop %v4611
        %v4860 = vmul.f32 %v4859, %v4611
        %v4861 = vmul.f32 %v4860, %v4859
        %v4862 = vmul.f32 0.5, %v4861
        %v4863 = vsub.f32 1.5, %v4862
        %v4864 = vmul.f32 %v4859, %v4863
        %vm4865 = vweird.f32 %v4611
        %vm4866 = vweird.f32 %v4859
        %vm4867 = vmor %vm4865, %vm4866
        %v4868 = vsel %vm4867, %v4859, %v4864
        %v4869 = vrsqrt.pop %v4612
        %v4870 = vmul.f32 %v4869, %v4612
        %v4871 = vmul.f32 %v4870, %v4869
        %v4872 = vmul.f32 0.5, %v4871
        %v4873 = vsub.f32 1.5, %v4872
        %v4874 = vmul.f32 %v4869, %v4873
        %vm4875 = vweird.f32 %v4612
        %vm4876 = vweird.f32 %v4869
        %vm4877 = vmor %vm4875, %vm4876
        %v4878 = vsel %vm4877, %v4869, %v4874
        %v4879 = vrsqrt.pop %v4613
        %v4880 = vmul.f32 %v4879, %v4613
        %v4881 = vmul.f32 %v4880, %v4879
        %v4882 = vmul.f32 0.5, %v4881
        %v4883 = vsub.f32 1.5, %v4882
        %v4884 = vmul.f32 %v4879, %v4883
        %vm4885 = vweird.f32 %v4613
        %vm4886 = vweird.f32 %v4879
        %vm4887 = vmor %vm4885, %vm4886
        %v4888 = vsel %vm4887, %v4879, %v4884
        %v4889 = vrsqrt.pop %v4614
        %v4890 = vmul.f32 %v4889, %v4614
        %v4891 = vmul.f32 %v4890, %v4889
        %v4892 = vmul.f32 0.5, %v4891
        %v4893 = vsub.f32 1.5, %v4892
        %v4894 = vmul.f32 %v4889, %v4893
        %vm4895 = vweird.f32 %v4614
        %vm4896 = vweird.f32 %v4889
        %vm4897 = vmor %vm4895, %vm4896
        %v4898 = vsel %vm4897, %v4889, %v4894
        %v4899 = vrsqrt.pop %v4615
        %v4900 = vmul.f32 %v4899, %v4615
        %v4901 = vmul.f32 %v4900, %v4899
        %v4902 = vmul.f32 0.5, %v4901
        %v4903 = vsub.f32 1.5, %v4902
        %v4904 = vmul.f32 %v4899, %v4903
        %vm4905 = vweird.f32 %v4615
        %vm4906 = vweird.f32 %v4899
        %vm4907 = vmor %vm4905, %vm4906
        %v4908 = vsel %vm4907, %v4899, %v4904
        %v4909 = vrsqrt.pop %v4616
        %v4910 = vmul.f32 %v4909, %v4616
        %v4911 = vmul.f32 %v4910, %v4909
        %v4912 = vmul.f32 0.5, %v4911
        %v4913 = vsub.f32 1.5, %v4912
        %v4914 = vmul.f32 %v4909, %v4913
        %vm4915 = vweird.f32 %v4616
        %vm4916 = vweird.f32 %v4909
        %vm4917 = vmor %vm4915, %vm4916
        %v4918 = vsel %vm4917, %v4909, %v4914
        %v4919 = vrsqrt.pop %v4617
        %v4920 = vmul.f32 %v4919, %v4617
        %v4921 = vmul.f32 %v4920, %v4919
        %v4922 = vmul.f32 0.5, %v4921
        %v4923 = vsub.f32 1.5, %v4922
        %v4924 = vmul.f32 %v4919, %v4923
        %vm4925 = vweird.f32 %v4617
        %vm4926 = vweird.f32 %v4919
        %vm4927 = vmor %vm4925, %vm4926
        %v4928 = vsel %vm4927, %v4919, %v4924
        %v4929 = vrsqrt.pop %v4618
        %v4930 = vmul.f32 %v4929, %v4618
        %v4931 = vmul.f32 %v4930, %v4929
        %v4932 = vmul.f32 0.5, %v4931
        %v4933 = vsub.f32 1.5, %v4932
        %v4934 = vmul.f32 %v4929, %v4933
        %vm4935 = vweird.f32 %v4618
        %vm4936 = vweird.f32 %v4929
        %vm4937 = vmor %vm4935, %vm4936
        %v4938 = vsel %vm4937, %v4929, %v4934
        %v4939 = vmul.f32 %v4395, %v4628
        %v4940 = vmul.f32 %v4396, %v4638
        %v4941 = vmul.f32 %v4397, %v4648
        %v4942 = vmul.f32 %v4398, %v4658
        %v4943 = vmul.f32 %v4399, %v4668
        %v4944 = vmul.f32 %v4400, %v4678
        %v4945 = vmul.f32 %v4401, %v4688
        %v4946 = vmul.f32 %v4402, %v4698
        %v4947 = vmul.f32 %v4403, %v4708
        %v4948 = vmul.f32 %v4404, %v4718
        %v4949 = vmul.f32 %v4405, %v4728
        %v4950 = vmul.f32 %v4406, %v4738
        %v4951 = vmul.f32 %v4407, %v4748
        %v4952 = vmul.f32 %v4408, %v4758
        %v4953 = vmul.f32 %v4409, %v4768
        %v4954 = vmul.f32 %v4410, %v4778
        %v4955 = vmul.f32 %v4411, %v4788
        %v4956 = vmul.f32 %v4412, %v4798
        %v4957 = vmul.f32 %v4413, %v4808
        %v4958 = vmul.f32 %v4414, %v4818
        %v4959 = vmul.f32 %v4415, %v4828
        %v4960 = vmul.f32 %v4416, %v4838
        %v4961 = vmul.f32 %v4417, %v4848
        %v4962 = vmul.f32 %v4418, %v4858
        %v4963 = vmul.f32 %v4419, %v4868
        %v4964 = vmul.f32 %v4420, %v4878
        %v4965 = vmul.f32 %v4421, %v4888
        %v4966 = vmul.f32 %v4422, %v4898
        %v4967 = vmul.f32 %v4423, %v4908
        %v4968 = vmul.f32 %v4424, %v4918
        %v4969 = vmul.f32 %v4425, %v4928
        %v4970 = vmul.f32 %v4426, %v4938
        %v4971 = vld [vmem:[%s3] sm:$0x1]
        %v4973 = vperm.slane %v4971, 0
        %v4975 = vmul.f32 %v4939, %v4973
        %v4976 = vmul.f32 %v4940, %v4973
        %v4977 = vmul.f32 %v4941, %v4973
        %v4978 = vmul.f32 %v4942, %v4973
        %v4979 = vmul.f32 %v4943, %v4973
        %v4980 = vmul.f32 %v4944, %v4973
        %v4981 = vmul.f32 %v4945, %v4973
        %v4982 = vmul.f32 %v4946, %v4973
        %v4983 = vmul.f32 %v4947, %v4973
        %v4984 = vmul.f32 %v4948, %v4973
        %v4985 = vmul.f32 %v4949, %v4973
        %v4986 = vmul.f32 %v4950, %v4973
        %v4987 = vmul.f32 %v4951, %v4973
        %v4988 = vmul.f32 %v4952, %v4973
        %v4989 = vmul.f32 %v4953, %v4973
        %v4990 = vmul.f32 %v4954, %v4973
        %v4991 = vmul.f32 %v4955, %v4973
        %v4992 = vmul.f32 %v4956, %v4973
        %v4993 = vmul.f32 %v4957, %v4973
        %v4994 = vmul.f32 %v4958, %v4973
        %v4995 = vmul.f32 %v4959, %v4973
        %v4996 = vmul.f32 %v4960, %v4973
        %v4997 = vmul.f32 %v4961, %v4973
        %v4998 = vmul.f32 %v4962, %v4973
        %v4999 = vmul.f32 %v4963, %v4973
        %v5000 = vmul.f32 %v4964, %v4973
        %v5001 = vmul.f32 %v4965, %v4973
        %v5002 = vmul.f32 %v4966, %v4973
        %v5003 = vmul.f32 %v4967, %v4973
        %v5004 = vmul.f32 %v4968, %v4973
        %v5005 = vmul.f32 %v4969, %v4973
        %v5006 = vmul.f32 %v4970, %v4973
        %v5007 = vld [vmem:[%s4] sm:$0x1]
        %v5009 = vperm.slane %v5007, 0
        %v5011 = vadd.f32 %v4975, %v5009
        %v5012 = vadd.f32 %v4976, %v5009
        %v5013 = vadd.f32 %v4977, %v5009
        %v5014 = vadd.f32 %v4978, %v5009
        %v5015 = vadd.f32 %v4979, %v5009
        %v5016 = vadd.f32 %v4980, %v5009
        %v5017 = vadd.f32 %v4981, %v5009
        %v5018 = vadd.f32 %v4982, %v5009
        %v5019 = vadd.f32 %v4983, %v5009
        %v5020 = vadd.f32 %v4984, %v5009
        %v5021 = vadd.f32 %v4985, %v5009
        %v5022 = vadd.f32 %v4986, %v5009
        %v5023 = vadd.f32 %v4987, %v5009
        %v5024 = vadd.f32 %v4988, %v5009
        %v5025 = vadd.f32 %v4989, %v5009
        %v5026 = vadd.f32 %v4990, %v5009
        %v5027 = vadd.f32 %v4991, %v5009
        %v5028 = vadd.f32 %v4992, %v5009
        %v5029 = vadd.f32 %v4993, %v5009
        %v5030 = vadd.f32 %v4994, %v5009
        %v5031 = vadd.f32 %v4995, %v5009
        %v5032 = vadd.f32 %v4996, %v5009
        %v5033 = vadd.f32 %v4997, %v5009
        %v5034 = vadd.f32 %v4998, %v5009
        %v5035 = vadd.f32 %v4999, %v5009
        %v5036 = vadd.f32 %v5000, %v5009
        %v5037 = vadd.f32 %v5001, %v5009
        %v5038 = vadd.f32 %v5002, %v5009
        %v5039 = vadd.f32 %v5003, %v5009
        %v5040 = vadd.f32 %v5004, %v5009
        %v5041 = vadd.f32 %v5005, %v5009
        %v5042 = vadd.f32 %v5006, %v5009
        %v5043 = vpack.c.bf16 %v5012, %v5011
        %v5044 = vpack.c.bf16 %v5014, %v5013
        %v5045 = vpack.c.bf16 %v5016, %v5015
        %v5046 = vpack.c.bf16 %v5018, %v5017
        %v5047 = vpack.c.bf16 %v5020, %v5019
        %v5048 = vpack.c.bf16 %v5022, %v5021
        %v5049 = vpack.c.bf16 %v5024, %v5023
        %v5050 = vpack.c.bf16 %v5026, %v5025
        %v5051 = vpack.c.bf16 %v5028, %v5027
        %v5052 = vpack.c.bf16 %v5030, %v5029
        %v5053 = vpack.c.bf16 %v5032, %v5031
        %v5054 = vpack.c.bf16 %v5034, %v5033
        %v5055 = vpack.c.bf16 %v5036, %v5035
        %v5056 = vpack.c.bf16 %v5038, %v5037
        %v5057 = vpack.c.bf16 %v5040, %v5039
        %v5058 = vpack.c.bf16 %v5042, %v5041
        %v5059 = vld [vmem:[%s5] sm:$0xf]
        %v5060 = vld [vmem:[%s5 + $0x4] sm:$0xf]
        %v5061 = vld [vmem:[%s5 + $0x8] sm:$0xf]
        %v5062 = vld [vmem:[%s5 + $0xc] sm:$0xf]
        %v5063 = vld [vmem:[%s6] sm:$0x1]
        %v5065 = vperm.slane %v5063, 0
        %v5071 = vunpack.c.l.b16 %v5059
        %v5072 = vunpack.c.l.b16 %v5060
        %v5073 = vunpack.c.l.b16 %v5061
        %v5074 = vunpack.c.l.b16 %v5062
        %v5075 = vpack.c.b16 %v5072, %v5071
        %v5076 = vpack.c.b16 %v5074, %v5073
        %v5080 = vsel %vm4259, %v5043, 0
        %v5083 = vsel %vm4259, %v5044, 0
        %v5086 = vsel %vm4259, %v5045, 0
        %v5089 = vsel %vm4259, %v5046, 0
        %v5092 = vsel %vm4259, %v5047, 0
        %v5095 = vsel %vm4259, %v5048, 0
        %v5098 = vsel %vm4259, %v5049, 0
        %v5101 = vsel %vm4259, %v5050, 0
        %v5104 = vsel %vm4259, %v5051, 0
        %v5107 = vsel %vm4259, %v5052, 0
        %v5110 = vsel %vm4259, %v5053, 0
        %v5113 = vsel %vm4259, %v5054, 0
        %v5116 = vsel %vm4259, %v5055, 0
        %v5119 = vsel %vm4259, %v5056, 0
        %v5122 = vsel %vm4259, %v5057, 0
        %v5125 = vsel %vm4259, %v5058, 0
        %5127 = vmatpush.bf16.msra.mxu0 0
        %5128 = vmatpush.bf16.msra.mxu0 0
        %5129 = vmatpush.bf16.msra.mxu0 0
        %5130 = vmatpush.bf16.msra.mxu0 0
        %5131 = vmatpush.bf16.msra.mxu0 0
        %5132 = vmatpush.bf16.msra.mxu0 0
        %5133 = vmatpush.bf16.msra.mxu0 %v5076
        %5134 = vmatpush.bf16.msra.mxu0 %v5075
        %5135 = vmatmul.bf16.gmra.mxu0 %v5080
        %v5136 = vpop.f32.mrf.mxu0
        %v5137 = vadd.f32 %v5065, %v5136
        %v5138 = vpop.f32.mrf.mxu0
        %v5139 = vadd.f32 %v5065, %v5138
        %5140 = vmatmul.bf16.gmra.mxu0 %v5083
        %v5141 = vpop.f32.mrf.mxu0
        %v5142 = vadd.f32 %v5065, %v5141
        %v5143 = vpop.f32.mrf.mxu0
        %v5144 = vadd.f32 %v5065, %v5143
        %5145 = vmatmul.bf16.gmra.mxu0 %v5086
        %v5146 = vpop.f32.mrf.mxu0
        %v5147 = vadd.f32 %v5065, %v5146
        %v5148 = vpop.f32.mrf.mxu0
        %v5149 = vadd.f32 %v5065, %v5148
        %5150 = vmatmul.bf16.gmra.mxu0 %v5089
        %v5151 = vpop.f32.mrf.mxu0
        %v5152 = vadd.f32 %v5065, %v5151
        %v5153 = vpop.f32.mrf.mxu0
        %v5154 = vadd.f32 %v5065, %v5153
        %5155 = vmatmul.bf16.gmra.mxu0 %v5092
        %v5156 = vpop.f32.mrf.mxu0
        %v5157 = vadd.f32 %v5065, %v5156
        %v5158 = vpop.f32.mrf.mxu0
        %v5159 = vadd.f32 %v5065, %v5158
        %5160 = vmatmul.bf16.gmra.mxu0 %v5095
        %v5161 = vpop.f32.mrf.mxu0
        %v5162 = vadd.f32 %v5065, %v5161
        %v5163 = vpop.f32.mrf.mxu0
        %v5164 = vadd.f32 %v5065, %v5163
        %5165 = vmatmul.bf16.gmra.mxu0 %v5098
        %v5166 = vpop.f32.mrf.mxu0
        %v5167 = vadd.f32 %v5065, %v5166
        %v5168 = vpop.f32.mrf.mxu0
        %v5169 = vadd.f32 %v5065, %v5168
        %5170 = vmatmul.bf16.gmra.mxu0 %v5101
        %v5171 = vpop.f32.mrf.mxu0
        %v5172 = vadd.f32 %v5065, %v5171
        %v5173 = vpop.f32.mrf.mxu0
        %v5174 = vadd.f32 %v5065, %v5173
        %5175 = vmatmul.bf16.gmra.mxu0 %v5104
        %v5176 = vpop.f32.mrf.mxu0
        %v5177 = vadd.f32 %v5065, %v5176
        %v5178 = vpop.f32.mrf.mxu0
        %v5179 = vadd.f32 %v5065, %v5178
        %5180 = vmatmul.bf16.gmra.mxu0 %v5107
        %v5181 = vpop.f32.mrf.mxu0
        %v5182 = vadd.f32 %v5065, %v5181
        %v5183 = vpop.f32.mrf.mxu0
        %v5184 = vadd.f32 %v5065, %v5183
        %5185 = vmatmul.bf16.gmra.mxu0 %v5110
        %v5186 = vpop.f32.mrf.mxu0
        %v5187 = vadd.f32 %v5065, %v5186
        %v5188 = vpop.f32.mrf.mxu0
        %v5189 = vadd.f32 %v5065, %v5188
        %5190 = vmatmul.bf16.gmra.mxu0 %v5113
        %v5191 = vpop.f32.mrf.mxu0
        %v5192 = vadd.f32 %v5065, %v5191
        %v5193 = vpop.f32.mrf.mxu0
        %v5194 = vadd.f32 %v5065, %v5193
        %5195 = vmatmul.bf16.gmra.mxu0 %v5116
        %v5196 = vpop.f32.mrf.mxu0
        %v5197 = vadd.f32 %v5065, %v5196
        %v5198 = vpop.f32.mrf.mxu0
        %v5199 = vadd.f32 %v5065, %v5198
        %5200 = vmatmul.bf16.gmra.mxu0 %v5119
        %v5201 = vpop.f32.mrf.mxu0
        %v5202 = vadd.f32 %v5065, %v5201
        %v5203 = vpop.f32.mrf.mxu0
        %v5204 = vadd.f32 %v5065, %v5203
        %5205 = vmatmul.bf16.gmra.mxu0 %v5122
        %v5206 = vpop.f32.mrf.mxu0
        %v5207 = vadd.f32 %v5065, %v5206
        %v5208 = vpop.f32.mrf.mxu0
        %v5209 = vadd.f32 %v5065, %v5208
        %5210 = vmatmul.bf16.gmra.mxu0 %v5125
        %v5211 = vpop.f32.mrf.mxu0
        %v5212 = vadd.f32 %v5065, %v5211
        %v5213 = vpop.f32.mrf.mxu0
        %v5214 = vadd.f32 %v5065, %v5213
        %5215 = vdwg.mxu0
        %v5216 = vmul.f32 %v5137, 0.5
        %v5217 = vmul.f32 %v5139, 0.5
        %v5218 = vmul.f32 %v5142, 0.5
        %v5219 = vmul.f32 %v5144, 0.5
        %v5220 = vmul.f32 %v5147, 0.5
        %v5221 = vmul.f32 %v5149, 0.5
        %v5222 = vmul.f32 %v5152, 0.5
        %v5223 = vmul.f32 %v5154, 0.5
        %v5224 = vmul.f32 %v5157, 0.5
        %v5225 = vmul.f32 %v5159, 0.5
        %v5226 = vmul.f32 %v5162, 0.5
        %v5227 = vmul.f32 %v5164, 0.5
        %v5228 = vmul.f32 %v5167, 0.5
        %v5229 = vmul.f32 %v5169, 0.5
        %v5230 = vmul.f32 %v5172, 0.5
        %v5231 = vmul.f32 %v5174, 0.5
        %v5232 = vmul.f32 %v5177, 0.5
        %v5233 = vmul.f32 %v5179, 0.5
        %v5234 = vmul.f32 %v5182, 0.5
        %v5235 = vmul.f32 %v5184, 0.5
        %v5236 = vmul.f32 %v5187, 0.5
        %v5237 = vmul.f32 %v5189, 0.5
        %v5238 = vmul.f32 %v5192, 0.5
        %v5239 = vmul.f32 %v5194, 0.5
        %v5240 = vmul.f32 %v5197, 0.5
        %v5241 = vmul.f32 %v5199, 0.5
        %v5242 = vmul.f32 %v5202, 0.5
        %v5243 = vmul.f32 %v5204, 0.5
        %v5244 = vmul.f32 %v5207, 0.5
        %v5245 = vmul.f32 %v5209, 0.5
        %v5246 = vmul.f32 %v5212, 0.5
        %v5247 = vmul.f32 %v5214, 0.5
        %v5248 = vmul.f32 %v5137, 0.70710677
        %v5249 = vmul.f32 %v5139, 0.70710677
        %v5250 = vmul.f32 %v5142, 0.70710677
        %v5251 = vmul.f32 %v5144, 0.70710677
        %v5252 = vmul.f32 %v5147, 0.70710677
        %v5253 = vmul.f32 %v5149, 0.70710677
        %v5254 = vmul.f32 %v5152, 0.70710677
        %v5255 = vmul.f32 %v5154, 0.70710677
        %v5256 = vmul.f32 %v5157, 0.70710677
        %v5257 = vmul.f32 %v5159, 0.70710677
        %v5258 = vmul.f32 %v5162, 0.70710677
        %v5259 = vmul.f32 %v5164, 0.70710677
        %v5260 = vmul.f32 %v5167, 0.70710677
        %v5261 = vmul.f32 %v5169, 0.70710677
        %v5262 = vmul.f32 %v5172, 0.70710677
        %v5263 = vmul.f32 %v5174, 0.70710677
        %v5264 = vmul.f32 %v5177, 0.70710677
        %v5265 = vmul.f32 %v5179, 0.70710677
        %v5266 = vmul.f32 %v5182, 0.70710677
        %v5267 = vmul.f32 %v5184, 0.70710677
        %v5268 = vmul.f32 %v5187, 0.70710677
        %v5269 = vmul.f32 %v5189, 0.70710677
        %v5270 = vmul.f32 %v5192, 0.70710677
        %v5271 = vmul.f32 %v5194, 0.70710677
        %v5272 = vmul.f32 %v5197, 0.70710677
        %v5273 = vmul.f32 %v5199, 0.70710677
        %v5274 = vmul.f32 %v5202, 0.70710677
        %v5275 = vmul.f32 %v5204, 0.70710677
        %v5276 = vmul.f32 %v5207, 0.70710677
        %v5277 = vmul.f32 %v5209, 0.70710677
        %v5278 = vmul.f32 %v5212, 0.70710677
        %v5279 = vmul.f32 %v5214, 0.70710677
        %v5280 = vand.u32 2147483647, %v5248
        %v5281 = vand.u32 2147483647, %v5249
        %v5282 = vand.u32 2147483647, %v5250
        %v5283 = vand.u32 2147483647, %v5251
        %v5284 = vand.u32 2147483647, %v5252
        %v5285 = vand.u32 2147483647, %v5253
        %v5286 = vand.u32 2147483647, %v5254
        %v5287 = vand.u32 2147483647, %v5255
        %v5288 = vand.u32 2147483647, %v5256
        %v5289 = vand.u32 2147483647, %v5257
        %v5290 = vand.u32 2147483647, %v5258
        %v5291 = vand.u32 2147483647, %v5259
        %v5292 = vand.u32 2147483647, %v5260
        %v5293 = vand.u32 2147483647, %v5261
        %v5294 = vand.u32 2147483647, %v5262
        %v5295 = vand.u32 2147483647, %v5263
        %v5296 = vand.u32 2147483647, %v5264
        %v5297 = vand.u32 2147483647, %v5265
        %v5298 = vand.u32 2147483647, %v5266
        %v5299 = vand.u32 2147483647, %v5267
        %v5300 = vand.u32 2147483647, %v5268
        %v5301 = vand.u32 2147483647, %v5269
        %v5302 = vand.u32 2147483647, %v5270
        %v5303 = vand.u32 2147483647, %v5271
        %v5304 = vand.u32 2147483647, %v5272
        %v5305 = vand.u32 2147483647, %v5273
        %v5306 = vand.u32 2147483647, %v5274
        %v5307 = vand.u32 2147483647, %v5275
        %v5308 = vand.u32 2147483647, %v5276
        %v5309 = vand.u32 2147483647, %v5277
        %v5310 = vand.u32 2147483647, %v5278
        %v5311 = vand.u32 2147483647, %v5279
        %v5312 = vmul.f32 %v5280, 0.3275911
        %v5313 = vmul.f32 %v5281, 0.3275911
        %v5314 = vmul.f32 %v5282, 0.3275911
        %v5315 = vmul.f32 %v5283, 0.3275911
        %v5316 = vmul.f32 %v5284, 0.3275911
        %v5317 = vmul.f32 %v5285, 0.3275911
        %v5318 = vmul.f32 %v5286, 0.3275911
        %v5319 = vmul.f32 %v5287, 0.3275911
        %v5320 = vmul.f32 %v5288, 0.3275911
        %v5321 = vmul.f32 %v5289, 0.3275911
        %v5322 = vmul.f32 %v5290, 0.3275911
        %v5323 = vmul.f32 %v5291, 0.3275911
        %v5324 = vmul.f32 %v5292, 0.3275911
        %v5325 = vmul.f32 %v5293, 0.3275911
        %v5326 = vmul.f32 %v5294, 0.3275911
        %v5327 = vmul.f32 %v5295, 0.3275911
        %v5328 = vmul.f32 %v5296, 0.3275911
        %v5329 = vmul.f32 %v5297, 0.3275911
        %v5330 = vmul.f32 %v5298, 0.3275911
        %v5331 = vmul.f32 %v5299, 0.3275911
        %v5332 = vmul.f32 %v5300, 0.3275911
        %v5333 = vmul.f32 %v5301, 0.3275911
        %v5334 = vmul.f32 %v5302, 0.3275911
        %v5335 = vmul.f32 %v5303, 0.3275911
        %v5336 = vmul.f32 %v5304, 0.3275911
        %v5337 = vmul.f32 %v5305, 0.3275911
        %v5338 = vmul.f32 %v5306, 0.3275911
        %v5339 = vmul.f32 %v5307, 0.3275911
        %v5340 = vmul.f32 %v5308, 0.3275911
        %v5341 = vmul.f32 %v5309, 0.3275911
        %v5342 = vmul.f32 %v5310, 0.3275911
        %v5343 = vmul.f32 %v5311, 0.3275911
        %v5344 = vadd.f32 %v5312, 1.0
        %v5345 = vadd.f32 %v5313, 1.0
        %v5346 = vadd.f32 %v5314, 1.0
        %v5347 = vadd.f32 %v5315, 1.0
        %v5348 = vadd.f32 %v5316, 1.0
        %v5349 = vadd.f32 %v5317, 1.0
        %v5350 = vadd.f32 %v5318, 1.0
        %v5351 = vadd.f32 %v5319, 1.0
        %v5352 = vadd.f32 %v5320, 1.0
        %v5353 = vadd.f32 %v5321, 1.0
        %v5354 = vadd.f32 %v5322, 1.0
        %v5355 = vadd.f32 %v5323, 1.0
        %v5356 = vadd.f32 %v5324, 1.0
        %v5357 = vadd.f32 %v5325, 1.0
        %v5358 = vadd.f32 %v5326, 1.0
        %v5359 = vadd.f32 %v5327, 1.0
        %v5360 = vadd.f32 %v5328, 1.0
        %v5361 = vadd.f32 %v5329, 1.0
        %v5362 = vadd.f32 %v5330, 1.0
        %v5363 = vadd.f32 %v5331, 1.0
        %v5364 = vadd.f32 %v5332, 1.0
        %v5365 = vadd.f32 %v5333, 1.0
        %v5366 = vadd.f32 %v5334, 1.0
        %v5367 = vadd.f32 %v5335, 1.0
        %v5368 = vadd.f32 %v5336, 1.0
        %v5369 = vadd.f32 %v5337, 1.0
        %v5370 = vadd.f32 %v5338, 1.0
        %v5371 = vadd.f32 %v5339, 1.0
        %v5372 = vadd.f32 %v5340, 1.0
        %v5373 = vadd.f32 %v5341, 1.0
        %v5374 = vadd.f32 %v5342, 1.0
        %v5375 = vadd.f32 %v5343, 1.0
        %v5376 = vrcp.pop %v5344
        %v5377 = vmul.f32 %v5344, %v5376
        %v5378 = vsub.f32 1.0, %v5377
        %v5379 = vmul.f32 %v5376, %v5378
        %v5380 = vadd.f32 %v5376, %v5379
        %vm5381 = vweird.f32 %v5344
        %vm5382 = vweird.f32 %v5376
        %vm5383 = vmor %vm5381, %vm5382
        %v5384 = vsel %vm5383, %v5376, %v5380
        %v5385 = vand.u32 2147483647, %v5344
        %vm5386 = vcmp.eq.f32.partialorder %v5385, 8.507059e+37
        %v5387 = vand.u32 %v5344, 2147483648
        %v5388 = vor.u32 1.1754944e-38, %v5387
        %v5389 = vsel %vm5386, %v5388, %v5384
        %v5390 = vmul.f32 1.0, %v5389
        %v5391 = vrcp.pop %v5345
        %v5392 = vmul.f32 %v5345, %v5391
        %v5393 = vsub.f32 1.0, %v5392
        %v5394 = vmul.f32 %v5391, %v5393
        %v5395 = vadd.f32 %v5391, %v5394
        %vm5396 = vweird.f32 %v5345
        %vm5397 = vweird.f32 %v5391
        %vm5398 = vmor %vm5396, %vm5397
        %v5399 = vsel %vm5398, %v5391, %v5395
        %v5400 = vand.u32 2147483647, %v5345
        %vm5401 = vcmp.eq.f32.partialorder %v5400, 8.507059e+37
        %v5402 = vand.u32 %v5345, 2147483648
        %v5403 = vor.u32 1.1754944e-38, %v5402
        %v5404 = vsel %vm5401, %v5403, %v5399
        %v5405 = vmul.f32 1.0, %v5404
        %v5406 = vrcp.pop %v5346
        %v5407 = vmul.f32 %v5346, %v5406
        %v5408 = vsub.f32 1.0, %v5407
        %v5409 = vmul.f32 %v5406, %v5408
        %v5410 = vadd.f32 %v5406, %v5409
        %vm5411 = vweird.f32 %v5346
        %vm5412 = vweird.f32 %v5406
        %vm5413 = vmor %vm5411, %vm5412
        %v5414 = vsel %vm5413, %v5406, %v5410
        %v5415 = vand.u32 2147483647, %v5346
        %vm5416 = vcmp.eq.f32.partialorder %v5415, 8.507059e+37
        %v5417 = vand.u32 %v5346, 2147483648
        %v5418 = vor.u32 1.1754944e-38, %v5417
        %v5419 = vsel %vm5416, %v5418, %v5414
        %v5420 = vmul.f32 1.0, %v5419
        %v5421 = vrcp.pop %v5347
        %v5422 = vmul.f32 %v5347, %v5421
        %v5423 = vsub.f32 1.0, %v5422
        %v5424 = vmul.f32 %v5421, %v5423
        %v5425 = vadd.f32 %v5421, %v5424
        %vm5426 = vweird.f32 %v5347
        %vm5427 = vweird.f32 %v5421
        %vm5428 = vmor %vm5426, %vm5427
        %v5429 = vsel %vm5428, %v5421, %v5425
        %v5430 = vand.u32 2147483647, %v5347
        %vm5431 = vcmp.eq.f32.partialorder %v5430, 8.507059e+37
        %v5432 = vand.u32 %v5347, 2147483648
        %v5433 = vor.u32 1.1754944e-38, %v5432
        %v5434 = vsel %vm5431, %v5433, %v5429
        %v5435 = vmul.f32 1.0, %v5434
        %v5436 = vrcp.pop %v5348
        %v5437 = vmul.f32 %v5348, %v5436
        %v5438 = vsub.f32 1.0, %v5437
        %v5439 = vmul.f32 %v5436, %v5438
        %v5440 = vadd.f32 %v5436, %v5439
        %vm5441 = vweird.f32 %v5348
        %vm5442 = vweird.f32 %v5436
        %vm5443 = vmor %vm5441, %vm5442
        %v5444 = vsel %vm5443, %v5436, %v5440
        %v5445 = vand.u32 2147483647, %v5348
        %vm5446 = vcmp.eq.f32.partialorder %v5445, 8.507059e+37
        %v5447 = vand.u32 %v5348, 2147483648
        %v5448 = vor.u32 1.1754944e-38, %v5447
        %v5449 = vsel %vm5446, %v5448, %v5444
        %v5450 = vmul.f32 1.0, %v5449
        %v5451 = vrcp.pop %v5349
        %v5452 = vmul.f32 %v5349, %v5451
        %v5453 = vsub.f32 1.0, %v5452
        %v5454 = vmul.f32 %v5451, %v5453
        %v5455 = vadd.f32 %v5451, %v5454
        %vm5456 = vweird.f32 %v5349
        %vm5457 = vweird.f32 %v5451
        %vm5458 = vmor %vm5456, %vm5457
        %v5459 = vsel %vm5458, %v5451, %v5455
        %v5460 = vand.u32 2147483647, %v5349
        %vm5461 = vcmp.eq.f32.partialorder %v5460, 8.507059e+37
        %v5462 = vand.u32 %v5349, 2147483648
        %v5463 = vor.u32 1.1754944e-38, %v5462
        %v5464 = vsel %vm5461, %v5463, %v5459
        %v5465 = vmul.f32 1.0, %v5464
        %v5466 = vrcp.pop %v5350
        %v5467 = vmul.f32 %v5350, %v5466
        %v5468 = vsub.f32 1.0, %v5467
        %v5469 = vmul.f32 %v5466, %v5468
        %v5470 = vadd.f32 %v5466, %v5469
        %vm5471 = vweird.f32 %v5350
        %vm5472 = vweird.f32 %v5466
        %vm5473 = vmor %vm5471, %vm5472
        %v5474 = vsel %vm5473, %v5466, %v5470
        %v5475 = vand.u32 2147483647, %v5350
        %vm5476 = vcmp.eq.f32.partialorder %v5475, 8.507059e+37
        %v5477 = vand.u32 %v5350, 2147483648
        %v5478 = vor.u32 1.1754944e-38, %v5477
        %v5479 = vsel %vm5476, %v5478, %v5474
        %v5480 = vmul.f32 1.0, %v5479
        %v5481 = vrcp.pop %v5351
        %v5482 = vmul.f32 %v5351, %v5481
        %v5483 = vsub.f32 1.0, %v5482
        %v5484 = vmul.f32 %v5481, %v5483
        %v5485 = vadd.f32 %v5481, %v5484
        %vm5486 = vweird.f32 %v5351
        %vm5487 = vweird.f32 %v5481
        %vm5488 = vmor %vm5486, %vm5487
        %v5489 = vsel %vm5488, %v5481, %v5485
        %v5490 = vand.u32 2147483647, %v5351
        %vm5491 = vcmp.eq.f32.partialorder %v5490, 8.507059e+37
        %v5492 = vand.u32 %v5351, 2147483648
        %v5493 = vor.u32 1.1754944e-38, %v5492
        %v5494 = vsel %vm5491, %v5493, %v5489
        %v5495 = vmul.f32 1.0, %v5494
        %v5496 = vrcp.pop %v5352
        %v5497 = vmul.f32 %v5352, %v5496
        %v5498 = vsub.f32 1.0, %v5497
        %v5499 = vmul.f32 %v5496, %v5498
        %v5500 = vadd.f32 %v5496, %v5499
        %vm5501 = vweird.f32 %v5352
        %vm5502 = vweird.f32 %v5496
        %vm5503 = vmor %vm5501, %vm5502
        %v5504 = vsel %vm5503, %v5496, %v5500
        %v5505 = vand.u32 2147483647, %v5352
        %vm5506 = vcmp.eq.f32.partialorder %v5505, 8.507059e+37
        %v5507 = vand.u32 %v5352, 2147483648
        %v5508 = vor.u32 1.1754944e-38, %v5507
        %v5509 = vsel %vm5506, %v5508, %v5504
        %v5510 = vmul.f32 1.0, %v5509
        %v5511 = vrcp.pop %v5353
        %v5512 = vmul.f32 %v5353, %v5511
        %v5513 = vsub.f32 1.0, %v5512
        %v5514 = vmul.f32 %v5511, %v5513
        %v5515 = vadd.f32 %v5511, %v5514
        %vm5516 = vweird.f32 %v5353
        %vm5517 = vweird.f32 %v5511
        %vm5518 = vmor %vm5516, %vm5517
        %v5519 = vsel %vm5518, %v5511, %v5515
        %v5520 = vand.u32 2147483647, %v5353
        %vm5521 = vcmp.eq.f32.partialorder %v5520, 8.507059e+37
        %v5522 = vand.u32 %v5353, 2147483648
        %v5523 = vor.u32 1.1754944e-38, %v5522
        %v5524 = vsel %vm5521, %v5523, %v5519
        %v5525 = vmul.f32 1.0, %v5524
        %v5526 = vrcp.pop %v5354
        %v5527 = vmul.f32 %v5354, %v5526
        %v5528 = vsub.f32 1.0, %v5527
        %v5529 = vmul.f32 %v5526, %v5528
        %v5530 = vadd.f32 %v5526, %v5529
        %vm5531 = vweird.f32 %v5354
        %vm5532 = vweird.f32 %v5526
        %vm5533 = vmor %vm5531, %vm5532
        %v5534 = vsel %vm5533, %v5526, %v5530
        %v5535 = vand.u32 2147483647, %v5354
        %vm5536 = vcmp.eq.f32.partialorder %v5535, 8.507059e+37
        %v5537 = vand.u32 %v5354, 2147483648
        %v5538 = vor.u32 1.1754944e-38, %v5537
        %v5539 = vsel %vm5536, %v5538, %v5534
        %v5540 = vmul.f32 1.0, %v5539
        %v5541 = vrcp.pop %v5355
        %v5542 = vmul.f32 %v5355, %v5541
        %v5543 = vsub.f32 1.0, %v5542
        %v5544 = vmul.f32 %v5541, %v5543
        %v5545 = vadd.f32 %v5541, %v5544
        %vm5546 = vweird.f32 %v5355
        %vm5547 = vweird.f32 %v5541
        %vm5548 = vmor %vm5546, %vm5547
        %v5549 = vsel %vm5548, %v5541, %v5545
        %v5550 = vand.u32 2147483647, %v5355
        %vm5551 = vcmp.eq.f32.partialorder %v5550, 8.507059e+37
        %v5552 = vand.u32 %v5355, 2147483648
        %v5553 = vor.u32 1.1754944e-38, %v5552
        %v5554 = vsel %vm5551, %v5553, %v5549
        %v5555 = vmul.f32 1.0, %v5554
        %v5556 = vrcp.pop %v5356
        %v5557 = vmul.f32 %v5356, %v5556
        %v5558 = vsub.f32 1.0, %v5557
        %v5559 = vmul.f32 %v5556, %v5558
        %v5560 = vadd.f32 %v5556, %v5559
        %vm5561 = vweird.f32 %v5356
        %vm5562 = vweird.f32 %v5556
        %vm5563 = vmor %vm5561, %vm5562
        %v5564 = vsel %vm5563, %v5556, %v5560
        %v5565 = vand.u32 2147483647, %v5356
        %vm5566 = vcmp.eq.f32.partialorder %v5565, 8.507059e+37
        %v5567 = vand.u32 %v5356, 2147483648
        %v5568 = vor.u32 1.1754944e-38, %v5567
        %v5569 = vsel %vm5566, %v5568, %v5564
        %v5570 = vmul.f32 1.0, %v5569
        %v5571 = vrcp.pop %v5357
        %v5572 = vmul.f32 %v5357, %v5571
        %v5573 = vsub.f32 1.0, %v5572
        %v5574 = vmul.f32 %v5571, %v5573
        %v5575 = vadd.f32 %v5571, %v5574
        %vm5576 = vweird.f32 %v5357
        %vm5577 = vweird.f32 %v5571
        %vm5578 = vmor %vm5576, %vm5577
        %v5579 = vsel %vm5578, %v5571, %v5575
        %v5580 = vand.u32 2147483647, %v5357
        %vm5581 = vcmp.eq.f32.partialorder %v5580, 8.507059e+37
        %v5582 = vand.u32 %v5357, 2147483648
        %v5583 = vor.u32 1.1754944e-38, %v5582
        %v5584 = vsel %vm5581, %v5583, %v5579
        %v5585 = vmul.f32 1.0, %v5584
        %v5586 = vrcp.pop %v5358
        %v5587 = vmul.f32 %v5358, %v5586
        %v5588 = vsub.f32 1.0, %v5587
        %v5589 = vmul.f32 %v5586, %v5588
        %v5590 = vadd.f32 %v5586, %v5589
        %vm5591 = vweird.f32 %v5358
        %vm5592 = vweird.f32 %v5586
        %vm5593 = vmor %vm5591, %vm5592
        %v5594 = vsel %vm5593, %v5586, %v5590
        %v5595 = vand.u32 2147483647, %v5358
        %vm5596 = vcmp.eq.f32.partialorder %v5595, 8.507059e+37
        %v5597 = vand.u32 %v5358, 2147483648
        %v5598 = vor.u32 1.1754944e-38, %v5597
        %v5599 = vsel %vm5596, %v5598, %v5594
        %v5600 = vmul.f32 1.0, %v5599
        %v5601 = vrcp.pop %v5359
        %v5602 = vmul.f32 %v5359, %v5601
        %v5603 = vsub.f32 1.0, %v5602
        %v5604 = vmul.f32 %v5601, %v5603
        %v5605 = vadd.f32 %v5601, %v5604
        %vm5606 = vweird.f32 %v5359
        %vm5607 = vweird.f32 %v5601
        %vm5608 = vmor %vm5606, %vm5607
        %v5609 = vsel %vm5608, %v5601, %v5605
        %v5610 = vand.u32 2147483647, %v5359
        %vm5611 = vcmp.eq.f32.partialorder %v5610, 8.507059e+37
        %v5612 = vand.u32 %v5359, 2147483648
        %v5613 = vor.u32 1.1754944e-38, %v5612
        %v5614 = vsel %vm5611, %v5613, %v5609
        %v5615 = vmul.f32 1.0, %v5614
        %v5616 = vrcp.pop %v5360
        %v5617 = vmul.f32 %v5360, %v5616
        %v5618 = vsub.f32 1.0, %v5617
        %v5619 = vmul.f32 %v5616, %v5618
        %v5620 = vadd.f32 %v5616, %v5619
        %vm5621 = vweird.f32 %v5360
        %vm5622 = vweird.f32 %v5616
        %vm5623 = vmor %vm5621, %vm5622
        %v5624 = vsel %vm5623, %v5616, %v5620
        %v5625 = vand.u32 2147483647, %v5360
        %vm5626 = vcmp.eq.f32.partialorder %v5625, 8.507059e+37
        %v5627 = vand.u32 %v5360, 2147483648
        %v5628 = vor.u32 1.1754944e-38, %v5627
        %v5629 = vsel %vm5626, %v5628, %v5624
        %v5630 = vmul.f32 1.0, %v5629
        %v5631 = vrcp.pop %v5361
        %v5632 = vmul.f32 %v5361, %v5631
        %v5633 = vsub.f32 1.0, %v5632
        %v5634 = vmul.f32 %v5631, %v5633
        %v5635 = vadd.f32 %v5631, %v5634
        %vm5636 = vweird.f32 %v5361
        %vm5637 = vweird.f32 %v5631
        %vm5638 = vmor %vm5636, %vm5637
        %v5639 = vsel %vm5638, %v5631, %v5635
        %v5640 = vand.u32 2147483647, %v5361
        %vm5641 = vcmp.eq.f32.partialorder %v5640, 8.507059e+37
        %v5642 = vand.u32 %v5361, 2147483648
        %v5643 = vor.u32 1.1754944e-38, %v5642
        %v5644 = vsel %vm5641, %v5643, %v5639
        %v5645 = vmul.f32 1.0, %v5644
        %v5646 = vrcp.pop %v5362
        %v5647 = vmul.f32 %v5362, %v5646
        %v5648 = vsub.f32 1.0, %v5647
        %v5649 = vmul.f32 %v5646, %v5648
        %v5650 = vadd.f32 %v5646, %v5649
        %vm5651 = vweird.f32 %v5362
        %vm5652 = vweird.f32 %v5646
        %vm5653 = vmor %vm5651, %vm5652
        %v5654 = vsel %vm5653, %v5646, %v5650
        %v5655 = vand.u32 2147483647, %v5362
        %vm5656 = vcmp.eq.f32.partialorder %v5655, 8.507059e+37
        %v5657 = vand.u32 %v5362, 2147483648
        %v5658 = vor.u32 1.1754944e-38, %v5657
        %v5659 = vsel %vm5656, %v5658, %v5654
        %v5660 = vmul.f32 1.0, %v5659
        %v5661 = vrcp.pop %v5363
        %v5662 = vmul.f32 %v5363, %v5661
        %v5663 = vsub.f32 1.0, %v5662
        %v5664 = vmul.f32 %v5661, %v5663
        %v5665 = vadd.f32 %v5661, %v5664
        %vm5666 = vweird.f32 %v5363
        %vm5667 = vweird.f32 %v5661
        %vm5668 = vmor %vm5666, %vm5667
        %v5669 = vsel %vm5668, %v5661, %v5665
        %v5670 = vand.u32 2147483647, %v5363
        %vm5671 = vcmp.eq.f32.partialorder %v5670, 8.507059e+37
        %v5672 = vand.u32 %v5363, 2147483648
        %v5673 = vor.u32 1.1754944e-38, %v5672
        %v5674 = vsel %vm5671, %v5673, %v5669
        %v5675 = vmul.f32 1.0, %v5674
        %v5676 = vrcp.pop %v5364
        %v5677 = vmul.f32 %v5364, %v5676
        %v5678 = vsub.f32 1.0, %v5677
        %v5679 = vmul.f32 %v5676, %v5678
        %v5680 = vadd.f32 %v5676, %v5679
        %vm5681 = vweird.f32 %v5364
        %vm5682 = vweird.f32 %v5676
        %vm5683 = vmor %vm5681, %vm5682
        %v5684 = vsel %vm5683, %v5676, %v5680
        %v5685 = vand.u32 2147483647, %v5364
        %vm5686 = vcmp.eq.f32.partialorder %v5685, 8.507059e+37
        %v5687 = vand.u32 %v5364, 2147483648
        %v5688 = vor.u32 1.1754944e-38, %v5687
        %v5689 = vsel %vm5686, %v5688, %v5684
        %v5690 = vmul.f32 1.0, %v5689
        %v5691 = vrcp.pop %v5365
        %v5692 = vmul.f32 %v5365, %v5691
        %v5693 = vsub.f32 1.0, %v5692
        %v5694 = vmul.f32 %v5691, %v5693
        %v5695 = vadd.f32 %v5691, %v5694
        %vm5696 = vweird.f32 %v5365
        %vm5697 = vweird.f32 %v5691
        %vm5698 = vmor %vm5696, %vm5697
        %v5699 = vsel %vm5698, %v5691, %v5695
        %v5700 = vand.u32 2147483647, %v5365
        %vm5701 = vcmp.eq.f32.partialorder %v5700, 8.507059e+37
        %v5702 = vand.u32 %v5365, 2147483648
        %v5703 = vor.u32 1.1754944e-38, %v5702
        %v5704 = vsel %vm5701, %v5703, %v5699
        %v5705 = vmul.f32 1.0, %v5704
        %v5706 = vrcp.pop %v5366
        %v5707 = vmul.f32 %v5366, %v5706
        %v5708 = vsub.f32 1.0, %v5707
        %v5709 = vmul.f32 %v5706, %v5708
        %v5710 = vadd.f32 %v5706, %v5709
        %vm5711 = vweird.f32 %v5366
        %vm5712 = vweird.f32 %v5706
        %vm5713 = vmor %vm5711, %vm5712
        %v5714 = vsel %vm5713, %v5706, %v5710
        %v5715 = vand.u32 2147483647, %v5366
        %vm5716 = vcmp.eq.f32.partialorder %v5715, 8.507059e+37
        %v5717 = vand.u32 %v5366, 2147483648
        %v5718 = vor.u32 1.1754944e-38, %v5717
        %v5719 = vsel %vm5716, %v5718, %v5714
        %v5720 = vmul.f32 1.0, %v5719
        %v5721 = vrcp.pop %v5367
        %v5722 = vmul.f32 %v5367, %v5721
        %v5723 = vsub.f32 1.0, %v5722
        %v5724 = vmul.f32 %v5721, %v5723
        %v5725 = vadd.f32 %v5721, %v5724
        %vm5726 = vweird.f32 %v5367
        %vm5727 = vweird.f32 %v5721
        %vm5728 = vmor %vm5726, %vm5727
        %v5729 = vsel %vm5728, %v5721, %v5725
        %v5730 = vand.u32 2147483647, %v5367
        %vm5731 = vcmp.eq.f32.partialorder %v5730, 8.507059e+37
        %v5732 = vand.u32 %v5367, 2147483648
        %v5733 = vor.u32 1.1754944e-38, %v5732
        %v5734 = vsel %vm5731, %v5733, %v5729
        %v5735 = vmul.f32 1.0, %v5734
        %v5736 = vrcp.pop %v5368
        %v5737 = vmul.f32 %v5368, %v5736
        %v5738 = vsub.f32 1.0, %v5737
        %v5739 = vmul.f32 %v5736, %v5738
        %v5740 = vadd.f32 %v5736, %v5739
        %vm5741 = vweird.f32 %v5368
        %vm5742 = vweird.f32 %v5736
        %vm5743 = vmor %vm5741, %vm5742
        %v5744 = vsel %vm5743, %v5736, %v5740
        %v5745 = vand.u32 2147483647, %v5368
        %vm5746 = vcmp.eq.f32.partialorder %v5745, 8.507059e+37
        %v5747 = vand.u32 %v5368, 2147483648
        %v5748 = vor.u32 1.1754944e-38, %v5747
        %v5749 = vsel %vm5746, %v5748, %v5744
        %v5750 = vmul.f32 1.0, %v5749
        %v5751 = vrcp.pop %v5369
        %v5752 = vmul.f32 %v5369, %v5751
        %v5753 = vsub.f32 1.0, %v5752
        %v5754 = vmul.f32 %v5751, %v5753
        %v5755 = vadd.f32 %v5751, %v5754
        %vm5756 = vweird.f32 %v5369
        %vm5757 = vweird.f32 %v5751
        %vm5758 = vmor %vm5756, %vm5757
        %v5759 = vsel %vm5758, %v5751, %v5755
        %v5760 = vand.u32 2147483647, %v5369
        %vm5761 = vcmp.eq.f32.partialorder %v5760, 8.507059e+37
        %v5762 = vand.u32 %v5369, 2147483648
        %v5763 = vor.u32 1.1754944e-38, %v5762
        %v5764 = vsel %vm5761, %v5763, %v5759
        %v5765 = vmul.f32 1.0, %v5764
        %v5766 = vrcp.pop %v5370
        %v5767 = vmul.f32 %v5370, %v5766
        %v5768 = vsub.f32 1.0, %v5767
        %v5769 = vmul.f32 %v5766, %v5768
        %v5770 = vadd.f32 %v5766, %v5769
        %vm5771 = vweird.f32 %v5370
        %vm5772 = vweird.f32 %v5766
        %vm5773 = vmor %vm5771, %vm5772
        %v5774 = vsel %vm5773, %v5766, %v5770
        %v5775 = vand.u32 2147483647, %v5370
        %vm5776 = vcmp.eq.f32.partialorder %v5775, 8.507059e+37
        %v5777 = vand.u32 %v5370, 2147483648
        %v5778 = vor.u32 1.1754944e-38, %v5777
        %v5779 = vsel %vm5776, %v5778, %v5774
        %v5780 = vmul.f32 1.0, %v5779
        %v5781 = vrcp.pop %v5371
        %v5782 = vmul.f32 %v5371, %v5781
        %v5783 = vsub.f32 1.0, %v5782
        %v5784 = vmul.f32 %v5781, %v5783
        %v5785 = vadd.f32 %v5781, %v5784
        %vm5786 = vweird.f32 %v5371
        %vm5787 = vweird.f32 %v5781
        %vm5788 = vmor %vm5786, %vm5787
        %v5789 = vsel %vm5788, %v5781, %v5785
        %v5790 = vand.u32 2147483647, %v5371
        %vm5791 = vcmp.eq.f32.partialorder %v5790, 8.507059e+37
        %v5792 = vand.u32 %v5371, 2147483648
        %v5793 = vor.u32 1.1754944e-38, %v5792
        %v5794 = vsel %vm5791, %v5793, %v5789
        %v5795 = vmul.f32 1.0, %v5794
        %v5796 = vrcp.pop %v5372
        %v5797 = vmul.f32 %v5372, %v5796
        %v5798 = vsub.f32 1.0, %v5797
        %v5799 = vmul.f32 %v5796, %v5798
        %v5800 = vadd.f32 %v5796, %v5799
        %vm5801 = vweird.f32 %v5372
        %vm5802 = vweird.f32 %v5796
        %vm5803 = vmor %vm5801, %vm5802
        %v5804 = vsel %vm5803, %v5796, %v5800
        %v5805 = vand.u32 2147483647, %v5372
        %vm5806 = vcmp.eq.f32.partialorder %v5805, 8.507059e+37
        %v5807 = vand.u32 %v5372, 2147483648
        %v5808 = vor.u32 1.1754944e-38, %v5807
        %v5809 = vsel %vm5806, %v5808, %v5804
        %v5810 = vmul.f32 1.0, %v5809
        %v5811 = vrcp.pop %v5373
        %v5812 = vmul.f32 %v5373, %v5811
        %v5813 = vsub.f32 1.0, %v5812
        %v5814 = vmul.f32 %v5811, %v5813
        %v5815 = vadd.f32 %v5811, %v5814
        %vm5816 = vweird.f32 %v5373
        %vm5817 = vweird.f32 %v5811
        %vm5818 = vmor %vm5816, %vm5817
        %v5819 = vsel %vm5818, %v5811, %v5815
        %v5820 = vand.u32 2147483647, %v5373
        %vm5821 = vcmp.eq.f32.partialorder %v5820, 8.507059e+37
        %v5822 = vand.u32 %v5373, 2147483648
        %v5823 = vor.u32 1.1754944e-38, %v5822
        %v5824 = vsel %vm5821, %v5823, %v5819
        %v5825 = vmul.f32 1.0, %v5824
        %v5826 = vrcp.pop %v5374
        %v5827 = vmul.f32 %v5374, %v5826
        %v5828 = vsub.f32 1.0, %v5827
        %v5829 = vmul.f32 %v5826, %v5828
        %v5830 = vadd.f32 %v5826, %v5829
        %vm5831 = vweird.f32 %v5374
        %vm5832 = vweird.f32 %v5826
        %vm5833 = vmor %vm5831, %vm5832
        %v5834 = vsel %vm5833, %v5826, %v5830
        %v5835 = vand.u32 2147483647, %v5374
        %vm5836 = vcmp.eq.f32.partialorder %v5835, 8.507059e+37
        %v5837 = vand.u32 %v5374, 2147483648
        %v5838 = vor.u32 1.1754944e-38, %v5837
        %v5839 = vsel %vm5836, %v5838, %v5834
        %v5840 = vmul.f32 1.0, %v5839
        %v5841 = vrcp.pop %v5375
        %v5842 = vmul.f32 %v5375, %v5841
        %v5843 = vsub.f32 1.0, %v5842
        %v5844 = vmul.f32 %v5841, %v5843
        %v5845 = vadd.f32 %v5841, %v5844
        %vm5846 = vweird.f32 %v5375
        %vm5847 = vweird.f32 %v5841
        %vm5848 = vmor %vm5846, %vm5847
        %v5849 = vsel %vm5848, %v5841, %v5845
        %v5850 = vand.u32 2147483647, %v5375
        %vm5851 = vcmp.eq.f32.partialorder %v5850, 8.507059e+37
        %v5852 = vand.u32 %v5375, 2147483648
        %v5853 = vor.u32 1.1754944e-38, %v5852
        %v5854 = vsel %vm5851, %v5853, %v5849
        %v5855 = vmul.f32 1.0, %v5854
        %v5856 = vmul.f32 %v5390, 1.0614054
        %v5857 = vmul.f32 %v5405, 1.0614054
        %v5858 = vmul.f32 %v5420, 1.0614054
        %v5859 = vmul.f32 %v5435, 1.0614054
        %v5860 = vmul.f32 %v5450, 1.0614054
        %v5861 = vmul.f32 %v5465, 1.0614054
        %v5862 = vmul.f32 %v5480, 1.0614054
        %v5863 = vmul.f32 %v5495, 1.0614054
        %v5864 = vmul.f32 %v5510, 1.0614054
        %v5865 = vmul.f32 %v5525, 1.0614054
        %v5866 = vmul.f32 %v5540, 1.0614054
        %v5867 = vmul.f32 %v5555, 1.0614054
        %v5868 = vmul.f32 %v5570, 1.0614054
        %v5869 = vmul.f32 %v5585, 1.0614054
        %v5870 = vmul.f32 %v5600, 1.0614054
        %v5871 = vmul.f32 %v5615, 1.0614054
        %v5872 = vmul.f32 %v5630, 1.0614054
        %v5873 = vmul.f32 %v5645, 1.0614054
        %v5874 = vmul.f32 %v5660, 1.0614054
        %v5875 = vmul.f32 %v5675, 1.0614054
        %v5876 = vmul.f32 %v5690, 1.0614054
        %v5877 = vmul.f32 %v5705, 1.0614054
        %v5878 = vmul.f32 %v5720, 1.0614054
        %v5879 = vmul.f32 %v5735, 1.0614054
        %v5880 = vmul.f32 %v5750, 1.0614054
        %v5881 = vmul.f32 %v5765, 1.0614054
        %v5882 = vmul.f32 %v5780, 1.0614054
        %v5883 = vmul.f32 %v5795, 1.0614054
        %v5884 = vmul.f32 %v5810, 1.0614054
        %v5885 = vmul.f32 %v5825, 1.0614054
        %v5886 = vmul.f32 %v5840, 1.0614054
        %v5887 = vmul.f32 %v5855, 1.0614054
        %v5888 = vadd.f32 %v5856, -1.4531521
        %v5889 = vadd.f32 %v5857, -1.4531521
        %v5890 = vadd.f32 %v5858, -1.4531521
        %v5891 = vadd.f32 %v5859, -1.4531521
        %v5892 = vadd.f32 %v5860, -1.4531521
        %v5893 = vadd.f32 %v5861, -1.4531521
        %v5894 = vadd.f32 %v5862, -1.4531521
        %v5895 = vadd.f32 %v5863, -1.4531521
        %v5896 = vadd.f32 %v5864, -1.4531521
        %v5897 = vadd.f32 %v5865, -1.4531521
        %v5898 = vadd.f32 %v5866, -1.4531521
        %v5899 = vadd.f32 %v5867, -1.4531521
        %v5900 = vadd.f32 %v5868, -1.4531521
        %v5901 = vadd.f32 %v5869, -1.4531521
        %v5902 = vadd.f32 %v5870, -1.4531521
        %v5903 = vadd.f32 %v5871, -1.4531521
        %v5904 = vadd.f32 %v5872, -1.4531521
        %v5905 = vadd.f32 %v5873, -1.4531521
        %v5906 = vadd.f32 %v5874, -1.4531521
        %v5907 = vadd.f32 %v5875, -1.4531521
        %v5908 = vadd.f32 %v5876, -1.4531521
        %v5909 = vadd.f32 %v5877, -1.4531521
        %v5910 = vadd.f32 %v5878, -1.4531521
        %v5911 = vadd.f32 %v5879, -1.4531521
        %v5912 = vadd.f32 %v5880, -1.4531521
        %v5913 = vadd.f32 %v5881, -1.4531521
        %v5914 = vadd.f32 %v5882, -1.4531521
        %v5915 = vadd.f32 %v5883, -1.4531521
        %v5916 = vadd.f32 %v5884, -1.4531521
        %v5917 = vadd.f32 %v5885, -1.4531521
        %v5918 = vadd.f32 %v5886, -1.4531521
        %v5919 = vadd.f32 %v5887, -1.4531521
        %v5920 = vmul.f32 %v5888, %v5390
        %v5921 = vmul.f32 %v5889, %v5405
        %v5922 = vmul.f32 %v5890, %v5420
        %v5923 = vmul.f32 %v5891, %v5435
        %v5924 = vmul.f32 %v5892, %v5450
        %v5925 = vmul.f32 %v5893, %v5465
        %v5926 = vmul.f32 %v5894, %v5480
        %v5927 = vmul.f32 %v5895, %v5495
        %v5928 = vmul.f32 %v5896, %v5510
        %v5929 = vmul.f32 %v5897, %v5525
        %v5930 = vmul.f32 %v5898, %v5540
        %v5931 = vmul.f32 %v5899, %v5555
        %v5932 = vmul.f32 %v5900, %v5570
        %v5933 = vmul.f32 %v5901, %v5585
        %v5934 = vmul.f32 %v5902, %v5600
        %v5935 = vmul.f32 %v5903, %v5615
        %v5936 = vmul.f32 %v5904, %v5630
        %v5937 = vmul.f32 %v5905, %v5645
        %v5938 = vmul.f32 %v5906, %v5660
        %v5939 = vmul.f32 %v5907, %v5675
        %v5940 = vmul.f32 %v5908, %v5690
        %v5941 = vmul.f32 %v5909, %v5705
        %v5942 = vmul.f32 %v5910, %v5720
        %v5943 = vmul.f32 %v5911, %v5735
        %v5944 = vmul.f32 %v5912, %v5750
        %v5945 = vmul.f32 %v5913, %v5765
        %v5946 = vmul.f32 %v5914, %v5780
        %v5947 = vmul.f32 %v5915, %v5795
        %v5948 = vmul.f32 %v5916, %v5810
        %v5949 = vmul.f32 %v5917, %v5825
        %v5950 = vmul.f32 %v5918, %v5840
        %v5951 = vmul.f32 %v5919, %v5855
        %v5952 = vadd.f32 %v5920, 1.4214138
        %v5953 = vadd.f32 %v5921, 1.4214138
        %v5954 = vadd.f32 %v5922, 1.4214138
        %v5955 = vadd.f32 %v5923, 1.4214138
        %v5956 = vadd.f32 %v5924, 1.4214138
        %v5957 = vadd.f32 %v5925, 1.4214138
        %v5958 = vadd.f32 %v5926, 1.4214138
        %v5959 = vadd.f32 %v5927, 1.4214138
        %v5960 = vadd.f32 %v5928, 1.4214138
        %v5961 = vadd.f32 %v5929, 1.4214138
        %v5962 = vadd.f32 %v5930, 1.4214138
        %v5963 = vadd.f32 %v5931, 1.4214138
        %v5964 = vadd.f32 %v5932, 1.4214138
        %v5965 = vadd.f32 %v5933, 1.4214138
        %v5966 = vadd.f32 %v5934, 1.4214138
        %v5967 = vadd.f32 %v5935, 1.4214138
        %v5968 = vadd.f32 %v5936, 1.4214138
        %v5969 = vadd.f32 %v5937, 1.4214138
        %v5970 = vadd.f32 %v5938, 1.4214138
        %v5971 = vadd.f32 %v5939, 1.4214138
        %v5972 = vadd.f32 %v5940, 1.4214138
        %v5973 = vadd.f32 %v5941, 1.4214138
        %v5974 = vadd.f32 %v5942, 1.4214138
        %v5975 = vadd.f32 %v5943, 1.4214138
        %v5976 = vadd.f32 %v5944, 1.4214138
        %v5977 = vadd.f32 %v5945, 1.4214138
        %v5978 = vadd.f32 %v5946, 1.4214138
        %v5979 = vadd.f32 %v5947, 1.4214138
        %v5980 = vadd.f32 %v5948, 1.4214138
        %v5981 = vadd.f32 %v5949, 1.4214138
        %v5982 = vadd.f32 %v5950, 1.4214138
        %v5983 = vadd.f32 %v5951, 1.4214138
        %v5984 = vmul.f32 %v5952, %v5390
        %v5985 = vmul.f32 %v5953, %v5405
        %v5986 = vmul.f32 %v5954, %v5420
        %v5987 = vmul.f32 %v5955, %v5435
        %v5988 = vmul.f32 %v5956, %v5450
        %v5989 = vmul.f32 %v5957, %v5465
        %v5990 = vmul.f32 %v5958, %v5480
        %v5991 = vmul.f32 %v5959, %v5495
        %v5992 = vmul.f32 %v5960, %v5510
        %v5993 = vmul.f32 %v5961, %v5525
        %v5994 = vmul.f32 %v5962, %v5540
        %v5995 = vmul.f32 %v5963, %v5555
        %v5996 = vmul.f32 %v5964, %v5570
        %v5997 = vmul.f32 %v5965, %v5585
        %v5998 = vmul.f32 %v5966, %v5600
        %v5999 = vmul.f32 %v5967, %v5615
        %v6000 = vmul.f32 %v5968, %v5630
        %v6001 = vmul.f32 %v5969, %v5645
        %v6002 = vmul.f32 %v5970, %v5660
        %v6003 = vmul.f32 %v5971, %v5675
        %v6004 = vmul.f32 %v5972, %v5690
        %v6005 = vmul.f32 %v5973, %v5705
        %v6006 = vmul.f32 %v5974, %v5720
        %v6007 = vmul.f32 %v5975, %v5735
        %v6008 = vmul.f32 %v5976, %v5750
        %v6009 = vmul.f32 %v5977, %v5765
        %v6010 = vmul.f32 %v5978, %v5780
        %v6011 = vmul.f32 %v5979, %v5795
        %v6012 = vmul.f32 %v5980, %v5810
        %v6013 = vmul.f32 %v5981, %v5825
        %v6014 = vmul.f32 %v5982, %v5840
        %v6015 = vmul.f32 %v5983, %v5855
        %v6016 = vadd.f32 %v5984, -0.28449672
        %v6017 = vadd.f32 %v5985, -0.28449672
        %v6018 = vadd.f32 %v5986, -0.28449672
        %v6019 = vadd.f32 %v5987, -0.28449672
        %v6020 = vadd.f32 %v5988, -0.28449672
        %v6021 = vadd.f32 %v5989, -0.28449672
        %v6022 = vadd.f32 %v5990, -0.28449672
        %v6023 = vadd.f32 %v5991, -0.28449672
        %v6024 = vadd.f32 %v5992, -0.28449672
        %v6025 = vadd.f32 %v5993, -0.28449672
        %v6026 = vadd.f32 %v5994, -0.28449672
        %v6027 = vadd.f32 %v5995, -0.28449672
        %v6028 = vadd.f32 %v5996, -0.28449672
        %v6029 = vadd.f32 %v5997, -0.28449672
        %v6030 = vadd.f32 %v5998, -0.28449672
        %v6031 = vadd.f32 %v5999, -0.28449672
        %v6032 = vadd.f32 %v6000, -0.28449672
        %v6033 = vadd.f32 %v6001, -0.28449672
        %v6034 = vadd.f32 %v6002, -0.28449672
        %v6035 = vadd.f32 %v6003, -0.28449672
        %v6036 = vadd.f32 %v6004, -0.28449672
        %v6037 = vadd.f32 %v6005, -0.28449672
        %v6038 = vadd.f32 %v6006, -0.28449672
        %v6039 = vadd.f32 %v6007, -0.28449672
        %v6040 = vadd.f32 %v6008, -0.28449672
        %v6041 = vadd.f32 %v6009, -0.28449672
        %v6042 = vadd.f32 %v6010, -0.28449672
        %v6043 = vadd.f32 %v6011, -0.28449672
        %v6044 = vadd.f32 %v6012, -0.28449672
        %v6045 = vadd.f32 %v6013, -0.28449672
        %v6046 = vadd.f32 %v6014, -0.28449672
        %v6047 = vadd.f32 %v6015, -0.28449672
        %v6048 = vmul.f32 %v6016, %v5390
        %v6049 = vmul.f32 %v6017, %v5405
        %v6050 = vmul.f32 %v6018, %v5420
        %v6051 = vmul.f32 %v6019, %v5435
        %v6052 = vmul.f32 %v6020, %v5450
        %v6053 = vmul.f32 %v6021, %v5465
        %v6054 = vmul.f32 %v6022, %v5480
        %v6055 = vmul.f32 %v6023, %v5495
        %v6056 = vmul.f32 %v6024, %v5510
        %v6057 = vmul.f32 %v6025, %v5525
        %v6058 = vmul.f32 %v6026, %v5540
        %v6059 = vmul.f32 %v6027, %v5555
        %v6060 = vmul.f32 %v6028, %v5570
        %v6061 = vmul.f32 %v6029, %v5585
        %v6062 = vmul.f32 %v6030, %v5600
        %v6063 = vmul.f32 %v6031, %v5615
        %v6064 = vmul.f32 %v6032, %v5630
        %v6065 = vmul.f32 %v6033, %v5645
        %v6066 = vmul.f32 %v6034, %v5660
        %v6067 = vmul.f32 %v6035, %v5675
        %v6068 = vmul.f32 %v6036, %v5690
        %v6069 = vmul.f32 %v6037, %v5705
        %v6070 = vmul.f32 %v6038, %v5720
        %v6071 = vmul.f32 %v6039, %v5735
        %v6072 = vmul.f32 %v6040, %v5750
        %v6073 = vmul.f32 %v6041, %v5765
        %v6074 = vmul.f32 %v6042, %v5780
        %v6075 = vmul.f32 %v6043, %v5795
        %v6076 = vmul.f32 %v6044, %v5810
        %v6077 = vmul.f32 %v6045, %v5825
        %v6078 = vmul.f32 %v6046, %v5840
        %v6079 = vmul.f32 %v6047, %v5855
        %v6080 = vadd.f32 %v6048, 0.2548296
        %v6081 = vadd.f32 %v6049, 0.2548296
        %v6082 = vadd.f32 %v6050, 0.2548296
        %v6083 = vadd.f32 %v6051, 0.2548296
        %v6084 = vadd.f32 %v6052, 0.2548296
        %v6085 = vadd.f32 %v6053, 0.2548296
        %v6086 = vadd.f32 %v6054, 0.2548296
        %v6087 = vadd.f32 %v6055, 0.2548296
        %v6088 = vadd.f32 %v6056, 0.2548296
        %v6089 = vadd.f32 %v6057, 0.2548296
        %v6090 = vadd.f32 %v6058, 0.2548296
        %v6091 = vadd.f32 %v6059, 0.2548296
        %v6092 = vadd.f32 %v6060, 0.2548296
        %v6093 = vadd.f32 %v6061, 0.2548296
        %v6094 = vadd.f32 %v6062, 0.2548296
        %v6095 = vadd.f32 %v6063, 0.2548296
        %v6096 = vadd.f32 %v6064, 0.2548296
        %v6097 = vadd.f32 %v6065, 0.2548296
        %v6098 = vadd.f32 %v6066, 0.2548296
        %v6099 = vadd.f32 %v6067, 0.2548296
        %v6100 = vadd.f32 %v6068, 0.2548296
        %v6101 = vadd.f32 %v6069, 0.2548296
        %v6102 = vadd.f32 %v6070, 0.2548296
        %v6103 = vadd.f32 %v6071, 0.2548296
        %v6104 = vadd.f32 %v6072, 0.2548296
        %v6105 = vadd.f32 %v6073, 0.2548296
        %v6106 = vadd.f32 %v6074, 0.2548296
        %v6107 = vadd.f32 %v6075, 0.2548296
        %v6108 = vadd.f32 %v6076, 0.2548296
        %v6109 = vadd.f32 %v6077, 0.2548296
        %v6110 = vadd.f32 %v6078, 0.2548296
        %v6111 = vadd.f32 %v6079, 0.2548296
        %v6112 = vmul.f32 %v6080, %v5390
        %v6113 = vmul.f32 %v6081, %v5405
        %v6114 = vmul.f32 %v6082, %v5420
        %v6115 = vmul.f32 %v6083, %v5435
        %v6116 = vmul.f32 %v6084, %v5450
        %v6117 = vmul.f32 %v6085, %v5465
        %v6118 = vmul.f32 %v6086, %v5480
        %v6119 = vmul.f32 %v6087, %v5495
        %v6120 = vmul.f32 %v6088, %v5510
        %v6121 = vmul.f32 %v6089, %v5525
        %v6122 = vmul.f32 %v6090, %v5540
        %v6123 = vmul.f32 %v6091, %v5555
        %v6124 = vmul.f32 %v6092, %v5570
        %v6125 = vmul.f32 %v6093, %v5585
        %v6126 = vmul.f32 %v6094, %v5600
        %v6127 = vmul.f32 %v6095, %v5615
        %v6128 = vmul.f32 %v6096, %v5630
        %v6129 = vmul.f32 %v6097, %v5645
        %v6130 = vmul.f32 %v6098, %v5660
        %v6131 = vmul.f32 %v6099, %v5675
        %v6132 = vmul.f32 %v6100, %v5690
        %v6133 = vmul.f32 %v6101, %v5705
        %v6134 = vmul.f32 %v6102, %v5720
        %v6135 = vmul.f32 %v6103, %v5735
        %v6136 = vmul.f32 %v6104, %v5750
        %v6137 = vmul.f32 %v6105, %v5765
        %v6138 = vmul.f32 %v6106, %v5780
        %v6139 = vmul.f32 %v6107, %v5795
        %v6140 = vmul.f32 %v6108, %v5810
        %v6141 = vmul.f32 %v6109, %v5825
        %v6142 = vmul.f32 %v6110, %v5840
        %v6143 = vmul.f32 %v6111, %v5855
        %v6144 = vsub.f32 0.0, %v5280
        %v6145 = vsub.f32 0.0, %v5281
        %v6146 = vsub.f32 0.0, %v5282
        %v6147 = vsub.f32 0.0, %v5283
        %v6148 = vsub.f32 0.0, %v5284
        %v6149 = vsub.f32 0.0, %v5285
        %v6150 = vsub.f32 0.0, %v5286
        %v6151 = vsub.f32 0.0, %v5287
        %v6152 = vsub.f32 0.0, %v5288
        %v6153 = vsub.f32 0.0, %v5289
        %v6154 = vsub.f32 0.0, %v5290
        %v6155 = vsub.f32 0.0, %v5291
        %v6156 = vsub.f32 0.0, %v5292
        %v6157 = vsub.f32 0.0, %v5293
        %v6158 = vsub.f32 0.0, %v5294
        %v6159 = vsub.f32 0.0, %v5295
        %v6160 = vsub.f32 0.0, %v5296
        %v6161 = vsub.f32 0.0, %v5297
        %v6162 = vsub.f32 0.0, %v5298
        %v6163 = vsub.f32 0.0, %v5299
        %v6164 = vsub.f32 0.0, %v5300
        %v6165 = vsub.f32 0.0, %v5301
        %v6166 = vsub.f32 0.0, %v5302
        %v6167 = vsub.f32 0.0, %v5303
        %v6168 = vsub.f32 0.0, %v5304
        %v6169 = vsub.f32 0.0, %v5305
        %v6170 = vsub.f32 0.0, %v5306
        %v6171 = vsub.f32 0.0, %v5307
        %v6172 = vsub.f32 0.0, %v5308
        %v6173 = vsub.f32 0.0, %v5309
        %v6174 = vsub.f32 0.0, %v5310
        %v6175 = vsub.f32 0.0, %v5311
        %v6176 = vmul.f32 %v6144, %v5280
        %v6177 = vmul.f32 %v6145, %v5281
        %v6178 = vmul.f32 %v6146, %v5282
        %v6179 = vmul.f32 %v6147, %v5283
        %v6180 = vmul.f32 %v6148, %v5284
        %v6181 = vmul.f32 %v6149, %v5285
        %v6182 = vmul.f32 %v6150, %v5286
        %v6183 = vmul.f32 %v6151, %v5287
        %v6184 = vmul.f32 %v6152, %v5288
        %v6185 = vmul.f32 %v6153, %v5289
        %v6186 = vmul.f32 %v6154, %v5290
        %v6187 = vmul.f32 %v6155, %v5291
        %v6188 = vmul.f32 %v6156, %v5292
        %v6189 = vmul.f32 %v6157, %v5293
        %v6190 = vmul.f32 %v6158, %v5294
        %v6191 = vmul.f32 %v6159, %v5295
        %v6192 = vmul.f32 %v6160, %v5296
        %v6193 = vmul.f32 %v6161, %v5297
        %v6194 = vmul.f32 %v6162, %v5298
        %v6195 = vmul.f32 %v6163, %v5299
        %v6196 = vmul.f32 %v6164, %v5300
        %v6197 = vmul.f32 %v6165, %v5301
        %v6198 = vmul.f32 %v6166, %v5302
        %v6199 = vmul.f32 %v6167, %v5303
        %v6200 = vmul.f32 %v6168, %v5304
        %v6201 = vmul.f32 %v6169, %v5305
        %v6202 = vmul.f32 %v6170, %v5306
        %v6203 = vmul.f32 %v6171, %v5307
        %v6204 = vmul.f32 %v6172, %v5308
        %v6205 = vmul.f32 %v6173, %v5309
        %v6206 = vmul.f32 %v6174, %v5310
        %v6207 = vmul.f32 %v6175, %v5311
        %v6208 = vmul.f32 %v6176, 1.442695
        %v6209 = vpow.pop %v6208
        %v6210 = vmul.f32 %v6177, 1.442695
        %v6211 = vpow.pop %v6210
        %v6212 = vmul.f32 %v6178, 1.442695
        %v6213 = vpow.pop %v6212
        %v6214 = vmul.f32 %v6179, 1.442695
        %v6215 = vpow.pop %v6214
        %v6216 = vmul.f32 %v6180, 1.442695
        %v6217 = vpow.pop %v6216
        %v6218 = vmul.f32 %v6181, 1.442695
        %v6219 = vpow.pop %v6218
        %v6220 = vmul.f32 %v6182, 1.442695
        %v6221 = vpow.pop %v6220
        %v6222 = vmul.f32 %v6183, 1.442695
        %v6223 = vpow.pop %v6222
        %v6224 = vmul.f32 %v6184, 1.442695
        %v6225 = vpow.pop %v6224
        %v6226 = vmul.f32 %v6185, 1.442695
        %v6227 = vpow.pop %v6226
        %v6228 = vmul.f32 %v6186, 1.442695
        %v6229 = vpow.pop %v6228
        %v6230 = vmul.f32 %v6187, 1.442695
        %v6231 = vpow.pop %v6230
        %v6232 = vmul.f32 %v6188, 1.442695
        %v6233 = vpow.pop %v6232
        %v6234 = vmul.f32 %v6189, 1.442695
        %v6235 = vpow.pop %v6234
        %v6236 = vmul.f32 %v6190, 1.442695
        %v6237 = vpow.pop %v6236
        %v6238 = vmul.f32 %v6191, 1.442695
        %v6239 = vpow.pop %v6238
        %v6240 = vmul.f32 %v6192, 1.442695
        %v6241 = vpow.pop %v6240
        %v6242 = vmul.f32 %v6193, 1.442695
        %v6243 = vpow.pop %v6242
        %v6244 = vmul.f32 %v6194, 1.442695
        %v6245 = vpow.pop %v6244
        %v6246 = vmul.f32 %v6195, 1.442695
        %v6247 = vpow.pop %v6246
        %v6248 = vmul.f32 %v6196, 1.442695
        %v6249 = vpow.pop %v6248
        %v6250 = vmul.f32 %v6197, 1.442695
        %v6251 = vpow.pop %v6250
        %v6252 = vmul.f32 %v6198, 1.442695
        %v6253 = vpow.pop %v6252
        %v6254 = vmul.f32 %v6199, 1.442695
        %v6255 = vpow.pop %v6254
        %v6256 = vmul.f32 %v6200, 1.442695
        %v6257 = vpow.pop %v6256
        %v6258 = vmul.f32 %v6201, 1.442695
        %v6259 = vpow.pop %v6258
        %v6260 = vmul.f32 %v6202, 1.442695
        %v6261 = vpow.pop %v6260
        %v6262 = vmul.f32 %v6203, 1.442695
        %v6263 = vpow.pop %v6262
        %v6264 = vmul.f32 %v6204, 1.442695
        %v6265 = vpow.pop %v6264
        %v6266 = vmul.f32 %v6205, 1.442695
        %v6267 = vpow.pop %v6266
        %v6268 = vmul.f32 %v6206, 1.442695
        %v6269 = vpow.pop %v6268
        %v6270 = vmul.f32 %v6207, 1.442695
        %v6271 = vpow.pop %v6270
        %v6272 = vmul.f32 %v6112, %v6209
        %v6273 = vmul.f32 %v6113, %v6211
        %v6274 = vmul.f32 %v6114, %v6213
        %v6275 = vmul.f32 %v6115, %v6215
        %v6276 = vmul.f32 %v6116, %v6217
        %v6277 = vmul.f32 %v6117, %v6219
        %v6278 = vmul.f32 %v6118, %v6221
        %v6279 = vmul.f32 %v6119, %v6223
        %v6280 = vmul.f32 %v6120, %v6225
        %v6281 = vmul.f32 %v6121, %v6227
        %v6282 = vmul.f32 %v6122, %v6229
        %v6283 = vmul.f32 %v6123, %v6231
        %v6284 = vmul.f32 %v6124, %v6233
        %v6285 = vmul.f32 %v6125, %v6235
        %v6286 = vmul.f32 %v6126, %v6237
        %v6287 = vmul.f32 %v6127, %v6239
        %v6288 = vmul.f32 %v6128, %v6241
        %v6289 = vmul.f32 %v6129, %v6243
        %v6290 = vmul.f32 %v6130, %v6245
        %v6291 = vmul.f32 %v6131, %v6247
        %v6292 = vmul.f32 %v6132, %v6249
        %v6293 = vmul.f32 %v6133, %v6251
        %v6294 = vmul.f32 %v6134, %v6253
        %v6295 = vmul.f32 %v6135, %v6255
        %v6296 = vmul.f32 %v6136, %v6257
        %v6297 = vmul.f32 %v6137, %v6259
        %v6298 = vmul.f32 %v6138, %v6261
        %v6299 = vmul.f32 %v6139, %v6263
        %v6300 = vmul.f32 %v6140, %v6265
        %v6301 = vmul.f32 %v6141, %v6267
        %v6302 = vmul.f32 %v6142, %v6269
        %v6303 = vmul.f32 %v6143, %v6271
        %v6304 = vsub.f32 1.0, %v6272
        %v6305 = vsub.f32 1.0, %v6273
        %v6306 = vsub.f32 1.0, %v6274
        %v6307 = vsub.f32 1.0, %v6275
        %v6308 = vsub.f32 1.0, %v6276
        %v6309 = vsub.f32 1.0, %v6277
        %v6310 = vsub.f32 1.0, %v6278
        %v6311 = vsub.f32 1.0, %v6279
        %v6312 = vsub.f32 1.0, %v6280
        %v6313 = vsub.f32 1.0, %v6281
        %v6314 = vsub.f32 1.0, %v6282
        %v6315 = vsub.f32 1.0, %v6283
        %v6316 = vsub.f32 1.0, %v6284
        %v6317 = vsub.f32 1.0, %v6285
        %v6318 = vsub.f32 1.0, %v6286
        %v6319 = vsub.f32 1.0, %v6287
        %v6320 = vsub.f32 1.0, %v6288
        %v6321 = vsub.f32 1.0, %v6289
        %v6322 = vsub.f32 1.0, %v6290
        %v6323 = vsub.f32 1.0, %v6291
        %v6324 = vsub.f32 1.0, %v6292
        %v6325 = vsub.f32 1.0, %v6293
        %v6326 = vsub.f32 1.0, %v6294
        %v6327 = vsub.f32 1.0, %v6295
        %v6328 = vsub.f32 1.0, %v6296
        %v6329 = vsub.f32 1.0, %v6297
        %v6330 = vsub.f32 1.0, %v6298
        %v6331 = vsub.f32 1.0, %v6299
        %v6332 = vsub.f32 1.0, %v6300
        %v6333 = vsub.f32 1.0, %v6301
        %v6334 = vsub.f32 1.0, %v6302
        %v6335 = vsub.f32 1.0, %v6303
        %vm6336 = vcmp.lt.f32.partialorder %v5248, 0.0
        %vm6337 = vcmp.lt.f32.partialorder %v5249, 0.0
        %vm6338 = vcmp.lt.f32.partialorder %v5250, 0.0
        %vm6339 = vcmp.lt.f32.partialorder %v5251, 0.0
        %vm6340 = vcmp.lt.f32.partialorder %v5252, 0.0
        %vm6341 = vcmp.lt.f32.partialorder %v5253, 0.0
        %vm6342 = vcmp.lt.f32.partialorder %v5254, 0.0
        %vm6343 = vcmp.lt.f32.partialorder %v5255, 0.0
        %vm6344 = vcmp.lt.f32.partialorder %v5256, 0.0
        %vm6345 = vcmp.lt.f32.partialorder %v5257, 0.0
        %vm6346 = vcmp.lt.f32.partialorder %v5258, 0.0
        %vm6347 = vcmp.lt.f32.partialorder %v5259, 0.0
        %vm6348 = vcmp.lt.f32.partialorder %v5260, 0.0
        %vm6349 = vcmp.lt.f32.partialorder %v5261, 0.0
        %vm6350 = vcmp.lt.f32.partialorder %v5262, 0.0
        %vm6351 = vcmp.lt.f32.partialorder %v5263, 0.0
        %vm6352 = vcmp.lt.f32.partialorder %v5264, 0.0
        %vm6353 = vcmp.lt.f32.partialorder %v5265, 0.0
        %vm6354 = vcmp.lt.f32.partialorder %v5266, 0.0
        %vm6355 = vcmp.lt.f32.partialorder %v5267, 0.0
        %vm6356 = vcmp.lt.f32.partialorder %v5268, 0.0
        %vm6357 = vcmp.lt.f32.partialorder %v5269, 0.0
        %vm6358 = vcmp.lt.f32.partialorder %v5270, 0.0
        %vm6359 = vcmp.lt.f32.partialorder %v5271, 0.0
        %vm6360 = vcmp.lt.f32.partialorder %v5272, 0.0
        %vm6361 = vcmp.lt.f32.partialorder %v5273, 0.0
        %vm6362 = vcmp.lt.f32.partialorder %v5274, 0.0
        %vm6363 = vcmp.lt.f32.partialorder %v5275, 0.0
        %vm6364 = vcmp.lt.f32.partialorder %v5276, 0.0
        %vm6365 = vcmp.lt.f32.partialorder %v5277, 0.0
        %vm6366 = vcmp.lt.f32.partialorder %v5278, 0.0
        %vm6367 = vcmp.lt.f32.partialorder %v5279, 0.0
        %v6368 = vsub.f32 0.0, %v6304
        %v6369 = vsub.f32 0.0, %v6305
        %v6370 = vsub.f32 0.0, %v6306
        %v6371 = vsub.f32 0.0, %v6307
        %v6372 = vsub.f32 0.0, %v6308
        %v6373 = vsub.f32 0.0, %v6309
        %v6374 = vsub.f32 0.0, %v6310
        %v6375 = vsub.f32 0.0, %v6311
        %v6376 = vsub.f32 0.0, %v6312
        %v6377 = vsub.f32 0.0, %v6313
        %v6378 = vsub.f32 0.0, %v6314
        %v6379 = vsub.f32 0.0, %v6315
        %v6380 = vsub.f32 0.0, %v6316
        %v6381 = vsub.f32 0.0, %v6317
        %v6382 = vsub.f32 0.0, %v6318
        %v6383 = vsub.f32 0.0, %v6319
        %v6384 = vsub.f32 0.0, %v6320
        %v6385 = vsub.f32 0.0, %v6321
        %v6386 = vsub.f32 0.0, %v6322
        %v6387 = vsub.f32 0.0, %v6323
        %v6388 = vsub.f32 0.0, %v6324
        %v6389 = vsub.f32 0.0, %v6325
        %v6390 = vsub.f32 0.0, %v6326
        %v6391 = vsub.f32 0.0, %v6327
        %v6392 = vsub.f32 0.0, %v6328
        %v6393 = vsub.f32 0.0, %v6329
        %v6394 = vsub.f32 0.0, %v6330
        %v6395 = vsub.f32 0.0, %v6331
        %v6396 = vsub.f32 0.0, %v6332
        %v6397 = vsub.f32 0.0, %v6333
        %v6398 = vsub.f32 0.0, %v6334
        %v6399 = vsub.f32 0.0, %v6335
        %v6400 = vsel %vm6336, %v6368, %v6304
        %v6401 = vsel %vm6337, %v6369, %v6305
        %v6402 = vsel %vm6338, %v6370, %v6306
        %v6403 = vsel %vm6339, %v6371, %v6307
        %v6404 = vsel %vm6340, %v6372, %v6308
        %v6405 = vsel %vm6341, %v6373, %v6309
        %v6406 = vsel %vm6342, %v6374, %v6310
        %v6407 = vsel %vm6343, %v6375, %v6311
        %v6408 = vsel %vm6344, %v6376, %v6312
        %v6409 = vsel %vm6345, %v6377, %v6313
        %v6410 = vsel %vm6346, %v6378, %v6314
        %v6411 = vsel %vm6347, %v6379, %v6315
        %v6412 = vsel %vm6348, %v6380, %v6316
        %v6413 = vsel %vm6349, %v6381, %v6317
        %v6414 = vsel %vm6350, %v6382, %v6318
        %v6415 = vsel %vm6351, %v6383, %v6319
        %v6416 = vsel %vm6352, %v6384, %v6320
        %v6417 = vsel %vm6353, %v6385, %v6321
        %v6418 = vsel %vm6354, %v6386, %v6322
        %v6419 = vsel %vm6355, %v6387, %v6323
        %v6420 = vsel %vm6356, %v6388, %v6324
        %v6421 = vsel %vm6357, %v6389, %v6325
        %v6422 = vsel %vm6358, %v6390, %v6326
        %v6423 = vsel %vm6359, %v6391, %v6327
        %v6424 = vsel %vm6360, %v6392, %v6328
        %v6425 = vsel %vm6361, %v6393, %v6329
        %v6426 = vsel %vm6362, %v6394, %v6330
        %v6427 = vsel %vm6363, %v6395, %v6331
        %v6428 = vsel %vm6364, %v6396, %v6332
        %v6429 = vsel %vm6365, %v6397, %v6333
        %v6430 = vsel %vm6366, %v6398, %v6334
        %v6431 = vsel %vm6367, %v6399, %v6335
        %v6432 = vadd.f32 %v6400, 1.0
        %v6433 = vadd.f32 %v6401, 1.0
        %v6434 = vadd.f32 %v6402, 1.0
        %v6435 = vadd.f32 %v6403, 1.0
        %v6436 = vadd.f32 %v6404, 1.0
        %v6437 = vadd.f32 %v6405, 1.0
        %v6438 = vadd.f32 %v6406, 1.0
        %v6439 = vadd.f32 %v6407, 1.0
        %v6440 = vadd.f32 %v6408, 1.0
        %v6441 = vadd.f32 %v6409, 1.0
        %v6442 = vadd.f32 %v6410, 1.0
        %v6443 = vadd.f32 %v6411, 1.0
        %v6444 = vadd.f32 %v6412, 1.0
        %v6445 = vadd.f32 %v6413, 1.0
        %v6446 = vadd.f32 %v6414, 1.0
        %v6447 = vadd.f32 %v6415, 1.0
        %v6448 = vadd.f32 %v6416, 1.0
        %v6449 = vadd.f32 %v6417, 1.0
        %v6450 = vadd.f32 %v6418, 1.0
        %v6451 = vadd.f32 %v6419, 1.0
        %v6452 = vadd.f32 %v6420, 1.0
        %v6453 = vadd.f32 %v6421, 1.0
        %v6454 = vadd.f32 %v6422, 1.0
        %v6455 = vadd.f32 %v6423, 1.0
        %v6456 = vadd.f32 %v6424, 1.0
        %v6457 = vadd.f32 %v6425, 1.0
        %v6458 = vadd.f32 %v6426, 1.0
        %v6459 = vadd.f32 %v6427, 1.0
        %v6460 = vadd.f32 %v6428, 1.0
        %v6461 = vadd.f32 %v6429, 1.0
        %v6462 = vadd.f32 %v6430, 1.0
        %v6463 = vadd.f32 %v6431, 1.0
        %v6464 = vmul.f32 %v5216, %v6432
        %v6465 = vmul.f32 %v5217, %v6433
        %v6466 = vmul.f32 %v5218, %v6434
        %v6467 = vmul.f32 %v5219, %v6435
        %v6468 = vmul.f32 %v5220, %v6436
        %v6469 = vmul.f32 %v5221, %v6437
        %v6470 = vmul.f32 %v5222, %v6438
        %v6471 = vmul.f32 %v5223, %v6439
        %v6472 = vmul.f32 %v5224, %v6440
        %v6473 = vmul.f32 %v5225, %v6441
        %v6474 = vmul.f32 %v5226, %v6442
        %v6475 = vmul.f32 %v5227, %v6443
        %v6476 = vmul.f32 %v5228, %v6444
        %v6477 = vmul.f32 %v5229, %v6445
        %v6478 = vmul.f32 %v5230, %v6446
        %v6479 = vmul.f32 %v5231, %v6447
        %v6480 = vmul.f32 %v5232, %v6448
        %v6481 = vmul.f32 %v5233, %v6449
        %v6482 = vmul.f32 %v5234, %v6450
        %v6483 = vmul.f32 %v5235, %v6451
        %v6484 = vmul.f32 %v5236, %v6452
        %v6485 = vmul.f32 %v5237, %v6453
        %v6486 = vmul.f32 %v5238, %v6454
        %v6487 = vmul.f32 %v5239, %v6455
        %v6488 = vmul.f32 %v5240, %v6456
        %v6489 = vmul.f32 %v5241, %v6457
        %v6490 = vmul.f32 %v5242, %v6458
        %v6491 = vmul.f32 %v5243, %v6459
        %v6492 = vmul.f32 %v5244, %v6460
        %v6493 = vmul.f32 %v5245, %v6461
        %v6494 = vmul.f32 %v5246, %v6462
        %v6495 = vmul.f32 %v5247, %v6463
        %v6496 = vmul.f32 %v6464, %v6464
        %v6497 = vmul.f32 %v6465, %v6465
        %v6498 = vmul.f32 %v6466, %v6466
        %v6499 = vmul.f32 %v6467, %v6467
        %v6500 = vmul.f32 %v6468, %v6468
        %v6501 = vmul.f32 %v6469, %v6469
        %v6502 = vmul.f32 %v6470, %v6470
        %v6503 = vmul.f32 %v6471, %v6471
        %v6504 = vmul.f32 %v6472, %v6472
        %v6505 = vmul.f32 %v6473, %v6473
        %v6506 = vmul.f32 %v6474, %v6474
        %v6507 = vmul.f32 %v6475, %v6475
        %v6508 = vmul.f32 %v6476, %v6476
        %v6509 = vmul.f32 %v6477, %v6477
        %v6510 = vmul.f32 %v6478, %v6478
        %v6511 = vmul.f32 %v6479, %v6479
        %v6512 = vmul.f32 %v6480, %v6480
        %v6513 = vmul.f32 %v6481, %v6481
        %v6514 = vmul.f32 %v6482, %v6482
        %v6515 = vmul.f32 %v6483, %v6483
        %v6516 = vmul.f32 %v6484, %v6484
        %v6517 = vmul.f32 %v6485, %v6485
        %v6518 = vmul.f32 %v6486, %v6486
        %v6519 = vmul.f32 %v6487, %v6487
        %v6520 = vmul.f32 %v6488, %v6488
        %v6521 = vmul.f32 %v6489, %v6489
        %v6522 = vmul.f32 %v6490, %v6490
        %v6523 = vmul.f32 %v6491, %v6491
        %v6524 = vmul.f32 %v6492, %v6492
        %v6525 = vmul.f32 %v6493, %v6493
        %v6526 = vmul.f32 %v6494, %v6494
        %v6527 = vmul.f32 %v6495, %v6495
        %v6528 = vadd.f32 %v6496, %v6497
        %v6529 = vadd.f32 %v6528, %v6498
        %v6530 = vadd.f32 %v6529, %v6499
        %v6531 = vadd.f32 %v6530, %v6500
        %v6532 = vadd.f32 %v6531, %v6501
        %v6533 = vadd.f32 %v6532, %v6502
        %v6534 = vadd.f32 %v6533, %v6503
        %v6535 = vadd.f32 %v6534, %v6504
        %v6536 = vadd.f32 %v6535, %v6505
        %v6537 = vadd.f32 %v6536, %v6506
        %v6538 = vadd.f32 %v6537, %v6507
        %v6539 = vadd.f32 %v6538, %v6508
        %v6540 = vadd.f32 %v6539, %v6509
        %v6541 = vadd.f32 %v6540, %v6510
        %v6542 = vadd.f32 %v6541, %v6511
        %v6543 = vadd.f32 %v6542, %v6512
        %v6544 = vadd.f32 %v6543, %v6513
        %v6545 = vadd.f32 %v6544, %v6514
        %v6546 = vadd.f32 %v6545, %v6515
        %v6547 = vadd.f32 %v6546, %v6516
        %v6548 = vadd.f32 %v6547, %v6517
        %v6549 = vadd.f32 %v6548, %v6518
        %v6550 = vadd.f32 %v6549, %v6519
        %v6551 = vadd.f32 %v6550, %v6520
        %v6552 = vadd.f32 %v6551, %v6521
        %v6553 = vadd.f32 %v6552, %v6522
        %v6554 = vadd.f32 %v6553, %v6523
        %v6555 = vadd.f32 %v6554, %v6524
        %v6556 = vadd.f32 %v6555, %v6525
        %v6557 = vadd.f32 %v6556, %v6526
        %v6558 = vadd.f32 %v6557, %v6527
        %v6559 = vrot.slane %v6558, 4
        %v6560 = vadd.f32 %v6558, %v6559
        %v6561 = vrot.slane %v6560, 2
        %v6562 = vadd.f32 %v6560, %v6561
        %v6563 = vrot.slane %v6562, 1
        %v6564 = vadd.f32 %v6562, %v6563
        %v6565 = vrsqrt.pop %v6564
        %v6566 = vmul.f32 %v6565, %v6564
        %v6567 = vmul.f32 %v6566, %v6565
        %v6568 = vmul.f32 0.5, %v6567
        %v6569 = vsub.f32 1.5, %v6568
        %v6570 = vmul.f32 %v6565, %v6569
        %v6571 = vmul.f32 %v6564, %v6570
        %vm6572 = vcmp.eq.f32.partialorder %v6564, inf
        %v6573 = vsel %vm6572, %v6564, %v6571
        %vm6574 = vcmp.eq.f32.partialorder %v6564, 0.0
        %v6575 = vand.u32 %v6564, 2147483648
        %v6576 = vsel %vm6574, %v6575, %v6573
        %6577 = vadd.xlane.f32.xlu0 %v6576
        %v6578 = vpop.xlane.xlu0 %6577
        %v6579 = vrcp.pop 128.0
        %v6580 = vmul.f32 128.0, %v6579
        %v6581 = vsub.f32 1.0, %v6580
        %v6582 = vmul.f32 %v6579, %v6581
        %v6583 = vadd.f32 %v6579, %v6582
        %vm6584 = vweird.f32 %v6579
        %v6585 = vsel %vm6584, %v6579, %v6583
        %v6586 = vmul.f32 %v6578, %v6585
        %v6587 = vadd.f32 %v6586, 1e-06
        %v6588 = vrcp.pop %v6587
        %v6589 = vmul.f32 %v6587, %v6588
        %v6590 = vsub.f32 1.0, %v6589
        %v6591 = vmul.f32 %v6588, %v6590
        %v6592 = vadd.f32 %v6588, %v6591
        %vm6593 = vweird.f32 %v6587
        %vm6594 = vweird.f32 %v6588
        %vm6595 = vmor %vm6593, %vm6594
        %v6596 = vsel %vm6595, %v6588, %v6592
        %v6597 = vand.u32 2147483647, %v6587
        %vm6598 = vcmp.eq.f32.partialorder %v6597, 8.507059e+37
        %v6599 = vand.u32 %v6587, 2147483648
        %v6600 = vor.u32 1.1754944e-38, %v6599
        %v6601 = vsel %vm6598, %v6600, %v6596
        %v6602 = vmul.f32 %v6576, %v6601
        %v6603 = vld [vmem:[%s7] sm:$0x1]
        %v6604 = vmul.f32 %v6464, %v6602
        %v6605 = vmul.f32 %v6465, %v6602
        %v6606 = vmul.f32 %v6466, %v6602
        %v6607 = vmul.f32 %v6467, %v6602
        %v6608 = vmul.f32 %v6468, %v6602
        %v6609 = vmul.f32 %v6469, %v6602
        %v6610 = vmul.f32 %v6470, %v6602
        %v6611 = vmul.f32 %v6471, %v6602
        %v6612 = vmul.f32 %v6472, %v6602
        %v6613 = vmul.f32 %v6473, %v6602
        %v6614 = vmul.f32 %v6474, %v6602
        %v6615 = vmul.f32 %v6475, %v6602
        %v6616 = vmul.f32 %v6476, %v6602
        %v6617 = vmul.f32 %v6477, %v6602
        %v6618 = vmul.f32 %v6478, %v6602
        %v6619 = vmul.f32 %v6479, %v6602
        %v6620 = vmul.f32 %v6480, %v6602
        %v6621 = vmul.f32 %v6481, %v6602
        %v6622 = vmul.f32 %v6482, %v6602
        %v6623 = vmul.f32 %v6483, %v6602
        %v6624 = vmul.f32 %v6484, %v6602
        %v6625 = vmul.f32 %v6485, %v6602
        %v6626 = vmul.f32 %v6486, %v6602
        %v6627 = vmul.f32 %v6487, %v6602
        %v6628 = vmul.f32 %v6488, %v6602
        %v6629 = vmul.f32 %v6489, %v6602
        %v6630 = vmul.f32 %v6490, %v6602
        %v6631 = vmul.f32 %v6491, %v6602
        %v6632 = vmul.f32 %v6492, %v6602
        %v6633 = vmul.f32 %v6493, %v6602
        %v6634 = vmul.f32 %v6494, %v6602
        %v6635 = vmul.f32 %v6495, %v6602
        %v6637 = vperm.slane %v6603, 0
        %v6639 = vmul.f32 %v6637, %v6604
        %v6640 = vmul.f32 %v6637, %v6605
        %v6641 = vmul.f32 %v6637, %v6606
        %v6642 = vmul.f32 %v6637, %v6607
        %v6643 = vmul.f32 %v6637, %v6608
        %v6644 = vmul.f32 %v6637, %v6609
        %v6645 = vmul.f32 %v6637, %v6610
        %v6646 = vmul.f32 %v6637, %v6611
        %v6647 = vmul.f32 %v6637, %v6612
        %v6648 = vmul.f32 %v6637, %v6613
        %v6649 = vmul.f32 %v6637, %v6614
        %v6650 = vmul.f32 %v6637, %v6615
        %v6651 = vmul.f32 %v6637, %v6616
        %v6652 = vmul.f32 %v6637, %v6617
        %v6653 = vmul.f32 %v6637, %v6618
        %v6654 = vmul.f32 %v6637, %v6619
        %v6655 = vmul.f32 %v6637, %v6620
        %v6656 = vmul.f32 %v6637, %v6621
        %v6657 = vmul.f32 %v6637, %v6622
        %v6658 = vmul.f32 %v6637, %v6623
        %v6659 = vmul.f32 %v6637, %v6624
        %v6660 = vmul.f32 %v6637, %v6625
        %v6661 = vmul.f32 %v6637, %v6626
        %v6662 = vmul.f32 %v6637, %v6627
        %v6663 = vmul.f32 %v6637, %v6628
        %v6664 = vmul.f32 %v6637, %v6629
        %v6665 = vmul.f32 %v6637, %v6630
        %v6666 = vmul.f32 %v6637, %v6631
        %v6667 = vmul.f32 %v6637, %v6632
        %v6668 = vmul.f32 %v6637, %v6633
        %v6669 = vmul.f32 %v6637, %v6634
        %v6670 = vmul.f32 %v6637, %v6635
        %v6671 = vld [vmem:[%s8] sm:$0x1]
        %v6673 = vperm.slane %v6671, 0
        %v6675 = vadd.f32 %v6639, %v6673
        %v6676 = vadd.f32 %v6640, %v6673
        %v6677 = vadd.f32 %v6641, %v6673
        %v6678 = vadd.f32 %v6642, %v6673
        %v6679 = vadd.f32 %v6643, %v6673
        %v6680 = vadd.f32 %v6644, %v6673
        %v6681 = vadd.f32 %v6645, %v6673
        %v6682 = vadd.f32 %v6646, %v6673
        %v6683 = vadd.f32 %v6647, %v6673
        %v6684 = vadd.f32 %v6648, %v6673
        %v6685 = vadd.f32 %v6649, %v6673
        %v6686 = vadd.f32 %v6650, %v6673
        %v6687 = vadd.f32 %v6651, %v6673
        %v6688 = vadd.f32 %v6652, %v6673
        %v6689 = vadd.f32 %v6653, %v6673
        %v6690 = vadd.f32 %v6654, %v6673
        %v6691 = vadd.f32 %v6655, %v6673
        %v6692 = vadd.f32 %v6656, %v6673
        %v6693 = vadd.f32 %v6657, %v6673
        %v6694 = vadd.f32 %v6658, %v6673
        %v6695 = vadd.f32 %v6659, %v6673
        %v6696 = vadd.f32 %v6660, %v6673
        %v6697 = vadd.f32 %v6661, %v6673
        %v6698 = vadd.f32 %v6662, %v6673
        %v6699 = vadd.f32 %v6663, %v6673
        %v6700 = vadd.f32 %v6664, %v6673
        %v6701 = vadd.f32 %v6665, %v6673
        %v6702 = vadd.f32 %v6666, %v6673
        %v6703 = vadd.f32 %v6667, %v6673
        %v6704 = vadd.f32 %v6668, %v6673
        %v6705 = vadd.f32 %v6669, %v6673
        %v6706 = vadd.f32 %v6670, %v6673
        %v6707 = vadd.f32 %v6675, %v6464
        %v6708 = vadd.f32 %v6676, %v6465
        %v6709 = vadd.f32 %v6677, %v6466
        %v6710 = vadd.f32 %v6678, %v6467
        %v6711 = vadd.f32 %v6679, %v6468
        %v6712 = vadd.f32 %v6680, %v6469
        %v6713 = vadd.f32 %v6681, %v6470
        %v6714 = vadd.f32 %v6682, %v6471
        %v6715 = vadd.f32 %v6683, %v6472
        %v6716 = vadd.f32 %v6684, %v6473
        %v6717 = vadd.f32 %v6685, %v6474
        %v6718 = vadd.f32 %v6686, %v6475
        %v6719 = vadd.f32 %v6687, %v6476
        %v6720 = vadd.f32 %v6688, %v6477
        %v6721 = vadd.f32 %v6689, %v6478
        %v6722 = vadd.f32 %v6690, %v6479
        %v6723 = vadd.f32 %v6691, %v6480
        %v6724 = vadd.f32 %v6692, %v6481
        %v6725 = vadd.f32 %v6693, %v6482
        %v6726 = vadd.f32 %v6694, %v6483
        %v6727 = vadd.f32 %v6695, %v6484
        %v6728 = vadd.f32 %v6696, %v6485
        %v6729 = vadd.f32 %v6697, %v6486
        %v6730 = vadd.f32 %v6698, %v6487
        %v6731 = vadd.f32 %v6699, %v6488
        %v6732 = vadd.f32 %v6700, %v6489
        %v6733 = vadd.f32 %v6701, %v6490
        %v6734 = vadd.f32 %v6702, %v6491
        %v6735 = vadd.f32 %v6703, %v6492
        %v6736 = vadd.f32 %v6704, %v6493
        %v6737 = vadd.f32 %v6705, %v6494
        %v6738 = vadd.f32 %v6706, %v6495
        %v6739 = vpack.c.bf16 %v6708, %v6707
        %v6740 = vpack.c.bf16 %v6710, %v6709
        %v6741 = vpack.c.bf16 %v6712, %v6711
        %v6742 = vpack.c.bf16 %v6714, %v6713
        %v6743 = vpack.c.bf16 %v6716, %v6715
        %v6744 = vpack.c.bf16 %v6718, %v6717
        %v6745 = vpack.c.bf16 %v6720, %v6719
        %v6746 = vpack.c.bf16 %v6722, %v6721
        %v6747 = vpack.c.bf16 %v6724, %v6723
        %v6748 = vpack.c.bf16 %v6726, %v6725
        %v6749 = vpack.c.bf16 %v6728, %v6727
        %v6750 = vpack.c.bf16 %v6730, %v6729
        %v6751 = vpack.c.bf16 %v6732, %v6731
        %v6752 = vpack.c.bf16 %v6734, %v6733
        %v6753 = vpack.c.bf16 %v6736, %v6735
        %v6754 = vpack.c.bf16 %v6738, %v6737
        %v6755 = vld [vmem:[%s9] sm:$0xf]
        %v6756 = vld [vmem:[%s9 + $0x4] sm:$0xf]
        %v6757 = vld [vmem:[%s9 + $0x8] sm:$0xf]
        %v6758 = vld [vmem:[%s9 + $0xc] sm:$0xf]
        %v6759 = vld [vmem:[%s9 + $0x10] sm:$0xf]
        %v6760 = vld [vmem:[%s9 + $0x14] sm:$0xf]
        %v6761 = vld [vmem:[%s9 + $0x18] sm:$0xf]
        %v6762 = vld [vmem:[%s9 + $0x1c] sm:$0xf]
        %v6763 = vld [vmem:[%s9 + $0x20] sm:$0xf]
        %v6764 = vld [vmem:[%s9 + $0x24] sm:$0xf]
        %v6765 = vld [vmem:[%s9 + $0x28] sm:$0xf]
        %v6766 = vld [vmem:[%s9 + $0x2c] sm:$0xf]
        %v6767 = vld [vmem:[%s9 + $0x30] sm:$0xf]
        %v6768 = vld [vmem:[%s9 + $0x34] sm:$0xf]
        %v6769 = vld [vmem:[%s9 + $0x38] sm:$0xf]
        %v6770 = vld [vmem:[%s9 + $0x3c] sm:$0xf]
        %v6771 = vld [vmem:[%s10] sm:$0x1]
        %v6773 = vperm.slane %v6771, 0
        %v6791 = vunpack.c.l.b16 %v6755
        %v6792 = vunpack.c.l.b16 %v6756
        %v6793 = vunpack.c.l.b16 %v6757
        %v6794 = vunpack.c.l.b16 %v6758
        %v6795 = vunpack.c.l.b16 %v6759
        %v6796 = vunpack.c.l.b16 %v6760
        %v6797 = vunpack.c.l.b16 %v6761
        %v6798 = vunpack.c.l.b16 %v6762
        %v6799 = vunpack.c.l.b16 %v6763
        %v6800 = vunpack.c.l.b16 %v6764
        %v6801 = vunpack.c.l.b16 %v6765
        %v6802 = vunpack.c.l.b16 %v6766
        %v6803 = vunpack.c.l.b16 %v6767
        %v6804 = vunpack.c.l.b16 %v6768
        %v6805 = vunpack.c.l.b16 %v6769
        %v6806 = vunpack.c.l.b16 %v6770
        %v6807 = vpack.c.b16 %v6792, %v6791
        %v6808 = vpack.c.b16 %v6794, %v6793
        %v6809 = vpack.c.b16 %v6796, %v6795
        %v6810 = vpack.c.b16 %v6798, %v6797
        %v6811 = vpack.c.b16 %v6800, %v6799
        %v6812 = vpack.c.b16 %v6802, %v6801
        %v6813 = vpack.c.b16 %v6804, %v6803
        %v6814 = vpack.c.b16 %v6806, %v6805
        %6823 = vmatpush.bf16.msra.mxu0 %v6814
        %6824 = vmatpush.bf16.msra.mxu0 %v6813
        %6825 = vmatpush.bf16.msra.mxu0 %v6812
        %6826 = vmatpush.bf16.msra.mxu0 %v6811
        %6827 = vmatpush.bf16.msra.mxu0 %v6810
        %6828 = vmatpush.bf16.msra.mxu0 %v6809
        %6829 = vmatpush.bf16.msra.mxu0 %v6808
        %6830 = vmatpush.bf16.msra.mxu0 %v6807
        %6831 = vmatmul.bf16.gmra.mxu0 %v6739
        %v6832 = vpop.f32.mrf.mxu0
        %v6833 = vadd.f32 %v6773, %v6832
        %v6834 = vpop.f32.mrf.mxu0
        %v6835 = vadd.f32 %v6773, %v6834
        %6836 = vmatmul.bf16.gmra.mxu0 %v6740
        %v6837 = vpop.f32.mrf.mxu0
        %v6838 = vadd.f32 %v6773, %v6837
        %v6839 = vpop.f32.mrf.mxu0
        %v6840 = vadd.f32 %v6773, %v6839
        %6841 = vmatmul.bf16.gmra.mxu0 %v6741
        %v6842 = vpop.f32.mrf.mxu0
        %v6843 = vadd.f32 %v6773, %v6842
        %v6844 = vpop.f32.mrf.mxu0
        %v6845 = vadd.f32 %v6773, %v6844
        %6846 = vmatmul.bf16.gmra.mxu0 %v6742
        %v6847 = vpop.f32.mrf.mxu0
        %v6848 = vadd.f32 %v6773, %v6847
        %v6849 = vpop.f32.mrf.mxu0
        %v6850 = vadd.f32 %v6773, %v6849
        %6851 = vmatmul.bf16.gmra.mxu0 %v6743
        %v6852 = vpop.f32.mrf.mxu0
        %v6853 = vadd.f32 %v6773, %v6852
        %v6854 = vpop.f32.mrf.mxu0
        %v6855 = vadd.f32 %v6773, %v6854
        %6856 = vmatmul.bf16.gmra.mxu0 %v6744
        %v6857 = vpop.f32.mrf.mxu0
        %v6858 = vadd.f32 %v6773, %v6857
        %v6859 = vpop.f32.mrf.mxu0
        %v6860 = vadd.f32 %v6773, %v6859
        %6861 = vmatmul.bf16.gmra.mxu0 %v6745
        %v6862 = vpop.f32.mrf.mxu0
        %v6863 = vadd.f32 %v6773, %v6862
        %v6864 = vpop.f32.mrf.mxu0
        %v6865 = vadd.f32 %v6773, %v6864
        %6866 = vmatmul.bf16.gmra.mxu0 %v6746
        %v6867 = vpop.f32.mrf.mxu0
        %v6868 = vadd.f32 %v6773, %v6867
        %v6869 = vpop.f32.mrf.mxu0
        %v6870 = vadd.f32 %v6773, %v6869
        %6871 = vmatmul.bf16.gmra.mxu0 %v6747
        %v6872 = vpop.f32.mrf.mxu0
        %v6873 = vadd.f32 %v6773, %v6872
        %v6874 = vpop.f32.mrf.mxu0
        %v6875 = vadd.f32 %v6773, %v6874
        %6876 = vmatmul.bf16.gmra.mxu0 %v6748
        %v6877 = vpop.f32.mrf.mxu0
        %v6878 = vadd.f32 %v6773, %v6877
        %v6879 = vpop.f32.mrf.mxu0
        %v6880 = vadd.f32 %v6773, %v6879
        %6881 = vmatmul.bf16.gmra.mxu0 %v6749
        %v6882 = vpop.f32.mrf.mxu0
        %v6883 = vadd.f32 %v6773, %v6882
        %v6884 = vpop.f32.mrf.mxu0
        %v6885 = vadd.f32 %v6773, %v6884
        %6886 = vmatmul.bf16.gmra.mxu0 %v6750
        %v6887 = vpop.f32.mrf.mxu0
        %v6888 = vadd.f32 %v6773, %v6887
        %v6889 = vpop.f32.mrf.mxu0
        %v6890 = vadd.f32 %v6773, %v6889
        %6891 = vmatmul.bf16.gmra.mxu0 %v6751
        %v6892 = vpop.f32.mrf.mxu0
        %v6893 = vadd.f32 %v6773, %v6892
        %v6894 = vpop.f32.mrf.mxu0
        %v6895 = vadd.f32 %v6773, %v6894
        %6896 = vmatmul.bf16.gmra.mxu0 %v6752
        %v6897 = vpop.f32.mrf.mxu0
        %v6898 = vadd.f32 %v6773, %v6897
        %v6899 = vpop.f32.mrf.mxu0
        %v6900 = vadd.f32 %v6773, %v6899
        %6901 = vmatmul.bf16.gmra.mxu0 %v6753
        %v6902 = vpop.f32.mrf.mxu0
        %v6903 = vadd.f32 %v6773, %v6902
        %v6904 = vpop.f32.mrf.mxu0
        %v6905 = vadd.f32 %v6773, %v6904
        %6906 = vmatmul.bf16.gmra.mxu0 %v6754
        %v6907 = vpop.f32.mrf.mxu0
        %v6908 = vadd.f32 %v6773, %v6907
        %v6909 = vpop.f32.mrf.mxu0
        %v6910 = vadd.f32 %v6773, %v6909
        %6911 = vdwg.mxu0
        %v6912 = vadd.f32 %v408, %v6833
        %v6913 = vadd.f32 %v409, %v6835
        %v6914 = vadd.f32 %v410, %v6838
        %v6915 = vadd.f32 %v411, %v6840
        %v6916 = vadd.f32 %v412, %v6843
        %v6917 = vadd.f32 %v413, %v6845
        %v6918 = vadd.f32 %v414, %v6848
        %v6919 = vadd.f32 %v415, %v6850
        %v6920 = vadd.f32 %v416, %v6853
        %v6921 = vadd.f32 %v417, %v6855
        %v6922 = vadd.f32 %v418, %v6858
        %v6923 = vadd.f32 %v419, %v6860
        %v6924 = vadd.f32 %v420, %v6863
        %v6925 = vadd.f32 %v421, %v6865
        %v6926 = vadd.f32 %v422, %v6868
        %v6927 = vadd.f32 %v423, %v6870
        %v6928 = vadd.f32 %v424, %v6873
        %v6929 = vadd.f32 %v425, %v6875
        %v6930 = vadd.f32 %v426, %v6878
        %v6931 = vadd.f32 %v427, %v6880
        %v6932 = vadd.f32 %v428, %v6883
        %v6933 = vadd.f32 %v429, %v6885
        %v6934 = vadd.f32 %v430, %v6888
        %v6935 = vadd.f32 %v431, %v6890
        %v6936 = vadd.f32 %v432, %v6893
        %v6937 = vadd.f32 %v433, %v6895
        %v6938 = vadd.f32 %v434, %v6898
        %v6939 = vadd.f32 %v435, %v6900
        %v6940 = vadd.f32 %v436, %v6903
        %v6941 = vadd.f32 %v437, %v6905
        %v6942 = vadd.f32 %v438, %v6908
        %v6943 = vadd.f32 %v439, %v6910
        %6944 = vst.msk [vmem:[%s406] sm:$0xff] %vm4259, %v6912
        %6945 = vst.msk [vmem:[%s406 + $0x8] sm:$0xff] %vm4259, %v6913
        %6946 = vst.msk [vmem:[%s406 + $0x10] sm:$0xff] %vm4259, %v6914
        %6947 = vst.msk [vmem:[%s406 + $0x18] sm:$0xff] %vm4259, %v6915
        %6948 = vst.msk [vmem:[%s406 + $0x20] sm:$0xff] %vm4259, %v6916
        %6949 = vst.msk [vmem:[%s406 + $0x28] sm:$0xff] %vm4259, %v6917
        %6950 = vst.msk [vmem:[%s406 + $0x30] sm:$0xff] %vm4259, %v6918
        %6951 = vst.msk [vmem:[%s406 + $0x38] sm:$0xff] %vm4259, %v6919
        %6952 = vst.msk [vmem:[%s406 + $0x40] sm:$0xff] %vm4259, %v6920
        %6953 = vst.msk [vmem:[%s406 + $0x48] sm:$0xff] %vm4259, %v6921
        %6954 = vst.msk [vmem:[%s406 + $0x50] sm:$0xff] %vm4259, %v6922
        %6955 = vst.msk [vmem:[%s406 + $0x58] sm:$0xff] %vm4259, %v6923
        %6956 = vst.msk [vmem:[%s406 + $0x60] sm:$0xff] %vm4259, %v6924
        %6957 = vst.msk [vmem:[%s406 + $0x68] sm:$0xff] %vm4259, %v6925
        %6958 = vst.msk [vmem:[%s406 + $0x70] sm:$0xff] %vm4259, %v6926
        %6959 = vst.msk [vmem:[%s406 + $0x78] sm:$0xff] %vm4259, %v6927
        %6960 = vst.msk [vmem:[%s406 + $0x80] sm:$0xff] %vm4259, %v6928
        %6961 = vst.msk [vmem:[%s406 + $0x88] sm:$0xff] %vm4259, %v6929
        %6962 = vst.msk [vmem:[%s406 + $0x90] sm:$0xff] %vm4259, %v6930
        %6963 = vst.msk [vmem:[%s406 + $0x98] sm:$0xff] %vm4259, %v6931
        %6964 = vst.msk [vmem:[%s406 + $0xa0] sm:$0xff] %vm4259, %v6932
        %6965 = vst.msk [vmem:[%s406 + $0xa8] sm:$0xff] %vm4259, %v6933
        %6966 = vst.msk [vmem:[%s406 + $0xb0] sm:$0xff] %vm4259, %v6934
        %6967 = vst.msk [vmem:[%s406 + $0xb8] sm:$0xff] %vm4259, %v6935
        %6968 = vst.msk [vmem:[%s406 + $0xc0] sm:$0xff] %vm4259, %v6936
        %6969 = vst.msk [vmem:[%s406 + $0xc8] sm:$0xff] %vm4259, %v6937
        %6970 = vst.msk [vmem:[%s406 + $0xd0] sm:$0xff] %vm4259, %v6938
        %6971 = vst.msk [vmem:[%s406 + $0xd8] sm:$0xff] %vm4259, %v6939
        %6972 = vst.msk [vmem:[%s406 + $0xe0] sm:$0xff] %vm4259, %v6940
        %6973 = vst.msk [vmem:[%s406 + $0xe8] sm:$0xff] %vm4259, %v6941
        %6974 = vst.msk [vmem:[%s406 + $0xf0] sm:$0xff] %vm4259, %v6942
        %6975 = vst.msk [vmem:[%s406 + $0xf8] sm:$0xff] %vm4259, %v6943
        %s6976 = sand.u32 %s272, 1
        %s6977 = scalar_lea.sflag [#allocation4], %s6976
        %s6978 = sand.u32 %s272, 1
        %s6979 = smul.addr %s6978, 256
        %s6980 = scalar_lea.vmem [#allocation5], %s6979
        // Predicated region
        $region69: #{tpu_custom_call.1} parent=63 // pred_check
          %p6981 = pneg %p282
        $region70: #{tpu_custom_call.1} parent=63 // pred_check_branch
          %6983 = sbr.rel (%p6981) target = $region72
        $region71: #{tpu_custom_call.1} parent=63 // pred_region
          %6985 = vsyncadd %s6977, 0
          %s6986 = smul.addr %s28, 32
          %s6987 = smul.addr %s6986, 8
          %s6988 = scalar_lea.hbm %s11, %s6987
          %s6989 = sshll.u32 %s6980, 4
          %s6990 = int_to_ptr.vmem [resolvable:$true] %s6989
          %s6991 = sshll.u32 %s6988, 4
          %s6992 = int_to_ptr.hbm [resolvable:$true] %s6991
          %6997 = dma.vmem_to_hbm [thread:$0]  %s6990, 4096, %s6992, %s6977, 128, 128, 8
        $region72: #{tpu_custom_call.1} parent=63 // pred_fallthru
          _
      $region64: #{tpu_custom_call.1} parent=5 // pred_fallthru
        _
      %p6998 = scmp.le.s32.totalorder 2, %s23
      // Predicated region
      $region73: #{tpu_custom_call.1} parent=5 // pred_check
        %p6999 = pneg %p6998
      $region74: #{tpu_custom_call.1} parent=5 // pred_check_branch
        %7001 = sbr.rel (%p6999) target = $region76
      $region75: #{tpu_custom_call.1} parent=5 // pred_region
        %s7002 = ssub.s32 %s23, 2
        // Predicated region
        $region77: #{tpu_custom_call.1} parent=75 // pred_check
          %p7003 = pneg %p288
        $region78: #{tpu_custom_call.1} parent=75 // pred_check_branch
          %7005 = sbr.rel (%p7003) target = $region80
        $region79: #{tpu_custom_call.1} parent=75 // pred_region
          %s7006 = sand.u32 %s273, 1
          %s7007 = scalar_lea.sflag [#allocation4], %s7006
          %s7008 = sand.u32 %s273, 1
          %s7009 = smul.addr %s7008, 256
          %s7010 = scalar_lea.vmem [#allocation5], %s7009
          %7012 = dma.done %s7007, 4096
        $region80: #{tpu_custom_call.1} parent=75 // pred_fallthru
          _
      $region76: #{tpu_custom_call.1} parent=5 // pred_fallthru
        _
    $region6: #{tpu_custom_call.1} parent=1 // loop_footer
      %s27 = sadd.s32 1, %s23
    $region7: #{tpu_custom_call.1} parent=1 // loop_footer_branch
      %22 = sbr.rel target = $region3
    $region8: #{tpu_custom_call.1} parent=1 // loop_exit
      _
    %7013 = vsyncpa [#allocation3], 1
    %s7014 = scalar_lea.sflag [#allocation3], 1
    %7015 = vsyncpa %s7014, 1
    %7016 = vsyncpa [#allocation4], 1
    %s7017 = scalar_lea.sflag [#allocation4], 1
    %7018 = vsyncpa %s7017, 1

</llo_original>
